<compile_context>
chip_gen: v6e
topology: v6e:2x2x1
jax: 0.10.0
libtpu: 0.0.40
codegen_flags: <defaults>
</compile_context>

<pallas_src>
import functools

import jax
import jax.numpy as jnp
from jax.experimental import pallas as pl
from jax.experimental.pallas import tpu as pltpu


def _round_up(x, m):
    return (x + m - 1) // m * m


def _vmem_limit_bytes():
    """Per-generation scoped-VMEM limit for the pallas_call."""
    try:
        kind = jax.devices()[0].device_kind.lower()
    except Exception:
        kind = ""
    if "v7" in kind or "7x" in kind:
        return 44 * 1024 * 1024          # v7x: 64 MiB physical VMEM per core
    if any(g in kind for g in ("v4", "v5", "v6")):
        return 96 * 1024 * 1024          # 128 MiB physical VMEM
    return 32 * 1024 * 1024              # unknown device: conservative


def _pick_block_h(H, W, cin_p, width_p, cout_p, budget_bytes):
    """Largest divisor of H whose per-step working set fits the VMEM budget.

    For every real ResNet-101 stage (and the toy test) this returns H, i.e.
    a whole image per grid step (no halo recompute at all).
    """
    wp = W + 2

    def working_set(bh):
        m = bh * wp
        x_tile = 2 * m * cin_p * 2                      # dbl-buffered bf16 input
        halos = 2 * 2 * wp * cin_p * 2                  # two 1-row halos, dbl-buf
        out_t = 2 * bh * W * cout_p * 2                 # dbl-buffered bf16 output
        h1scr = ((bh + 2) * wp + 2) * width_p * 2       # conv1 staging scratch
        acc = m * width_p * 4                           # f32 conv2 accumulator
        h3 = m * cout_p * 4                             # f32 conv3 result
        wts = 2 * (cin_p * width_p + 9 * width_p * width_p
                   + width_p * cout_p) * 2              # dbl-buffered bf16 weights
        return x_tile + halos + out_t + h1scr + acc + h3 + wts

    best = 1
    for d in range(1, H + 1):
        if H % d == 0 and working_set(d) <= budget_bytes:
            best = d
    return best


def _fold_bn(bn, eps=1e-5):
    """Inference-mode BN -> per-channel (scale, bias)."""
    gamma, beta, mean, var = (jnp.asarray(t, jnp.float32) for t in bn)
    s = gamma / jnp.sqrt(var + eps)
    b = beta - mean * s
    return s, b


def _pad_bias(b, cpad):
    return jnp.pad(b, (0, cpad - b.shape[0]))[None, :]


# ----------------------------------------------------------------------------
# Kernel: one (block_h x W) row-tile of one image per grid step.
# ----------------------------------------------------------------------------
def _bottleneck_kernel(x_ref, xt_ref, xb_ref,
                       w1_ref, b1_ref,
                       w2_ref, b2_ref,
                       w3_ref, b3_ref,
                       out_ref,
                       h1_ref,
                       *, block_h, W, n_hblk):
    hb = pl.program_id(1)
    wp = W + 2                               # padded width
    cin_p = x_ref.shape[-1]
    width_p = w1_ref.shape[-1]
    cout_p = w3_ref.shape[-1]
    m = block_h * wp                         # rows per step (padded-width domain)

    b1 = b1_ref[...]                         # hoisted: conv1 is called up to 3x

    # {0,1} mask zeroing the two padded border columns of every image row:
    # they are conv2's zero padding, so conv1's bias/relu must not leak there.
    col = jax.lax.broadcasted_iota(jnp.int32, (m, 1), 0) % wp
    colmask = jnp.logical_and(col >= 1, col <= W).astype(jnp.bfloat16)

    def conv1_bn_relu(x2d, mask):
        h = jnp.dot(x2d, w1_ref[...], preferred_element_type=jnp.float32)
        return jnp.maximum(h + b1, 0.0).astype(jnp.bfloat16) * mask

    # ---- stage conv1+bn1+relu into the flat, zero-bordered scratch ---------
    # scratch row (i*wp + j + 1) holds padded-H row i, padded-W column j:
    #   i = 0           : zero row above the tile (or the halo row)
    #   i = 1..block_h  : the tile's rows
    #   i = block_h + 1 : zero row below the tile (or the halo row)
    # (+1 leading / +1 trailing slack row so the discarded junk-column
    #  outputs always read in-bounds; their values are never used.)
    zeros_edge = jnp.zeros((wp + 1, width_p), jnp.bfloat16)
    h1_ref[pl.ds(0, wp + 1), :] = zeros_edge
    h1_ref[pl.ds((block_h + 1) * wp + 1, wp + 1), :] = zeros_edge

    x_flat = x_ref[...].reshape(m, cin_p)
    h1_ref[pl.ds(wp + 1, m), :] = conv1_bn_relu(x_flat, colmask)

    @pl.when(hb > 0)                 # halo row above (only if the image is split)
    def _():
        h1_ref[pl.ds(1, wp), :] = conv1_bn_relu(
            xt_ref[...].reshape(wp, cin_p), colmask[:wp])

    @pl.when(hb < n_hblk - 1)        # halo row below
    def _():
        h1_ref[pl.ds((block_h + 1) * wp + 1, wp), :] = conv1_bn_relu(
            xb_ref[...].reshape(wp, cin_p), colmask[:wp])

    # ---- conv2 (3x3, stride 1, pad 1): 9 accumulating MXU matmuls ----------
    # Each tap (ky,kx) is a CONTIGUOUS row-offset slice of the flat scratch;
    # no im2col staging buffer and no per-tap gather/reshape copies.
    acc = None
    for k in range(9):
        off = (k // 3) * wp + (k % 3)
        tap = h1_ref[pl.ds(off, m), :]
        part = jnp.dot(tap, w2_ref[k], preferred_element_type=jnp.float32)
        acc = part if acc is None else acc + part
    h2 = jnp.maximum(acc + b2_ref[...], 0.0).astype(jnp.bfloat16)

    # dropout1 = nn.Dropout2d(p=0.0) (and/or eval mode) -> identity.
    # TODO(synk): training-mode channel dropout (p > 0) not implemented.

    # ---- conv3 (1x1) + bn3 + residual + relu, drop the 2 junk columns ------
    h3 = jnp.dot(h2, w3_ref[...], preferred_element_type=jnp.float32)
    h3 = h3 + b3_ref[...] + x_flat.astype(jnp.float32)
    out = jnp.maximum(h3, 0.0).astype(jnp.bfloat16)
    out_ref[...] = out.reshape(block_h, wp, cout_p)[:, 1:W + 1, :]


# ----------------------------------------------------------------------------
# NHWC wrapper (preferred: no layout round-trip through HBM).
# ----------------------------------------------------------------------------
def bottleneck_do_forward_nhwc(x_nhwc, pt_params, *, block_h=None,
                               vmem_limit=None):
    """Returns the block output in bf16, NHWC."""
    N, H, W, cin = x_nhwc.shape
    conv1_w = jnp.asarray(pt_params["conv1_w"], jnp.float32)   # (width, cin, 1, 1)
    conv2_w = jnp.asarray(pt_params["conv2_w"], jnp.float32)   # (width, width, 3, 3)
    conv3_w = jnp.asarray(pt_params["conv3_w"], jnp.float32)   # (cout,  width, 1, 1)
    width = conv1_w.shape[0]
    cout = conv3_w.shape[0]
    assert cin == cout, "downsample=None requires inplanes == planes * expansion"

    cin_p = _round_up(cin, 128)
    width_p = _round_up(width, 128)
    cout_p = _round_up(cout, 128)
    assert cin_p == cout_p
    wp = W + 2

    vlim = int(vmem_limit if vmem_limit is not None else _vmem_limit_bytes())
    if block_h is None:
        bh = _pick_block_h(H, W, cin_p, width_p, cout_p, int(vlim * 0.6))
    else:
        bh = block_h
    assert H % bh == 0, "block_h must divide H"
    n_hblk = H // bh

    # ---- fold BN scale into bf16 weights; keep the bias as an f32 vector ---
    s1, b1 = _fold_bn(pt_params["bn1"])
    s2, b2 = _fold_bn(pt_params["bn2"])
    s3, b3 = _fold_bn(pt_params["bn3"])

    w1 = jnp.transpose(conv1_w[:, :, 0, 0], (1, 0)) * s1[None, :]        # (cin, width)
    w1 = jnp.pad(w1, ((0, cin_p - cin), (0, width_p - width))).astype(jnp.bfloat16)

    w2 = jnp.transpose(conv2_w, (2, 3, 1, 0)) * s2[None, None, None, :]  # (ky,kx,in,out)
    w2 = w2.reshape(9, width, width)
    w2 = jnp.pad(w2, ((0, 0), (0, width_p - width),
                      (0, width_p - width))).astype(jnp.bfloat16)

    w3 = jnp.transpose(conv3_w[:, :, 0, 0], (1, 0)) * s3[None, :]        # (width, cout)
    w3 = jnp.pad(w3, ((0, width_p - width), (0, cout_p - cout))).astype(jnp.bfloat16)

    b1 = _pad_bias(b1, width_p)
    b2 = _pad_bias(b2, width_p)
    b3 = _pad_bias(b3, cout_p)

    # ---- activations: W-pad (conv2 zero padding) + channel-pad, bf16 -------
    x3d = jnp.pad(x_nhwc.astype(jnp.bfloat16),
                  ((0, 0), (0, 0), (1, 1), (0, cin_p - cin)))
    x3d = x3d.reshape(N * H, wp, cin_p)

    def mid_map(n, hb):
        return (n * n_hblk + hb, 0, 0)

    def top_map(n, hb):      # image row just above the tile (clamped; dead at hb==0)
        return (jnp.maximum(n * H + hb * bh - 1, n * H), 0, 0)

    def bot_map(n, hb):      # image row just below the tile (clamped; dead at last hb)
        return (jnp.minimum(n * H + (hb + 1) * bh, n * H + H - 1), 0, 0)

    def cmap2(n, hb):
        return (0, 0)

    def cmap3(n, hb):
        return (0, 0, 0)

    kernel = functools.partial(_bottleneck_kernel,
                               block_h=bh, W=W, n_hblk=n_hblk)

    out3d = pl.pallas_call(
        kernel,
        out_shape=jax.ShapeDtypeStruct((N * H, W, cout_p), jnp.bfloat16),
        grid_spec=pltpu.PrefetchScalarGridSpec(
            num_scalar_prefetch=0,
            grid=(N, n_hblk),
            in_specs=[
                pl.BlockSpec((bh, wp, cin_p), mid_map),
                pl.BlockSpec((1, wp, cin_p), top_map),
                pl.BlockSpec((1, wp, cin_p), bot_map),
                pl.BlockSpec((cin_p, width_p), cmap2),       # w1 (scale-folded)
                pl.BlockSpec((1, width_p), cmap2),           # b1
                pl.BlockSpec((9, width_p, width_p), cmap3),  # w2 (scale-folded)
                pl.BlockSpec((1, width_p), cmap2),           # b2
                pl.BlockSpec((width_p, cout_p), cmap2),      # w3 (scale-folded)
                pl.BlockSpec((1, cout_p), cmap2),            # b3
            ],
            out_specs=pl.BlockSpec((bh, W, cout_p), mid_map),
            scratch_shapes=[
                # flat conv1-output staging buffer in the padded-width domain
                pltpu.VMEM(((bh + 2) * wp + 2, width_p), jnp.bfloat16),
            ],
        ),
        compiler_params=pltpu.CompilerParams(
            dimension_semantics=("parallel", "parallel"),
            vmem_limit_bytes=vlim,
        ),
    )(x3d, x3d, x3d, w1, b1, w2, b2, w3, b3)

    out = out3d.reshape(N, H, W, cout_p)
    if cout_p != cout:
        # Only channel counts that are not multiples of 128 (the toy config)
        # pay this post-kernel slice; all real ResNet stages skip it.
        out = out[..., :cout]
    return out


# ----------------------------------------------------------------------------
# NCHW wrapper: PyTorch parity.  The NCHW<->NHWC transposes cost one extra HBM
# round-trip of the activation; prefer the NHWC entry point when the model
# keeps activations channels-last.
# ----------------------------------------------------------------------------
def bottleneck_do_forward(x_nchw, pt_params, *, block_h=None):
    x_nhwc = jnp.transpose(x_nchw, (0, 2, 3, 1))
    out = bottleneck_do_forward_nhwc(x_nhwc, pt_params, block_h=block_h)
    return jnp.transpose(out, (0, 3, 1, 2))


# ----------------------------------------------------------------------------
# Pure-JAX reference (same inference-mode BN semantics) for validation.
# ----------------------------------------------------------------------------
def _reference(x, pt, eps=1e-5):
    def bn(y, g, b, m, v):
        return ((y - m[None, :, None, None])
                * (g / jnp.sqrt(v + eps))[None, :, None, None]
                + b[None, :, None, None])

    def conv(y, w, pad):
        return jax.lax.conv_general_dilated(
            y, w, window_strides=(1, 1), padding=[(pad, pad), (pad, pad)],
            dimension_numbers=("NCHW", "OIHW", "NCHW"))

    out = jax.nn.relu(bn(conv(x, pt["conv1_w"], 0), *pt["bn1"]))
    out = jax.nn.relu(bn(conv(out, pt["conv2_w"], 1), *pt["bn2"]))
    out = bn(conv(out, pt["conv3_w"], 0), *pt["bn3"])
    return jax.nn.relu(out + x)


if __name__ == "__main__":
    key = jax.random.PRNGKey(0)
    keys = jax.random.split(key, 8)

    # planes=4, expansion=4 -> inplanes = cout = 16, width = 4 (base_width=64).
    N, H, W = 2, 16, 16
    planes = 4
    inplanes = planes * 4        # 16 (identity residual valid)
    width = planes               # int(planes * 64/64) * 1
    outc = planes * 4            # 16

    x = jax.random.normal(keys[0], (N, inplanes, H, W), jnp.float32)

    def bn_init(k, c):
        k1, k2, k3, k4 = jax.random.split(k, 4)
        gamma = jax.random.uniform(k1, (c,), minval=0.5, maxval=1.5)
        beta = 0.1 * jax.random.normal(k2, (c,))
        mean = 0.1 * jax.random.normal(k3, (c,))
        var = jax.random.uniform(k4, (c,), minval=0.5, maxval=1.5)
        return (gamma, beta, mean, var)

    pt_params = {
        "conv1_w": 0.1 * jax.random.normal(keys[1], (width, inplanes, 1, 1), jnp.float32),
        "conv2_w": 0.1 * jax.random.normal(keys[2], (width, width, 3, 3), jnp.float32),
        "conv3_w": 0.1 * jax.random.normal(keys[3], (outc, width, 1, 1), jnp.float32),
        "bn1": bn_init(keys[4], width),
        "bn2": bn_init(keys[5], width),
        "bn3": bn_init(keys[6], outc),
    }

    out = jax.block_until_ready(bottleneck_do_forward(x, pt_params))
    ref = jax.block_until_ready(_reference(x, pt_params))

    assert out.shape == (N, outc, H, W), out.shape
    out_f32 = out.astype(jnp.float32)
    max_err = float(jnp.max(jnp.abs(out_f32 - ref)))
    # bf16 matmul operands + bf16 output (f32 accumulation) -> tolerance sized
    # for bf16 noise; structural bugs (tap order / halo / padding) would show
    # up as O(0.1-1) errors.
    if not bool(jnp.allclose(out_f32, ref, atol=3e-2, rtol=3e-2)):
        raise AssertionError(f"mismatch vs reference, max abs diff = {max_err}")

    print("KERNEL_OK")
</pallas_src>

<mosaic_0001>
module attributes {stable_mosaic.version = 11 : i64} {
  func.func @_bottleneck_kernel(%arg0: i32, %arg1: i32, %arg2: memref<16x18x128xbf16, #tpu.memory_space<vmem>>, %arg3: memref<1x18x128xbf16, #tpu.memory_space<vmem>>, %arg4: memref<1x18x128xbf16, #tpu.memory_space<vmem>>, %arg5: memref<128x128xbf16, #tpu.memory_space<vmem>>, %arg6: memref<1x128xf32, #tpu.memory_space<vmem>>, %arg7: memref<9x128x128xbf16, #tpu.memory_space<vmem>>, %arg8: memref<1x128xf32, #tpu.memory_space<vmem>>, %arg9: memref<128x128xbf16, #tpu.memory_space<vmem>>, %arg10: memref<1x128xf32, #tpu.memory_space<vmem>>, %arg11: memref<16x16x128xbf16, #tpu.memory_space<vmem>>, %arg12: memref<326x128xbf16, #tpu.memory_space<vmem>>) attributes {dimension_semantics = [#tpu.dimension_semantics<parallel>, #tpu.dimension_semantics<parallel>], iteration_bounds = array<i64: 2, 1>, scalar_prefetch = 0 : i64, scratch_operands = 1 : i64, tpu.core_type = #tpu.core_type<tc>, window_params = [{transform_indices = @transform_0, window_bounds = array<i64: 16, 18, 128>}, {transform_indices = @transform_1, window_bounds = array<i64: 1, 18, 128>}, {transform_indices = @transform_2, window_bounds = array<i64: 1, 18, 128>}, {pipeline_mode = #tpu.pipeline_mode<synchronous>, transform_indices = @transform_3, window_bounds = array<i64: 128, 128>}, {pipeline_mode = #tpu.pipeline_mode<synchronous>, transform_indices = @transform_4, window_bounds = array<i64: 1, 128>}, {pipeline_mode = #tpu.pipeline_mode<synchronous>, transform_indices = @transform_5, window_bounds = array<i64: 9, 128, 128>}, {pipeline_mode = #tpu.pipeline_mode<synchronous>, transform_indices = @transform_6, window_bounds = array<i64: 1, 128>}, {pipeline_mode = #tpu.pipeline_mode<synchronous>, transform_indices = @transform_7, window_bounds = array<i64: 128, 128>}, {pipeline_mode = #tpu.pipeline_mode<synchronous>, transform_indices = @transform_8, window_bounds = array<i64: 1, 128>}, {transform_indices = @transform_9, window_bounds = array<i64: 16, 16, 128>}]} {
    %c0 = arith.constant 0 : index
    %c0_0 = arith.constant 0 : index
    %0 = vector.load %arg6[%c0, %c0_0] : memref<1x128xf32, #tpu.memory_space<vmem>>, vector<1x128xf32>
    %1 = tpu.iota {dimensions = array<i32: 0>} : vector<288x1xi32>
    %c18_i32 = arith.constant 18 : i32
    %c0_i32 = arith.constant 0 : i32
    %2 = arith.cmpi eq, %c18_i32, %c0_i32 : i32
    %c1_i32 = arith.constant 1 : i32
    %3 = arith.select %2, %c1_i32, %c18_i32 : i32
    %4 = vector.broadcast %3 : i32 to vector<288x1xi32>
    %5 = arith.remsi %1, %4 : vector<288x1xi32>
    %c0_i32_1 = arith.constant 0 : i32
    %6 = vector.broadcast %c0_i32_1 : i32 to vector<288x1xi32>
    %7 = arith.cmpi ne, %5, %6 : vector<288x1xi32>
    %c0_i32_2 = arith.constant 0 : i32
    %8 = vector.broadcast %c0_i32_2 : i32 to vector<288x1xi32>
    %9 = arith.cmpi slt, %5, %8 : vector<288x1xi32>
    %c0_i32_3 = arith.constant 0 : i32
    %10 = arith.cmpi slt, %3, %c0_i32_3 : i32
    %11 = vector.broadcast %10 : i1 to vector<288x1xi1>
    %12 = vector.broadcast %11 : vector<288x1xi1> to vector<288x1xi1>
    %13 = arith.xori %9, %12 : vector<288x1xi1>
    %14 = arith.andi %13, %7 : vector<288x1xi1>
    %15 = vector.broadcast %3 : i32 to vector<288x1xi32>
    %16 = arith.addi %5, %15 : vector<288x1xi32>
    %17 = arith.select %14, %16, %5 : vector<288x1xi1>, vector<288x1xi32>
    %c1_i32_4 = arith.constant 1 : i32
    %18 = vector.broadcast %c1_i32_4 : i32 to vector<288x1xi32>
    %19 = arith.cmpi sge, %17, %18 : vector<288x1xi32>
    %c16_i32 = arith.constant 16 : i32
    %20 = vector.broadcast %c16_i32 : i32 to vector<288x1xi32>
    %21 = arith.cmpi sle, %17, %20 : vector<288x1xi32>
    %22 = arith.andi %19, %21 : vector<288x1xi1>
    %23 = arith.extui %22 : vector<288x1xi1> to vector<288x1xi32>
    %24 = arith.sitofp %23 : vector<288x1xi32> to vector<288x1xf32>
    %25 = arith.truncf %24 : vector<288x1xf32> to vector<288x1xbf16>
    %cst = arith.constant 0.000000e+00 : bf16
    %26 = vector.broadcast %cst : bf16 to vector<19x128xbf16>
    %c0_5 = arith.constant 0 : index
    %c0_6 = arith.constant 0 : index
    %27 = vector.load %arg12[%c0_5, %c0_6] : memref<326x128xbf16, #tpu.memory_space<vmem>>, vector<19x128xbf16>
    tpu.vector_store %arg12[%c0_5, %c0_6], %26 {strides = array<i32>} : memref<326x128xbf16, #tpu.memory_space<vmem>>, vector<19x128xbf16>,
    %c307 = arith.constant 307 : index
    %c0_7 = arith.constant 0 : index
    %28 = vector.load %arg12[%c307, %c0_7] : memref<326x128xbf16, #tpu.memory_space<vmem>>, vector<19x128xbf16>
    tpu.vector_store %arg12[%c307, %c0_7], %26 {strides = array<i32>} : memref<326x128xbf16, #tpu.memory_space<vmem>>, vector<19x128xbf16>,
    %c0_8 = arith.constant 0 : index
    %c0_9 = arith.constant 0 : index
    %c0_10 = arith.constant 0 : index
    %29 = vector.load %arg2[%c0_8, %c0_9, %c0_10] : memref<16x18x128xbf16, #tpu.memory_space<vmem>>, vector<16x18x128xbf16>
    %30 = vector.shape_cast %29 : vector<16x18x128xbf16> to vector<288x128xbf16>
    %c0_11 = arith.constant 0 : index
    %c0_12 = arith.constant 0 : index
    %31 = vector.load %arg5[%c0_11, %c0_12] : memref<128x128xbf16, #tpu.memory_space<vmem>>, vector<128x128xbf16>
    %cst_13 = arith.constant dense<0.000000e+00> : vector<288x128xf32>
    %32 = tpu.matmul %30, %31, %cst_13 {dimension_numbers = #tpu.dot_dimension_numbers<[1], [0], [0], [1], [0, 0, 1, 1], [], []>} : vector<288x128xbf16>, vector<128x128xbf16>, vector<288x128xf32> -> vector<288x128xf32>
    %33 = vector.broadcast %0 : vector<1x128xf32> to vector<288x128xf32>
    %34 = arith.addf %32, %33 : vector<288x128xf32>
    %cst_14 = arith.constant 0.000000e+00 : f32
    %35 = vector.broadcast %cst_14 : f32 to vector<288x128xf32>
    %36 = arith.maximumf %34, %35 : vector<288x128xf32>
    %37 = arith.truncf %36 : vector<288x128xf32> to vector<288x128xbf16>
    %38 = vector.broadcast %25 : vector<288x1xbf16> to vector<288x128xbf16>
    %39 = arith.mulf %37, %38 : vector<288x128xbf16>
    %c19 = arith.constant 19 : index
    %c0_15 = arith.constant 0 : index
    %40 = vector.load %arg12[%c19, %c0_15] : memref<326x128xbf16, #tpu.memory_space<vmem>>, vector<288x128xbf16>
    tpu.vector_store %arg12[%c19, %c0_15], %39 {strides = array<i32>} : memref<326x128xbf16, #tpu.memory_space<vmem>>, vector<288x128xbf16>,
    %c0_i32_16 = arith.constant 0 : i32
    %41 = arith.cmpi sgt, %arg1, %c0_i32_16 : i32
    %42 = arith.extui %41 : i1 to i32
    %c0_i32_17 = arith.constant 0 : i32
    %43 = arith.cmpi ne, %42, %c0_i32_17 : i32
    scf.if %43 {
      %c0_73 = arith.constant 0 : index
      %c0_74 = arith.constant 0 : index
      %c0_75 = arith.constant 0 : index
      %110 = vector.load %arg3[%c0_73, %c0_74, %c0_75] : memref<1x18x128xbf16, #tpu.memory_space<vmem>>, vector<1x18x128xbf16>
      %111 = vector.shape_cast %110 : vector<1x18x128xbf16> to vector<18x128xbf16>
      %112 = vector.extract_strided_slice %25 {offsets = [0, 0], sizes = [18, 1], strides = [1, 1]} : vector<288x1xbf16> to vector<18x1xbf16>
      %c0_76 = arith.constant 0 : index
      %c0_77 = arith.constant 0 : index
      %113 = vector.load %arg5[%c0_76, %c0_77] : memref<128x128xbf16, #tpu.memory_space<vmem>>, vector<128x128xbf16>
      %cst_78 = arith.constant dense<0.000000e+00> : vector<18x128xf32>
      %114 = tpu.matmul %111, %113, %cst_78 {dimension_numbers = #tpu.dot_dimension_numbers<[1], [0], [0], [1], [0, 0, 1, 1], [], []>} : vector<18x128xbf16>, vector<128x128xbf16>, vector<18x128xf32> -> vector<18x128xf32>
      %115 = vector.broadcast %0 : vector<1x128xf32> to vector<18x128xf32>
      %116 = arith.addf %114, %115 : vector<18x128xf32>
      %cst_79 = arith.constant 0.000000e+00 : f32
      %117 = vector.broadcast %cst_79 : f32 to vector<18x128xf32>
      %118 = arith.maximumf %116, %117 : vector<18x128xf32>
      %119 = arith.truncf %118 : vector<18x128xf32> to vector<18x128xbf16>
      %120 = vector.broadcast %112 : vector<18x1xbf16> to vector<18x128xbf16>
      %121 = arith.mulf %119, %120 : vector<18x128xbf16>
      %c1_80 = arith.constant 1 : index
      %c0_81 = arith.constant 0 : index
      %122 = vector.load %arg12[%c1_80, %c0_81] : memref<326x128xbf16, #tpu.memory_space<vmem>>, vector<18x128xbf16>
      tpu.vector_store %arg12[%c1_80, %c0_81], %121 {strides = array<i32>} : memref<326x128xbf16, #tpu.memory_space<vmem>>, vector<18x128xbf16>,
    } else {
    }
    %c0_i32_18 = arith.constant 0 : i32
    %44 = arith.cmpi slt, %arg1, %c0_i32_18 : i32
    %45 = arith.extui %44 : i1 to i32
    %c0_i32_19 = arith.constant 0 : i32
    %46 = arith.cmpi ne, %45, %c0_i32_19 : i32
    scf.if %46 {
      %c0_73 = arith.constant 0 : index
      %c0_74 = arith.constant 0 : index
      %c0_75 = arith.constant 0 : index
      %110 = vector.load %arg4[%c0_73, %c0_74, %c0_75] : memref<1x18x128xbf16, #tpu.memory_space<vmem>>, vector<1x18x128xbf16>
      %111 = vector.shape_cast %110 : vector<1x18x128xbf16> to vector<18x128xbf16>
      %112 = vector.extract_strided_slice %25 {offsets = [0, 0], sizes = [18, 1], strides = [1, 1]} : vector<288x1xbf16> to vector<18x1xbf16>
      %c0_76 = arith.constant 0 : index
      %c0_77 = arith.constant 0 : index
      %113 = vector.load %arg5[%c0_76, %c0_77] : memref<128x128xbf16, #tpu.memory_space<vmem>>, vector<128x128xbf16>
      %cst_78 = arith.constant dense<0.000000e+00> : vector<18x128xf32>
      %114 = tpu.matmul %111, %113, %cst_78 {dimension_numbers = #tpu.dot_dimension_numbers<[1], [0], [0], [1], [0, 0, 1, 1], [], []>} : vector<18x128xbf16>, vector<128x128xbf16>, vector<18x128xf32> -> vector<18x128xf32>
      %115 = vector.broadcast %0 : vector<1x128xf32> to vector<18x128xf32>
      %116 = arith.addf %114, %115 : vector<18x128xf32>
      %cst_79 = arith.constant 0.000000e+00 : f32
      %117 = vector.broadcast %cst_79 : f32 to vector<18x128xf32>
      %118 = arith.maximumf %116, %117 : vector<18x128xf32>
      %119 = arith.truncf %118 : vector<18x128xf32> to vector<18x128xbf16>
      %120 = vector.broadcast %112 : vector<18x1xbf16> to vector<18x128xbf16>
      %121 = arith.mulf %119, %120 : vector<18x128xbf16>
      %c307_80 = arith.constant 307 : index
      %c0_81 = arith.constant 0 : index
      %122 = vector.load %arg12[%c307_80, %c0_81] : memref<326x128xbf16, #tpu.memory_space<vmem>>, vector<18x128xbf16>
      tpu.vector_store %arg12[%c307_80, %c0_81], %121 {strides = array<i32>} : memref<326x128xbf16, #tpu.memory_space<vmem>>, vector<18x128xbf16>,
    } else {
    }
    %c0_20 = arith.constant 0 : index
    %c0_21 = arith.constant 0 : index
    %47 = vector.load %arg12[%c0_20, %c0_21] : memref<326x128xbf16, #tpu.memory_space<vmem>>, vector<288x128xbf16>
    %c0_22 = arith.constant 0 : index
    %c0_23 = arith.constant 0 : index
    %c0_24 = arith.constant 0 : index
    %48 = vector.load %arg7[%c0_22, %c0_23, %c0_24] : memref<9x128x128xbf16, #tpu.memory_space<vmem>>, vector<1x128x128xbf16>
    %49 = vector.shape_cast %48 : vector<1x128x128xbf16> to vector<128x128xbf16>
    %cst_25 = arith.constant dense<0.000000e+00> : vector<288x128xf32>
    %50 = tpu.matmul %47, %49, %cst_25 {dimension_numbers = #tpu.dot_dimension_numbers<[1], [0], [0], [1], [0, 0, 1, 1], [], []>} : vector<288x128xbf16>, vector<128x128xbf16>, vector<288x128xf32> -> vector<288x128xf32>
    %c1 = arith.constant 1 : index
    %c0_26 = arith.constant 0 : index
    %51 = vector.load %arg12[%c1, %c0_26] : memref<326x128xbf16, #tpu.memory_space<vmem>>, vector<288x128xbf16>
    %c1_27 = arith.constant 1 : index
    %c0_28 = arith.constant 0 : index
    %c0_29 = arith.constant 0 : index
    %52 = vector.load %arg7[%c1_27, %c0_28, %c0_29] : memref<9x128x128xbf16, #tpu.memory_space<vmem>>, vector<1x128x128xbf16>
    %53 = vector.shape_cast %52 : vector<1x128x128xbf16> to vector<128x128xbf16>
    %cst_30 = arith.constant dense<0.000000e+00> : vector<288x128xf32>
    %54 = tpu.matmul %51, %53, %cst_30 {dimension_numbers = #tpu.dot_dimension_numbers<[1], [0], [0], [1], [0, 0, 1, 1], [], []>} : vector<288x128xbf16>, vector<128x128xbf16>, vector<288x128xf32> -> vector<288x128xf32>
    %55 = arith.addf %50, %54 : vector<288x128xf32>
    %c2 = arith.constant 2 : index
    %c0_31 = arith.constant 0 : index
    %56 = vector.load %arg12[%c2, %c0_31] : memref<326x128xbf16, #tpu.memory_space<vmem>>, vector<288x128xbf16>
    %c2_32 = arith.constant 2 : index
    %c0_33 = arith.constant 0 : index
    %c0_34 = arith.constant 0 : index
    %57 = vector.load %arg7[%c2_32, %c0_33, %c0_34] : memref<9x128x128xbf16, #tpu.memory_space<vmem>>, vector<1x128x128xbf16>
    %58 = vector.shape_cast %57 : vector<1x128x128xbf16> to vector<128x128xbf16>
    %cst_35 = arith.constant dense<0.000000e+00> : vector<288x128xf32>
    %59 = tpu.matmul %56, %58, %cst_35 {dimension_numbers = #tpu.dot_dimension_numbers<[1], [0], [0], [1], [0, 0, 1, 1], [], []>} : vector<288x128xbf16>, vector<128x128xbf16>, vector<288x128xf32> -> vector<288x128xf32>
    %60 = arith.addf %55, %59 : vector<288x128xf32>
    %c18 = arith.constant 18 : index
    %c0_36 = arith.constant 0 : index
    %61 = vector.load %arg12[%c18, %c0_36] : memref<326x128xbf16, #tpu.memory_space<vmem>>, vector<288x128xbf16>
    %c3 = arith.constant 3 : index
    %c0_37 = arith.constant 0 : index
    %c0_38 = arith.constant 0 : index
    %62 = vector.load %arg7[%c3, %c0_37, %c0_38] : memref<9x128x128xbf16, #tpu.memory_space<vmem>>, vector<1x128x128xbf16>
    %63 = vector.shape_cast %62 : vector<1x128x128xbf16> to vector<128x128xbf16>
    %cst_39 = arith.constant dense<0.000000e+00> : vector<288x128xf32>
    %64 = tpu.matmul %61, %63, %cst_39 {dimension_numbers = #tpu.dot_dimension_numbers<[1], [0], [0], [1], [0, 0, 1, 1], [], []>} : vector<288x128xbf16>, vector<128x128xbf16>, vector<288x128xf32> -> vector<288x128xf32>
    %65 = arith.addf %60, %64 : vector<288x128xf32>
    %c19_40 = arith.constant 19 : index
    %c0_41 = arith.constant 0 : index
    %66 = vector.load %arg12[%c19_40, %c0_41] : memref<326x128xbf16, #tpu.memory_space<vmem>>, vector<288x128xbf16>
    %c4 = arith.constant 4 : index
    %c0_42 = arith.constant 0 : index
    %c0_43 = arith.constant 0 : index
    %67 = vector.load %arg7[%c4, %c0_42, %c0_43] : memref<9x128x128xbf16, #tpu.memory_space<vmem>>, vector<1x128x128xbf16>
    %68 = vector.shape_cast %67 : vector<1x128x128xbf16> to vector<128x128xbf16>
    %cst_44 = arith.constant dense<0.000000e+00> : vector<288x128xf32>
    %69 = tpu.matmul %66, %68, %cst_44 {dimension_numbers = #tpu.dot_dimension_numbers<[1], [0], [0], [1], [0, 0, 1, 1], [], []>} : vector<288x128xbf16>, vector<128x128xbf16>, vector<288x128xf32> -> vector<288x128xf32>
    %70 = arith.addf %65, %69 : vector<288x128xf32>
    %c20 = arith.constant 20 : index
    %c0_45 = arith.constant 0 : index
    %71 = vector.load %arg12[%c20, %c0_45] : memref<326x128xbf16, #tpu.memory_space<vmem>>, vector<288x128xbf16>
    %c5 = arith.constant 5 : index
    %c0_46 = arith.constant 0 : index
    %c0_47 = arith.constant 0 : index
    %72 = vector.load %arg7[%c5, %c0_46, %c0_47] : memref<9x128x128xbf16, #tpu.memory_space<vmem>>, vector<1x128x128xbf16>
    %73 = vector.shape_cast %72 : vector<1x128x128xbf16> to vector<128x128xbf16>
    %cst_48 = arith.constant dense<0.000000e+00> : vector<288x128xf32>
    %74 = tpu.matmul %71, %73, %cst_48 {dimension_numbers = #tpu.dot_dimension_numbers<[1], [0], [0], [1], [0, 0, 1, 1], [], []>} : vector<288x128xbf16>, vector<128x128xbf16>, vector<288x128xf32> -> vector<288x128xf32>
    %75 = arith.addf %70, %74 : vector<288x128xf32>
    %c36 = arith.constant 36 : index
    %c0_49 = arith.constant 0 : index
    %76 = vector.load %arg12[%c36, %c0_49] : memref<326x128xbf16, #tpu.memory_space<vmem>>, vector<288x128xbf16>
    %c6 = arith.constant 6 : index
    %c0_50 = arith.constant 0 : index
    %c0_51 = arith.constant 0 : index
    %77 = vector.load %arg7[%c6, %c0_50, %c0_51] : memref<9x128x128xbf16, #tpu.memory_space<vmem>>, vector<1x128x128xbf16>
    %78 = vector.shape_cast %77 : vector<1x128x128xbf16> to vector<128x128xbf16>
    %cst_52 = arith.constant dense<0.000000e+00> : vector<288x128xf32>
    %79 = tpu.matmul %76, %78, %cst_52 {dimension_numbers = #tpu.dot_dimension_numbers<[1], [0], [0], [1], [0, 0, 1, 1], [], []>} : vector<288x128xbf16>, vector<128x128xbf16>, vector<288x128xf32> -> vector<288x128xf32>
    %80 = arith.addf %75, %79 : vector<288x128xf32>
    %c37 = arith.constant 37 : index
    %c0_53 = arith.constant 0 : index
    %81 = vector.load %arg12[%c37, %c0_53] : memref<326x128xbf16, #tpu.memory_space<vmem>>, vector<288x128xbf16>
    %c7 = arith.constant 7 : index
    %c0_54 = arith.constant 0 : index
    %c0_55 = arith.constant 0 : index
    %82 = vector.load %arg7[%c7, %c0_54, %c0_55] : memref<9x128x128xbf16, #tpu.memory_space<vmem>>, vector<1x128x128xbf16>
    %83 = vector.shape_cast %82 : vector<1x128x128xbf16> to vector<128x128xbf16>
    %cst_56 = arith.constant dense<0.000000e+00> : vector<288x128xf32>
    %84 = tpu.matmul %81, %83, %cst_56 {dimension_numbers = #tpu.dot_dimension_numbers<[1], [0], [0], [1], [0, 0, 1, 1], [], []>} : vector<288x128xbf16>, vector<128x128xbf16>, vector<288x128xf32> -> vector<288x128xf32>
    %85 = arith.addf %80, %84 : vector<288x128xf32>
    %c38 = arith.constant 38 : index
    %c0_57 = arith.constant 0 : index
    %86 = vector.load %arg12[%c38, %c0_57] : memref<326x128xbf16, #tpu.memory_space<vmem>>, vector<288x128xbf16>
    %c8 = arith.constant 8 : index
    %c0_58 = arith.constant 0 : index
    %c0_59 = arith.constant 0 : index
    %87 = vector.load %arg7[%c8, %c0_58, %c0_59] : memref<9x128x128xbf16, #tpu.memory_space<vmem>>, vector<1x128x128xbf16>
    %88 = vector.shape_cast %87 : vector<1x128x128xbf16> to vector<128x128xbf16>
    %cst_60 = arith.constant dense<0.000000e+00> : vector<288x128xf32>
    %89 = tpu.matmul %86, %88, %cst_60 {dimension_numbers = #tpu.dot_dimension_numbers<[1], [0], [0], [1], [0, 0, 1, 1], [], []>} : vector<288x128xbf16>, vector<128x128xbf16>, vector<288x128xf32> -> vector<288x128xf32>
    %90 = arith.addf %85, %89 : vector<288x128xf32>
    %c0_61 = arith.constant 0 : index
    %c0_62 = arith.constant 0 : index
    %91 = vector.load %arg8[%c0_61, %c0_62] : memref<1x128xf32, #tpu.memory_space<vmem>>, vector<1x128xf32>
    %92 = vector.broadcast %91 : vector<1x128xf32> to vector<288x128xf32>
    %93 = arith.addf %90, %92 : vector<288x128xf32>
    %cst_63 = arith.constant 0.000000e+00 : f32
    %94 = vector.broadcast %cst_63 : f32 to vector<288x128xf32>
    %95 = arith.maximumf %93, %94 : vector<288x128xf32>
    %96 = arith.truncf %95 : vector<288x128xf32> to vector<288x128xbf16>
    %c0_64 = arith.constant 0 : index
    %c0_65 = arith.constant 0 : index
    %97 = vector.load %arg9[%c0_64, %c0_65] : memref<128x128xbf16, #tpu.memory_space<vmem>>, vector<128x128xbf16>
    %cst_66 = arith.constant dense<0.000000e+00> : vector<288x128xf32>
    %98 = tpu.matmul %96, %97, %cst_66 {dimension_numbers = #tpu.dot_dimension_numbers<[1], [0], [0], [1], [0, 0, 1, 1], [], []>} : vector<288x128xbf16>, vector<128x128xbf16>, vector<288x128xf32> -> vector<288x128xf32>
    %c0_67 = arith.constant 0 : index
    %c0_68 = arith.constant 0 : index
    %99 = vector.load %arg10[%c0_67, %c0_68] : memref<1x128xf32, #tpu.memory_space<vmem>>, vector<1x128xf32>
    %100 = vector.broadcast %99 : vector<1x128xf32> to vector<288x128xf32>
    %101 = arith.addf %98, %100 : vector<288x128xf32>
    %102 = arith.extf %30 : vector<288x128xbf16> to vector<288x128xf32>
    %103 = arith.addf %101, %102 : vector<288x128xf32>
    %cst_69 = arith.constant 0.000000e+00 : f32
    %104 = vector.broadcast %cst_69 : f32 to vector<288x128xf32>
    %105 = arith.maximumf %103, %104 : vector<288x128xf32>
    %106 = arith.truncf %105 : vector<288x128xf32> to vector<288x128xbf16>
    %107 = vector.shape_cast %106 : vector<288x128xbf16> to vector<16x18x128xbf16>
    %108 = vector.extract_strided_slice %107 {offsets = [0, 1, 0], sizes = [16, 16, 128], strides = [1, 1, 1]} : vector<16x18x128xbf16> to vector<16x16x128xbf16>
    %c0_70 = arith.constant 0 : index
    %c0_71 = arith.constant 0 : index
    %c0_72 = arith.constant 0 : index
    %109 = vector.load %arg11[%c0_70, %c0_71, %c0_72] : memref<16x16x128xbf16, #tpu.memory_space<vmem>>, vector<16x16x128xbf16>
    tpu.vector_store %arg11[%c0_70, %c0_71, %c0_72], %108 {strides = array<i32>} : memref<16x16x128xbf16, #tpu.memory_space<vmem>>, vector<16x16x128xbf16>,
    return
  }
  func.func @transform_0(%arg0: i32, %arg1: i32) -> (i32, i32, i32) {
    %c1_i32 = arith.constant 1 : i32
    %0 = arith.muli %arg0, %c1_i32 : i32
    %1 = arith.addi %0, %arg1 : i32
    %c0_i32 = arith.constant 0 : i32
    %c0_i32_0 = arith.constant 0 : i32
    %c0_i32_1 = arith.constant 0 : i32
    return %1, %c0_i32, %c0_i32_0 : i32, i32, i32
  }
  func.func @transform_1(%arg0: i32, %arg1: i32) -> (i32, i32, i32) {
    %c16_i32 = arith.constant 16 : i32
    %0 = arith.muli %arg0, %c16_i32 : i32
    %c16_i32_0 = arith.constant 16 : i32
    %1 = arith.muli %arg1, %c16_i32_0 : i32
    %2 = arith.addi %0, %1 : i32
    %c1_i32 = arith.constant 1 : i32
    %3 = arith.subi %2, %c1_i32 : i32
    %c16_i32_1 = arith.constant 16 : i32
    %4 = arith.muli %arg0, %c16_i32_1 : i32
    %5 = arith.maxsi %3, %4 : i32
    %c0_i32 = arith.constant 0 : i32
    %c0_i32_2 = arith.constant 0 : i32
    %c0_i32_3 = arith.constant 0 : i32
    return %5, %c0_i32, %c0_i32_2 : i32, i32, i32
  }
  func.func @transform_2(%arg0: i32, %arg1: i32) -> (i32, i32, i32) {
    %c16_i32 = arith.constant 16 : i32
    %0 = arith.muli %arg0, %c16_i32 : i32
    %c1_i32 = arith.constant 1 : i32
    %1 = arith.addi %arg1, %c1_i32 : i32
    %c16_i32_0 = arith.constant 16 : i32
    %2 = arith.muli %1, %c16_i32_0 : i32
    %3 = arith.addi %0, %2 : i32
    %c16_i32_1 = arith.constant 16 : i32
    %4 = arith.muli %arg0, %c16_i32_1 : i32
    %c16_i32_2 = arith.constant 16 : i32
    %5 = arith.addi %4, %c16_i32_2 : i32
    %c1_i32_3 = arith.constant 1 : i32
    %6 = arith.subi %5, %c1_i32_3 : i32
    %7 = arith.minsi %3, %6 : i32
    %c0_i32 = arith.constant 0 : i32
    %c0_i32_4 = arith.constant 0 : i32
    %c0_i32_5 = arith.constant 0 : i32
    return %7, %c0_i32, %c0_i32_4 : i32, i32, i32
  }
  func.func @transform_3(%arg0: i32, %arg1: i32) -> (i32, i32) {
    %c0_i32 = arith.constant 0 : i32
    %c0_i32_0 = arith.constant 0 : i32
    %c0_i32_1 = arith.constant 0 : i32
    return %c0_i32, %c0_i32_0 : i32, i32
  }
  func.func @transform_4(%arg0: i32, %arg1: i32) -> (i32, i32) {
    %c0_i32 = arith.constant 0 : i32
    %c0_i32_0 = arith.constant 0 : i32
    %c0_i32_1 = arith.constant 0 : i32
    return %c0_i32, %c0_i32_0 : i32, i32
  }
  func.func @transform_5(%arg0: i32, %arg1: i32) -> (i32, i32, i32) {
    %c0_i32 = arith.constant 0 : i32
    %c0_i32_0 = arith.constant 0 : i32
    %c0_i32_1 = arith.constant 0 : i32
    %c0_i32_2 = arith.constant 0 : i32
    return %c0_i32, %c0_i32_0, %c0_i32_1 : i32, i32, i32
  }
  func.func @transform_6(%arg0: i32, %arg1: i32) -> (i32, i32) {
    %c0_i32 = arith.constant 0 : i32
    %c0_i32_0 = arith.constant 0 : i32
    %c0_i32_1 = arith.constant 0 : i32
    return %c0_i32, %c0_i32_0 : i32, i32
  }
  func.func @transform_7(%arg0: i32, %arg1: i32) -> (i32, i32) {
    %c0_i32 = arith.constant 0 : i32
    %c0_i32_0 = arith.constant 0 : i32
    %c0_i32_1 = arith.constant 0 : i32
    return %c0_i32, %c0_i32_0 : i32, i32
  }
  func.func @transform_8(%arg0: i32, %arg1: i32) -> (i32, i32) {
    %c0_i32 = arith.constant 0 : i32
    %c0_i32_0 = arith.constant 0 : i32
    %c0_i32_1 = arith.constant 0 : i32
    return %c0_i32, %c0_i32_0 : i32, i32
  }
  func.func @transform_9(%arg0: i32, %arg1: i32) -> (i32, i32, i32) {
    %c1_i32 = arith.constant 1 : i32
    %0 = arith.muli %arg0, %c1_i32 : i32
    %1 = arith.addi %0, %arg1 : i32
    %c0_i32 = arith.constant 0 : i32
    %c0_i32_0 = arith.constant 0 : i32
    %c0_i32_1 = arith.constant 0 : i32
    return %1, %c0_i32, %c0_i32_0 : i32, i32, i32
  }
}

</mosaic_0001>

<llo_original>
// kernel: tpu_custom_call.1
$region0: #{tpu_custom_call.1}
  #allocation0 [shape = 'u32[]', space=smem, size = 0x4, offset = 0x4, fixed_abs, tag = 'smem constant byte address 0x4 - core index']
  #allocation1 [shape = 'u32[144,128]{1,0:T(1,128)}', space=vmem, size = 0x12000, scoped, tag = 'internal scratch']
  #allocation2 [shape = 'bf16[326,128]{1,0:T(8,128)(2,1)}', space=vmem, size = 0x14800, scoped, tag = 'scratch operand']
  %s0 = inlined_call_operand.vmem [shape: bf16[32,18,128], index: 0, kind: input, shape index: {}]
  %s1 = inlined_call_operand.vmem [shape: bf16[32,18,128], index: 1, kind: input, shape index: {}]
  %s2 = inlined_call_operand.vmem [shape: bf16[32,18,128], index: 2, kind: input, shape index: {}]
  %s3 = inlined_call_operand.vmem [shape: bf16[128,128], index: 3, kind: input, shape index: {}]
  %s4 = inlined_call_operand.vmem [shape: f32[1,128], index: 4, kind: input, shape index: {}]
  %s5 = inlined_call_operand.vmem [shape: bf16[9,128,128], index: 5, kind: input, shape index: {}]
  %s6 = inlined_call_operand.vmem [shape: f32[1,128], index: 6, kind: input, shape index: {}]
  %s7 = inlined_call_operand.vmem [shape: bf16[128,128], index: 7, kind: input, shape index: {}]
  %s8 = inlined_call_operand.vmem [shape: f32[1,128], index: 8, kind: input, shape index: {}]
  %s9 = inlined_call_operand.hbm [shape: bf16[32,16,128], index: 9, kind: output, shape index: {}]
  %s10 = sld [smem:[#allocation0]]
  $region77: #{tpu_custom_call.1} parent=0
    _
  %s12 = ssub.s32 1, %s10
  %s13 = scalar_select 0, %s12, %s10
  $region1: #{tpu_custom_call.1} parent=0
    #allocation3 [shape = 'u8[131072]{0}', space=vmem, size = 0x20000, scoped, tag = 'output window, operand 0']
    #allocation4 [shape = 's32[2]{0}', space=sflag, size = 0x8, scoped, tag = 'scoped memory for tpu_custom_call.1']
    %14 = vsyncpa [#allocation4], 0
    %s15 = scalar_lea.sflag [#allocation4], 1
    %16 = vsyncpa %s15, 0
    loop: start=0, step=1, limit=4
    $region2: #{tpu_custom_call.1} parent=1 // loop_pre_header
      _
    $region3: #{tpu_custom_call.1} parent=1 // loop_header
      %s18 = sphi 0, %s22
      %p19 = scmp.ge.s32.totalorder %s18, 4
      %s25 = sphi 0, %s37
      %s26 = sphi 0, %s33
      %s27 = sphi 0, %s25
      %s28 = sphi 0, %s26
      %s29 = sphi 0, %s27
      %s30 = sphi 0, %s28
      %s42 = sphi 0, %s44
      %s45 = sphi 0, %s42
      %s46 = sphi 0, %s45
      %s62 = sphi 0, %s46
      %s80 = sphi 0, %s82
      %s83 = sphi 0, %s80
      %s84 = sphi 0, %s83
      %s100 = sphi 0, %s84
      %s120 = sphi 0, %s122
      %s123 = sphi 0, %s120
      %s124 = sphi 0, %s123
      %s140 = sphi 0, %s124
      %s144 = sphi 0, %s144
      %s146 = sphi 0, %s144
      %s147 = sphi 0, %s146
      %s161 = sphi 0, %s147
      %s165 = sphi 0, %s165
      %s167 = sphi 0, %s165
      %s168 = sphi 0, %s167
      %s182 = sphi 0, %s168
      %s186 = sphi 0, %s186
      %s188 = sphi 0, %s186
      %s189 = sphi 0, %s188
      %s203 = sphi 0, %s189
      %s207 = sphi 0, %s207
      %s209 = sphi 0, %s207
      %s210 = sphi 0, %s209
      %s224 = sphi 0, %s210
      %s228 = sphi 0, %s228
      %s230 = sphi 0, %s228
      %s231 = sphi 0, %s230
      %s245 = sphi 0, %s231
      %s249 = sphi 0, %s249
      %s251 = sphi 0, %s249
      %s252 = sphi 0, %s251
      %s266 = sphi 0, %s252
      %s274 = sphi 0, %s276
      %s277 = sphi 0, %s274
      %s278 = sphi 0, %s277
      %s294 = sphi 0, %s278
    $region4: #{tpu_custom_call.1} parent=1 // loop_header_branch
      %21 = sbr.rel (%p19) target = $region8
    $region5: #{tpu_custom_call.1} parent=1 // loop_body
      %s23 = ssub.s32 %s18, 1
      %s24 = ssub.s32 %s18, 2
      %s31 = sadd.s32 1, %s26
      %p32 = scmp.ge.s32.totalorder %s31, 1
      %s33 = scalar_select %p32, 0, %s31
      %s34 = sadd.s32 1, %s25
      %s35 = scalar_select %p32, %s34, %s25
      %p36 = scmp.ge.s32.totalorder %s35, 2
      %s37 = scalar_select %p36, 0, %s35
      %s38 = sadd.s32 %s25, %s26
      %s39 = sadd.s32 %s37, %s33
      %s40 = ssub.s32 %s38, %s39
      %p41 = scmp.eq.s32.totalorder %s40, 0
      %s43 = sadd.s32 %s42, 1
      %s44 = scalar_select %p41, %s42, %s43
      %p47 = pneg %p41
      %p48 = scmp.eq.s32.totalorder %s18, 1
      %p49 = por %p47, %p48
      %p50 = scmp.ne.s32.totalorder %s42, %s45
      %p51 = scmp.eq.s32.totalorder %s18, 0
      %p52 = por %p50, %p51
      %p53 = scmp.ne.s32.totalorder %s42, %s45
      %p54 = scmp.eq.s32.totalorder %s23, 1
      %p55 = por %p53, %p54
      %p56 = scmp.ne.s32.totalorder %s45, %s46
      %p57 = scmp.eq.s32.totalorder %s23, 0
      %p58 = por %p56, %p57
      %p59 = scmp.ne.s32.totalorder %s45, %s46
      %p60 = scmp.eq.s32.totalorder %s24, 1
      %p61 = por %p59, %p60
      %p63 = scmp.ne.s32.totalorder %s46, %s62
      %p64 = scmp.eq.s32.totalorder %s24, 0
      %p65 = por %p63, %p64
      %s66 = smul.u32 %s25, 16
      %s67 = smul.u32 %s26, 16
      %s68 = sadd.s32 %s66, %s67
      %s69 = ssub.s32 %s68, 1
      %p70 = scmp.gt.s32.totalorder %s69, %s66
      %s71 = scalar_select %p70, %s69, %s66
      %s72 = smul.u32 %s37, 16
      %s73 = smul.u32 %s33, 16
      %s74 = sadd.s32 %s72, %s73
      %s75 = ssub.s32 %s74, 1
      %p76 = scmp.gt.s32.totalorder %s75, %s72
      %s77 = scalar_select %p76, %s75, %s72
      %s78 = ssub.s32 %s71, %s77
      %p79 = scmp.eq.s32.totalorder %s78, 0
      %s81 = sadd.s32 %s80, 1
      %s82 = scalar_select %p79, %s80, %s81
      %p85 = pneg %p79
      %p86 = scmp.eq.s32.totalorder %s18, 1
      %p87 = por %p85, %p86
      %p88 = scmp.ne.s32.totalorder %s80, %s83
      %p89 = scmp.eq.s32.totalorder %s18, 0
      %p90 = por %p88, %p89
      %p91 = scmp.ne.s32.totalorder %s80, %s83
      %p92 = scmp.eq.s32.totalorder %s23, 1
      %p93 = por %p91, %p92
      %p94 = scmp.ne.s32.totalorder %s83, %s84
      %p95 = scmp.eq.s32.totalorder %s23, 0
      %p96 = por %p94, %p95
      %p97 = scmp.ne.s32.totalorder %s83, %s84
      %p98 = scmp.eq.s32.totalorder %s24, 1
      %p99 = por %p97, %p98
      %p101 = scmp.ne.s32.totalorder %s84, %s100
      %p102 = scmp.eq.s32.totalorder %s24, 0
      %p103 = por %p101, %p102
      %s104 = smul.u32 %s25, 16
      %s105 = sadd.s32 %s26, 1
      %s106 = smul.u32 %s105, 16
      %s107 = sadd.s32 %s104, %s106
      %s108 = sadd.s32 %s104, 15
      %p109 = scmp.lt.s32.totalorder %s107, %s108
      %s110 = scalar_select %p109, %s107, %s108
      %s111 = smul.u32 %s37, 16
      %s112 = sadd.s32 %s33, 1
      %s113 = smul.u32 %s112, 16
      %s114 = sadd.s32 %s111, %s113
      %s115 = sadd.s32 %s111, 15
      %p116 = scmp.lt.s32.totalorder %s114, %s115
      %s117 = scalar_select %p116, %s114, %s115
      %s118 = ssub.s32 %s110, %s117
      %p119 = scmp.eq.s32.totalorder %s118, 0
      %s121 = sadd.s32 %s120, 1
      %s122 = scalar_select %p119, %s120, %s121
      %p125 = pneg %p119
      %p126 = scmp.eq.s32.totalorder %s18, 1
      %p127 = por %p125, %p126
      %p128 = scmp.ne.s32.totalorder %s120, %s123
      %p129 = scmp.eq.s32.totalorder %s18, 0
      %p130 = por %p128, %p129
      %p131 = scmp.ne.s32.totalorder %s120, %s123
      %p132 = scmp.eq.s32.totalorder %s23, 1
      %p133 = por %p131, %p132
      %p134 = scmp.ne.s32.totalorder %s123, %s124
      %p135 = scmp.eq.s32.totalorder %s23, 0
      %p136 = por %p134, %p135
      %p137 = scmp.ne.s32.totalorder %s123, %s124
      %p138 = scmp.eq.s32.totalorder %s24, 1
      %p139 = por %p137, %p138
      %p141 = scmp.ne.s32.totalorder %s124, %s140
      %p142 = scmp.eq.s32.totalorder %s24, 0
      %p143 = por %p141, %p142
      %s145 = sadd.s32 %s144, 1
      %p148 = scmp.eq.s32.totalorder %s18, 1
      %p149 = scmp.ne.s32.totalorder %s144, %s146
      %p150 = scmp.eq.s32.totalorder %s18, 0
      %p151 = por %p149, %p150
      %p152 = scmp.ne.s32.totalorder %s144, %s146
      %p153 = scmp.eq.s32.totalorder %s23, 1
      %p154 = por %p152, %p153
      %p155 = scmp.ne.s32.totalorder %s146, %s147
      %p156 = scmp.eq.s32.totalorder %s23, 0
      %p157 = por %p155, %p156
      %p158 = scmp.ne.s32.totalorder %s146, %s147
      %p159 = scmp.eq.s32.totalorder %s24, 1
      %p160 = por %p158, %p159
      %p162 = scmp.ne.s32.totalorder %s147, %s161
      %p163 = scmp.eq.s32.totalorder %s24, 0
      %p164 = por %p162, %p163
      %s166 = sadd.s32 %s165, 1
      %p169 = scmp.eq.s32.totalorder %s18, 1
      %p170 = scmp.ne.s32.totalorder %s165, %s167
      %p171 = scmp.eq.s32.totalorder %s18, 0
      %p172 = por %p170, %p171
      %p173 = scmp.ne.s32.totalorder %s165, %s167
      %p174 = scmp.eq.s32.totalorder %s23, 1
      %p175 = por %p173, %p174
      %p176 = scmp.ne.s32.totalorder %s167, %s168
      %p177 = scmp.eq.s32.totalorder %s23, 0
      %p178 = por %p176, %p177
      %p179 = scmp.ne.s32.totalorder %s167, %s168
      %p180 = scmp.eq.s32.totalorder %s24, 1
      %p181 = por %p179, %p180
      %p183 = scmp.ne.s32.totalorder %s168, %s182
      %p184 = scmp.eq.s32.totalorder %s24, 0
      %p185 = por %p183, %p184
      %s187 = sadd.s32 %s186, 1
      %p190 = scmp.eq.s32.totalorder %s18, 1
      %p191 = scmp.ne.s32.totalorder %s186, %s188
      %p192 = scmp.eq.s32.totalorder %s18, 0
      %p193 = por %p191, %p192
      %p194 = scmp.ne.s32.totalorder %s186, %s188
      %p195 = scmp.eq.s32.totalorder %s23, 1
      %p196 = por %p194, %p195
      %p197 = scmp.ne.s32.totalorder %s188, %s189
      %p198 = scmp.eq.s32.totalorder %s23, 0
      %p199 = por %p197, %p198
      %p200 = scmp.ne.s32.totalorder %s188, %s189
      %p201 = scmp.eq.s32.totalorder %s24, 1
      %p202 = por %p200, %p201
      %p204 = scmp.ne.s32.totalorder %s189, %s203
      %p205 = scmp.eq.s32.totalorder %s24, 0
      %p206 = por %p204, %p205
      %s208 = sadd.s32 %s207, 1
      %p211 = scmp.eq.s32.totalorder %s18, 1
      %p212 = scmp.ne.s32.totalorder %s207, %s209
      %p213 = scmp.eq.s32.totalorder %s18, 0
      %p214 = por %p212, %p213
      %p215 = scmp.ne.s32.totalorder %s207, %s209
      %p216 = scmp.eq.s32.totalorder %s23, 1
      %p217 = por %p215, %p216
      %p218 = scmp.ne.s32.totalorder %s209, %s210
      %p219 = scmp.eq.s32.totalorder %s23, 0
      %p220 = por %p218, %p219
      %p221 = scmp.ne.s32.totalorder %s209, %s210
      %p222 = scmp.eq.s32.totalorder %s24, 1
      %p223 = por %p221, %p222
      %p225 = scmp.ne.s32.totalorder %s210, %s224
      %p226 = scmp.eq.s32.totalorder %s24, 0
      %p227 = por %p225, %p226
      %s229 = sadd.s32 %s228, 1
      %p232 = scmp.eq.s32.totalorder %s18, 1
      %p233 = scmp.ne.s32.totalorder %s228, %s230
      %p234 = scmp.eq.s32.totalorder %s18, 0
      %p235 = por %p233, %p234
      %p236 = scmp.ne.s32.totalorder %s228, %s230
      %p237 = scmp.eq.s32.totalorder %s23, 1
      %p238 = por %p236, %p237
      %p239 = scmp.ne.s32.totalorder %s230, %s231
      %p240 = scmp.eq.s32.totalorder %s23, 0
      %p241 = por %p239, %p240
      %p242 = scmp.ne.s32.totalorder %s230, %s231
      %p243 = scmp.eq.s32.totalorder %s24, 1
      %p244 = por %p242, %p243
      %p246 = scmp.ne.s32.totalorder %s231, %s245
      %p247 = scmp.eq.s32.totalorder %s24, 0
      %p248 = por %p246, %p247
      %s250 = sadd.s32 %s249, 1
      %p253 = scmp.eq.s32.totalorder %s18, 1
      %p254 = scmp.ne.s32.totalorder %s249, %s251
      %p255 = scmp.eq.s32.totalorder %s18, 0
      %p256 = por %p254, %p255
      %p257 = scmp.ne.s32.totalorder %s249, %s251
      %p258 = scmp.eq.s32.totalorder %s23, 1
      %p259 = por %p257, %p258
      %p260 = scmp.ne.s32.totalorder %s251, %s252
      %p261 = scmp.eq.s32.totalorder %s23, 0
      %p262 = por %p260, %p261
      %p263 = scmp.ne.s32.totalorder %s251, %s252
      %p264 = scmp.eq.s32.totalorder %s24, 1
      %p265 = por %p263, %p264
      %p267 = scmp.ne.s32.totalorder %s252, %s266
      %p268 = scmp.eq.s32.totalorder %s24, 0
      %p269 = por %p267, %p268
      %s270 = sadd.s32 %s25, %s26
      %s271 = sadd.s32 %s37, %s33
      %s272 = ssub.s32 %s270, %s271
      %p273 = scmp.eq.s32.totalorder %s272, 0
      %s275 = sadd.s32 %s274, 1
      %s276 = scalar_select %p273, %s274, %s275
      %p279 = pneg %p273
      %p280 = scmp.eq.s32.totalorder %s18, 1
      %p281 = por %p279, %p280
      %p282 = scmp.ne.s32.totalorder %s274, %s277
      %p283 = scmp.eq.s32.totalorder %s18, 0
      %p284 = por %p282, %p283
      %p285 = scmp.ne.s32.totalorder %s274, %s277
      %p286 = scmp.eq.s32.totalorder %s23, 1
      %p287 = por %p285, %p286
      %p288 = scmp.ne.s32.totalorder %s277, %s278
      %p289 = scmp.eq.s32.totalorder %s23, 0
      %p290 = por %p288, %p289
      %p291 = scmp.ne.s32.totalorder %s277, %s278
      %p292 = scmp.eq.s32.totalorder %s24, 1
      %p293 = por %p291, %p292
      %p295 = scmp.ne.s32.totalorder %s278, %s294
      %p296 = scmp.eq.s32.totalorder %s24, 0
      %p297 = por %p295, %p296
      %p298 = scmp.le.s32.totalorder 1, %s18
      %p299 = scmp.lt.s32.totalorder %s18, 3
      %p300 = pnand %p298, %p299
      %p301 = pneg %p300
      // Predicated region
      $region9: #{tpu_custom_call.1} parent=5 // pred_check
        _
      $region10: #{tpu_custom_call.1} parent=5 // pred_check_branch
        %303 = sbr.rel (%p300) target = $region12
      $region11: #{tpu_custom_call.1} parent=5 // pred_region
        %s304 = ssub.s32 %s18, 1
        // Predicated region
        $region13: #{tpu_custom_call.1} parent=11 // pred_check
          %p305 = pneg %p157
        $region14: #{tpu_custom_call.1} parent=11 // pred_check_branch
          %307 = sbr.rel (%p305) target = $region16
        $region15: #{tpu_custom_call.1} parent=11 // pred_region
          _
        $region16: #{tpu_custom_call.1} parent=11 // pred_fallthru
          _
        // Predicated region
        $region17: #{tpu_custom_call.1} parent=11 // pred_check
          %p308 = pneg %p178
        $region18: #{tpu_custom_call.1} parent=11 // pred_check_branch
          %310 = sbr.rel (%p308) target = $region20
        $region19: #{tpu_custom_call.1} parent=11 // pred_region
          _
        $region20: #{tpu_custom_call.1} parent=11 // pred_fallthru
          _
        // Predicated region
        $region21: #{tpu_custom_call.1} parent=11 // pred_check
          %p311 = pneg %p199
        $region22: #{tpu_custom_call.1} parent=11 // pred_check_branch
          %313 = sbr.rel (%p311) target = $region24
        $region23: #{tpu_custom_call.1} parent=11 // pred_region
          _
        $region24: #{tpu_custom_call.1} parent=11 // pred_fallthru
          _
        // Predicated region
        $region25: #{tpu_custom_call.1} parent=11 // pred_check
          %p314 = pneg %p220
        $region26: #{tpu_custom_call.1} parent=11 // pred_check_branch
          %316 = sbr.rel (%p314) target = $region28
        $region27: #{tpu_custom_call.1} parent=11 // pred_region
          _
        $region28: #{tpu_custom_call.1} parent=11 // pred_fallthru
          _
        // Predicated region
        $region29: #{tpu_custom_call.1} parent=11 // pred_check
          %p317 = pneg %p241
        $region30: #{tpu_custom_call.1} parent=11 // pred_check_branch
          %319 = sbr.rel (%p317) target = $region32
        $region31: #{tpu_custom_call.1} parent=11 // pred_region
          _
        $region32: #{tpu_custom_call.1} parent=11 // pred_fallthru
          _
        // Predicated region
        $region33: #{tpu_custom_call.1} parent=11 // pred_check
          %p320 = pneg %p262
        $region34: #{tpu_custom_call.1} parent=11 // pred_check_branch
          %322 = sbr.rel (%p320) target = $region36
        $region35: #{tpu_custom_call.1} parent=11 // pred_region
          _
        $region36: #{tpu_custom_call.1} parent=11 // pred_fallthru
          _
      $region12: #{tpu_custom_call.1} parent=5 // pred_fallthru
        _
      %p323 = scmp.lt.s32.totalorder %s18, 2
      // Predicated region
      $region37: #{tpu_custom_call.1} parent=5 // pred_check
        %p324 = pneg %p323
      $region38: #{tpu_custom_call.1} parent=5 // pred_check_branch
        %326 = sbr.rel (%p324) target = $region40
      $region39: #{tpu_custom_call.1} parent=5 // pred_region
        // Predicated region
        $region41: #{tpu_custom_call.1} parent=39 // pred_check
          %p327 = pneg %p52
        $region42: #{tpu_custom_call.1} parent=39 // pred_check_branch
          %329 = sbr.rel (%p327) target = $region44
        $region43: #{tpu_custom_call.1} parent=39 // pred_region
          %s330 = sadd.s32 %s25, %s26
          %s331 = smul.u32 16, %s330
          %p332 = scmp.lt.s32.totalorder %s331, 31
          %s333 = scalar_select %p332, %s331, 31
          %s334 = smul.addr %s333, 3
          %s335 = smul.addr %s334, 4
          %s336 = scalar_lea.vmem %s0, %s335
          %s337 = sadd.s32 %s25, %s26
          %s338 = smul.u32 16, %s337
        $region44: #{tpu_custom_call.1} parent=39 // pred_fallthru
          _
        // Predicated region
        $region45: #{tpu_custom_call.1} parent=39 // pred_check
          %p339 = pneg %p90
        $region46: #{tpu_custom_call.1} parent=39 // pred_check_branch
          %341 = sbr.rel (%p339) target = $region48
        $region47: #{tpu_custom_call.1} parent=39 // pred_region
          %s342 = smul.u32 %s25, 16
          %s343 = smul.u32 %s26, 16
          %s344 = sadd.s32 %s342, %s343
          %s345 = ssub.s32 %s344, 1
          %p346 = scmp.gt.s32.totalorder %s345, %s342
          %s347 = scalar_select %p346, %s345, %s342
          %p348 = scmp.lt.s32.totalorder %s347, 31
          %s349 = scalar_select %p348, %s347, 31
          %s350 = smul.addr %s349, 3
          %s351 = smul.addr %s350, 4
          %s352 = scalar_lea.vmem %s1, %s351
          %s353 = smul.u32 %s25, 16
          %s354 = smul.u32 %s26, 16
          %s355 = sadd.s32 %s353, %s354
          %s356 = ssub.s32 %s355, 1
          %p357 = scmp.gt.s32.totalorder %s356, %s353
          %s358 = scalar_select %p357, %s356, %s353
        $region48: #{tpu_custom_call.1} parent=39 // pred_fallthru
          _
        // Predicated region
        $region49: #{tpu_custom_call.1} parent=39 // pred_check
          %p359 = pneg %p130
        $region50: #{tpu_custom_call.1} parent=39 // pred_check_branch
          %361 = sbr.rel (%p359) target = $region52
        $region51: #{tpu_custom_call.1} parent=39 // pred_region
          %s362 = smul.u32 %s25, 16
          %s363 = sadd.s32 %s26, 1
          %s364 = smul.u32 %s363, 16
          %s365 = sadd.s32 %s362, %s364
          %s366 = sadd.s32 %s362, 15
          %p367 = scmp.lt.s32.totalorder %s365, %s366
          %s368 = scalar_select %p367, %s365, %s366
          %p369 = scmp.lt.s32.totalorder %s368, 31
          %s370 = scalar_select %p369, %s368, 31
          %s371 = smul.addr %s370, 3
          %s372 = smul.addr %s371, 4
          %s373 = scalar_lea.vmem %s2, %s372
          %s374 = smul.u32 %s25, 16
          %s375 = sadd.s32 %s26, 1
          %s376 = smul.u32 %s375, 16
          %s377 = sadd.s32 %s374, %s376
          %s378 = sadd.s32 %s374, 15
          %p379 = scmp.lt.s32.totalorder %s377, %s378
          %s380 = scalar_select %p379, %s377, %s378
        $region52: #{tpu_custom_call.1} parent=39 // pred_fallthru
          _
      $region40: #{tpu_custom_call.1} parent=5 // pred_fallthru
        _
      %p381 = scmp.le.s32.totalorder 1, %s18
      %p382 = scmp.lt.s32.totalorder %s18, 3
      %p383 = pnand %p381, %p382
      %p384 = pneg %p383
      // Predicated region
      $region53: #{tpu_custom_call.1} parent=5 // pred_check
        _
      $region54: #{tpu_custom_call.1} parent=5 // pred_check_branch
        %386 = sbr.rel (%p383) target = $region56
      $region55: #{tpu_custom_call.1} parent=5 // pred_region
        %s387 = ssub.s32 %s18, 1
        %s388 = sadd.s32 %s27, %s28
        %s389 = smul.u32 16, %s388
        %p390 = scmp.lt.s32.totalorder %s389, 31
        %s391 = scalar_select %p390, %s389, 31
        %s392 = smul.addr %s391, 3
        %s393 = smul.addr %s392, 4
        %s394 = scalar_lea.vmem %s0, %s393
        %p395 = pneg %p58
        %p396 = pneg %p55
        %s397 = smul.u32 %s27, 16
        %s398 = smul.u32 %s28, 16
        %s399 = sadd.s32 %s397, %s398
        %s400 = ssub.s32 %s399, 1
        %p401 = scmp.gt.s32.totalorder %s400, %s397
        %s402 = scalar_select %p401, %s400, %s397
        %p403 = scmp.lt.s32.totalorder %s402, 31
        %s404 = scalar_select %p403, %s402, 31
        %s405 = smul.addr %s404, 3
        %s406 = smul.addr %s405, 4
        %s407 = scalar_lea.vmem %s1, %s406
        %p408 = pneg %p96
        %p409 = pneg %p93
        %s410 = smul.u32 %s27, 16
        %s411 = sadd.s32 %s28, 1
        %s412 = smul.u32 %s411, 16
        %s413 = sadd.s32 %s410, %s412
        %s414 = sadd.s32 %s410, 15
        %p415 = scmp.lt.s32.totalorder %s413, %s414
        %s416 = scalar_select %p415, %s413, %s414
        %p417 = scmp.lt.s32.totalorder %s416, 31
        %s418 = scalar_select %p417, %s416, 31
        %s419 = smul.addr %s418, 3
        %s420 = smul.addr %s419, 4
        %s421 = scalar_lea.vmem %s2, %s420
        %p422 = pneg %p136
        %p423 = pneg %p133
        %p424 = pneg %p157
        %p425 = pneg %p154
        %p426 = pneg %p178
        %p427 = pneg %p175
        %p428 = pneg %p199
        %p429 = pneg %p196
        %p430 = pneg %p220
        %p431 = pneg %p217
        %p432 = pneg %p241
        %p433 = pneg %p238
        %p434 = pneg %p262
        %p435 = pneg %p259
        %p436 = pneg %p290
        %p437 = pneg %p287
        %s438 = sand.u32 %s277, 1
        %s439 = scalar_lea.sflag [#allocation4], %s438
        %s440 = sand.u32 %s277, 1
        %s441 = smul.addr %s440, 128
        %s442 = scalar_lea.vmem [#allocation3], %s441
        %s443 = sadd.s32 %s27, %s28
        %s444 = smul.u32 16, %s443
        %p445 = scmp.lt.s32.totalorder %s444, 31
        %s446 = scalar_select %p445, %s444, 31
        %s447 = smul.addr %s446, 3
        %s448 = smul.addr %s447, 4
        %s449 = scalar_lea.vmem %s0, %s448
        %s450 = sadd.s32 %s27, %s28
        %s451 = smul.u32 16, %s450
        %s452 = smul.u32 %s27, 16
        %s453 = smul.u32 %s28, 16
        %s454 = sadd.s32 %s452, %s453
        %s455 = ssub.s32 %s454, 1
        %p456 = scmp.gt.s32.totalorder %s455, %s452
        %s457 = scalar_select %p456, %s455, %s452
        %p458 = scmp.lt.s32.totalorder %s457, 31
        %s459 = scalar_select %p458, %s457, 31
        %s460 = smul.addr %s459, 3
        %s461 = smul.addr %s460, 4
        %s462 = scalar_lea.vmem %s1, %s461
        %s463 = smul.u32 %s27, 16
        %s464 = smul.u32 %s28, 16
        %s465 = sadd.s32 %s463, %s464
        %s466 = ssub.s32 %s465, 1
        %p467 = scmp.gt.s32.totalorder %s466, %s463
        %s468 = scalar_select %p467, %s466, %s463
        %s469 = smul.u32 %s27, 16
        %s470 = sadd.s32 %s28, 1
        %s471 = smul.u32 %s470, 16
        %s472 = sadd.s32 %s469, %s471
        %s473 = sadd.s32 %s469, 15
        %p474 = scmp.lt.s32.totalorder %s472, %s473
        %s475 = scalar_select %p474, %s472, %s473
        %p476 = scmp.lt.s32.totalorder %s475, 31
        %s477 = scalar_select %p476, %s475, 31
        %s478 = smul.addr %s477, 3
        %s479 = smul.addr %s478, 4
        %s480 = scalar_lea.vmem %s2, %s479
        %s481 = smul.u32 %s27, 16
        %s482 = sadd.s32 %s28, 1
        %s483 = smul.u32 %s482, 16
        %s484 = sadd.s32 %s481, %s483
        %s485 = sadd.s32 %s481, 15
        %p486 = scmp.lt.s32.totalorder %s484, %s485
        %s487 = scalar_select %p486, %s484, %s485
        %s488 = sadd.s32 %s27, %s28
        %s489 = smul.u32 16, %s488
        %v491 = vld [vmem:[%s4] sm:$0x1]
        %v492 = vlaneseq
        %v493 = vshrl.u32 %v492, 7
        %v494 = vadd.s32 %v493, 8
        %v495 = vadd.s32 %v493, 16
        %v496 = vadd.s32 %v493, 24
        %v497 = vadd.s32 %v493, 32
        %v498 = vadd.s32 %v493, 40
        %v499 = vadd.s32 %v493, 48
        %v500 = vadd.s32 %v493, 56
        %v501 = vadd.s32 %v493, 64
        %v502 = vadd.s32 %v493, 72
        %v503 = vadd.s32 %v493, 80
        %v504 = vadd.s32 %v493, 88
        %v505 = vadd.s32 %v493, 96
        %v506 = vadd.s32 %v493, 104
        %v507 = vadd.s32 %v493, 112
        %v508 = vadd.s32 %v493, 120
        %v509 = vadd.s32 %v493, 128
        %v510 = vadd.s32 %v493, 136
        %v511 = vadd.s32 %v493, 144
        %v512 = vadd.s32 %v493, 152
        %v513 = vadd.s32 %v493, 160
        %v514 = vadd.s32 %v493, 168
        %v515 = vadd.s32 %v493, 176
        %v516 = vadd.s32 %v493, 184
        %v517 = vadd.s32 %v493, 192
        %v518 = vadd.s32 %v493, 200
        %v519 = vadd.s32 %v493, 208
        %v520 = vadd.s32 %v493, 216
        %v521 = vadd.s32 %v493, 224
        %v522 = vadd.s32 %v493, 232
        %v523 = vadd.s32 %v493, 240
        %v524 = vadd.s32 %v493, 248
        %v525 = vadd.s32 %v493, 256
        %v526 = vadd.s32 %v493, 264
        %v527 = vadd.s32 %v493, 272
        %v528 = vadd.s32 %v493, 280
        %vm529 = vcmp.lt.s32.totalorder %v493, 0
        %v530 = vsub.s32 0, %v493
        %v531 = vsel %vm529, %v530, %v493
        %v532 = vmul.u32.u64.compose %v531, 3817748708
        %v533 = vextract.low.u32 %v532
        %v534 = vextract.high.u32 %v532
        %v535 = vshrl.u32 %v534, 4
        %v536 = vmul.u32 %v535, 18
        %v537 = vsub.s32 %v531, %v536
        %v538 = vsub.s32 0, %v537
        %v539 = vsel %vm529, %v538, %v537
        %vm540 = vcmp.lt.s32.totalorder %v494, 0
        %v541 = vsub.s32 0, %v494
        %v542 = vsel %vm540, %v541, %v494
        %v543 = vmul.u32.u64.compose %v542, 3817748708
        %v544 = vextract.low.u32 %v543
        %v545 = vextract.high.u32 %v543
        %v546 = vshrl.u32 %v545, 4
        %v547 = vmul.u32 %v546, 18
        %v548 = vsub.s32 %v542, %v547
        %v549 = vsub.s32 0, %v548
        %v550 = vsel %vm540, %v549, %v548
        %vm551 = vcmp.lt.s32.totalorder %v495, 0
        %v552 = vsub.s32 0, %v495
        %v553 = vsel %vm551, %v552, %v495
        %v554 = vmul.u32.u64.compose %v553, 3817748708
        %v555 = vextract.low.u32 %v554
        %v556 = vextract.high.u32 %v554
        %v557 = vshrl.u32 %v556, 4
        %v558 = vmul.u32 %v557, 18
        %v559 = vsub.s32 %v553, %v558
        %v560 = vsub.s32 0, %v559
        %v561 = vsel %vm551, %v560, %v559
        %vm562 = vcmp.lt.s32.totalorder %v496, 0
        %v563 = vsub.s32 0, %v496
        %v564 = vsel %vm562, %v563, %v496
        %v565 = vmul.u32.u64.compose %v564, 3817748708
        %v566 = vextract.low.u32 %v565
        %v567 = vextract.high.u32 %v565
        %v568 = vshrl.u32 %v567, 4
        %v569 = vmul.u32 %v568, 18
        %v570 = vsub.s32 %v564, %v569
        %v571 = vsub.s32 0, %v570
        %v572 = vsel %vm562, %v571, %v570
        %vm573 = vcmp.lt.s32.totalorder %v497, 0
        %v574 = vsub.s32 0, %v497
        %v575 = vsel %vm573, %v574, %v497
        %v576 = vmul.u32.u64.compose %v575, 3817748708
        %v577 = vextract.low.u32 %v576
        %v578 = vextract.high.u32 %v576
        %v579 = vshrl.u32 %v578, 4
        %v580 = vmul.u32 %v579, 18
        %v581 = vsub.s32 %v575, %v580
        %v582 = vsub.s32 0, %v581
        %v583 = vsel %vm573, %v582, %v581
        %vm584 = vcmp.lt.s32.totalorder %v498, 0
        %v585 = vsub.s32 0, %v498
        %v586 = vsel %vm584, %v585, %v498
        %v587 = vmul.u32.u64.compose %v586, 3817748708
        %v588 = vextract.low.u32 %v587
        %v589 = vextract.high.u32 %v587
        %v590 = vshrl.u32 %v589, 4
        %v591 = vmul.u32 %v590, 18
        %v592 = vsub.s32 %v586, %v591
        %v593 = vsub.s32 0, %v592
        %v594 = vsel %vm584, %v593, %v592
        %vm595 = vcmp.lt.s32.totalorder %v499, 0
        %v596 = vsub.s32 0, %v499
        %v597 = vsel %vm595, %v596, %v499
        %v598 = vmul.u32.u64.compose %v597, 3817748708
        %v599 = vextract.low.u32 %v598
        %v600 = vextract.high.u32 %v598
        %v601 = vshrl.u32 %v600, 4
        %v602 = vmul.u32 %v601, 18
        %v603 = vsub.s32 %v597, %v602
        %v604 = vsub.s32 0, %v603
        %v605 = vsel %vm595, %v604, %v603
        %vm606 = vcmp.lt.s32.totalorder %v500, 0
        %v607 = vsub.s32 0, %v500
        %v608 = vsel %vm606, %v607, %v500
        %v609 = vmul.u32.u64.compose %v608, 3817748708
        %v610 = vextract.low.u32 %v609
        %v611 = vextract.high.u32 %v609
        %v612 = vshrl.u32 %v611, 4
        %v613 = vmul.u32 %v612, 18
        %v614 = vsub.s32 %v608, %v613
        %v615 = vsub.s32 0, %v614
        %v616 = vsel %vm606, %v615, %v614
        %vm617 = vcmp.lt.s32.totalorder %v501, 0
        %v618 = vsub.s32 0, %v501
        %v619 = vsel %vm617, %v618, %v501
        %v620 = vmul.u32.u64.compose %v619, 3817748708
        %v621 = vextract.low.u32 %v620
        %v622 = vextract.high.u32 %v620
        %v623 = vshrl.u32 %v622, 4
        %v624 = vmul.u32 %v623, 18
        %v625 = vsub.s32 %v619, %v624
        %v626 = vsub.s32 0, %v625
        %v627 = vsel %vm617, %v626, %v625
        %vm628 = vcmp.lt.s32.totalorder %v502, 0
        %v629 = vsub.s32 0, %v502
        %v630 = vsel %vm628, %v629, %v502
        %v631 = vmul.u32.u64.compose %v630, 3817748708
        %v632 = vextract.low.u32 %v631
        %v633 = vextract.high.u32 %v631
        %v634 = vshrl.u32 %v633, 4
        %v635 = vmul.u32 %v634, 18
        %v636 = vsub.s32 %v630, %v635
        %v637 = vsub.s32 0, %v636
        %v638 = vsel %vm628, %v637, %v636
        %vm639 = vcmp.lt.s32.totalorder %v503, 0
        %v640 = vsub.s32 0, %v503
        %v641 = vsel %vm639, %v640, %v503
        %v642 = vmul.u32.u64.compose %v641, 3817748708
        %v643 = vextract.low.u32 %v642
        %v644 = vextract.high.u32 %v642
        %v645 = vshrl.u32 %v644, 4
        %v646 = vmul.u32 %v645, 18
        %v647 = vsub.s32 %v641, %v646
        %v648 = vsub.s32 0, %v647
        %v649 = vsel %vm639, %v648, %v647
        %vm650 = vcmp.lt.s32.totalorder %v504, 0
        %v651 = vsub.s32 0, %v504
        %v652 = vsel %vm650, %v651, %v504
        %v653 = vmul.u32.u64.compose %v652, 3817748708
        %v654 = vextract.low.u32 %v653
        %v655 = vextract.high.u32 %v653
        %v656 = vshrl.u32 %v655, 4
        %v657 = vmul.u32 %v656, 18
        %v658 = vsub.s32 %v652, %v657
        %v659 = vsub.s32 0, %v658
        %v660 = vsel %vm650, %v659, %v658
        %vm661 = vcmp.lt.s32.totalorder %v505, 0
        %v662 = vsub.s32 0, %v505
        %v663 = vsel %vm661, %v662, %v505
        %v664 = vmul.u32.u64.compose %v663, 3817748708
        %v665 = vextract.low.u32 %v664
        %v666 = vextract.high.u32 %v664
        %v667 = vshrl.u32 %v666, 4
        %v668 = vmul.u32 %v667, 18
        %v669 = vsub.s32 %v663, %v668
        %v670 = vsub.s32 0, %v669
        %v671 = vsel %vm661, %v670, %v669
        %vm672 = vcmp.lt.s32.totalorder %v506, 0
        %v673 = vsub.s32 0, %v506
        %v674 = vsel %vm672, %v673, %v506
        %v675 = vmul.u32.u64.compose %v674, 3817748708
        %v676 = vextract.low.u32 %v675
        %v677 = vextract.high.u32 %v675
        %v678 = vshrl.u32 %v677, 4
        %v679 = vmul.u32 %v678, 18
        %v680 = vsub.s32 %v674, %v679
        %v681 = vsub.s32 0, %v680
        %v682 = vsel %vm672, %v681, %v680
        %vm683 = vcmp.lt.s32.totalorder %v507, 0
        %v684 = vsub.s32 0, %v507
        %v685 = vsel %vm683, %v684, %v507
        %v686 = vmul.u32.u64.compose %v685, 3817748708
        %v687 = vextract.low.u32 %v686
        %v688 = vextract.high.u32 %v686
        %v689 = vshrl.u32 %v688, 4
        %v690 = vmul.u32 %v689, 18
        %v691 = vsub.s32 %v685, %v690
        %v692 = vsub.s32 0, %v691
        %v693 = vsel %vm683, %v692, %v691
        %vm694 = vcmp.lt.s32.totalorder %v508, 0
        %v695 = vsub.s32 0, %v508
        %v696 = vsel %vm694, %v695, %v508
        %v697 = vmul.u32.u64.compose %v696, 3817748708
        %v698 = vextract.low.u32 %v697
        %v699 = vextract.high.u32 %v697
        %v700 = vshrl.u32 %v699, 4
        %v701 = vmul.u32 %v700, 18
        %v702 = vsub.s32 %v696, %v701
        %v703 = vsub.s32 0, %v702
        %v704 = vsel %vm694, %v703, %v702
        %vm705 = vcmp.lt.s32.totalorder %v509, 0
        %v706 = vsub.s32 0, %v509
        %v707 = vsel %vm705, %v706, %v509
        %v708 = vmul.u32.u64.compose %v707, 3817748708
        %v709 = vextract.low.u32 %v708
        %v710 = vextract.high.u32 %v708
        %v711 = vshrl.u32 %v710, 4
        %v712 = vmul.u32 %v711, 18
        %v713 = vsub.s32 %v707, %v712
        %v714 = vsub.s32 0, %v713
        %v715 = vsel %vm705, %v714, %v713
        %vm716 = vcmp.lt.s32.totalorder %v510, 0
        %v717 = vsub.s32 0, %v510
        %v718 = vsel %vm716, %v717, %v510
        %v719 = vmul.u32.u64.compose %v718, 3817748708
        %v720 = vextract.low.u32 %v719
        %v721 = vextract.high.u32 %v719
        %v722 = vshrl.u32 %v721, 4
        %v723 = vmul.u32 %v722, 18
        %v724 = vsub.s32 %v718, %v723
        %v725 = vsub.s32 0, %v724
        %v726 = vsel %vm716, %v725, %v724
        %vm727 = vcmp.lt.s32.totalorder %v511, 0
        %v728 = vsub.s32 0, %v511
        %v729 = vsel %vm727, %v728, %v511
        %v730 = vmul.u32.u64.compose %v729, 3817748708
        %v731 = vextract.low.u32 %v730
        %v732 = vextract.high.u32 %v730
        %v733 = vshrl.u32 %v732, 4
        %v734 = vmul.u32 %v733, 18
        %v735 = vsub.s32 %v729, %v734
        %v736 = vsub.s32 0, %v735
        %v737 = vsel %vm727, %v736, %v735
        %vm738 = vcmp.lt.s32.totalorder %v512, 0
        %v739 = vsub.s32 0, %v512
        %v740 = vsel %vm738, %v739, %v512
        %v741 = vmul.u32.u64.compose %v740, 3817748708
        %v742 = vextract.low.u32 %v741
        %v743 = vextract.high.u32 %v741
        %v744 = vshrl.u32 %v743, 4
        %v745 = vmul.u32 %v744, 18
        %v746 = vsub.s32 %v740, %v745
        %v747 = vsub.s32 0, %v746
        %v748 = vsel %vm738, %v747, %v746
        %vm749 = vcmp.lt.s32.totalorder %v513, 0
        %v750 = vsub.s32 0, %v513
        %v751 = vsel %vm749, %v750, %v513
        %v752 = vmul.u32.u64.compose %v751, 3817748708
        %v753 = vextract.low.u32 %v752
        %v754 = vextract.high.u32 %v752
        %v755 = vshrl.u32 %v754, 4
        %v756 = vmul.u32 %v755, 18
        %v757 = vsub.s32 %v751, %v756
        %v758 = vsub.s32 0, %v757
        %v759 = vsel %vm749, %v758, %v757
        %vm760 = vcmp.lt.s32.totalorder %v514, 0
        %v761 = vsub.s32 0, %v514
        %v762 = vsel %vm760, %v761, %v514
        %v763 = vmul.u32.u64.compose %v762, 3817748708
        %v764 = vextract.low.u32 %v763
        %v765 = vextract.high.u32 %v763
        %v766 = vshrl.u32 %v765, 4
        %v767 = vmul.u32 %v766, 18
        %v768 = vsub.s32 %v762, %v767
        %v769 = vsub.s32 0, %v768
        %v770 = vsel %vm760, %v769, %v768
        %vm771 = vcmp.lt.s32.totalorder %v515, 0
        %v772 = vsub.s32 0, %v515
        %v773 = vsel %vm771, %v772, %v515
        %v774 = vmul.u32.u64.compose %v773, 3817748708
        %v775 = vextract.low.u32 %v774
        %v776 = vextract.high.u32 %v774
        %v777 = vshrl.u32 %v776, 4
        %v778 = vmul.u32 %v777, 18
        %v779 = vsub.s32 %v773, %v778
        %v780 = vsub.s32 0, %v779
        %v781 = vsel %vm771, %v780, %v779
        %vm782 = vcmp.lt.s32.totalorder %v516, 0
        %v783 = vsub.s32 0, %v516
        %v784 = vsel %vm782, %v783, %v516
        %v785 = vmul.u32.u64.compose %v784, 3817748708
        %v786 = vextract.low.u32 %v785
        %v787 = vextract.high.u32 %v785
        %v788 = vshrl.u32 %v787, 4
        %v789 = vmul.u32 %v788, 18
        %v790 = vsub.s32 %v784, %v789
        %v791 = vsub.s32 0, %v790
        %v792 = vsel %vm782, %v791, %v790
        %vm793 = vcmp.lt.s32.totalorder %v517, 0
        %v794 = vsub.s32 0, %v517
        %v795 = vsel %vm793, %v794, %v517
        %v796 = vmul.u32.u64.compose %v795, 3817748708
        %v797 = vextract.low.u32 %v796
        %v798 = vextract.high.u32 %v796
        %v799 = vshrl.u32 %v798, 4
        %v800 = vmul.u32 %v799, 18
        %v801 = vsub.s32 %v795, %v800
        %v802 = vsub.s32 0, %v801
        %v803 = vsel %vm793, %v802, %v801
        %vm804 = vcmp.lt.s32.totalorder %v518, 0
        %v805 = vsub.s32 0, %v518
        %v806 = vsel %vm804, %v805, %v518
        %v807 = vmul.u32.u64.compose %v806, 3817748708
        %v808 = vextract.low.u32 %v807
        %v809 = vextract.high.u32 %v807
        %v810 = vshrl.u32 %v809, 4
        %v811 = vmul.u32 %v810, 18
        %v812 = vsub.s32 %v806, %v811
        %v813 = vsub.s32 0, %v812
        %v814 = vsel %vm804, %v813, %v812
        %vm815 = vcmp.lt.s32.totalorder %v519, 0
        %v816 = vsub.s32 0, %v519
        %v817 = vsel %vm815, %v816, %v519
        %v818 = vmul.u32.u64.compose %v817, 3817748708
        %v819 = vextract.low.u32 %v818
        %v820 = vextract.high.u32 %v818
        %v821 = vshrl.u32 %v820, 4
        %v822 = vmul.u32 %v821, 18
        %v823 = vsub.s32 %v817, %v822
        %v824 = vsub.s32 0, %v823
        %v825 = vsel %vm815, %v824, %v823
        %vm826 = vcmp.lt.s32.totalorder %v520, 0
        %v827 = vsub.s32 0, %v520
        %v828 = vsel %vm826, %v827, %v520
        %v829 = vmul.u32.u64.compose %v828, 3817748708
        %v830 = vextract.low.u32 %v829
        %v831 = vextract.high.u32 %v829
        %v832 = vshrl.u32 %v831, 4
        %v833 = vmul.u32 %v832, 18
        %v834 = vsub.s32 %v828, %v833
        %v835 = vsub.s32 0, %v834
        %v836 = vsel %vm826, %v835, %v834
        %vm837 = vcmp.lt.s32.totalorder %v521, 0
        %v838 = vsub.s32 0, %v521
        %v839 = vsel %vm837, %v838, %v521
        %v840 = vmul.u32.u64.compose %v839, 3817748708
        %v841 = vextract.low.u32 %v840
        %v842 = vextract.high.u32 %v840
        %v843 = vshrl.u32 %v842, 4
        %v844 = vmul.u32 %v843, 18
        %v845 = vsub.s32 %v839, %v844
        %v846 = vsub.s32 0, %v845
        %v847 = vsel %vm837, %v846, %v845
        %vm848 = vcmp.lt.s32.totalorder %v522, 0
        %v849 = vsub.s32 0, %v522
        %v850 = vsel %vm848, %v849, %v522
        %v851 = vmul.u32.u64.compose %v850, 3817748708
        %v852 = vextract.low.u32 %v851
        %v853 = vextract.high.u32 %v851
        %v854 = vshrl.u32 %v853, 4
        %v855 = vmul.u32 %v854, 18
        %v856 = vsub.s32 %v850, %v855
        %v857 = vsub.s32 0, %v856
        %v858 = vsel %vm848, %v857, %v856
        %vm859 = vcmp.lt.s32.totalorder %v523, 0
        %v860 = vsub.s32 0, %v523
        %v861 = vsel %vm859, %v860, %v523
        %v862 = vmul.u32.u64.compose %v861, 3817748708
        %v863 = vextract.low.u32 %v862
        %v864 = vextract.high.u32 %v862
        %v865 = vshrl.u32 %v864, 4
        %v866 = vmul.u32 %v865, 18
        %v867 = vsub.s32 %v861, %v866
        %v868 = vsub.s32 0, %v867
        %v869 = vsel %vm859, %v868, %v867
        %vm870 = vcmp.lt.s32.totalorder %v524, 0
        %v871 = vsub.s32 0, %v524
        %v872 = vsel %vm870, %v871, %v524
        %v873 = vmul.u32.u64.compose %v872, 3817748708
        %v874 = vextract.low.u32 %v873
        %v875 = vextract.high.u32 %v873
        %v876 = vshrl.u32 %v875, 4
        %v877 = vmul.u32 %v876, 18
        %v878 = vsub.s32 %v872, %v877
        %v879 = vsub.s32 0, %v878
        %v880 = vsel %vm870, %v879, %v878
        %vm881 = vcmp.lt.s32.totalorder %v525, 0
        %v882 = vsub.s32 0, %v525
        %v883 = vsel %vm881, %v882, %v525
        %v884 = vmul.u32.u64.compose %v883, 3817748708
        %v885 = vextract.low.u32 %v884
        %v886 = vextract.high.u32 %v884
        %v887 = vshrl.u32 %v886, 4
        %v888 = vmul.u32 %v887, 18
        %v889 = vsub.s32 %v883, %v888
        %v890 = vsub.s32 0, %v889
        %v891 = vsel %vm881, %v890, %v889
        %vm892 = vcmp.lt.s32.totalorder %v526, 0
        %v893 = vsub.s32 0, %v526
        %v894 = vsel %vm892, %v893, %v526
        %v895 = vmul.u32.u64.compose %v894, 3817748708
        %v896 = vextract.low.u32 %v895
        %v897 = vextract.high.u32 %v895
        %v898 = vshrl.u32 %v897, 4
        %v899 = vmul.u32 %v898, 18
        %v900 = vsub.s32 %v894, %v899
        %v901 = vsub.s32 0, %v900
        %v902 = vsel %vm892, %v901, %v900
        %vm903 = vcmp.lt.s32.totalorder %v527, 0
        %v904 = vsub.s32 0, %v527
        %v905 = vsel %vm903, %v904, %v527
        %v906 = vmul.u32.u64.compose %v905, 3817748708
        %v907 = vextract.low.u32 %v906
        %v908 = vextract.high.u32 %v906
        %v909 = vshrl.u32 %v908, 4
        %v910 = vmul.u32 %v909, 18
        %v911 = vsub.s32 %v905, %v910
        %v912 = vsub.s32 0, %v911
        %v913 = vsel %vm903, %v912, %v911
        %vm914 = vcmp.lt.s32.totalorder %v528, 0
        %v915 = vsub.s32 0, %v528
        %v916 = vsel %vm914, %v915, %v528
        %v917 = vmul.u32.u64.compose %v916, 3817748708
        %v918 = vextract.low.u32 %v917
        %v919 = vextract.high.u32 %v917
        %v920 = vshrl.u32 %v919, 4
        %v921 = vmul.u32 %v920, 18
        %v922 = vsub.s32 %v916, %v921
        %v923 = vsub.s32 0, %v922
        %v924 = vsel %vm914, %v923, %v922
        %vm925 = vcmp.ne.s32.totalorder %v539, 0
        %vm926 = vcmp.ne.s32.totalorder %v550, 0
        %vm927 = vcmp.ne.s32.totalorder %v561, 0
        %vm928 = vcmp.ne.s32.totalorder %v572, 0
        %vm929 = vcmp.ne.s32.totalorder %v583, 0
        %vm930 = vcmp.ne.s32.totalorder %v594, 0
        %vm931 = vcmp.ne.s32.totalorder %v605, 0
        %vm932 = vcmp.ne.s32.totalorder %v616, 0
        %vm933 = vcmp.ne.s32.totalorder %v627, 0
        %vm934 = vcmp.ne.s32.totalorder %v638, 0
        %vm935 = vcmp.ne.s32.totalorder %v649, 0
        %vm936 = vcmp.ne.s32.totalorder %v660, 0
        %vm937 = vcmp.ne.s32.totalorder %v671, 0
        %vm938 = vcmp.ne.s32.totalorder %v682, 0
        %vm939 = vcmp.ne.s32.totalorder %v693, 0
        %vm940 = vcmp.ne.s32.totalorder %v704, 0
        %vm941 = vcmp.ne.s32.totalorder %v715, 0
        %vm942 = vcmp.ne.s32.totalorder %v726, 0
        %vm943 = vcmp.ne.s32.totalorder %v737, 0
        %vm944 = vcmp.ne.s32.totalorder %v748, 0
        %vm945 = vcmp.ne.s32.totalorder %v759, 0
        %vm946 = vcmp.ne.s32.totalorder %v770, 0
        %vm947 = vcmp.ne.s32.totalorder %v781, 0
        %vm948 = vcmp.ne.s32.totalorder %v792, 0
        %vm949 = vcmp.ne.s32.totalorder %v803, 0
        %vm950 = vcmp.ne.s32.totalorder %v814, 0
        %vm951 = vcmp.ne.s32.totalorder %v825, 0
        %vm952 = vcmp.ne.s32.totalorder %v836, 0
        %vm953 = vcmp.ne.s32.totalorder %v847, 0
        %vm954 = vcmp.ne.s32.totalorder %v858, 0
        %vm955 = vcmp.ne.s32.totalorder %v869, 0
        %vm956 = vcmp.ne.s32.totalorder %v880, 0
        %vm957 = vcmp.ne.s32.totalorder %v891, 0
        %vm958 = vcmp.ne.s32.totalorder %v902, 0
        %vm959 = vcmp.ne.s32.totalorder %v913, 0
        %vm960 = vcmp.ne.s32.totalorder %v924, 0
        %vm961 = vcmp.lt.s32.totalorder %v539, 0
        %vm962 = vcmp.lt.s32.totalorder %v550, 0
        %vm963 = vcmp.lt.s32.totalorder %v561, 0
        %vm964 = vcmp.lt.s32.totalorder %v572, 0
        %vm965 = vcmp.lt.s32.totalorder %v583, 0
        %vm966 = vcmp.lt.s32.totalorder %v594, 0
        %vm967 = vcmp.lt.s32.totalorder %v605, 0
        %vm968 = vcmp.lt.s32.totalorder %v616, 0
        %vm969 = vcmp.lt.s32.totalorder %v627, 0
        %vm970 = vcmp.lt.s32.totalorder %v638, 0
        %vm971 = vcmp.lt.s32.totalorder %v649, 0
        %vm972 = vcmp.lt.s32.totalorder %v660, 0
        %vm973 = vcmp.lt.s32.totalorder %v671, 0
        %vm974 = vcmp.lt.s32.totalorder %v682, 0
        %vm975 = vcmp.lt.s32.totalorder %v693, 0
        %vm976 = vcmp.lt.s32.totalorder %v704, 0
        %vm977 = vcmp.lt.s32.totalorder %v715, 0
        %vm978 = vcmp.lt.s32.totalorder %v726, 0
        %vm979 = vcmp.lt.s32.totalorder %v737, 0
        %vm980 = vcmp.lt.s32.totalorder %v748, 0
        %vm981 = vcmp.lt.s32.totalorder %v759, 0
        %vm982 = vcmp.lt.s32.totalorder %v770, 0
        %vm983 = vcmp.lt.s32.totalorder %v781, 0
        %vm984 = vcmp.lt.s32.totalorder %v792, 0
        %vm985 = vcmp.lt.s32.totalorder %v803, 0
        %vm986 = vcmp.lt.s32.totalorder %v814, 0
        %vm987 = vcmp.lt.s32.totalorder %v825, 0
        %vm988 = vcmp.lt.s32.totalorder %v836, 0
        %vm989 = vcmp.lt.s32.totalorder %v847, 0
        %vm990 = vcmp.lt.s32.totalorder %v858, 0
        %vm991 = vcmp.lt.s32.totalorder %v869, 0
        %vm992 = vcmp.lt.s32.totalorder %v880, 0
        %vm993 = vcmp.lt.s32.totalorder %v891, 0
        %vm994 = vcmp.lt.s32.totalorder %v902, 0
        %vm995 = vcmp.lt.s32.totalorder %v913, 0
        %vm996 = vcmp.lt.s32.totalorder %v924, 0
        %vm997 = vmand %vm961, %vm925
        %vm998 = vmand %vm962, %vm926
        %vm999 = vmand %vm963, %vm927
        %vm1000 = vmand %vm964, %vm928
        %vm1001 = vmand %vm965, %vm929
        %vm1002 = vmand %vm966, %vm930
        %vm1003 = vmand %vm967, %vm931
        %vm1004 = vmand %vm968, %vm932
        %vm1005 = vmand %vm969, %vm933
        %vm1006 = vmand %vm970, %vm934
        %vm1007 = vmand %vm971, %vm935
        %vm1008 = vmand %vm972, %vm936
        %vm1009 = vmand %vm973, %vm937
        %vm1010 = vmand %vm974, %vm938
        %vm1011 = vmand %vm975, %vm939
        %vm1012 = vmand %vm976, %vm940
        %vm1013 = vmand %vm977, %vm941
        %vm1014 = vmand %vm978, %vm942
        %vm1015 = vmand %vm979, %vm943
        %vm1016 = vmand %vm980, %vm944
        %vm1017 = vmand %vm981, %vm945
        %vm1018 = vmand %vm982, %vm946
        %vm1019 = vmand %vm983, %vm947
        %vm1020 = vmand %vm984, %vm948
        %vm1021 = vmand %vm985, %vm949
        %vm1022 = vmand %vm986, %vm950
        %vm1023 = vmand %vm987, %vm951
        %vm1024 = vmand %vm988, %vm952
        %vm1025 = vmand %vm989, %vm953
        %vm1026 = vmand %vm990, %vm954
        %vm1027 = vmand %vm991, %vm955
        %vm1028 = vmand %vm992, %vm956
        %vm1029 = vmand %vm993, %vm957
        %vm1030 = vmand %vm994, %vm958
        %vm1031 = vmand %vm995, %vm959
        %vm1032 = vmand %vm996, %vm960
        %v1033 = vadd.s32 %v539, 18
        %v1034 = vadd.s32 %v550, 18
        %v1035 = vadd.s32 %v561, 18
        %v1036 = vadd.s32 %v572, 18
        %v1037 = vadd.s32 %v583, 18
        %v1038 = vadd.s32 %v594, 18
        %v1039 = vadd.s32 %v605, 18
        %v1040 = vadd.s32 %v616, 18
        %v1041 = vadd.s32 %v627, 18
        %v1042 = vadd.s32 %v638, 18
        %v1043 = vadd.s32 %v649, 18
        %v1044 = vadd.s32 %v660, 18
        %v1045 = vadd.s32 %v671, 18
        %v1046 = vadd.s32 %v682, 18
        %v1047 = vadd.s32 %v693, 18
        %v1048 = vadd.s32 %v704, 18
        %v1049 = vadd.s32 %v715, 18
        %v1050 = vadd.s32 %v726, 18
        %v1051 = vadd.s32 %v737, 18
        %v1052 = vadd.s32 %v748, 18
        %v1053 = vadd.s32 %v759, 18
        %v1054 = vadd.s32 %v770, 18
        %v1055 = vadd.s32 %v781, 18
        %v1056 = vadd.s32 %v792, 18
        %v1057 = vadd.s32 %v803, 18
        %v1058 = vadd.s32 %v814, 18
        %v1059 = vadd.s32 %v825, 18
        %v1060 = vadd.s32 %v836, 18
        %v1061 = vadd.s32 %v847, 18
        %v1062 = vadd.s32 %v858, 18
        %v1063 = vadd.s32 %v869, 18
        %v1064 = vadd.s32 %v880, 18
        %v1065 = vadd.s32 %v891, 18
        %v1066 = vadd.s32 %v902, 18
        %v1067 = vadd.s32 %v913, 18
        %v1068 = vadd.s32 %v924, 18
        %v1069 = vsel %vm997, %v1033, %v539
        %v1070 = vsel %vm998, %v1034, %v550
        %v1071 = vsel %vm999, %v1035, %v561
        %v1072 = vsel %vm1000, %v1036, %v572
        %v1073 = vsel %vm1001, %v1037, %v583
        %v1074 = vsel %vm1002, %v1038, %v594
        %v1075 = vsel %vm1003, %v1039, %v605
        %v1076 = vsel %vm1004, %v1040, %v616
        %v1077 = vsel %vm1005, %v1041, %v627
        %v1078 = vsel %vm1006, %v1042, %v638
        %v1079 = vsel %vm1007, %v1043, %v649
        %v1080 = vsel %vm1008, %v1044, %v660
        %v1081 = vsel %vm1009, %v1045, %v671
        %v1082 = vsel %vm1010, %v1046, %v682
        %v1083 = vsel %vm1011, %v1047, %v693
        %v1084 = vsel %vm1012, %v1048, %v704
        %v1085 = vsel %vm1013, %v1049, %v715
        %v1086 = vsel %vm1014, %v1050, %v726
        %v1087 = vsel %vm1015, %v1051, %v737
        %v1088 = vsel %vm1016, %v1052, %v748
        %v1089 = vsel %vm1017, %v1053, %v759
        %v1090 = vsel %vm1018, %v1054, %v770
        %v1091 = vsel %vm1019, %v1055, %v781
        %v1092 = vsel %vm1020, %v1056, %v792
        %v1093 = vsel %vm1021, %v1057, %v803
        %v1094 = vsel %vm1022, %v1058, %v814
        %v1095 = vsel %vm1023, %v1059, %v825
        %v1096 = vsel %vm1024, %v1060, %v836
        %v1097 = vsel %vm1025, %v1061, %v847
        %v1098 = vsel %vm1026, %v1062, %v858
        %v1099 = vsel %vm1027, %v1063, %v869
        %v1100 = vsel %vm1028, %v1064, %v880
        %v1101 = vsel %vm1029, %v1065, %v891
        %v1102 = vsel %vm1030, %v1066, %v902
        %v1103 = vsel %vm1031, %v1067, %v913
        %v1104 = vsel %vm1032, %v1068, %v924
        %vm1105 = vcmp.ge.s32.totalorder %v1069, 1
        %vm1106 = vcmp.ge.s32.totalorder %v1070, 1
        %vm1107 = vcmp.ge.s32.totalorder %v1071, 1
        %vm1108 = vcmp.ge.s32.totalorder %v1072, 1
        %vm1109 = vcmp.ge.s32.totalorder %v1073, 1
        %vm1110 = vcmp.ge.s32.totalorder %v1074, 1
        %vm1111 = vcmp.ge.s32.totalorder %v1075, 1
        %vm1112 = vcmp.ge.s32.totalorder %v1076, 1
        %vm1113 = vcmp.ge.s32.totalorder %v1077, 1
        %vm1114 = vcmp.ge.s32.totalorder %v1078, 1
        %vm1115 = vcmp.ge.s32.totalorder %v1079, 1
        %vm1116 = vcmp.ge.s32.totalorder %v1080, 1
        %vm1117 = vcmp.ge.s32.totalorder %v1081, 1
        %vm1118 = vcmp.ge.s32.totalorder %v1082, 1
        %vm1119 = vcmp.ge.s32.totalorder %v1083, 1
        %vm1120 = vcmp.ge.s32.totalorder %v1084, 1
        %vm1121 = vcmp.ge.s32.totalorder %v1085, 1
        %vm1122 = vcmp.ge.s32.totalorder %v1086, 1
        %vm1123 = vcmp.ge.s32.totalorder %v1087, 1
        %vm1124 = vcmp.ge.s32.totalorder %v1088, 1
        %vm1125 = vcmp.ge.s32.totalorder %v1089, 1
        %vm1126 = vcmp.ge.s32.totalorder %v1090, 1
        %vm1127 = vcmp.ge.s32.totalorder %v1091, 1
        %vm1128 = vcmp.ge.s32.totalorder %v1092, 1
        %vm1129 = vcmp.ge.s32.totalorder %v1093, 1
        %vm1130 = vcmp.ge.s32.totalorder %v1094, 1
        %vm1131 = vcmp.ge.s32.totalorder %v1095, 1
        %vm1132 = vcmp.ge.s32.totalorder %v1096, 1
        %vm1133 = vcmp.ge.s32.totalorder %v1097, 1
        %vm1134 = vcmp.ge.s32.totalorder %v1098, 1
        %vm1135 = vcmp.ge.s32.totalorder %v1099, 1
        %vm1136 = vcmp.ge.s32.totalorder %v1100, 1
        %vm1137 = vcmp.ge.s32.totalorder %v1101, 1
        %vm1138 = vcmp.ge.s32.totalorder %v1102, 1
        %vm1139 = vcmp.ge.s32.totalorder %v1103, 1
        %vm1140 = vcmp.ge.s32.totalorder %v1104, 1
        %vm1141 = vcmp.le.s32.totalorder %v1069, 16
        %vm1142 = vcmp.le.s32.totalorder %v1070, 16
        %vm1143 = vcmp.le.s32.totalorder %v1071, 16
        %vm1144 = vcmp.le.s32.totalorder %v1072, 16
        %vm1145 = vcmp.le.s32.totalorder %v1073, 16
        %vm1146 = vcmp.le.s32.totalorder %v1074, 16
        %vm1147 = vcmp.le.s32.totalorder %v1075, 16
        %vm1148 = vcmp.le.s32.totalorder %v1076, 16
        %vm1149 = vcmp.le.s32.totalorder %v1077, 16
        %vm1150 = vcmp.le.s32.totalorder %v1078, 16
        %vm1151 = vcmp.le.s32.totalorder %v1079, 16
        %vm1152 = vcmp.le.s32.totalorder %v1080, 16
        %vm1153 = vcmp.le.s32.totalorder %v1081, 16
        %vm1154 = vcmp.le.s32.totalorder %v1082, 16
        %vm1155 = vcmp.le.s32.totalorder %v1083, 16
        %vm1156 = vcmp.le.s32.totalorder %v1084, 16
        %vm1157 = vcmp.le.s32.totalorder %v1085, 16
        %vm1158 = vcmp.le.s32.totalorder %v1086, 16
        %vm1159 = vcmp.le.s32.totalorder %v1087, 16
        %vm1160 = vcmp.le.s32.totalorder %v1088, 16
        %vm1161 = vcmp.le.s32.totalorder %v1089, 16
        %vm1162 = vcmp.le.s32.totalorder %v1090, 16
        %vm1163 = vcmp.le.s32.totalorder %v1091, 16
        %vm1164 = vcmp.le.s32.totalorder %v1092, 16
        %vm1165 = vcmp.le.s32.totalorder %v1093, 16
        %vm1166 = vcmp.le.s32.totalorder %v1094, 16
        %vm1167 = vcmp.le.s32.totalorder %v1095, 16
        %vm1168 = vcmp.le.s32.totalorder %v1096, 16
        %vm1169 = vcmp.le.s32.totalorder %v1097, 16
        %vm1170 = vcmp.le.s32.totalorder %v1098, 16
        %vm1171 = vcmp.le.s32.totalorder %v1099, 16
        %vm1172 = vcmp.le.s32.totalorder %v1100, 16
        %vm1173 = vcmp.le.s32.totalorder %v1101, 16
        %vm1174 = vcmp.le.s32.totalorder %v1102, 16
        %vm1175 = vcmp.le.s32.totalorder %v1103, 16
        %vm1176 = vcmp.le.s32.totalorder %v1104, 16
        %vm1177 = vmand %vm1105, %vm1141
        %vm1178 = vmand %vm1106, %vm1142
        %vm1179 = vmand %vm1107, %vm1143
        %vm1180 = vmand %vm1108, %vm1144
        %vm1181 = vmand %vm1109, %vm1145
        %vm1182 = vmand %vm1110, %vm1146
        %vm1183 = vmand %vm1111, %vm1147
        %vm1184 = vmand %vm1112, %vm1148
        %vm1185 = vmand %vm1113, %vm1149
        %vm1186 = vmand %vm1114, %vm1150
        %vm1187 = vmand %vm1115, %vm1151
        %vm1188 = vmand %vm1116, %vm1152
        %vm1189 = vmand %vm1117, %vm1153
        %vm1190 = vmand %vm1118, %vm1154
        %vm1191 = vmand %vm1119, %vm1155
        %vm1192 = vmand %vm1120, %vm1156
        %vm1193 = vmand %vm1121, %vm1157
        %vm1194 = vmand %vm1122, %vm1158
        %vm1195 = vmand %vm1123, %vm1159
        %vm1196 = vmand %vm1124, %vm1160
        %vm1197 = vmand %vm1125, %vm1161
        %vm1198 = vmand %vm1126, %vm1162
        %vm1199 = vmand %vm1127, %vm1163
        %vm1200 = vmand %vm1128, %vm1164
        %vm1201 = vmand %vm1129, %vm1165
        %vm1202 = vmand %vm1130, %vm1166
        %vm1203 = vmand %vm1131, %vm1167
        %vm1204 = vmand %vm1132, %vm1168
        %vm1205 = vmand %vm1133, %vm1169
        %vm1206 = vmand %vm1134, %vm1170
        %vm1207 = vmand %vm1135, %vm1171
        %vm1208 = vmand %vm1136, %vm1172
        %vm1209 = vmand %vm1137, %vm1173
        %vm1210 = vmand %vm1138, %vm1174
        %vm1211 = vmand %vm1139, %vm1175
        %vm1212 = vmand %vm1140, %vm1176
        %v1213 = vsel %vm1177, 1, 0
        %v1214 = vsel %vm1178, 1, 0
        %v1215 = vsel %vm1179, 1, 0
        %v1216 = vsel %vm1180, 1, 0
        %v1217 = vsel %vm1181, 1, 0
        %v1218 = vsel %vm1182, 1, 0
        %v1219 = vsel %vm1183, 1, 0
        %v1220 = vsel %vm1184, 1, 0
        %v1221 = vsel %vm1185, 1, 0
        %v1222 = vsel %vm1186, 1, 0
        %v1223 = vsel %vm1187, 1, 0
        %v1224 = vsel %vm1188, 1, 0
        %v1225 = vsel %vm1189, 1, 0
        %v1226 = vsel %vm1190, 1, 0
        %v1227 = vsel %vm1191, 1, 0
        %v1228 = vsel %vm1192, 1, 0
        %v1229 = vsel %vm1193, 1, 0
        %v1230 = vsel %vm1194, 1, 0
        %v1231 = vsel %vm1195, 1, 0
        %v1232 = vsel %vm1196, 1, 0
        %v1233 = vsel %vm1197, 1, 0
        %v1234 = vsel %vm1198, 1, 0
        %v1235 = vsel %vm1199, 1, 0
        %v1236 = vsel %vm1200, 1, 0
        %v1237 = vsel %vm1201, 1, 0
        %v1238 = vsel %vm1202, 1, 0
        %v1239 = vsel %vm1203, 1, 0
        %v1240 = vsel %vm1204, 1, 0
        %v1241 = vsel %vm1205, 1, 0
        %v1242 = vsel %vm1206, 1, 0
        %v1243 = vsel %vm1207, 1, 0
        %v1244 = vsel %vm1208, 1, 0
        %v1245 = vsel %vm1209, 1, 0
        %v1246 = vsel %vm1210, 1, 0
        %v1247 = vsel %vm1211, 1, 0
        %v1248 = vsel %vm1212, 1, 0
        %v1249 = vcvt.s32.f32 %v1213
        %v1250 = vcvt.s32.f32 %v1214
        %v1251 = vcvt.s32.f32 %v1215
        %v1252 = vcvt.s32.f32 %v1216
        %v1253 = vcvt.s32.f32 %v1217
        %v1254 = vcvt.s32.f32 %v1218
        %v1255 = vcvt.s32.f32 %v1219
        %v1256 = vcvt.s32.f32 %v1220
        %v1257 = vcvt.s32.f32 %v1221
        %v1258 = vcvt.s32.f32 %v1222
        %v1259 = vcvt.s32.f32 %v1223
        %v1260 = vcvt.s32.f32 %v1224
        %v1261 = vcvt.s32.f32 %v1225
        %v1262 = vcvt.s32.f32 %v1226
        %v1263 = vcvt.s32.f32 %v1227
        %v1264 = vcvt.s32.f32 %v1228
        %v1265 = vcvt.s32.f32 %v1229
        %v1266 = vcvt.s32.f32 %v1230
        %v1267 = vcvt.s32.f32 %v1231
        %v1268 = vcvt.s32.f32 %v1232
        %v1269 = vcvt.s32.f32 %v1233
        %v1270 = vcvt.s32.f32 %v1234
        %v1271 = vcvt.s32.f32 %v1235
        %v1272 = vcvt.s32.f32 %v1236
        %v1273 = vcvt.s32.f32 %v1237
        %v1274 = vcvt.s32.f32 %v1238
        %v1275 = vcvt.s32.f32 %v1239
        %v1276 = vcvt.s32.f32 %v1240
        %v1277 = vcvt.s32.f32 %v1241
        %v1278 = vcvt.s32.f32 %v1242
        %v1279 = vcvt.s32.f32 %v1243
        %v1280 = vcvt.s32.f32 %v1244
        %v1281 = vcvt.s32.f32 %v1245
        %v1282 = vcvt.s32.f32 %v1246
        %v1283 = vcvt.s32.f32 %v1247
        %v1284 = vcvt.s32.f32 %v1248
        %v1285 = vpack.c.bf16 %v1250, %v1249
        %v1286 = vpack.c.bf16 %v1252, %v1251
        %v1287 = vpack.c.bf16 %v1254, %v1253
        %v1288 = vpack.c.bf16 %v1256, %v1255
        %v1289 = vpack.c.bf16 %v1258, %v1257
        %v1290 = vpack.c.bf16 %v1260, %v1259
        %v1291 = vpack.c.bf16 %v1262, %v1261
        %v1292 = vpack.c.bf16 %v1264, %v1263
        %v1293 = vpack.c.bf16 %v1266, %v1265
        %v1294 = vpack.c.bf16 %v1268, %v1267
        %v1295 = vpack.c.bf16 %v1270, %v1269
        %v1296 = vpack.c.bf16 %v1272, %v1271
        %v1297 = vpack.c.bf16 %v1274, %v1273
        %v1298 = vpack.c.bf16 %v1276, %v1275
        %v1299 = vpack.c.bf16 %v1278, %v1277
        %v1300 = vpack.c.bf16 %v1280, %v1279
        %v1301 = vpack.c.bf16 %v1282, %v1281
        %v1302 = vpack.c.bf16 %v1284, %v1283
        %1303 = vst [vmem:[#allocation2] sm:$0xf] 0
        %1304 = vst [vmem:[#allocation2 + $0x4] sm:$0xf] 0
        %vm1305 = vcmask 1041408
        %vm1306 = vsmask.f32 1280
        %vm1307 = vmand %vm1305, %vm1306
        %v1308 = vld [vmem:[#allocation2 + $0x8] sm:$0x3]
        %v1309 = vsel %vm1307, 0, %v1308
        %1310 = vst [vmem:[#allocation2 + $0x8] sm:$0x3] %v1309
        %vm1311 = vcmask 1043457
        %vm1312 = vsmask.f32 7942
        %vm1313 = vmand %vm1311, %vm1312
        %v1314 = vld [vmem:[#allocation2 + $0x98] sm:$0xe]
        %v1315 = vsel %vm1313, 0, %v1314
        %1316 = vst [vmem:[#allocation2 + $0x98] sm:$0xe] %v1315
        %1317 = vst [vmem:[#allocation2 + $0x9c] sm:$0xf] 0
        %1318 = vst [vmem:[#allocation2 + $0xa0] sm:$0x7] 0
        %v1319 = vld [vmem:[%s449] sm:$0xf]
        %v1320 = vld [vmem:[%s449 + $0x4] sm:$0xf]
        %v1321 = vld [vmem:[%s449 + $0x8] sm:$0x1]
        %v1322 = vld [vmem:[%s449 + $0xc] sm:$0xf]
        %v1323 = vld [vmem:[%s449 + $0x10] sm:$0xf]
        %v1324 = vld [vmem:[%s449 + $0x14] sm:$0x1]
        %v1325 = vld [vmem:[%s449 + $0x18] sm:$0xf]
        %v1326 = vld [vmem:[%s449 + $0x1c] sm:$0xf]
        %v1327 = vld [vmem:[%s449 + $0x20] sm:$0x1]
        %v1328 = vld [vmem:[%s449 + $0x24] sm:$0xf]
        %v1329 = vld [vmem:[%s449 + $0x28] sm:$0xf]
        %v1330 = vld [vmem:[%s449 + $0x2c] sm:$0x1]
        %v1331 = vld [vmem:[%s449 + $0x30] sm:$0xf]
        %v1332 = vld [vmem:[%s449 + $0x34] sm:$0xf]
        %v1333 = vld [vmem:[%s449 + $0x38] sm:$0x1]
        %v1334 = vld [vmem:[%s449 + $0x3c] sm:$0xf]
        %v1335 = vld [vmem:[%s449 + $0x40] sm:$0xf]
        %v1336 = vld [vmem:[%s449 + $0x44] sm:$0x1]
        %v1337 = vld [vmem:[%s449 + $0x48] sm:$0xf]
        %v1338 = vld [vmem:[%s449 + $0x4c] sm:$0xf]
        %v1339 = vld [vmem:[%s449 + $0x50] sm:$0x1]
        %v1340 = vld [vmem:[%s449 + $0x54] sm:$0xf]
        %v1341 = vld [vmem:[%s449 + $0x58] sm:$0xf]
        %v1342 = vld [vmem:[%s449 + $0x5c] sm:$0x1]
        %v1343 = vld [vmem:[%s449 + $0x60] sm:$0xf]
        %v1344 = vld [vmem:[%s449 + $0x64] sm:$0xf]
        %v1345 = vld [vmem:[%s449 + $0x68] sm:$0x1]
        %v1346 = vld [vmem:[%s449 + $0x6c] sm:$0xf]
        %v1347 = vld [vmem:[%s449 + $0x70] sm:$0xf]
        %v1348 = vld [vmem:[%s449 + $0x74] sm:$0x1]
        %v1349 = vld [vmem:[%s449 + $0x78] sm:$0xf]
        %v1350 = vld [vmem:[%s449 + $0x7c] sm:$0xf]
        %v1351 = vld [vmem:[%s449 + $0x80] sm:$0x1]
        %v1352 = vld [vmem:[%s449 + $0x84] sm:$0xf]
        %v1353 = vld [vmem:[%s449 + $0x88] sm:$0xf]
        %v1354 = vld [vmem:[%s449 + $0x8c] sm:$0x1]
        %v1355 = vld [vmem:[%s449 + $0x90] sm:$0xf]
        %v1356 = vld [vmem:[%s449 + $0x94] sm:$0xf]
        %v1357 = vld [vmem:[%s449 + $0x98] sm:$0x1]
        %v1358 = vld [vmem:[%s449 + $0x9c] sm:$0xf]
        %v1359 = vld [vmem:[%s449 + $0xa0] sm:$0xf]
        %v1360 = vld [vmem:[%s449 + $0xa4] sm:$0x1]
        %v1361 = vld [vmem:[%s449 + $0xa8] sm:$0xf]
        %v1362 = vld [vmem:[%s449 + $0xac] sm:$0xf]
        %v1363 = vld [vmem:[%s449 + $0xb0] sm:$0x1]
        %v1364 = vld [vmem:[%s449 + $0xb4] sm:$0xf]
        %v1365 = vld [vmem:[%s449 + $0xb8] sm:$0xf]
        %v1366 = vld [vmem:[%s449 + $0xbc] sm:$0x1]
        %v1416 = vunpack.c.l.s4 1966171168
        %v1417 = vunpack.c.0.s8 %v1416
        %v1418 = vlaneseq
        %v1419 = vshrl.u32 %v1418, 7
        %v1420 = vsub.s32 %v1417, %v1419
        %v1421 = vrot.slane %v1319, %v1420
        %v1422 = vcombine.high %v1421, %v1421
        %v1424 = vunpack.c.l.s4 1966171168
        %v1425 = vunpack.c.0.s8 %v1424
        %v1426 = vlaneseq
        %v1427 = vshrl.u32 %v1426, 7
        %v1428 = vsub.s32 %v1425, %v1427
        %v1429 = vrot.slane %v1421, %v1428
        %v1431 = vunpack.c.l.s4 1966171168
        %v1432 = vunpack.c.0.s8 %v1431
        %v1433 = vlaneseq
        %v1434 = vshrl.u32 %v1433, 7
        %v1435 = vsub.s32 %v1432, %v1434
        %v1436 = vrot.slane %v1422, %v1435
        %v1437 = vcombine.high %v1429, %v1429
        %v1438 = vcombine.high %v1436, %v1436
        %v1440 = vunpack.c.l.s4 1966171168
        %v1441 = vunpack.c.0.s8 %v1440
        %v1442 = vlaneseq
        %v1443 = vshrl.u32 %v1442, 7
        %v1444 = vsub.s32 %v1441, %v1443
        %v1445 = vrot.slane %v1320, %v1444
        %v1446 = vcombine.high %v1445, %v1445
        %v1448 = vunpack.c.l.s4 1966171168
        %v1449 = vunpack.c.0.s8 %v1448
        %v1450 = vlaneseq
        %v1451 = vshrl.u32 %v1450, 7
        %v1452 = vsub.s32 %v1449, %v1451
        %v1453 = vrot.slane %v1445, %v1452
        %v1455 = vunpack.c.l.s4 1966171168
        %v1456 = vunpack.c.0.s8 %v1455
        %v1457 = vlaneseq
        %v1458 = vshrl.u32 %v1457, 7
        %v1459 = vsub.s32 %v1456, %v1458
        %v1460 = vrot.slane %v1446, %v1459
        %v1461 = vcombine.high %v1453, %v1453
        %v1462 = vcombine.high %v1460, %v1460
        %v1464 = vunpack.c.l.s4 1966171168
        %v1465 = vunpack.c.0.s8 %v1464
        %v1466 = vlaneseq
        %v1467 = vshrl.u32 %v1466, 7
        %v1468 = vsub.s32 %v1465, %v1467
        %v1469 = vrot.slane %v1321, %v1468
        %v1471 = vunpack.c.l.s4 1966171168
        %v1472 = vunpack.c.0.s8 %v1471
        %v1473 = vlaneseq
        %v1474 = vshrl.u32 %v1473, 7
        %v1475 = vsub.s32 %v1472, %v1474
        %v1476 = vrot.slane %v1469, %v1475
        %v1478 = vunpack.c.l.s4 1966171168
        %v1479 = vunpack.c.0.s8 %v1478
        %v1480 = vlaneseq
        %v1481 = vshrl.u32 %v1480, 7
        %v1482 = vsub.s32 %v1479, %v1481
        %v1483 = vrot.slane %v1322, %v1482
        %v1484 = vcombine.high %v1483, %v1483
        %v1486 = vunpack.c.l.s4 1966171168
        %v1487 = vunpack.c.0.s8 %v1486
        %v1488 = vlaneseq
        %v1489 = vshrl.u32 %v1488, 7
        %v1490 = vsub.s32 %v1487, %v1489
        %v1491 = vrot.slane %v1483, %v1490
        %v1493 = vunpack.c.l.s4 1966171168
        %v1494 = vunpack.c.0.s8 %v1493
        %v1495 = vlaneseq
        %v1496 = vshrl.u32 %v1495, 7
        %v1497 = vsub.s32 %v1494, %v1496
        %v1498 = vrot.slane %v1484, %v1497
        %v1499 = vcombine.high %v1491, %v1491
        %v1500 = vcombine.high %v1498, %v1498
        %v1502 = vunpack.c.l.s4 1966171168
        %v1503 = vunpack.c.0.s8 %v1502
        %v1504 = vlaneseq
        %v1505 = vshrl.u32 %v1504, 7
        %v1506 = vsub.s32 %v1503, %v1505
        %v1507 = vrot.slane %v1323, %v1506
        %v1508 = vcombine.high %v1507, %v1507
        %v1510 = vunpack.c.l.s4 1966171168
        %v1511 = vunpack.c.0.s8 %v1510
        %v1512 = vlaneseq
        %v1513 = vshrl.u32 %v1512, 7
        %v1514 = vsub.s32 %v1511, %v1513
        %v1515 = vrot.slane %v1507, %v1514
        %v1517 = vunpack.c.l.s4 1966171168
        %v1518 = vunpack.c.0.s8 %v1517
        %v1519 = vlaneseq
        %v1520 = vshrl.u32 %v1519, 7
        %v1521 = vsub.s32 %v1518, %v1520
        %v1522 = vrot.slane %v1508, %v1521
        %v1523 = vcombine.high %v1515, %v1515
        %v1524 = vcombine.high %v1522, %v1522
        %v1526 = vunpack.c.l.s4 1966171168
        %v1527 = vunpack.c.0.s8 %v1526
        %v1528 = vlaneseq
        %v1529 = vshrl.u32 %v1528, 7
        %v1530 = vsub.s32 %v1527, %v1529
        %v1531 = vrot.slane %v1324, %v1530
        %v1533 = vunpack.c.l.s4 1966171168
        %v1534 = vunpack.c.0.s8 %v1533
        %v1535 = vlaneseq
        %v1536 = vshrl.u32 %v1535, 7
        %v1537 = vsub.s32 %v1534, %v1536
        %v1538 = vrot.slane %v1531, %v1537
        %v1540 = vunpack.c.l.s4 1966171168
        %v1541 = vunpack.c.0.s8 %v1540
        %v1542 = vlaneseq
        %v1543 = vshrl.u32 %v1542, 7
        %v1544 = vsub.s32 %v1541, %v1543
        %v1545 = vrot.slane %v1325, %v1544
        %v1546 = vcombine.high %v1545, %v1545
        %v1548 = vunpack.c.l.s4 1966171168
        %v1549 = vunpack.c.0.s8 %v1548
        %v1550 = vlaneseq
        %v1551 = vshrl.u32 %v1550, 7
        %v1552 = vsub.s32 %v1549, %v1551
        %v1553 = vrot.slane %v1545, %v1552
        %v1555 = vunpack.c.l.s4 1966171168
        %v1556 = vunpack.c.0.s8 %v1555
        %v1557 = vlaneseq
        %v1558 = vshrl.u32 %v1557, 7
        %v1559 = vsub.s32 %v1556, %v1558
        %v1560 = vrot.slane %v1546, %v1559
        %v1561 = vcombine.high %v1553, %v1553
        %v1562 = vcombine.high %v1560, %v1560
        %v1564 = vunpack.c.l.s4 1966171168
        %v1565 = vunpack.c.0.s8 %v1564
        %v1566 = vlaneseq
        %v1567 = vshrl.u32 %v1566, 7
        %v1568 = vsub.s32 %v1565, %v1567
        %v1569 = vrot.slane %v1326, %v1568
        %v1570 = vcombine.high %v1569, %v1569
        %v1572 = vunpack.c.l.s4 1966171168
        %v1573 = vunpack.c.0.s8 %v1572
        %v1574 = vlaneseq
        %v1575 = vshrl.u32 %v1574, 7
        %v1576 = vsub.s32 %v1573, %v1575
        %v1577 = vrot.slane %v1569, %v1576
        %v1579 = vunpack.c.l.s4 1966171168
        %v1580 = vunpack.c.0.s8 %v1579
        %v1581 = vlaneseq
        %v1582 = vshrl.u32 %v1581, 7
        %v1583 = vsub.s32 %v1580, %v1582
        %v1584 = vrot.slane %v1570, %v1583
        %v1585 = vcombine.high %v1577, %v1577
        %v1586 = vcombine.high %v1584, %v1584
        %v1588 = vunpack.c.l.s4 1966171168
        %v1589 = vunpack.c.0.s8 %v1588
        %v1590 = vlaneseq
        %v1591 = vshrl.u32 %v1590, 7
        %v1592 = vsub.s32 %v1589, %v1591
        %v1593 = vrot.slane %v1327, %v1592
        %v1595 = vunpack.c.l.s4 1966171168
        %v1596 = vunpack.c.0.s8 %v1595
        %v1597 = vlaneseq
        %v1598 = vshrl.u32 %v1597, 7
        %v1599 = vsub.s32 %v1596, %v1598
        %v1600 = vrot.slane %v1593, %v1599
        %v1602 = vunpack.c.l.s4 1966171168
        %v1603 = vunpack.c.0.s8 %v1602
        %v1604 = vlaneseq
        %v1605 = vshrl.u32 %v1604, 7
        %v1606 = vsub.s32 %v1603, %v1605
        %v1607 = vrot.slane %v1328, %v1606
        %v1608 = vcombine.high %v1607, %v1607
        %v1610 = vunpack.c.l.s4 1966171168
        %v1611 = vunpack.c.0.s8 %v1610
        %v1612 = vlaneseq
        %v1613 = vshrl.u32 %v1612, 7
        %v1614 = vsub.s32 %v1611, %v1613
        %v1615 = vrot.slane %v1607, %v1614
        %v1617 = vunpack.c.l.s4 1966171168
        %v1618 = vunpack.c.0.s8 %v1617
        %v1619 = vlaneseq
        %v1620 = vshrl.u32 %v1619, 7
        %v1621 = vsub.s32 %v1618, %v1620
        %v1622 = vrot.slane %v1608, %v1621
        %v1623 = vcombine.high %v1615, %v1615
        %v1624 = vcombine.high %v1622, %v1622
        %v1626 = vunpack.c.l.s4 1966171168
        %v1627 = vunpack.c.0.s8 %v1626
        %v1628 = vlaneseq
        %v1629 = vshrl.u32 %v1628, 7
        %v1630 = vsub.s32 %v1627, %v1629
        %v1631 = vrot.slane %v1329, %v1630
        %v1632 = vcombine.high %v1631, %v1631
        %v1634 = vunpack.c.l.s4 1966171168
        %v1635 = vunpack.c.0.s8 %v1634
        %v1636 = vlaneseq
        %v1637 = vshrl.u32 %v1636, 7
        %v1638 = vsub.s32 %v1635, %v1637
        %v1639 = vrot.slane %v1631, %v1638
        %v1641 = vunpack.c.l.s4 1966171168
        %v1642 = vunpack.c.0.s8 %v1641
        %v1643 = vlaneseq
        %v1644 = vshrl.u32 %v1643, 7
        %v1645 = vsub.s32 %v1642, %v1644
        %v1646 = vrot.slane %v1632, %v1645
        %v1647 = vcombine.high %v1639, %v1639
        %v1648 = vcombine.high %v1646, %v1646
        %v1650 = vunpack.c.l.s4 1966171168
        %v1651 = vunpack.c.0.s8 %v1650
        %v1652 = vlaneseq
        %v1653 = vshrl.u32 %v1652, 7
        %v1654 = vsub.s32 %v1651, %v1653
        %v1655 = vrot.slane %v1330, %v1654
        %v1657 = vunpack.c.l.s4 1966171168
        %v1658 = vunpack.c.0.s8 %v1657
        %v1659 = vlaneseq
        %v1660 = vshrl.u32 %v1659, 7
        %v1661 = vsub.s32 %v1658, %v1660
        %v1662 = vrot.slane %v1655, %v1661
        %v1664 = vunpack.c.l.s4 1966171168
        %v1665 = vunpack.c.0.s8 %v1664
        %v1666 = vlaneseq
        %v1667 = vshrl.u32 %v1666, 7
        %v1668 = vsub.s32 %v1665, %v1667
        %v1669 = vrot.slane %v1331, %v1668
        %v1670 = vcombine.high %v1669, %v1669
        %v1672 = vunpack.c.l.s4 1966171168
        %v1673 = vunpack.c.0.s8 %v1672
        %v1674 = vlaneseq
        %v1675 = vshrl.u32 %v1674, 7
        %v1676 = vsub.s32 %v1673, %v1675
        %v1677 = vrot.slane %v1669, %v1676
        %v1679 = vunpack.c.l.s4 1966171168
        %v1680 = vunpack.c.0.s8 %v1679
        %v1681 = vlaneseq
        %v1682 = vshrl.u32 %v1681, 7
        %v1683 = vsub.s32 %v1680, %v1682
        %v1684 = vrot.slane %v1670, %v1683
        %v1685 = vcombine.high %v1677, %v1677
        %v1686 = vcombine.high %v1684, %v1684
        %v1688 = vunpack.c.l.s4 1966171168
        %v1689 = vunpack.c.0.s8 %v1688
        %v1690 = vlaneseq
        %v1691 = vshrl.u32 %v1690, 7
        %v1692 = vsub.s32 %v1689, %v1691
        %v1693 = vrot.slane %v1332, %v1692
        %v1694 = vcombine.high %v1693, %v1693
        %v1696 = vunpack.c.l.s4 1966171168
        %v1697 = vunpack.c.0.s8 %v1696
        %v1698 = vlaneseq
        %v1699 = vshrl.u32 %v1698, 7
        %v1700 = vsub.s32 %v1697, %v1699
        %v1701 = vrot.slane %v1693, %v1700
        %v1703 = vunpack.c.l.s4 1966171168
        %v1704 = vunpack.c.0.s8 %v1703
        %v1705 = vlaneseq
        %v1706 = vshrl.u32 %v1705, 7
        %v1707 = vsub.s32 %v1704, %v1706
        %v1708 = vrot.slane %v1694, %v1707
        %v1709 = vcombine.high %v1701, %v1701
        %v1710 = vcombine.high %v1708, %v1708
        %v1712 = vunpack.c.l.s4 1966171168
        %v1713 = vunpack.c.0.s8 %v1712
        %v1714 = vlaneseq
        %v1715 = vshrl.u32 %v1714, 7
        %v1716 = vsub.s32 %v1713, %v1715
        %v1717 = vrot.slane %v1333, %v1716
        %v1719 = vunpack.c.l.s4 1966171168
        %v1720 = vunpack.c.0.s8 %v1719
        %v1721 = vlaneseq
        %v1722 = vshrl.u32 %v1721, 7
        %v1723 = vsub.s32 %v1720, %v1722
        %v1724 = vrot.slane %v1717, %v1723
        %v1726 = vunpack.c.l.s4 1966171168
        %v1727 = vunpack.c.0.s8 %v1726
        %v1728 = vlaneseq
        %v1729 = vshrl.u32 %v1728, 7
        %v1730 = vsub.s32 %v1727, %v1729
        %v1731 = vrot.slane %v1334, %v1730
        %v1732 = vcombine.high %v1731, %v1731
        %v1734 = vunpack.c.l.s4 1966171168
        %v1735 = vunpack.c.0.s8 %v1734
        %v1736 = vlaneseq
        %v1737 = vshrl.u32 %v1736, 7
        %v1738 = vsub.s32 %v1735, %v1737
        %v1739 = vrot.slane %v1731, %v1738
        %v1741 = vunpack.c.l.s4 1966171168
        %v1742 = vunpack.c.0.s8 %v1741
        %v1743 = vlaneseq
        %v1744 = vshrl.u32 %v1743, 7
        %v1745 = vsub.s32 %v1742, %v1744
        %v1746 = vrot.slane %v1732, %v1745
        %v1747 = vcombine.high %v1739, %v1739
        %v1748 = vcombine.high %v1746, %v1746
        %v1750 = vunpack.c.l.s4 1966171168
        %v1751 = vunpack.c.0.s8 %v1750
        %v1752 = vlaneseq
        %v1753 = vshrl.u32 %v1752, 7
        %v1754 = vsub.s32 %v1751, %v1753
        %v1755 = vrot.slane %v1335, %v1754
        %v1756 = vcombine.high %v1755, %v1755
        %v1758 = vunpack.c.l.s4 1966171168
        %v1759 = vunpack.c.0.s8 %v1758
        %v1760 = vlaneseq
        %v1761 = vshrl.u32 %v1760, 7
        %v1762 = vsub.s32 %v1759, %v1761
        %v1763 = vrot.slane %v1755, %v1762
        %v1765 = vunpack.c.l.s4 1966171168
        %v1766 = vunpack.c.0.s8 %v1765
        %v1767 = vlaneseq
        %v1768 = vshrl.u32 %v1767, 7
        %v1769 = vsub.s32 %v1766, %v1768
        %v1770 = vrot.slane %v1756, %v1769
        %v1771 = vcombine.high %v1763, %v1763
        %v1772 = vcombine.high %v1770, %v1770
        %v1774 = vunpack.c.l.s4 1966171168
        %v1775 = vunpack.c.0.s8 %v1774
        %v1776 = vlaneseq
        %v1777 = vshrl.u32 %v1776, 7
        %v1778 = vsub.s32 %v1775, %v1777
        %v1779 = vrot.slane %v1336, %v1778
        %v1781 = vunpack.c.l.s4 1966171168
        %v1782 = vunpack.c.0.s8 %v1781
        %v1783 = vlaneseq
        %v1784 = vshrl.u32 %v1783, 7
        %v1785 = vsub.s32 %v1782, %v1784
        %v1786 = vrot.slane %v1779, %v1785
        %v1788 = vunpack.c.l.s4 1966171168
        %v1789 = vunpack.c.0.s8 %v1788
        %v1790 = vlaneseq
        %v1791 = vshrl.u32 %v1790, 7
        %v1792 = vsub.s32 %v1789, %v1791
        %v1793 = vrot.slane %v1337, %v1792
        %v1794 = vcombine.high %v1793, %v1793
        %v1796 = vunpack.c.l.s4 1966171168
        %v1797 = vunpack.c.0.s8 %v1796
        %v1798 = vlaneseq
        %v1799 = vshrl.u32 %v1798, 7
        %v1800 = vsub.s32 %v1797, %v1799
        %v1801 = vrot.slane %v1793, %v1800
        %v1803 = vunpack.c.l.s4 1966171168
        %v1804 = vunpack.c.0.s8 %v1803
        %v1805 = vlaneseq
        %v1806 = vshrl.u32 %v1805, 7
        %v1807 = vsub.s32 %v1804, %v1806
        %v1808 = vrot.slane %v1794, %v1807
        %v1809 = vcombine.high %v1801, %v1801
        %v1810 = vcombine.high %v1808, %v1808
        %v1812 = vunpack.c.l.s4 1966171168
        %v1813 = vunpack.c.0.s8 %v1812
        %v1814 = vlaneseq
        %v1815 = vshrl.u32 %v1814, 7
        %v1816 = vsub.s32 %v1813, %v1815
        %v1817 = vrot.slane %v1338, %v1816
        %v1818 = vcombine.high %v1817, %v1817
        %v1820 = vunpack.c.l.s4 1966171168
        %v1821 = vunpack.c.0.s8 %v1820
        %v1822 = vlaneseq
        %v1823 = vshrl.u32 %v1822, 7
        %v1824 = vsub.s32 %v1821, %v1823
        %v1825 = vrot.slane %v1817, %v1824
        %v1827 = vunpack.c.l.s4 1966171168
        %v1828 = vunpack.c.0.s8 %v1827
        %v1829 = vlaneseq
        %v1830 = vshrl.u32 %v1829, 7
        %v1831 = vsub.s32 %v1828, %v1830
        %v1832 = vrot.slane %v1818, %v1831
        %v1833 = vcombine.high %v1825, %v1825
        %v1834 = vcombine.high %v1832, %v1832
        %v1836 = vunpack.c.l.s4 1966171168
        %v1837 = vunpack.c.0.s8 %v1836
        %v1838 = vlaneseq
        %v1839 = vshrl.u32 %v1838, 7
        %v1840 = vsub.s32 %v1837, %v1839
        %v1841 = vrot.slane %v1339, %v1840
        %v1843 = vunpack.c.l.s4 1966171168
        %v1844 = vunpack.c.0.s8 %v1843
        %v1845 = vlaneseq
        %v1846 = vshrl.u32 %v1845, 7
        %v1847 = vsub.s32 %v1844, %v1846
        %v1848 = vrot.slane %v1841, %v1847
        %v1850 = vunpack.c.l.s4 1966171168
        %v1851 = vunpack.c.0.s8 %v1850
        %v1852 = vlaneseq
        %v1853 = vshrl.u32 %v1852, 7
        %v1854 = vsub.s32 %v1851, %v1853
        %v1855 = vrot.slane %v1340, %v1854
        %v1856 = vcombine.high %v1855, %v1855
        %v1858 = vunpack.c.l.s4 1966171168
        %v1859 = vunpack.c.0.s8 %v1858
        %v1860 = vlaneseq
        %v1861 = vshrl.u32 %v1860, 7
        %v1862 = vsub.s32 %v1859, %v1861
        %v1863 = vrot.slane %v1855, %v1862
        %v1865 = vunpack.c.l.s4 1966171168
        %v1866 = vunpack.c.0.s8 %v1865
        %v1867 = vlaneseq
        %v1868 = vshrl.u32 %v1867, 7
        %v1869 = vsub.s32 %v1866, %v1868
        %v1870 = vrot.slane %v1856, %v1869
        %v1871 = vcombine.high %v1863, %v1863
        %v1872 = vcombine.high %v1870, %v1870
        %v1874 = vunpack.c.l.s4 1966171168
        %v1875 = vunpack.c.0.s8 %v1874
        %v1876 = vlaneseq
        %v1877 = vshrl.u32 %v1876, 7
        %v1878 = vsub.s32 %v1875, %v1877
        %v1879 = vrot.slane %v1341, %v1878
        %v1880 = vcombine.high %v1879, %v1879
        %v1882 = vunpack.c.l.s4 1966171168
        %v1883 = vunpack.c.0.s8 %v1882
        %v1884 = vlaneseq
        %v1885 = vshrl.u32 %v1884, 7
        %v1886 = vsub.s32 %v1883, %v1885
        %v1887 = vrot.slane %v1879, %v1886
        %v1889 = vunpack.c.l.s4 1966171168
        %v1890 = vunpack.c.0.s8 %v1889
        %v1891 = vlaneseq
        %v1892 = vshrl.u32 %v1891, 7
        %v1893 = vsub.s32 %v1890, %v1892
        %v1894 = vrot.slane %v1880, %v1893
        %v1895 = vcombine.high %v1887, %v1887
        %v1896 = vcombine.high %v1894, %v1894
        %v1898 = vunpack.c.l.s4 1966171168
        %v1899 = vunpack.c.0.s8 %v1898
        %v1900 = vlaneseq
        %v1901 = vshrl.u32 %v1900, 7
        %v1902 = vsub.s32 %v1899, %v1901
        %v1903 = vrot.slane %v1342, %v1902
        %v1905 = vunpack.c.l.s4 1966171168
        %v1906 = vunpack.c.0.s8 %v1905
        %v1907 = vlaneseq
        %v1908 = vshrl.u32 %v1907, 7
        %v1909 = vsub.s32 %v1906, %v1908
        %v1910 = vrot.slane %v1903, %v1909
        %v1912 = vunpack.c.l.s4 1966171168
        %v1913 = vunpack.c.0.s8 %v1912
        %v1914 = vlaneseq
        %v1915 = vshrl.u32 %v1914, 7
        %v1916 = vsub.s32 %v1913, %v1915
        %v1917 = vrot.slane %v1343, %v1916
        %v1918 = vcombine.high %v1917, %v1917
        %v1920 = vunpack.c.l.s4 1966171168
        %v1921 = vunpack.c.0.s8 %v1920
        %v1922 = vlaneseq
        %v1923 = vshrl.u32 %v1922, 7
        %v1924 = vsub.s32 %v1921, %v1923
        %v1925 = vrot.slane %v1917, %v1924
        %v1927 = vunpack.c.l.s4 1966171168
        %v1928 = vunpack.c.0.s8 %v1927
        %v1929 = vlaneseq
        %v1930 = vshrl.u32 %v1929, 7
        %v1931 = vsub.s32 %v1928, %v1930
        %v1932 = vrot.slane %v1918, %v1931
        %v1933 = vcombine.high %v1925, %v1925
        %v1934 = vcombine.high %v1932, %v1932
        %v1936 = vunpack.c.l.s4 1966171168
        %v1937 = vunpack.c.0.s8 %v1936
        %v1938 = vlaneseq
        %v1939 = vshrl.u32 %v1938, 7
        %v1940 = vsub.s32 %v1937, %v1939
        %v1941 = vrot.slane %v1344, %v1940
        %v1942 = vcombine.high %v1941, %v1941
        %v1944 = vunpack.c.l.s4 1966171168
        %v1945 = vunpack.c.0.s8 %v1944
        %v1946 = vlaneseq
        %v1947 = vshrl.u32 %v1946, 7
        %v1948 = vsub.s32 %v1945, %v1947
        %v1949 = vrot.slane %v1941, %v1948
        %v1951 = vunpack.c.l.s4 1966171168
        %v1952 = vunpack.c.0.s8 %v1951
        %v1953 = vlaneseq
        %v1954 = vshrl.u32 %v1953, 7
        %v1955 = vsub.s32 %v1952, %v1954
        %v1956 = vrot.slane %v1942, %v1955
        %v1957 = vcombine.high %v1949, %v1949
        %v1958 = vcombine.high %v1956, %v1956
        %v1960 = vunpack.c.l.s4 1966171168
        %v1961 = vunpack.c.0.s8 %v1960
        %v1962 = vlaneseq
        %v1963 = vshrl.u32 %v1962, 7
        %v1964 = vsub.s32 %v1961, %v1963
        %v1965 = vrot.slane %v1345, %v1964
        %v1967 = vunpack.c.l.s4 1966171168
        %v1968 = vunpack.c.0.s8 %v1967
        %v1969 = vlaneseq
        %v1970 = vshrl.u32 %v1969, 7
        %v1971 = vsub.s32 %v1968, %v1970
        %v1972 = vrot.slane %v1965, %v1971
        %v1974 = vunpack.c.l.s4 1966171168
        %v1975 = vunpack.c.0.s8 %v1974
        %v1976 = vlaneseq
        %v1977 = vshrl.u32 %v1976, 7
        %v1978 = vsub.s32 %v1975, %v1977
        %v1979 = vrot.slane %v1346, %v1978
        %v1980 = vcombine.high %v1979, %v1979
        %v1982 = vunpack.c.l.s4 1966171168
        %v1983 = vunpack.c.0.s8 %v1982
        %v1984 = vlaneseq
        %v1985 = vshrl.u32 %v1984, 7
        %v1986 = vsub.s32 %v1983, %v1985
        %v1987 = vrot.slane %v1979, %v1986
        %v1989 = vunpack.c.l.s4 1966171168
        %v1990 = vunpack.c.0.s8 %v1989
        %v1991 = vlaneseq
        %v1992 = vshrl.u32 %v1991, 7
        %v1993 = vsub.s32 %v1990, %v1992
        %v1994 = vrot.slane %v1980, %v1993
        %v1995 = vcombine.high %v1987, %v1987
        %v1996 = vcombine.high %v1994, %v1994
        %v1998 = vunpack.c.l.s4 1966171168
        %v1999 = vunpack.c.0.s8 %v1998
        %v2000 = vlaneseq
        %v2001 = vshrl.u32 %v2000, 7
        %v2002 = vsub.s32 %v1999, %v2001
        %v2003 = vrot.slane %v1347, %v2002
        %v2004 = vcombine.high %v2003, %v2003
        %v2006 = vunpack.c.l.s4 1966171168
        %v2007 = vunpack.c.0.s8 %v2006
        %v2008 = vlaneseq
        %v2009 = vshrl.u32 %v2008, 7
        %v2010 = vsub.s32 %v2007, %v2009
        %v2011 = vrot.slane %v2003, %v2010
        %v2013 = vunpack.c.l.s4 1966171168
        %v2014 = vunpack.c.0.s8 %v2013
        %v2015 = vlaneseq
        %v2016 = vshrl.u32 %v2015, 7
        %v2017 = vsub.s32 %v2014, %v2016
        %v2018 = vrot.slane %v2004, %v2017
        %v2019 = vcombine.high %v2011, %v2011
        %v2020 = vcombine.high %v2018, %v2018
        %v2022 = vunpack.c.l.s4 1966171168
        %v2023 = vunpack.c.0.s8 %v2022
        %v2024 = vlaneseq
        %v2025 = vshrl.u32 %v2024, 7
        %v2026 = vsub.s32 %v2023, %v2025
        %v2027 = vrot.slane %v1348, %v2026
        %v2029 = vunpack.c.l.s4 1966171168
        %v2030 = vunpack.c.0.s8 %v2029
        %v2031 = vlaneseq
        %v2032 = vshrl.u32 %v2031, 7
        %v2033 = vsub.s32 %v2030, %v2032
        %v2034 = vrot.slane %v2027, %v2033
        %v2036 = vunpack.c.l.s4 1966171168
        %v2037 = vunpack.c.0.s8 %v2036
        %v2038 = vlaneseq
        %v2039 = vshrl.u32 %v2038, 7
        %v2040 = vsub.s32 %v2037, %v2039
        %v2041 = vrot.slane %v1349, %v2040
        %v2042 = vcombine.high %v2041, %v2041
        %v2044 = vunpack.c.l.s4 1966171168
        %v2045 = vunpack.c.0.s8 %v2044
        %v2046 = vlaneseq
        %v2047 = vshrl.u32 %v2046, 7
        %v2048 = vsub.s32 %v2045, %v2047
        %v2049 = vrot.slane %v2041, %v2048
        %v2051 = vunpack.c.l.s4 1966171168
        %v2052 = vunpack.c.0.s8 %v2051
        %v2053 = vlaneseq
        %v2054 = vshrl.u32 %v2053, 7
        %v2055 = vsub.s32 %v2052, %v2054
        %v2056 = vrot.slane %v2042, %v2055
        %v2057 = vcombine.high %v2049, %v2049
        %v2058 = vcombine.high %v2056, %v2056
        %v2060 = vunpack.c.l.s4 1966171168
        %v2061 = vunpack.c.0.s8 %v2060
        %v2062 = vlaneseq
        %v2063 = vshrl.u32 %v2062, 7
        %v2064 = vsub.s32 %v2061, %v2063
        %v2065 = vrot.slane %v1350, %v2064
        %v2066 = vcombine.high %v2065, %v2065
        %v2068 = vunpack.c.l.s4 1966171168
        %v2069 = vunpack.c.0.s8 %v2068
        %v2070 = vlaneseq
        %v2071 = vshrl.u32 %v2070, 7
        %v2072 = vsub.s32 %v2069, %v2071
        %v2073 = vrot.slane %v2065, %v2072
        %v2075 = vunpack.c.l.s4 1966171168
        %v2076 = vunpack.c.0.s8 %v2075
        %v2077 = vlaneseq
        %v2078 = vshrl.u32 %v2077, 7
        %v2079 = vsub.s32 %v2076, %v2078
        %v2080 = vrot.slane %v2066, %v2079
        %v2081 = vcombine.high %v2073, %v2073
        %v2082 = vcombine.high %v2080, %v2080
        %v2084 = vunpack.c.l.s4 1966171168
        %v2085 = vunpack.c.0.s8 %v2084
        %v2086 = vlaneseq
        %v2087 = vshrl.u32 %v2086, 7
        %v2088 = vsub.s32 %v2085, %v2087
        %v2089 = vrot.slane %v1351, %v2088
        %v2091 = vunpack.c.l.s4 1966171168
        %v2092 = vunpack.c.0.s8 %v2091
        %v2093 = vlaneseq
        %v2094 = vshrl.u32 %v2093, 7
        %v2095 = vsub.s32 %v2092, %v2094
        %v2096 = vrot.slane %v2089, %v2095
        %v2098 = vunpack.c.l.s4 1966171168
        %v2099 = vunpack.c.0.s8 %v2098
        %v2100 = vlaneseq
        %v2101 = vshrl.u32 %v2100, 7
        %v2102 = vsub.s32 %v2099, %v2101
        %v2103 = vrot.slane %v1352, %v2102
        %v2104 = vcombine.high %v2103, %v2103
        %v2106 = vunpack.c.l.s4 1966171168
        %v2107 = vunpack.c.0.s8 %v2106
        %v2108 = vlaneseq
        %v2109 = vshrl.u32 %v2108, 7
        %v2110 = vsub.s32 %v2107, %v2109
        %v2111 = vrot.slane %v2103, %v2110
        %v2113 = vunpack.c.l.s4 1966171168
        %v2114 = vunpack.c.0.s8 %v2113
        %v2115 = vlaneseq
        %v2116 = vshrl.u32 %v2115, 7
        %v2117 = vsub.s32 %v2114, %v2116
        %v2118 = vrot.slane %v2104, %v2117
        %v2119 = vcombine.high %v2111, %v2111
        %v2120 = vcombine.high %v2118, %v2118
        %v2122 = vunpack.c.l.s4 1966171168
        %v2123 = vunpack.c.0.s8 %v2122
        %v2124 = vlaneseq
        %v2125 = vshrl.u32 %v2124, 7
        %v2126 = vsub.s32 %v2123, %v2125
        %v2127 = vrot.slane %v1353, %v2126
        %v2128 = vcombine.high %v2127, %v2127
        %v2130 = vunpack.c.l.s4 1966171168
        %v2131 = vunpack.c.0.s8 %v2130
        %v2132 = vlaneseq
        %v2133 = vshrl.u32 %v2132, 7
        %v2134 = vsub.s32 %v2131, %v2133
        %v2135 = vrot.slane %v2127, %v2134
        %v2137 = vunpack.c.l.s4 1966171168
        %v2138 = vunpack.c.0.s8 %v2137
        %v2139 = vlaneseq
        %v2140 = vshrl.u32 %v2139, 7
        %v2141 = vsub.s32 %v2138, %v2140
        %v2142 = vrot.slane %v2128, %v2141
        %v2143 = vcombine.high %v2135, %v2135
        %v2144 = vcombine.high %v2142, %v2142
        %v2146 = vunpack.c.l.s4 1966171168
        %v2147 = vunpack.c.0.s8 %v2146
        %v2148 = vlaneseq
        %v2149 = vshrl.u32 %v2148, 7
        %v2150 = vsub.s32 %v2147, %v2149
        %v2151 = vrot.slane %v1354, %v2150
        %v2153 = vunpack.c.l.s4 1966171168
        %v2154 = vunpack.c.0.s8 %v2153
        %v2155 = vlaneseq
        %v2156 = vshrl.u32 %v2155, 7
        %v2157 = vsub.s32 %v2154, %v2156
        %v2158 = vrot.slane %v2151, %v2157
        %v2160 = vunpack.c.l.s4 1966171168
        %v2161 = vunpack.c.0.s8 %v2160
        %v2162 = vlaneseq
        %v2163 = vshrl.u32 %v2162, 7
        %v2164 = vsub.s32 %v2161, %v2163
        %v2165 = vrot.slane %v1355, %v2164
        %v2166 = vcombine.high %v2165, %v2165
        %v2168 = vunpack.c.l.s4 1966171168
        %v2169 = vunpack.c.0.s8 %v2168
        %v2170 = vlaneseq
        %v2171 = vshrl.u32 %v2170, 7
        %v2172 = vsub.s32 %v2169, %v2171
        %v2173 = vrot.slane %v2165, %v2172
        %v2175 = vunpack.c.l.s4 1966171168
        %v2176 = vunpack.c.0.s8 %v2175
        %v2177 = vlaneseq
        %v2178 = vshrl.u32 %v2177, 7
        %v2179 = vsub.s32 %v2176, %v2178
        %v2180 = vrot.slane %v2166, %v2179
        %v2181 = vcombine.high %v2173, %v2173
        %v2182 = vcombine.high %v2180, %v2180
        %v2184 = vunpack.c.l.s4 1966171168
        %v2185 = vunpack.c.0.s8 %v2184
        %v2186 = vlaneseq
        %v2187 = vshrl.u32 %v2186, 7
        %v2188 = vsub.s32 %v2185, %v2187
        %v2189 = vrot.slane %v1356, %v2188
        %v2190 = vcombine.high %v2189, %v2189
        %v2192 = vunpack.c.l.s4 1966171168
        %v2193 = vunpack.c.0.s8 %v2192
        %v2194 = vlaneseq
        %v2195 = vshrl.u32 %v2194, 7
        %v2196 = vsub.s32 %v2193, %v2195
        %v2197 = vrot.slane %v2189, %v2196
        %v2199 = vunpack.c.l.s4 1966171168
        %v2200 = vunpack.c.0.s8 %v2199
        %v2201 = vlaneseq
        %v2202 = vshrl.u32 %v2201, 7
        %v2203 = vsub.s32 %v2200, %v2202
        %v2204 = vrot.slane %v2190, %v2203
        %v2205 = vcombine.high %v2197, %v2197
        %v2206 = vcombine.high %v2204, %v2204
        %v2208 = vunpack.c.l.s4 1966171168
        %v2209 = vunpack.c.0.s8 %v2208
        %v2210 = vlaneseq
        %v2211 = vshrl.u32 %v2210, 7
        %v2212 = vsub.s32 %v2209, %v2211
        %v2213 = vrot.slane %v1357, %v2212
        %v2215 = vunpack.c.l.s4 1966171168
        %v2216 = vunpack.c.0.s8 %v2215
        %v2217 = vlaneseq
        %v2218 = vshrl.u32 %v2217, 7
        %v2219 = vsub.s32 %v2216, %v2218
        %v2220 = vrot.slane %v2213, %v2219
        %v2222 = vunpack.c.l.s4 1966171168
        %v2223 = vunpack.c.0.s8 %v2222
        %v2224 = vlaneseq
        %v2225 = vshrl.u32 %v2224, 7
        %v2226 = vsub.s32 %v2223, %v2225
        %v2227 = vrot.slane %v1358, %v2226
        %v2228 = vcombine.high %v2227, %v2227
        %v2230 = vunpack.c.l.s4 1966171168
        %v2231 = vunpack.c.0.s8 %v2230
        %v2232 = vlaneseq
        %v2233 = vshrl.u32 %v2232, 7
        %v2234 = vsub.s32 %v2231, %v2233
        %v2235 = vrot.slane %v2227, %v2234
        %v2237 = vunpack.c.l.s4 1966171168
        %v2238 = vunpack.c.0.s8 %v2237
        %v2239 = vlaneseq
        %v2240 = vshrl.u32 %v2239, 7
        %v2241 = vsub.s32 %v2238, %v2240
        %v2242 = vrot.slane %v2228, %v2241
        %v2243 = vcombine.high %v2235, %v2235
        %v2244 = vcombine.high %v2242, %v2242
        %v2246 = vunpack.c.l.s4 1966171168
        %v2247 = vunpack.c.0.s8 %v2246
        %v2248 = vlaneseq
        %v2249 = vshrl.u32 %v2248, 7
        %v2250 = vsub.s32 %v2247, %v2249
        %v2251 = vrot.slane %v1359, %v2250
        %v2252 = vcombine.high %v2251, %v2251
        %v2254 = vunpack.c.l.s4 1966171168
        %v2255 = vunpack.c.0.s8 %v2254
        %v2256 = vlaneseq
        %v2257 = vshrl.u32 %v2256, 7
        %v2258 = vsub.s32 %v2255, %v2257
        %v2259 = vrot.slane %v2251, %v2258
        %v2261 = vunpack.c.l.s4 1966171168
        %v2262 = vunpack.c.0.s8 %v2261
        %v2263 = vlaneseq
        %v2264 = vshrl.u32 %v2263, 7
        %v2265 = vsub.s32 %v2262, %v2264
        %v2266 = vrot.slane %v2252, %v2265
        %v2267 = vcombine.high %v2259, %v2259
        %v2268 = vcombine.high %v2266, %v2266
        %v2270 = vunpack.c.l.s4 1966171168
        %v2271 = vunpack.c.0.s8 %v2270
        %v2272 = vlaneseq
        %v2273 = vshrl.u32 %v2272, 7
        %v2274 = vsub.s32 %v2271, %v2273
        %v2275 = vrot.slane %v1360, %v2274
        %v2277 = vunpack.c.l.s4 1966171168
        %v2278 = vunpack.c.0.s8 %v2277
        %v2279 = vlaneseq
        %v2280 = vshrl.u32 %v2279, 7
        %v2281 = vsub.s32 %v2278, %v2280
        %v2282 = vrot.slane %v2275, %v2281
        %v2284 = vunpack.c.l.s4 1966171168
        %v2285 = vunpack.c.0.s8 %v2284
        %v2286 = vlaneseq
        %v2287 = vshrl.u32 %v2286, 7
        %v2288 = vsub.s32 %v2285, %v2287
        %v2289 = vrot.slane %v1361, %v2288
        %v2290 = vcombine.high %v2289, %v2289
        %v2292 = vunpack.c.l.s4 1966171168
        %v2293 = vunpack.c.0.s8 %v2292
        %v2294 = vlaneseq
        %v2295 = vshrl.u32 %v2294, 7
        %v2296 = vsub.s32 %v2293, %v2295
        %v2297 = vrot.slane %v2289, %v2296
        %v2299 = vunpack.c.l.s4 1966171168
        %v2300 = vunpack.c.0.s8 %v2299
        %v2301 = vlaneseq
        %v2302 = vshrl.u32 %v2301, 7
        %v2303 = vsub.s32 %v2300, %v2302
        %v2304 = vrot.slane %v2290, %v2303
        %v2305 = vcombine.high %v2297, %v2297
        %v2306 = vcombine.high %v2304, %v2304
        %v2308 = vunpack.c.l.s4 1966171168
        %v2309 = vunpack.c.0.s8 %v2308
        %v2310 = vlaneseq
        %v2311 = vshrl.u32 %v2310, 7
        %v2312 = vsub.s32 %v2309, %v2311
        %v2313 = vrot.slane %v1362, %v2312
        %v2314 = vcombine.high %v2313, %v2313
        %v2316 = vunpack.c.l.s4 1966171168
        %v2317 = vunpack.c.0.s8 %v2316
        %v2318 = vlaneseq
        %v2319 = vshrl.u32 %v2318, 7
        %v2320 = vsub.s32 %v2317, %v2319
        %v2321 = vrot.slane %v2313, %v2320
        %v2323 = vunpack.c.l.s4 1966171168
        %v2324 = vunpack.c.0.s8 %v2323
        %v2325 = vlaneseq
        %v2326 = vshrl.u32 %v2325, 7
        %v2327 = vsub.s32 %v2324, %v2326
        %v2328 = vrot.slane %v2314, %v2327
        %v2329 = vcombine.high %v2321, %v2321
        %v2330 = vcombine.high %v2328, %v2328
        %v2332 = vunpack.c.l.s4 1966171168
        %v2333 = vunpack.c.0.s8 %v2332
        %v2334 = vlaneseq
        %v2335 = vshrl.u32 %v2334, 7
        %v2336 = vsub.s32 %v2333, %v2335
        %v2337 = vrot.slane %v1363, %v2336
        %v2339 = vunpack.c.l.s4 1966171168
        %v2340 = vunpack.c.0.s8 %v2339
        %v2341 = vlaneseq
        %v2342 = vshrl.u32 %v2341, 7
        %v2343 = vsub.s32 %v2340, %v2342
        %v2344 = vrot.slane %v2337, %v2343
        %v2346 = vunpack.c.l.s4 1966171168
        %v2347 = vunpack.c.0.s8 %v2346
        %v2348 = vlaneseq
        %v2349 = vshrl.u32 %v2348, 7
        %v2350 = vsub.s32 %v2347, %v2349
        %v2351 = vrot.slane %v1364, %v2350
        %v2352 = vcombine.high %v2351, %v2351
        %v2354 = vunpack.c.l.s4 1966171168
        %v2355 = vunpack.c.0.s8 %v2354
        %v2356 = vlaneseq
        %v2357 = vshrl.u32 %v2356, 7
        %v2358 = vsub.s32 %v2355, %v2357
        %v2359 = vrot.slane %v2351, %v2358
        %v2361 = vunpack.c.l.s4 1966171168
        %v2362 = vunpack.c.0.s8 %v2361
        %v2363 = vlaneseq
        %v2364 = vshrl.u32 %v2363, 7
        %v2365 = vsub.s32 %v2362, %v2364
        %v2366 = vrot.slane %v2352, %v2365
        %v2367 = vcombine.high %v2359, %v2359
        %v2368 = vcombine.high %v2366, %v2366
        %v2370 = vunpack.c.l.s4 1966171168
        %v2371 = vunpack.c.0.s8 %v2370
        %v2372 = vlaneseq
        %v2373 = vshrl.u32 %v2372, 7
        %v2374 = vsub.s32 %v2371, %v2373
        %v2375 = vrot.slane %v1365, %v2374
        %v2376 = vcombine.high %v2375, %v2375
        %v2378 = vunpack.c.l.s4 1966171168
        %v2379 = vunpack.c.0.s8 %v2378
        %v2380 = vlaneseq
        %v2381 = vshrl.u32 %v2380, 7
        %v2382 = vsub.s32 %v2379, %v2381
        %v2383 = vrot.slane %v2375, %v2382
        %v2385 = vunpack.c.l.s4 1966171168
        %v2386 = vunpack.c.0.s8 %v2385
        %v2387 = vlaneseq
        %v2388 = vshrl.u32 %v2387, 7
        %v2389 = vsub.s32 %v2386, %v2388
        %v2390 = vrot.slane %v2376, %v2389
        %v2391 = vcombine.high %v2383, %v2383
        %v2392 = vcombine.high %v2390, %v2390
        %v2394 = vunpack.c.l.s4 1966171168
        %v2395 = vunpack.c.0.s8 %v2394
        %v2396 = vlaneseq
        %v2397 = vshrl.u32 %v2396, 7
        %v2398 = vsub.s32 %v2395, %v2397
        %v2399 = vrot.slane %v1366, %v2398
        %v2401 = vunpack.c.l.s4 1966171168
        %v2402 = vunpack.c.0.s8 %v2401
        %v2403 = vlaneseq
        %v2404 = vshrl.u32 %v2403, 7
        %v2405 = vsub.s32 %v2402, %v2404
        %v2406 = vrot.slane %v2399, %v2405
        %v2551 = vld [vmem:[%s3] sm:$0xf]
        %v2552 = vld [vmem:[%s3 + $0x4] sm:$0xf]
        %v2553 = vld [vmem:[%s3 + $0x8] sm:$0xf]
        %v2554 = vld [vmem:[%s3 + $0xc] sm:$0xf]
        %v2555 = vld [vmem:[%s3 + $0x10] sm:$0xf]
        %v2556 = vld [vmem:[%s3 + $0x14] sm:$0xf]
        %v2557 = vld [vmem:[%s3 + $0x18] sm:$0xf]
        %v2558 = vld [vmem:[%s3 + $0x1c] sm:$0xf]
        %v2559 = vld [vmem:[%s3 + $0x20] sm:$0xf]
        %v2560 = vld [vmem:[%s3 + $0x24] sm:$0xf]
        %v2561 = vld [vmem:[%s3 + $0x28] sm:$0xf]
        %v2562 = vld [vmem:[%s3 + $0x2c] sm:$0xf]
        %v2563 = vld [vmem:[%s3 + $0x30] sm:$0xf]
        %v2564 = vld [vmem:[%s3 + $0x34] sm:$0xf]
        %v2565 = vld [vmem:[%s3 + $0x38] sm:$0xf]
        %v2566 = vld [vmem:[%s3 + $0x3c] sm:$0xf]
        %v2568 = vlaneseq
        %v2569 = vshrl.u32 %v2568, 7
        %v2570 = vsub.s32 0, %v2569
        %v2571 = vrot.slane %v491, %v2570
        %v2573 = vcombine.low %v1429, %v1436
        %v2574 = vcombine.low %v1437, %v1438
        %v2575 = vcombine.low %v1453, %v1460
        %v2576 = vcombine.low %v1461, %v1462
        %v2578 = vunpack.c.l.s4 1966171168
        %v2579 = vunpack.c.0.s8 %v2578
        %v2580 = vlaneseq
        %v2581 = vshrl.u32 %v2580, 7
        %v2582 = vsub.s32 %v2579, %v2581
        %v2583 = vrot.slane %v2573, %v2582
        %v2585 = vunpack.c.l.s4 1966171168
        %v2586 = vunpack.c.0.s8 %v2585
        %v2587 = vlaneseq
        %v2588 = vshrl.u32 %v2587, 7
        %v2589 = vsub.s32 %v2586, %v2588
        %v2590 = vrot.slane %v2574, %v2589
        %v2592 = vunpack.c.l.s4 1966171168
        %v2593 = vunpack.c.0.s8 %v2592
        %v2594 = vlaneseq
        %v2595 = vshrl.u32 %v2594, 7
        %v2596 = vsub.s32 %v2593, %v2595
        %v2597 = vrot.slane %v2575, %v2596
        %v2599 = vunpack.c.l.s4 1966171168
        %v2600 = vunpack.c.0.s8 %v2599
        %v2601 = vlaneseq
        %v2602 = vshrl.u32 %v2601, 7
        %v2603 = vsub.s32 %v2600, %v2602
        %v2604 = vrot.slane %v2576, %v2603
        %v2605 = vcombine.low %v2583, %v2590
        %v2606 = vcombine.low %v2597, %v2604
        %v2608 = vunpack.c.l.s4 1966171168
        %v2609 = vunpack.c.0.s8 %v2608
        %v2610 = vlaneseq
        %v2611 = vshrl.u32 %v2610, 7
        %v2612 = vsub.s32 %v2609, %v2611
        %v2613 = vrot.slane %v2605, %v2612
        %v2615 = vunpack.c.l.s4 1966171168
        %v2616 = vunpack.c.0.s8 %v2615
        %v2617 = vlaneseq
        %v2618 = vshrl.u32 %v2617, 7
        %v2619 = vsub.s32 %v2616, %v2618
        %v2620 = vrot.slane %v2606, %v2619
        %v2621 = vcombine.low %v2613, %v2620
        %v2622 = vcombine.low %v1476, %v1491
        %v2623 = vcombine.low %v1498, %v1499
        %v2624 = vcombine.low %v1500, %v1515
        %v2625 = vcombine.low %v1522, %v1523
        %v2627 = vunpack.c.l.s4 1966171168
        %v2628 = vunpack.c.0.s8 %v2627
        %v2629 = vlaneseq
        %v2630 = vshrl.u32 %v2629, 7
        %v2631 = vsub.s32 %v2628, %v2630
        %v2632 = vrot.slane %v2622, %v2631
        %v2634 = vunpack.c.l.s4 1966171168
        %v2635 = vunpack.c.0.s8 %v2634
        %v2636 = vlaneseq
        %v2637 = vshrl.u32 %v2636, 7
        %v2638 = vsub.s32 %v2635, %v2637
        %v2639 = vrot.slane %v2623, %v2638
        %v2641 = vunpack.c.l.s4 1966171168
        %v2642 = vunpack.c.0.s8 %v2641
        %v2643 = vlaneseq
        %v2644 = vshrl.u32 %v2643, 7
        %v2645 = vsub.s32 %v2642, %v2644
        %v2646 = vrot.slane %v2624, %v2645
        %v2648 = vunpack.c.l.s4 1966171168
        %v2649 = vunpack.c.0.s8 %v2648
        %v2650 = vlaneseq
        %v2651 = vshrl.u32 %v2650, 7
        %v2652 = vsub.s32 %v2649, %v2651
        %v2653 = vrot.slane %v2625, %v2652
        %v2654 = vcombine.low %v2632, %v2639
        %v2655 = vcombine.low %v2646, %v2653
        %v2657 = vunpack.c.l.s4 1966171168
        %v2658 = vunpack.c.0.s8 %v2657
        %v2659 = vlaneseq
        %v2660 = vshrl.u32 %v2659, 7
        %v2661 = vsub.s32 %v2658, %v2660
        %v2662 = vrot.slane %v2654, %v2661
        %v2664 = vunpack.c.l.s4 1966171168
        %v2665 = vunpack.c.0.s8 %v2664
        %v2666 = vlaneseq
        %v2667 = vshrl.u32 %v2666, 7
        %v2668 = vsub.s32 %v2665, %v2667
        %v2669 = vrot.slane %v2655, %v2668
        %v2670 = vcombine.low %v2662, %v2669
        %v2671 = vcombine.low %v1524, %v1538
        %v2672 = vcombine.low %v1553, %v1560
        %v2673 = vcombine.low %v1561, %v1562
        %v2674 = vcombine.low %v1577, %v1584
        %v2676 = vunpack.c.l.s4 1966171168
        %v2677 = vunpack.c.0.s8 %v2676
        %v2678 = vlaneseq
        %v2679 = vshrl.u32 %v2678, 7
        %v2680 = vsub.s32 %v2677, %v2679
        %v2681 = vrot.slane %v2671, %v2680
        %v2683 = vunpack.c.l.s4 1966171168
        %v2684 = vunpack.c.0.s8 %v2683
        %v2685 = vlaneseq
        %v2686 = vshrl.u32 %v2685, 7
        %v2687 = vsub.s32 %v2684, %v2686
        %v2688 = vrot.slane %v2672, %v2687
        %v2690 = vunpack.c.l.s4 1966171168
        %v2691 = vunpack.c.0.s8 %v2690
        %v2692 = vlaneseq
        %v2693 = vshrl.u32 %v2692, 7
        %v2694 = vsub.s32 %v2691, %v2693
        %v2695 = vrot.slane %v2673, %v2694
        %v2697 = vunpack.c.l.s4 1966171168
        %v2698 = vunpack.c.0.s8 %v2697
        %v2699 = vlaneseq
        %v2700 = vshrl.u32 %v2699, 7
        %v2701 = vsub.s32 %v2698, %v2700
        %v2702 = vrot.slane %v2674, %v2701
        %v2703 = vcombine.low %v2681, %v2688
        %v2704 = vcombine.low %v2695, %v2702
        %v2706 = vunpack.c.l.s4 1966171168
        %v2707 = vunpack.c.0.s8 %v2706
        %v2708 = vlaneseq
        %v2709 = vshrl.u32 %v2708, 7
        %v2710 = vsub.s32 %v2707, %v2709
        %v2711 = vrot.slane %v2703, %v2710
        %v2713 = vunpack.c.l.s4 1966171168
        %v2714 = vunpack.c.0.s8 %v2713
        %v2715 = vlaneseq
        %v2716 = vshrl.u32 %v2715, 7
        %v2717 = vsub.s32 %v2714, %v2716
        %v2718 = vrot.slane %v2704, %v2717
        %v2719 = vcombine.low %v2711, %v2718
        %v2720 = vcombine.low %v1585, %v1586
        %v2721 = vcombine.low %v1600, %v1615
        %v2722 = vcombine.low %v1622, %v1623
        %v2723 = vcombine.low %v1624, %v1639
        %v2725 = vunpack.c.l.s4 1966171168
        %v2726 = vunpack.c.0.s8 %v2725
        %v2727 = vlaneseq
        %v2728 = vshrl.u32 %v2727, 7
        %v2729 = vsub.s32 %v2726, %v2728
        %v2730 = vrot.slane %v2720, %v2729
        %v2732 = vunpack.c.l.s4 1966171168
        %v2733 = vunpack.c.0.s8 %v2732
        %v2734 = vlaneseq
        %v2735 = vshrl.u32 %v2734, 7
        %v2736 = vsub.s32 %v2733, %v2735
        %v2737 = vrot.slane %v2721, %v2736
        %v2739 = vunpack.c.l.s4 1966171168
        %v2740 = vunpack.c.0.s8 %v2739
        %v2741 = vlaneseq
        %v2742 = vshrl.u32 %v2741, 7
        %v2743 = vsub.s32 %v2740, %v2742
        %v2744 = vrot.slane %v2722, %v2743
        %v2746 = vunpack.c.l.s4 1966171168
        %v2747 = vunpack.c.0.s8 %v2746
        %v2748 = vlaneseq
        %v2749 = vshrl.u32 %v2748, 7
        %v2750 = vsub.s32 %v2747, %v2749
        %v2751 = vrot.slane %v2723, %v2750
        %v2752 = vcombine.low %v2730, %v2737
        %v2753 = vcombine.low %v2744, %v2751
        %v2755 = vunpack.c.l.s4 1966171168
        %v2756 = vunpack.c.0.s8 %v2755
        %v2757 = vlaneseq
        %v2758 = vshrl.u32 %v2757, 7
        %v2759 = vsub.s32 %v2756, %v2758
        %v2760 = vrot.slane %v2752, %v2759
        %v2762 = vunpack.c.l.s4 1966171168
        %v2763 = vunpack.c.0.s8 %v2762
        %v2764 = vlaneseq
        %v2765 = vshrl.u32 %v2764, 7
        %v2766 = vsub.s32 %v2763, %v2765
        %v2767 = vrot.slane %v2753, %v2766
        %v2768 = vcombine.low %v2760, %v2767
        %v2769 = vcombine.low %v1646, %v1647
        %v2770 = vcombine.low %v1648, %v1662
        %v2771 = vcombine.low %v1677, %v1684
        %v2772 = vcombine.low %v1685, %v1686
        %v2774 = vunpack.c.l.s4 1966171168
        %v2775 = vunpack.c.0.s8 %v2774
        %v2776 = vlaneseq
        %v2777 = vshrl.u32 %v2776, 7
        %v2778 = vsub.s32 %v2775, %v2777
        %v2779 = vrot.slane %v2769, %v2778
        %v2781 = vunpack.c.l.s4 1966171168
        %v2782 = vunpack.c.0.s8 %v2781
        %v2783 = vlaneseq
        %v2784 = vshrl.u32 %v2783, 7
        %v2785 = vsub.s32 %v2782, %v2784
        %v2786 = vrot.slane %v2770, %v2785
        %v2788 = vunpack.c.l.s4 1966171168
        %v2789 = vunpack.c.0.s8 %v2788
        %v2790 = vlaneseq
        %v2791 = vshrl.u32 %v2790, 7
        %v2792 = vsub.s32 %v2789, %v2791
        %v2793 = vrot.slane %v2771, %v2792
        %v2795 = vunpack.c.l.s4 1966171168
        %v2796 = vunpack.c.0.s8 %v2795
        %v2797 = vlaneseq
        %v2798 = vshrl.u32 %v2797, 7
        %v2799 = vsub.s32 %v2796, %v2798
        %v2800 = vrot.slane %v2772, %v2799
        %v2801 = vcombine.low %v2779, %v2786
        %v2802 = vcombine.low %v2793, %v2800
        %v2804 = vunpack.c.l.s4 1966171168
        %v2805 = vunpack.c.0.s8 %v2804
        %v2806 = vlaneseq
        %v2807 = vshrl.u32 %v2806, 7
        %v2808 = vsub.s32 %v2805, %v2807
        %v2809 = vrot.slane %v2801, %v2808
        %v2811 = vunpack.c.l.s4 1966171168
        %v2812 = vunpack.c.0.s8 %v2811
        %v2813 = vlaneseq
        %v2814 = vshrl.u32 %v2813, 7
        %v2815 = vsub.s32 %v2812, %v2814
        %v2816 = vrot.slane %v2802, %v2815
        %v2817 = vcombine.low %v2809, %v2816
        %v2818 = vcombine.low %v1701, %v1708
        %v2819 = vcombine.low %v1709, %v1710
        %v2820 = vcombine.low %v1724, %v1739
        %v2821 = vcombine.low %v1746, %v1747
        %v2823 = vunpack.c.l.s4 1966171168
        %v2824 = vunpack.c.0.s8 %v2823
        %v2825 = vlaneseq
        %v2826 = vshrl.u32 %v2825, 7
        %v2827 = vsub.s32 %v2824, %v2826
        %v2828 = vrot.slane %v2818, %v2827
        %v2830 = vunpack.c.l.s4 1966171168
        %v2831 = vunpack.c.0.s8 %v2830
        %v2832 = vlaneseq
        %v2833 = vshrl.u32 %v2832, 7
        %v2834 = vsub.s32 %v2831, %v2833
        %v2835 = vrot.slane %v2819, %v2834
        %v2837 = vunpack.c.l.s4 1966171168
        %v2838 = vunpack.c.0.s8 %v2837
        %v2839 = vlaneseq
        %v2840 = vshrl.u32 %v2839, 7
        %v2841 = vsub.s32 %v2838, %v2840
        %v2842 = vrot.slane %v2820, %v2841
        %v2844 = vunpack.c.l.s4 1966171168
        %v2845 = vunpack.c.0.s8 %v2844
        %v2846 = vlaneseq
        %v2847 = vshrl.u32 %v2846, 7
        %v2848 = vsub.s32 %v2845, %v2847
        %v2849 = vrot.slane %v2821, %v2848
        %v2850 = vcombine.low %v2828, %v2835
        %v2851 = vcombine.low %v2842, %v2849
        %v2853 = vunpack.c.l.s4 1966171168
        %v2854 = vunpack.c.0.s8 %v2853
        %v2855 = vlaneseq
        %v2856 = vshrl.u32 %v2855, 7
        %v2857 = vsub.s32 %v2854, %v2856
        %v2858 = vrot.slane %v2850, %v2857
        %v2860 = vunpack.c.l.s4 1966171168
        %v2861 = vunpack.c.0.s8 %v2860
        %v2862 = vlaneseq
        %v2863 = vshrl.u32 %v2862, 7
        %v2864 = vsub.s32 %v2861, %v2863
        %v2865 = vrot.slane %v2851, %v2864
        %v2866 = vcombine.low %v2858, %v2865
        %v2867 = vcombine.low %v1748, %v1763
        %v2868 = vcombine.low %v1770, %v1771
        %v2869 = vcombine.low %v1772, %v1786
        %v2870 = vcombine.low %v1801, %v1808
        %v2872 = vunpack.c.l.s4 1966171168
        %v2873 = vunpack.c.0.s8 %v2872
        %v2874 = vlaneseq
        %v2875 = vshrl.u32 %v2874, 7
        %v2876 = vsub.s32 %v2873, %v2875
        %v2877 = vrot.slane %v2867, %v2876
        %v2879 = vunpack.c.l.s4 1966171168
        %v2880 = vunpack.c.0.s8 %v2879
        %v2881 = vlaneseq
        %v2882 = vshrl.u32 %v2881, 7
        %v2883 = vsub.s32 %v2880, %v2882
        %v2884 = vrot.slane %v2868, %v2883
        %v2886 = vunpack.c.l.s4 1966171168
        %v2887 = vunpack.c.0.s8 %v2886
        %v2888 = vlaneseq
        %v2889 = vshrl.u32 %v2888, 7
        %v2890 = vsub.s32 %v2887, %v2889
        %v2891 = vrot.slane %v2869, %v2890
        %v2893 = vunpack.c.l.s4 1966171168
        %v2894 = vunpack.c.0.s8 %v2893
        %v2895 = vlaneseq
        %v2896 = vshrl.u32 %v2895, 7
        %v2897 = vsub.s32 %v2894, %v2896
        %v2898 = vrot.slane %v2870, %v2897
        %v2899 = vcombine.low %v2877, %v2884
        %v2900 = vcombine.low %v2891, %v2898
        %v2902 = vunpack.c.l.s4 1966171168
        %v2903 = vunpack.c.0.s8 %v2902
        %v2904 = vlaneseq
        %v2905 = vshrl.u32 %v2904, 7
        %v2906 = vsub.s32 %v2903, %v2905
        %v2907 = vrot.slane %v2899, %v2906
        %v2909 = vunpack.c.l.s4 1966171168
        %v2910 = vunpack.c.0.s8 %v2909
        %v2911 = vlaneseq
        %v2912 = vshrl.u32 %v2911, 7
        %v2913 = vsub.s32 %v2910, %v2912
        %v2914 = vrot.slane %v2900, %v2913
        %v2915 = vcombine.low %v2907, %v2914
        %v2916 = vcombine.low %v1809, %v1810
        %v2917 = vcombine.low %v1825, %v1832
        %v2918 = vcombine.low %v1833, %v1834
        %v2919 = vcombine.low %v1848, %v1863
        %v2921 = vunpack.c.l.s4 1966171168
        %v2922 = vunpack.c.0.s8 %v2921
        %v2923 = vlaneseq
        %v2924 = vshrl.u32 %v2923, 7
        %v2925 = vsub.s32 %v2922, %v2924
        %v2926 = vrot.slane %v2916, %v2925
        %v2928 = vunpack.c.l.s4 1966171168
        %v2929 = vunpack.c.0.s8 %v2928
        %v2930 = vlaneseq
        %v2931 = vshrl.u32 %v2930, 7
        %v2932 = vsub.s32 %v2929, %v2931
        %v2933 = vrot.slane %v2917, %v2932
        %v2935 = vunpack.c.l.s4 1966171168
        %v2936 = vunpack.c.0.s8 %v2935
        %v2937 = vlaneseq
        %v2938 = vshrl.u32 %v2937, 7
        %v2939 = vsub.s32 %v2936, %v2938
        %v2940 = vrot.slane %v2918, %v2939
        %v2942 = vunpack.c.l.s4 1966171168
        %v2943 = vunpack.c.0.s8 %v2942
        %v2944 = vlaneseq
        %v2945 = vshrl.u32 %v2944, 7
        %v2946 = vsub.s32 %v2943, %v2945
        %v2947 = vrot.slane %v2919, %v2946
        %v2948 = vcombine.low %v2926, %v2933
        %v2949 = vcombine.low %v2940, %v2947
        %v2951 = vunpack.c.l.s4 1966171168
        %v2952 = vunpack.c.0.s8 %v2951
        %v2953 = vlaneseq
        %v2954 = vshrl.u32 %v2953, 7
        %v2955 = vsub.s32 %v2952, %v2954
        %v2956 = vrot.slane %v2948, %v2955
        %v2958 = vunpack.c.l.s4 1966171168
        %v2959 = vunpack.c.0.s8 %v2958
        %v2960 = vlaneseq
        %v2961 = vshrl.u32 %v2960, 7
        %v2962 = vsub.s32 %v2959, %v2961
        %v2963 = vrot.slane %v2949, %v2962
        %v2964 = vcombine.low %v2956, %v2963
        %v2965 = vcombine.low %v1870, %v1871
        %v2966 = vcombine.low %v1872, %v1887
        %v2967 = vcombine.low %v1894, %v1895
        %v2968 = vcombine.low %v1896, %v1910
        %v2970 = vunpack.c.l.s4 1966171168
        %v2971 = vunpack.c.0.s8 %v2970
        %v2972 = vlaneseq
        %v2973 = vshrl.u32 %v2972, 7
        %v2974 = vsub.s32 %v2971, %v2973
        %v2975 = vrot.slane %v2965, %v2974
        %v2977 = vunpack.c.l.s4 1966171168
        %v2978 = vunpack.c.0.s8 %v2977
        %v2979 = vlaneseq
        %v2980 = vshrl.u32 %v2979, 7
        %v2981 = vsub.s32 %v2978, %v2980
        %v2982 = vrot.slane %v2966, %v2981
        %v2984 = vunpack.c.l.s4 1966171168
        %v2985 = vunpack.c.0.s8 %v2984
        %v2986 = vlaneseq
        %v2987 = vshrl.u32 %v2986, 7
        %v2988 = vsub.s32 %v2985, %v2987
        %v2989 = vrot.slane %v2967, %v2988
        %v2991 = vunpack.c.l.s4 1966171168
        %v2992 = vunpack.c.0.s8 %v2991
        %v2993 = vlaneseq
        %v2994 = vshrl.u32 %v2993, 7
        %v2995 = vsub.s32 %v2992, %v2994
        %v2996 = vrot.slane %v2968, %v2995
        %v2997 = vcombine.low %v2975, %v2982
        %v2998 = vcombine.low %v2989, %v2996
        %v3000 = vunpack.c.l.s4 1966171168
        %v3001 = vunpack.c.0.s8 %v3000
        %v3002 = vlaneseq
        %v3003 = vshrl.u32 %v3002, 7
        %v3004 = vsub.s32 %v3001, %v3003
        %v3005 = vrot.slane %v2997, %v3004
        %v3007 = vunpack.c.l.s4 1966171168
        %v3008 = vunpack.c.0.s8 %v3007
        %v3009 = vlaneseq
        %v3010 = vshrl.u32 %v3009, 7
        %v3011 = vsub.s32 %v3008, %v3010
        %v3012 = vrot.slane %v2998, %v3011
        %v3013 = vcombine.low %v3005, %v3012
        %v3014 = vcombine.low %v1925, %v1932
        %v3015 = vcombine.low %v1933, %v1934
        %v3016 = vcombine.low %v1949, %v1956
        %v3017 = vcombine.low %v1957, %v1958
        %v3019 = vunpack.c.l.s4 1966171168
        %v3020 = vunpack.c.0.s8 %v3019
        %v3021 = vlaneseq
        %v3022 = vshrl.u32 %v3021, 7
        %v3023 = vsub.s32 %v3020, %v3022
        %v3024 = vrot.slane %v3014, %v3023
        %v3026 = vunpack.c.l.s4 1966171168
        %v3027 = vunpack.c.0.s8 %v3026
        %v3028 = vlaneseq
        %v3029 = vshrl.u32 %v3028, 7
        %v3030 = vsub.s32 %v3027, %v3029
        %v3031 = vrot.slane %v3015, %v3030
        %v3033 = vunpack.c.l.s4 1966171168
        %v3034 = vunpack.c.0.s8 %v3033
        %v3035 = vlaneseq
        %v3036 = vshrl.u32 %v3035, 7
        %v3037 = vsub.s32 %v3034, %v3036
        %v3038 = vrot.slane %v3016, %v3037
        %v3040 = vunpack.c.l.s4 1966171168
        %v3041 = vunpack.c.0.s8 %v3040
        %v3042 = vlaneseq
        %v3043 = vshrl.u32 %v3042, 7
        %v3044 = vsub.s32 %v3041, %v3043
        %v3045 = vrot.slane %v3017, %v3044
        %v3046 = vcombine.low %v3024, %v3031
        %v3047 = vcombine.low %v3038, %v3045
        %v3049 = vunpack.c.l.s4 1966171168
        %v3050 = vunpack.c.0.s8 %v3049
        %v3051 = vlaneseq
        %v3052 = vshrl.u32 %v3051, 7
        %v3053 = vsub.s32 %v3050, %v3052
        %v3054 = vrot.slane %v3046, %v3053
        %v3056 = vunpack.c.l.s4 1966171168
        %v3057 = vunpack.c.0.s8 %v3056
        %v3058 = vlaneseq
        %v3059 = vshrl.u32 %v3058, 7
        %v3060 = vsub.s32 %v3057, %v3059
        %v3061 = vrot.slane %v3047, %v3060
        %v3062 = vcombine.low %v3054, %v3061
        %v3063 = vcombine.low %v1972, %v1987
        %v3064 = vcombine.low %v1994, %v1995
        %v3065 = vcombine.low %v1996, %v2011
        %v3066 = vcombine.low %v2018, %v2019
        %v3068 = vunpack.c.l.s4 1966171168
        %v3069 = vunpack.c.0.s8 %v3068
        %v3070 = vlaneseq
        %v3071 = vshrl.u32 %v3070, 7
        %v3072 = vsub.s32 %v3069, %v3071
        %v3073 = vrot.slane %v3063, %v3072
        %v3075 = vunpack.c.l.s4 1966171168
        %v3076 = vunpack.c.0.s8 %v3075
        %v3077 = vlaneseq
        %v3078 = vshrl.u32 %v3077, 7
        %v3079 = vsub.s32 %v3076, %v3078
        %v3080 = vrot.slane %v3064, %v3079
        %v3082 = vunpack.c.l.s4 1966171168
        %v3083 = vunpack.c.0.s8 %v3082
        %v3084 = vlaneseq
        %v3085 = vshrl.u32 %v3084, 7
        %v3086 = vsub.s32 %v3083, %v3085
        %v3087 = vrot.slane %v3065, %v3086
        %v3089 = vunpack.c.l.s4 1966171168
        %v3090 = vunpack.c.0.s8 %v3089
        %v3091 = vlaneseq
        %v3092 = vshrl.u32 %v3091, 7
        %v3093 = vsub.s32 %v3090, %v3092
        %v3094 = vrot.slane %v3066, %v3093
        %v3095 = vcombine.low %v3073, %v3080
        %v3096 = vcombine.low %v3087, %v3094
        %v3098 = vunpack.c.l.s4 1966171168
        %v3099 = vunpack.c.0.s8 %v3098
        %v3100 = vlaneseq
        %v3101 = vshrl.u32 %v3100, 7
        %v3102 = vsub.s32 %v3099, %v3101
        %v3103 = vrot.slane %v3095, %v3102
        %v3105 = vunpack.c.l.s4 1966171168
        %v3106 = vunpack.c.0.s8 %v3105
        %v3107 = vlaneseq
        %v3108 = vshrl.u32 %v3107, 7
        %v3109 = vsub.s32 %v3106, %v3108
        %v3110 = vrot.slane %v3096, %v3109
        %v3111 = vcombine.low %v3103, %v3110
        %v3112 = vcombine.low %v2020, %v2034
        %v3113 = vcombine.low %v2049, %v2056
        %v3114 = vcombine.low %v2057, %v2058
        %v3115 = vcombine.low %v2073, %v2080
        %v3117 = vunpack.c.l.s4 1966171168
        %v3118 = vunpack.c.0.s8 %v3117
        %v3119 = vlaneseq
        %v3120 = vshrl.u32 %v3119, 7
        %v3121 = vsub.s32 %v3118, %v3120
        %v3122 = vrot.slane %v3112, %v3121
        %v3124 = vunpack.c.l.s4 1966171168
        %v3125 = vunpack.c.0.s8 %v3124
        %v3126 = vlaneseq
        %v3127 = vshrl.u32 %v3126, 7
        %v3128 = vsub.s32 %v3125, %v3127
        %v3129 = vrot.slane %v3113, %v3128
        %v3131 = vunpack.c.l.s4 1966171168
        %v3132 = vunpack.c.0.s8 %v3131
        %v3133 = vlaneseq
        %v3134 = vshrl.u32 %v3133, 7
        %v3135 = vsub.s32 %v3132, %v3134
        %v3136 = vrot.slane %v3114, %v3135
        %v3138 = vunpack.c.l.s4 1966171168
        %v3139 = vunpack.c.0.s8 %v3138
        %v3140 = vlaneseq
        %v3141 = vshrl.u32 %v3140, 7
        %v3142 = vsub.s32 %v3139, %v3141
        %v3143 = vrot.slane %v3115, %v3142
        %v3144 = vcombine.low %v3122, %v3129
        %v3145 = vcombine.low %v3136, %v3143
        %v3147 = vunpack.c.l.s4 1966171168
        %v3148 = vunpack.c.0.s8 %v3147
        %v3149 = vlaneseq
        %v3150 = vshrl.u32 %v3149, 7
        %v3151 = vsub.s32 %v3148, %v3150
        %v3152 = vrot.slane %v3144, %v3151
        %v3154 = vunpack.c.l.s4 1966171168
        %v3155 = vunpack.c.0.s8 %v3154
        %v3156 = vlaneseq
        %v3157 = vshrl.u32 %v3156, 7
        %v3158 = vsub.s32 %v3155, %v3157
        %v3159 = vrot.slane %v3145, %v3158
        %v3160 = vcombine.low %v3152, %v3159
        %v3161 = vcombine.low %v2081, %v2082
        %v3162 = vcombine.low %v2096, %v2111
        %v3163 = vcombine.low %v2118, %v2119
        %v3164 = vcombine.low %v2120, %v2135
        %v3166 = vunpack.c.l.s4 1966171168
        %v3167 = vunpack.c.0.s8 %v3166
        %v3168 = vlaneseq
        %v3169 = vshrl.u32 %v3168, 7
        %v3170 = vsub.s32 %v3167, %v3169
        %v3171 = vrot.slane %v3161, %v3170
        %v3173 = vunpack.c.l.s4 1966171168
        %v3174 = vunpack.c.0.s8 %v3173
        %v3175 = vlaneseq
        %v3176 = vshrl.u32 %v3175, 7
        %v3177 = vsub.s32 %v3174, %v3176
        %v3178 = vrot.slane %v3162, %v3177
        %v3180 = vunpack.c.l.s4 1966171168
        %v3181 = vunpack.c.0.s8 %v3180
        %v3182 = vlaneseq
        %v3183 = vshrl.u32 %v3182, 7
        %v3184 = vsub.s32 %v3181, %v3183
        %v3185 = vrot.slane %v3163, %v3184
        %v3187 = vunpack.c.l.s4 1966171168
        %v3188 = vunpack.c.0.s8 %v3187
        %v3189 = vlaneseq
        %v3190 = vshrl.u32 %v3189, 7
        %v3191 = vsub.s32 %v3188, %v3190
        %v3192 = vrot.slane %v3164, %v3191
        %v3193 = vcombine.low %v3171, %v3178
        %v3194 = vcombine.low %v3185, %v3192
        %v3196 = vunpack.c.l.s4 1966171168
        %v3197 = vunpack.c.0.s8 %v3196
        %v3198 = vlaneseq
        %v3199 = vshrl.u32 %v3198, 7
        %v3200 = vsub.s32 %v3197, %v3199
        %v3201 = vrot.slane %v3193, %v3200
        %v3203 = vunpack.c.l.s4 1966171168
        %v3204 = vunpack.c.0.s8 %v3203
        %v3205 = vlaneseq
        %v3206 = vshrl.u32 %v3205, 7
        %v3207 = vsub.s32 %v3204, %v3206
        %v3208 = vrot.slane %v3194, %v3207
        %v3209 = vcombine.low %v3201, %v3208
        %v3210 = vcombine.low %v2142, %v2143
        %v3211 = vcombine.low %v2144, %v2158
        %v3212 = vcombine.low %v2173, %v2180
        %v3213 = vcombine.low %v2181, %v2182
        %v3215 = vunpack.c.l.s4 1966171168
        %v3216 = vunpack.c.0.s8 %v3215
        %v3217 = vlaneseq
        %v3218 = vshrl.u32 %v3217, 7
        %v3219 = vsub.s32 %v3216, %v3218
        %v3220 = vrot.slane %v3210, %v3219
        %v3222 = vunpack.c.l.s4 1966171168
        %v3223 = vunpack.c.0.s8 %v3222
        %v3224 = vlaneseq
        %v3225 = vshrl.u32 %v3224, 7
        %v3226 = vsub.s32 %v3223, %v3225
        %v3227 = vrot.slane %v3211, %v3226
        %v3229 = vunpack.c.l.s4 1966171168
        %v3230 = vunpack.c.0.s8 %v3229
        %v3231 = vlaneseq
        %v3232 = vshrl.u32 %v3231, 7
        %v3233 = vsub.s32 %v3230, %v3232
        %v3234 = vrot.slane %v3212, %v3233
        %v3236 = vunpack.c.l.s4 1966171168
        %v3237 = vunpack.c.0.s8 %v3236
        %v3238 = vlaneseq
        %v3239 = vshrl.u32 %v3238, 7
        %v3240 = vsub.s32 %v3237, %v3239
        %v3241 = vrot.slane %v3213, %v3240
        %v3242 = vcombine.low %v3220, %v3227
        %v3243 = vcombine.low %v3234, %v3241
        %v3245 = vunpack.c.l.s4 1966171168
        %v3246 = vunpack.c.0.s8 %v3245
        %v3247 = vlaneseq
        %v3248 = vshrl.u32 %v3247, 7
        %v3249 = vsub.s32 %v3246, %v3248
        %v3250 = vrot.slane %v3242, %v3249
        %v3252 = vunpack.c.l.s4 1966171168
        %v3253 = vunpack.c.0.s8 %v3252
        %v3254 = vlaneseq
        %v3255 = vshrl.u32 %v3254, 7
        %v3256 = vsub.s32 %v3253, %v3255
        %v3257 = vrot.slane %v3243, %v3256
        %v3258 = vcombine.low %v3250, %v3257
        %v3259 = vcombine.low %v2197, %v2204
        %v3260 = vcombine.low %v2205, %v2206
        %v3261 = vcombine.low %v2220, %v2235
        %v3262 = vcombine.low %v2242, %v2243
        %v3264 = vunpack.c.l.s4 1966171168
        %v3265 = vunpack.c.0.s8 %v3264
        %v3266 = vlaneseq
        %v3267 = vshrl.u32 %v3266, 7
        %v3268 = vsub.s32 %v3265, %v3267
        %v3269 = vrot.slane %v3259, %v3268
        %v3271 = vunpack.c.l.s4 1966171168
        %v3272 = vunpack.c.0.s8 %v3271
        %v3273 = vlaneseq
        %v3274 = vshrl.u32 %v3273, 7
        %v3275 = vsub.s32 %v3272, %v3274
        %v3276 = vrot.slane %v3260, %v3275
        %v3278 = vunpack.c.l.s4 1966171168
        %v3279 = vunpack.c.0.s8 %v3278
        %v3280 = vlaneseq
        %v3281 = vshrl.u32 %v3280, 7
        %v3282 = vsub.s32 %v3279, %v3281
        %v3283 = vrot.slane %v3261, %v3282
        %v3285 = vunpack.c.l.s4 1966171168
        %v3286 = vunpack.c.0.s8 %v3285
        %v3287 = vlaneseq
        %v3288 = vshrl.u32 %v3287, 7
        %v3289 = vsub.s32 %v3286, %v3288
        %v3290 = vrot.slane %v3262, %v3289
        %v3291 = vcombine.low %v3269, %v3276
        %v3292 = vcombine.low %v3283, %v3290
        %v3294 = vunpack.c.l.s4 1966171168
        %v3295 = vunpack.c.0.s8 %v3294
        %v3296 = vlaneseq
        %v3297 = vshrl.u32 %v3296, 7
        %v3298 = vsub.s32 %v3295, %v3297
        %v3299 = vrot.slane %v3291, %v3298
        %v3301 = vunpack.c.l.s4 1966171168
        %v3302 = vunpack.c.0.s8 %v3301
        %v3303 = vlaneseq
        %v3304 = vshrl.u32 %v3303, 7
        %v3305 = vsub.s32 %v3302, %v3304
        %v3306 = vrot.slane %v3292, %v3305
        %v3307 = vcombine.low %v3299, %v3306
        %v3308 = vcombine.low %v2244, %v2259
        %v3309 = vcombine.low %v2266, %v2267
        %v3310 = vcombine.low %v2268, %v2282
        %v3311 = vcombine.low %v2297, %v2304
        %v3313 = vunpack.c.l.s4 1966171168
        %v3314 = vunpack.c.0.s8 %v3313
        %v3315 = vlaneseq
        %v3316 = vshrl.u32 %v3315, 7
        %v3317 = vsub.s32 %v3314, %v3316
        %v3318 = vrot.slane %v3308, %v3317
        %v3320 = vunpack.c.l.s4 1966171168
        %v3321 = vunpack.c.0.s8 %v3320
        %v3322 = vlaneseq
        %v3323 = vshrl.u32 %v3322, 7
        %v3324 = vsub.s32 %v3321, %v3323
        %v3325 = vrot.slane %v3309, %v3324
        %v3327 = vunpack.c.l.s4 1966171168
        %v3328 = vunpack.c.0.s8 %v3327
        %v3329 = vlaneseq
        %v3330 = vshrl.u32 %v3329, 7
        %v3331 = vsub.s32 %v3328, %v3330
        %v3332 = vrot.slane %v3310, %v3331
        %v3334 = vunpack.c.l.s4 1966171168
        %v3335 = vunpack.c.0.s8 %v3334
        %v3336 = vlaneseq
        %v3337 = vshrl.u32 %v3336, 7
        %v3338 = vsub.s32 %v3335, %v3337
        %v3339 = vrot.slane %v3311, %v3338
        %v3340 = vcombine.low %v3318, %v3325
        %v3341 = vcombine.low %v3332, %v3339
        %v3343 = vunpack.c.l.s4 1966171168
        %v3344 = vunpack.c.0.s8 %v3343
        %v3345 = vlaneseq
        %v3346 = vshrl.u32 %v3345, 7
        %v3347 = vsub.s32 %v3344, %v3346
        %v3348 = vrot.slane %v3340, %v3347
        %v3350 = vunpack.c.l.s4 1966171168
        %v3351 = vunpack.c.0.s8 %v3350
        %v3352 = vlaneseq
        %v3353 = vshrl.u32 %v3352, 7
        %v3354 = vsub.s32 %v3351, %v3353
        %v3355 = vrot.slane %v3341, %v3354
        %v3356 = vcombine.low %v3348, %v3355
        %v3357 = vcombine.low %v2305, %v2306
        %v3358 = vcombine.low %v2321, %v2328
        %v3359 = vcombine.low %v2329, %v2330
        %v3360 = vcombine.low %v2344, %v2359
        %v3362 = vunpack.c.l.s4 1966171168
        %v3363 = vunpack.c.0.s8 %v3362
        %v3364 = vlaneseq
        %v3365 = vshrl.u32 %v3364, 7
        %v3366 = vsub.s32 %v3363, %v3365
        %v3367 = vrot.slane %v3357, %v3366
        %v3369 = vunpack.c.l.s4 1966171168
        %v3370 = vunpack.c.0.s8 %v3369
        %v3371 = vlaneseq
        %v3372 = vshrl.u32 %v3371, 7
        %v3373 = vsub.s32 %v3370, %v3372
        %v3374 = vrot.slane %v3358, %v3373
        %v3376 = vunpack.c.l.s4 1966171168
        %v3377 = vunpack.c.0.s8 %v3376
        %v3378 = vlaneseq
        %v3379 = vshrl.u32 %v3378, 7
        %v3380 = vsub.s32 %v3377, %v3379
        %v3381 = vrot.slane %v3359, %v3380
        %v3383 = vunpack.c.l.s4 1966171168
        %v3384 = vunpack.c.0.s8 %v3383
        %v3385 = vlaneseq
        %v3386 = vshrl.u32 %v3385, 7
        %v3387 = vsub.s32 %v3384, %v3386
        %v3388 = vrot.slane %v3360, %v3387
        %v3389 = vcombine.low %v3367, %v3374
        %v3390 = vcombine.low %v3381, %v3388
        %v3392 = vunpack.c.l.s4 1966171168
        %v3393 = vunpack.c.0.s8 %v3392
        %v3394 = vlaneseq
        %v3395 = vshrl.u32 %v3394, 7
        %v3396 = vsub.s32 %v3393, %v3395
        %v3397 = vrot.slane %v3389, %v3396
        %v3399 = vunpack.c.l.s4 1966171168
        %v3400 = vunpack.c.0.s8 %v3399
        %v3401 = vlaneseq
        %v3402 = vshrl.u32 %v3401, 7
        %v3403 = vsub.s32 %v3400, %v3402
        %v3404 = vrot.slane %v3390, %v3403
        %v3405 = vcombine.low %v3397, %v3404
        %v3406 = vcombine.low %v2366, %v2367
        %v3407 = vcombine.low %v2368, %v2383
        %v3408 = vcombine.low %v2390, %v2391
        %v3409 = vcombine.low %v2392, %v2406
        %v3411 = vunpack.c.l.s4 1966171168
        %v3412 = vunpack.c.0.s8 %v3411
        %v3413 = vlaneseq
        %v3414 = vshrl.u32 %v3413, 7
        %v3415 = vsub.s32 %v3412, %v3414
        %v3416 = vrot.slane %v3406, %v3415
        %v3418 = vunpack.c.l.s4 1966171168
        %v3419 = vunpack.c.0.s8 %v3418
        %v3420 = vlaneseq
        %v3421 = vshrl.u32 %v3420, 7
        %v3422 = vsub.s32 %v3419, %v3421
        %v3423 = vrot.slane %v3407, %v3422
        %v3425 = vunpack.c.l.s4 1966171168
        %v3426 = vunpack.c.0.s8 %v3425
        %v3427 = vlaneseq
        %v3428 = vshrl.u32 %v3427, 7
        %v3429 = vsub.s32 %v3426, %v3428
        %v3430 = vrot.slane %v3408, %v3429
        %v3432 = vunpack.c.l.s4 1966171168
        %v3433 = vunpack.c.0.s8 %v3432
        %v3434 = vlaneseq
        %v3435 = vshrl.u32 %v3434, 7
        %v3436 = vsub.s32 %v3433, %v3435
        %v3437 = vrot.slane %v3409, %v3436
        %v3438 = vcombine.low %v3416, %v3423
        %v3439 = vcombine.low %v3430, %v3437
        %v3441 = vunpack.c.l.s4 1966171168
        %v3442 = vunpack.c.0.s8 %v3441
        %v3443 = vlaneseq
        %v3444 = vshrl.u32 %v3443, 7
        %v3445 = vsub.s32 %v3442, %v3444
        %v3446 = vrot.slane %v3438, %v3445
        %v3448 = vunpack.c.l.s4 1966171168
        %v3449 = vunpack.c.0.s8 %v3448
        %v3450 = vlaneseq
        %v3451 = vshrl.u32 %v3450, 7
        %v3452 = vsub.s32 %v3449, %v3451
        %v3453 = vrot.slane %v3439, %v3452
        %v3454 = vcombine.low %v3446, %v3453
        %v3489 = vunpack.c.l.b16 %v2551
        %v3490 = vunpack.c.l.b16 %v2552
        %v3491 = vunpack.c.l.b16 %v2553
        %v3492 = vunpack.c.l.b16 %v2554
        %v3493 = vunpack.c.l.b16 %v2555
        %v3494 = vunpack.c.l.b16 %v2556
        %v3495 = vunpack.c.l.b16 %v2557
        %v3496 = vunpack.c.l.b16 %v2558
        %v3497 = vunpack.c.l.b16 %v2559
        %v3498 = vunpack.c.l.b16 %v2560
        %v3499 = vunpack.c.l.b16 %v2561
        %v3500 = vunpack.c.l.b16 %v2562
        %v3501 = vunpack.c.l.b16 %v2563
        %v3502 = vunpack.c.l.b16 %v2564
        %v3503 = vunpack.c.l.b16 %v2565
        %v3504 = vunpack.c.l.b16 %v2566
        %v3505 = vpack.c.b16 %v3490, %v3489
        %v3506 = vpack.c.b16 %v3492, %v3491
        %v3507 = vpack.c.b16 %v3494, %v3493
        %v3508 = vpack.c.b16 %v3496, %v3495
        %v3509 = vpack.c.b16 %v3498, %v3497
        %v3510 = vpack.c.b16 %v3500, %v3499
        %v3511 = vpack.c.b16 %v3502, %v3501
        %v3512 = vpack.c.b16 %v3504, %v3503
        %3521 = vmatprep.subr.bf16.mxu0 0
        %3522 = vmatpush1.bf16.msra.mxu0 %v3512
        %3523 = vmatprep.subr.bf16.mxu0 0
        %3524 = vmatpush1.bf16.msra.mxu0 %v3511
        %3525 = vmatprep.subr.bf16.mxu0 0
        %3526 = vmatpush1.bf16.msra.mxu0 %v3510
        %3527 = vmatprep.subr.bf16.mxu0 0
        %3528 = vmatpush1.bf16.msra.mxu0 %v3509
        %3529 = vmatprep.subr.bf16.mxu0 0
        %3530 = vmatpush1.bf16.msra.mxu0 %v3508
        %3531 = vmatprep.subr.bf16.mxu0 0
        %3532 = vmatpush1.bf16.msra.mxu0 %v3507
        %3533 = vmatprep.subr.bf16.mxu0 0
        %3534 = vmatpush1.bf16.msra.mxu0 %v3506
        %3535 = vmatprep.subr.bf16.mxu0 0
        %3536 = vmatpush1.bf16.msra.mxu0 %v3505
        %3537 = vmatprep.subr.bf16.mxu0 0
        %3538 = vmatpush2.bf16.msra.mxu0 0
        %3539 = vmatprep.subr.bf16.mxu0 0
        %3540 = vmatpush2.bf16.msra.mxu0 0
        %3541 = vmatprep.subr.bf16.mxu0 0
        %3542 = vmatpush2.bf16.msra.mxu0 0
        %3543 = vmatprep.subr.bf16.mxu0 0
        %3544 = vmatpush2.bf16.msra.mxu0 0
        %3545 = vmatprep.subr.bf16.mxu0 0
        %3546 = vmatpush2.bf16.msra.mxu0 0
        %3547 = vmatprep.subr.bf16.mxu0 0
        %3548 = vmatpush2.bf16.msra.mxu0 0
        %3549 = vmatprep.subr.bf16.mxu0 0
        %3550 = vmatpush2.bf16.msra.mxu0 0
        %3551 = vmatprep.subr.bf16.mxu0 0
        %3552 = vmatpush2.bf16.msra.mxu0 0
        %3553 = vmatprep.mubr.bf16.mxu0 0
        %3554 = vmatmul.mubr.bf16.gmra.mxu0 %v2621
        %v3555 = vpop.f32.mrf.mxu0
        %v3556 = vadd.f32 %v2571, %v3555
        %v3557 = vpop.f32.mrf.mxu0
        %v3558 = vpop.f32.mrf.mxu0
        %v3559 = vadd.f32 %v2571, %v3558
        %v3560 = vpop.f32.mrf.mxu0
        %3561 = vmatprep.mubr.bf16.mxu0 0
        %3562 = vmatmul.mubr.bf16.gmra.mxu0 %v2670
        %v3563 = vpop.f32.mrf.mxu0
        %v3564 = vadd.f32 %v2571, %v3563
        %v3565 = vpop.f32.mrf.mxu0
        %v3566 = vpop.f32.mrf.mxu0
        %v3567 = vadd.f32 %v2571, %v3566
        %v3568 = vpop.f32.mrf.mxu0
        %3569 = vmatprep.mubr.bf16.mxu0 0
        %3570 = vmatmul.mubr.bf16.gmra.mxu0 %v2719
        %v3571 = vpop.f32.mrf.mxu0
        %v3572 = vadd.f32 %v2571, %v3571
        %v3573 = vpop.f32.mrf.mxu0
        %v3574 = vpop.f32.mrf.mxu0
        %v3575 = vadd.f32 %v2571, %v3574
        %v3576 = vpop.f32.mrf.mxu0
        %3577 = vmatprep.mubr.bf16.mxu0 0
        %3578 = vmatmul.mubr.bf16.gmra.mxu0 %v2768
        %v3579 = vpop.f32.mrf.mxu0
        %v3580 = vadd.f32 %v2571, %v3579
        %v3581 = vpop.f32.mrf.mxu0
        %v3582 = vpop.f32.mrf.mxu0
        %v3583 = vadd.f32 %v2571, %v3582
        %v3584 = vpop.f32.mrf.mxu0
        %3585 = vmatprep.mubr.bf16.mxu0 0
        %3586 = vmatmul.mubr.bf16.gmra.mxu0 %v2817
        %v3587 = vpop.f32.mrf.mxu0
        %v3588 = vadd.f32 %v2571, %v3587
        %v3589 = vpop.f32.mrf.mxu0
        %v3590 = vpop.f32.mrf.mxu0
        %v3591 = vadd.f32 %v2571, %v3590
        %v3592 = vpop.f32.mrf.mxu0
        %3593 = vmatprep.mubr.bf16.mxu0 0
        %3594 = vmatmul.mubr.bf16.gmra.mxu0 %v2866
        %v3595 = vpop.f32.mrf.mxu0
        %v3596 = vadd.f32 %v2571, %v3595
        %v3597 = vpop.f32.mrf.mxu0
        %v3598 = vpop.f32.mrf.mxu0
        %v3599 = vadd.f32 %v2571, %v3598
        %v3600 = vpop.f32.mrf.mxu0
        %3601 = vmatprep.mubr.bf16.mxu0 0
        %3602 = vmatmul.mubr.bf16.gmra.mxu0 %v2915
        %v3603 = vpop.f32.mrf.mxu0
        %v3604 = vadd.f32 %v2571, %v3603
        %v3605 = vpop.f32.mrf.mxu0
        %v3606 = vpop.f32.mrf.mxu0
        %v3607 = vadd.f32 %v2571, %v3606
        %v3608 = vpop.f32.mrf.mxu0
        %3609 = vmatprep.mubr.bf16.mxu0 0
        %3610 = vmatmul.mubr.bf16.gmra.mxu0 %v2964
        %v3611 = vpop.f32.mrf.mxu0
        %v3612 = vadd.f32 %v2571, %v3611
        %v3613 = vpop.f32.mrf.mxu0
        %v3614 = vpop.f32.mrf.mxu0
        %v3615 = vadd.f32 %v2571, %v3614
        %v3616 = vpop.f32.mrf.mxu0
        %3617 = vmatprep.mubr.bf16.mxu0 0
        %3618 = vmatmul.mubr.bf16.gmra.mxu0 %v3013
        %v3619 = vpop.f32.mrf.mxu0
        %v3620 = vadd.f32 %v2571, %v3619
        %v3621 = vpop.f32.mrf.mxu0
        %v3622 = vpop.f32.mrf.mxu0
        %v3623 = vadd.f32 %v2571, %v3622
        %v3624 = vpop.f32.mrf.mxu0
        %3625 = vmatprep.mubr.bf16.mxu0 0
        %3626 = vmatmul.mubr.bf16.gmra.mxu0 %v3062
        %v3627 = vpop.f32.mrf.mxu0
        %v3628 = vadd.f32 %v2571, %v3627
        %v3629 = vpop.f32.mrf.mxu0
        %v3630 = vpop.f32.mrf.mxu0
        %v3631 = vadd.f32 %v2571, %v3630
        %v3632 = vpop.f32.mrf.mxu0
        %3633 = vmatprep.mubr.bf16.mxu0 0
        %3634 = vmatmul.mubr.bf16.gmra.mxu0 %v3111
        %v3635 = vpop.f32.mrf.mxu0
        %v3636 = vadd.f32 %v2571, %v3635
        %v3637 = vpop.f32.mrf.mxu0
        %v3638 = vpop.f32.mrf.mxu0
        %v3639 = vadd.f32 %v2571, %v3638
        %v3640 = vpop.f32.mrf.mxu0
        %3641 = vmatprep.mubr.bf16.mxu0 0
        %3642 = vmatmul.mubr.bf16.gmra.mxu0 %v3160
        %v3643 = vpop.f32.mrf.mxu0
        %v3644 = vadd.f32 %v2571, %v3643
        %v3645 = vpop.f32.mrf.mxu0
        %v3646 = vpop.f32.mrf.mxu0
        %v3647 = vadd.f32 %v2571, %v3646
        %v3648 = vpop.f32.mrf.mxu0
        %3649 = vmatprep.mubr.bf16.mxu0 0
        %3650 = vmatmul.mubr.bf16.gmra.mxu0 %v3209
        %v3651 = vpop.f32.mrf.mxu0
        %v3652 = vadd.f32 %v2571, %v3651
        %v3653 = vpop.f32.mrf.mxu0
        %v3654 = vpop.f32.mrf.mxu0
        %v3655 = vadd.f32 %v2571, %v3654
        %v3656 = vpop.f32.mrf.mxu0
        %3657 = vmatprep.mubr.bf16.mxu0 0
        %3658 = vmatmul.mubr.bf16.gmra.mxu0 %v3258
        %v3659 = vpop.f32.mrf.mxu0
        %v3660 = vadd.f32 %v2571, %v3659
        %v3661 = vpop.f32.mrf.mxu0
        %v3662 = vpop.f32.mrf.mxu0
        %v3663 = vadd.f32 %v2571, %v3662
        %v3664 = vpop.f32.mrf.mxu0
        %3665 = vmatprep.mubr.bf16.mxu0 0
        %3666 = vmatmul.mubr.bf16.gmra.mxu0 %v3307
        %v3667 = vpop.f32.mrf.mxu0
        %v3668 = vadd.f32 %v2571, %v3667
        %v3669 = vpop.f32.mrf.mxu0
        %v3670 = vpop.f32.mrf.mxu0
        %v3671 = vadd.f32 %v2571, %v3670
        %v3672 = vpop.f32.mrf.mxu0
        %3673 = vmatprep.mubr.bf16.mxu0 0
        %3674 = vmatmul.mubr.bf16.gmra.mxu0 %v3356
        %v3675 = vpop.f32.mrf.mxu0
        %v3676 = vadd.f32 %v2571, %v3675
        %v3677 = vpop.f32.mrf.mxu0
        %v3678 = vpop.f32.mrf.mxu0
        %v3679 = vadd.f32 %v2571, %v3678
        %v3680 = vpop.f32.mrf.mxu0
        %3681 = vmatprep.mubr.bf16.mxu0 0
        %3682 = vmatmul.mubr.bf16.gmra.mxu0 %v3405
        %v3683 = vpop.f32.mrf.mxu0
        %v3684 = vadd.f32 %v2571, %v3683
        %v3685 = vpop.f32.mrf.mxu0
        %v3686 = vpop.f32.mrf.mxu0
        %v3687 = vadd.f32 %v2571, %v3686
        %v3688 = vpop.f32.mrf.mxu0
        %3689 = vmatprep.mubr.bf16.mxu0 0
        %3690 = vmatmul.mubr.bf16.gmra.mxu0 %v3454
        %v3691 = vpop.f32.mrf.mxu0
        %v3692 = vadd.f32 %v2571, %v3691
        %v3693 = vpop.f32.mrf.mxu0
        %v3694 = vpop.f32.mrf.mxu0
        %v3695 = vadd.f32 %v2571, %v3694
        %v3696 = vpop.f32.mrf.mxu0
        %3697 = vdwg.mxu0
        %v3698 = vmax.f32 %v3556, 0.0
        %v3699 = vmax.f32 %v3559, 0.0
        %v3700 = vmax.f32 %v3564, 0.0
        %v3701 = vmax.f32 %v3567, 0.0
        %v3702 = vmax.f32 %v3572, 0.0
        %v3703 = vmax.f32 %v3575, 0.0
        %v3704 = vmax.f32 %v3580, 0.0
        %v3705 = vmax.f32 %v3583, 0.0
        %v3706 = vmax.f32 %v3588, 0.0
        %v3707 = vmax.f32 %v3591, 0.0
        %v3708 = vmax.f32 %v3596, 0.0
        %v3709 = vmax.f32 %v3599, 0.0
        %v3710 = vmax.f32 %v3604, 0.0
        %v3711 = vmax.f32 %v3607, 0.0
        %v3712 = vmax.f32 %v3612, 0.0
        %v3713 = vmax.f32 %v3615, 0.0
        %v3714 = vmax.f32 %v3620, 0.0
        %v3715 = vmax.f32 %v3623, 0.0
        %v3716 = vmax.f32 %v3628, 0.0
        %v3717 = vmax.f32 %v3631, 0.0
        %v3718 = vmax.f32 %v3636, 0.0
        %v3719 = vmax.f32 %v3639, 0.0
        %v3720 = vmax.f32 %v3644, 0.0
        %v3721 = vmax.f32 %v3647, 0.0
        %v3722 = vmax.f32 %v3652, 0.0
        %v3723 = vmax.f32 %v3655, 0.0
        %v3724 = vmax.f32 %v3660, 0.0
        %v3725 = vmax.f32 %v3663, 0.0
        %v3726 = vmax.f32 %v3668, 0.0
        %v3727 = vmax.f32 %v3671, 0.0
        %v3728 = vmax.f32 %v3676, 0.0
        %v3729 = vmax.f32 %v3679, 0.0
        %v3730 = vmax.f32 %v3684, 0.0
        %v3731 = vmax.f32 %v3687, 0.0
        %v3732 = vmax.f32 %v3692, 0.0
        %v3733 = vmax.f32 %v3695, 0.0
        %v3734 = vpack.c.bf16 %v3699, %v3698
        %v3735 = vpack.c.bf16 %v3701, %v3700
        %v3736 = vpack.c.bf16 %v3703, %v3702
        %v3737 = vpack.c.bf16 %v3705, %v3704
        %v3738 = vpack.c.bf16 %v3707, %v3706
        %v3739 = vpack.c.bf16 %v3709, %v3708
        %v3740 = vpack.c.bf16 %v3711, %v3710
        %v3741 = vpack.c.bf16 %v3713, %v3712
        %v3742 = vpack.c.bf16 %v3715, %v3714
        %v3743 = vpack.c.bf16 %v3717, %v3716
        %v3744 = vpack.c.bf16 %v3719, %v3718
        %v3745 = vpack.c.bf16 %v3721, %v3720
        %v3746 = vpack.c.bf16 %v3723, %v3722
        %v3747 = vpack.c.bf16 %v3725, %v3724
        %v3748 = vpack.c.bf16 %v3727, %v3726
        %v3749 = vpack.c.bf16 %v3729, %v3728
        %v3750 = vpack.c.bf16 %v3731, %v3730
        %v3751 = vpack.c.bf16 %v3733, %v3732
        %v3752 = vmul.bf16 %v3734, %v1285
        %v3753 = vmul.bf16 %v3735, %v1286
        %v3754 = vmul.bf16 %v3736, %v1287
        %v3755 = vmul.bf16 %v3737, %v1288
        %v3756 = vmul.bf16 %v3738, %v1289
        %v3757 = vmul.bf16 %v3739, %v1290
        %v3758 = vmul.bf16 %v3740, %v1291
        %v3759 = vmul.bf16 %v3741, %v1292
        %v3760 = vmul.bf16 %v3742, %v1293
        %v3761 = vmul.bf16 %v3743, %v1294
        %v3762 = vmul.bf16 %v3744, %v1295
        %v3763 = vmul.bf16 %v3745, %v1296
        %v3764 = vmul.bf16 %v3746, %v1297
        %v3765 = vmul.bf16 %v3747, %v1298
        %v3766 = vmul.bf16 %v3748, %v1299
        %v3767 = vmul.bf16 %v3749, %v1300
        %v3768 = vmul.bf16 %v3750, %v1301
        %v3769 = vmul.bf16 %v3751, %v1302
        %v3788 = vunpack.c.l.b16 %v3752
        %v3789 = vunpack.c.h.b16 %v3752
        %v3790 = vunpack.c.l.b16 %v3753
        %v3791 = vunpack.c.h.b16 %v3753
        %v3792 = vunpack.c.l.b16 %v3754
        %v3793 = vunpack.c.h.b16 %v3754
        %v3794 = vunpack.c.l.b16 %v3755
        %v3795 = vunpack.c.h.b16 %v3755
        %v3796 = vunpack.c.l.b16 %v3756
        %v3797 = vunpack.c.h.b16 %v3756
        %v3798 = vunpack.c.l.b16 %v3757
        %v3799 = vunpack.c.h.b16 %v3757
        %v3800 = vunpack.c.l.b16 %v3758
        %v3801 = vunpack.c.h.b16 %v3758
        %v3802 = vunpack.c.l.b16 %v3759
        %v3803 = vunpack.c.h.b16 %v3759
        %v3804 = vunpack.c.l.b16 %v3760
        %v3805 = vunpack.c.h.b16 %v3760
        %v3806 = vunpack.c.l.b16 %v3761
        %v3807 = vunpack.c.h.b16 %v3761
        %v3808 = vunpack.c.l.b16 %v3762
        %v3809 = vunpack.c.h.b16 %v3762
        %v3810 = vunpack.c.l.b16 %v3763
        %v3811 = vunpack.c.h.b16 %v3763
        %v3812 = vunpack.c.l.b16 %v3764
        %v3813 = vunpack.c.h.b16 %v3764
        %v3814 = vunpack.c.l.b16 %v3765
        %v3815 = vunpack.c.h.b16 %v3765
        %v3816 = vunpack.c.l.b16 %v3766
        %v3817 = vunpack.c.h.b16 %v3766
        %v3818 = vunpack.c.l.b16 %v3767
        %v3819 = vunpack.c.h.b16 %v3767
        %v3820 = vunpack.c.l.b16 %v3768
        %v3821 = vunpack.c.h.b16 %v3768
        %v3822 = vunpack.c.l.b16 %v3769
        %v3823 = vunpack.c.h.b16 %v3769
        %v3824 = vpack.c.b16 %v3788, %v3788
        %v3825 = vpack.c.b16 %v3789, %v3789
        %v3826 = vpack.c.b16 %v3790, %v3790
        %v3827 = vpack.c.b16 %v3791, %v3791
        %v3828 = vpack.c.b16 %v3792, %v3792
        %v3829 = vpack.c.b16 %v3793, %v3793
        %v3830 = vpack.c.b16 %v3794, %v3794
        %v3831 = vpack.c.b16 %v3795, %v3795
        %v3832 = vpack.c.b16 %v3796, %v3796
        %v3833 = vpack.c.b16 %v3797, %v3797
        %v3834 = vpack.c.b16 %v3798, %v3798
        %v3835 = vpack.c.b16 %v3799, %v3799
        %v3836 = vpack.c.b16 %v3800, %v3800
        %v3837 = vpack.c.b16 %v3801, %v3801
        %v3838 = vpack.c.b16 %v3802, %v3802
        %v3839 = vpack.c.b16 %v3803, %v3803
        %v3840 = vpack.c.b16 %v3804, %v3804
        %v3841 = vpack.c.b16 %v3805, %v3805
        %v3842 = vpack.c.b16 %v3806, %v3806
        %v3843 = vpack.c.b16 %v3807, %v3807
        %v3844 = vpack.c.b16 %v3808, %v3808
        %v3845 = vpack.c.b16 %v3809, %v3809
        %v3846 = vpack.c.b16 %v3810, %v3810
        %v3847 = vpack.c.b16 %v3811, %v3811
        %v3848 = vpack.c.b16 %v3812, %v3812
        %v3849 = vpack.c.b16 %v3813, %v3813
        %v3850 = vpack.c.b16 %v3814, %v3814
        %v3851 = vpack.c.b16 %v3815, %v3815
        %v3852 = vpack.c.b16 %v3816, %v3816
        %v3853 = vpack.c.b16 %v3817, %v3817
        %v3854 = vpack.c.b16 %v3818, %v3818
        %v3855 = vpack.c.b16 %v3819, %v3819
        %v3856 = vpack.c.b16 %v3820, %v3820
        %v3857 = vpack.c.b16 %v3821, %v3821
        %v3858 = vpack.c.b16 %v3822, %v3822
        %v3859 = vpack.c.b16 %v3823, %v3823
        %vm3860 = vsmask.f32 5392
        %vm3861 = vmor %vm1306, %vm3860
        %v3863 = vshrl.u32 %v3824, 16
        %v3865 = vrot.slane %v3863, 6
        %v3866 = vshll.u32 %v3824, 16
        %v3868 = vrot.slane %v3866, 7
        %v3869 = vor.u32 %v3865, %v3868
        %v3870 = vrot.slane %v3869, 4
        %v3872 = vshrl.u32 %v3825, 16
        %v3874 = vrot.slane %v3872, 6
        %v3875 = vshll.u32 %v3825, 16
        %v3877 = vrot.slane %v3875, 7
        %v3878 = vor.u32 %v3874, %v3877
        %v3879 = vsel %vm3861, %v3870, %v3878
        %v3880 = vrot.slane %v3878, 4
        %v3882 = vshrl.u32 %v3826, 16
        %v3884 = vrot.slane %v3882, 6
        %v3885 = vshll.u32 %v3826, 16
        %v3887 = vrot.slane %v3885, 7
        %v3888 = vor.u32 %v3884, %v3887
        %v3889 = vsel %vm3861, %v3880, %v3888
        %v3890 = vrot.slane %v3888, 4
        %v3892 = vshrl.u32 %v3827, 16
        %v3894 = vrot.slane %v3892, 6
        %v3895 = vshll.u32 %v3827, 16
        %v3897 = vrot.slane %v3895, 7
        %v3898 = vor.u32 %v3894, %v3897
        %v3899 = vsel %vm3861, %v3890, %v3898
        %v3900 = vrot.slane %v3898, 4
        %v3902 = vshrl.u32 %v3828, 16
        %v3904 = vrot.slane %v3902, 6
        %v3905 = vshll.u32 %v3828, 16
        %v3907 = vrot.slane %v3905, 7
        %v3908 = vor.u32 %v3904, %v3907
        %v3909 = vsel %vm3861, %v3900, %v3908
        %v3910 = vrot.slane %v3908, 4
        %v3912 = vshrl.u32 %v3829, 16
        %v3914 = vrot.slane %v3912, 6
        %v3915 = vshll.u32 %v3829, 16
        %v3917 = vrot.slane %v3915, 7
        %v3918 = vor.u32 %v3914, %v3917
        %v3919 = vsel %vm3861, %v3910, %v3918
        %v3920 = vrot.slane %v3918, 4
        %v3922 = vshrl.u32 %v3830, 16
        %v3924 = vrot.slane %v3922, 6
        %v3925 = vshll.u32 %v3830, 16
        %v3927 = vrot.slane %v3925, 7
        %v3928 = vor.u32 %v3924, %v3927
        %v3929 = vsel %vm3861, %v3920, %v3928
        %v3930 = vrot.slane %v3928, 4
        %v3932 = vshrl.u32 %v3831, 16
        %v3934 = vrot.slane %v3932, 6
        %v3935 = vshll.u32 %v3831, 16
        %v3937 = vrot.slane %v3935, 7
        %v3938 = vor.u32 %v3934, %v3937
        %v3939 = vsel %vm3861, %v3930, %v3938
        %v3940 = vrot.slane %v3938, 4
        %v3942 = vshrl.u32 %v3832, 16
        %v3944 = vrot.slane %v3942, 6
        %v3945 = vshll.u32 %v3832, 16
        %v3947 = vrot.slane %v3945, 7
        %v3948 = vor.u32 %v3944, %v3947
        %v3949 = vsel %vm3861, %v3940, %v3948
        %v3950 = vrot.slane %v3948, 4
        %v3952 = vshrl.u32 %v3833, 16
        %v3954 = vrot.slane %v3952, 6
        %v3955 = vshll.u32 %v3833, 16
        %v3957 = vrot.slane %v3955, 7
        %v3958 = vor.u32 %v3954, %v3957
        %v3959 = vsel %vm3861, %v3950, %v3958
        %v3960 = vrot.slane %v3958, 4
        %v3962 = vshrl.u32 %v3834, 16
        %v3964 = vrot.slane %v3962, 6
        %v3965 = vshll.u32 %v3834, 16
        %v3967 = vrot.slane %v3965, 7
        %v3968 = vor.u32 %v3964, %v3967
        %v3969 = vsel %vm3861, %v3960, %v3968
        %v3970 = vrot.slane %v3968, 4
        %v3972 = vshrl.u32 %v3835, 16
        %v3974 = vrot.slane %v3972, 6
        %v3975 = vshll.u32 %v3835, 16
        %v3977 = vrot.slane %v3975, 7
        %v3978 = vor.u32 %v3974, %v3977
        %v3979 = vsel %vm3861, %v3970, %v3978
        %v3980 = vrot.slane %v3978, 4
        %v3982 = vshrl.u32 %v3836, 16
        %v3984 = vrot.slane %v3982, 6
        %v3985 = vshll.u32 %v3836, 16
        %v3987 = vrot.slane %v3985, 7
        %v3988 = vor.u32 %v3984, %v3987
        %v3989 = vsel %vm3861, %v3980, %v3988
        %v3990 = vrot.slane %v3988, 4
        %v3992 = vshrl.u32 %v3837, 16
        %v3994 = vrot.slane %v3992, 6
        %v3995 = vshll.u32 %v3837, 16
        %v3997 = vrot.slane %v3995, 7
        %v3998 = vor.u32 %v3994, %v3997
        %v3999 = vsel %vm3861, %v3990, %v3998
        %v4000 = vrot.slane %v3998, 4
        %v4002 = vshrl.u32 %v3838, 16
        %v4004 = vrot.slane %v4002, 6
        %v4005 = vshll.u32 %v3838, 16
        %v4007 = vrot.slane %v4005, 7
        %v4008 = vor.u32 %v4004, %v4007
        %v4009 = vsel %vm3861, %v4000, %v4008
        %v4010 = vrot.slane %v4008, 4
        %v4012 = vshrl.u32 %v3839, 16
        %v4014 = vrot.slane %v4012, 6
        %v4015 = vshll.u32 %v3839, 16
        %v4017 = vrot.slane %v4015, 7
        %v4018 = vor.u32 %v4014, %v4017
        %v4019 = vsel %vm3861, %v4010, %v4018
        %v4020 = vrot.slane %v4018, 4
        %v4022 = vshrl.u32 %v3840, 16
        %v4024 = vrot.slane %v4022, 6
        %v4025 = vshll.u32 %v3840, 16
        %v4027 = vrot.slane %v4025, 7
        %v4028 = vor.u32 %v4024, %v4027
        %v4029 = vsel %vm3861, %v4020, %v4028
        %v4030 = vrot.slane %v4028, 4
        %v4032 = vshrl.u32 %v3841, 16
        %v4034 = vrot.slane %v4032, 6
        %v4035 = vshll.u32 %v3841, 16
        %v4037 = vrot.slane %v4035, 7
        %v4038 = vor.u32 %v4034, %v4037
        %v4039 = vsel %vm3861, %v4030, %v4038
        %v4040 = vrot.slane %v4038, 4
        %v4042 = vshrl.u32 %v3842, 16
        %v4044 = vrot.slane %v4042, 6
        %v4045 = vshll.u32 %v3842, 16
        %v4047 = vrot.slane %v4045, 7
        %v4048 = vor.u32 %v4044, %v4047
        %v4049 = vsel %vm3861, %v4040, %v4048
        %v4050 = vrot.slane %v4048, 4
        %v4052 = vshrl.u32 %v3843, 16
        %v4054 = vrot.slane %v4052, 6
        %v4055 = vshll.u32 %v3843, 16
        %v4057 = vrot.slane %v4055, 7
        %v4058 = vor.u32 %v4054, %v4057
        %v4059 = vsel %vm3861, %v4050, %v4058
        %v4060 = vrot.slane %v4058, 4
        %v4062 = vshrl.u32 %v3844, 16
        %v4064 = vrot.slane %v4062, 6
        %v4065 = vshll.u32 %v3844, 16
        %v4067 = vrot.slane %v4065, 7
        %v4068 = vor.u32 %v4064, %v4067
        %v4069 = vsel %vm3861, %v4060, %v4068
        %v4070 = vrot.slane %v4068, 4
        %v4072 = vshrl.u32 %v3845, 16
        %v4074 = vrot.slane %v4072, 6
        %v4075 = vshll.u32 %v3845, 16
        %v4077 = vrot.slane %v4075, 7
        %v4078 = vor.u32 %v4074, %v4077
        %v4079 = vsel %vm3861, %v4070, %v4078
        %v4080 = vrot.slane %v4078, 4
        %v4082 = vshrl.u32 %v3846, 16
        %v4084 = vrot.slane %v4082, 6
        %v4085 = vshll.u32 %v3846, 16
        %v4087 = vrot.slane %v4085, 7
        %v4088 = vor.u32 %v4084, %v4087
        %v4089 = vsel %vm3861, %v4080, %v4088
        %v4090 = vrot.slane %v4088, 4
        %v4092 = vshrl.u32 %v3847, 16
        %v4094 = vrot.slane %v4092, 6
        %v4095 = vshll.u32 %v3847, 16
        %v4097 = vrot.slane %v4095, 7
        %v4098 = vor.u32 %v4094, %v4097
        %v4099 = vsel %vm3861, %v4090, %v4098
        %v4100 = vrot.slane %v4098, 4
        %v4102 = vshrl.u32 %v3848, 16
        %v4104 = vrot.slane %v4102, 6
        %v4105 = vshll.u32 %v3848, 16
        %v4107 = vrot.slane %v4105, 7
        %v4108 = vor.u32 %v4104, %v4107
        %v4109 = vsel %vm3861, %v4100, %v4108
        %v4110 = vrot.slane %v4108, 4
        %v4112 = vshrl.u32 %v3849, 16
        %v4114 = vrot.slane %v4112, 6
        %v4115 = vshll.u32 %v3849, 16
        %v4117 = vrot.slane %v4115, 7
        %v4118 = vor.u32 %v4114, %v4117
        %v4119 = vsel %vm3861, %v4110, %v4118
        %v4120 = vrot.slane %v4118, 4
        %v4122 = vshrl.u32 %v3850, 16
        %v4124 = vrot.slane %v4122, 6
        %v4125 = vshll.u32 %v3850, 16
        %v4127 = vrot.slane %v4125, 7
        %v4128 = vor.u32 %v4124, %v4127
        %v4129 = vsel %vm3861, %v4120, %v4128
        %v4130 = vrot.slane %v4128, 4
        %v4132 = vshrl.u32 %v3851, 16
        %v4134 = vrot.slane %v4132, 6
        %v4135 = vshll.u32 %v3851, 16
        %v4137 = vrot.slane %v4135, 7
        %v4138 = vor.u32 %v4134, %v4137
        %v4139 = vsel %vm3861, %v4130, %v4138
        %v4140 = vrot.slane %v4138, 4
        %v4142 = vshrl.u32 %v3852, 16
        %v4144 = vrot.slane %v4142, 6
        %v4145 = vshll.u32 %v3852, 16
        %v4147 = vrot.slane %v4145, 7
        %v4148 = vor.u32 %v4144, %v4147
        %v4149 = vsel %vm3861, %v4140, %v4148
        %v4150 = vrot.slane %v4148, 4
        %v4152 = vshrl.u32 %v3853, 16
        %v4154 = vrot.slane %v4152, 6
        %v4155 = vshll.u32 %v3853, 16
        %v4157 = vrot.slane %v4155, 7
        %v4158 = vor.u32 %v4154, %v4157
        %v4159 = vsel %vm3861, %v4150, %v4158
        %v4160 = vrot.slane %v4158, 4
        %v4162 = vshrl.u32 %v3854, 16
        %v4164 = vrot.slane %v4162, 6
        %v4165 = vshll.u32 %v3854, 16
        %v4167 = vrot.slane %v4165, 7
        %v4168 = vor.u32 %v4164, %v4167
        %v4169 = vsel %vm3861, %v4160, %v4168
        %v4170 = vrot.slane %v4168, 4
        %v4172 = vshrl.u32 %v3855, 16
        %v4174 = vrot.slane %v4172, 6
        %v4175 = vshll.u32 %v3855, 16
        %v4177 = vrot.slane %v4175, 7
        %v4178 = vor.u32 %v4174, %v4177
        %v4179 = vsel %vm3861, %v4170, %v4178
        %v4180 = vrot.slane %v4178, 4
        %v4182 = vshrl.u32 %v3856, 16
        %v4184 = vrot.slane %v4182, 6
        %v4185 = vshll.u32 %v3856, 16
        %v4187 = vrot.slane %v4185, 7
        %v4188 = vor.u32 %v4184, %v4187
        %v4189 = vsel %vm3861, %v4180, %v4188
        %v4190 = vrot.slane %v4188, 4
        %v4192 = vshrl.u32 %v3857, 16
        %v4194 = vrot.slane %v4192, 6
        %v4195 = vshll.u32 %v3857, 16
        %v4197 = vrot.slane %v4195, 7
        %v4198 = vor.u32 %v4194, %v4197
        %v4199 = vsel %vm3861, %v4190, %v4198
        %v4200 = vrot.slane %v4198, 4
        %v4202 = vshrl.u32 %v3858, 16
        %v4204 = vrot.slane %v4202, 6
        %v4205 = vshll.u32 %v3858, 16
        %v4207 = vrot.slane %v4205, 7
        %v4208 = vor.u32 %v4204, %v4207
        %v4209 = vsel %vm3861, %v4200, %v4208
        %v4210 = vrot.slane %v4208, 4
        %v4212 = vshrl.u32 %v3859, 16
        %v4214 = vrot.slane %v4212, 6
        %v4215 = vshll.u32 %v3859, 16
        %v4217 = vrot.slane %v4215, 7
        %v4218 = vor.u32 %v4214, %v4217
        %v4219 = vsel %vm3861, %v4210, %v4218
        %v4220 = vrot.slane %v4218, 4
        %v4258 = vld [vmem:[#allocation2 + $0x8] sm:$0xe]
        %v4259 = vsel %vm1313, %v3869, %v4258
        %4260 = vst [vmem:[#allocation2 + $0x8] sm:$0xe] %v4259
        %4261 = vst [vmem:[#allocation2 + $0xc] sm:$0xf] %v3879
        %4262 = vst [vmem:[#allocation2 + $0x10] sm:$0xf] %v3889
        %4263 = vst [vmem:[#allocation2 + $0x14] sm:$0xf] %v3899
        %4264 = vst [vmem:[#allocation2 + $0x18] sm:$0xf] %v3909
        %4265 = vst [vmem:[#allocation2 + $0x1c] sm:$0xf] %v3919
        %4266 = vst [vmem:[#allocation2 + $0x20] sm:$0xf] %v3929
        %4267 = vst [vmem:[#allocation2 + $0x24] sm:$0xf] %v3939
        %4268 = vst [vmem:[#allocation2 + $0x28] sm:$0xf] %v3949
        %4269 = vst [vmem:[#allocation2 + $0x2c] sm:$0xf] %v3959
        %4270 = vst [vmem:[#allocation2 + $0x30] sm:$0xf] %v3969
        %4271 = vst [vmem:[#allocation2 + $0x34] sm:$0xf] %v3979
        %4272 = vst [vmem:[#allocation2 + $0x38] sm:$0xf] %v3989
        %4273 = vst [vmem:[#allocation2 + $0x3c] sm:$0xf] %v3999
        %4274 = vst [vmem:[#allocation2 + $0x40] sm:$0xf] %v4009
        %4275 = vst [vmem:[#allocation2 + $0x44] sm:$0xf] %v4019
        %4276 = vst [vmem:[#allocation2 + $0x48] sm:$0xf] %v4029
        %4277 = vst [vmem:[#allocation2 + $0x4c] sm:$0xf] %v4039
        %4278 = vst [vmem:[#allocation2 + $0x50] sm:$0xf] %v4049
        %4279 = vst [vmem:[#allocation2 + $0x54] sm:$0xf] %v4059
        %4280 = vst [vmem:[#allocation2 + $0x58] sm:$0xf] %v4069
        %4281 = vst [vmem:[#allocation2 + $0x5c] sm:$0xf] %v4079
        %4282 = vst [vmem:[#allocation2 + $0x60] sm:$0xf] %v4089
        %4283 = vst [vmem:[#allocation2 + $0x64] sm:$0xf] %v4099
        %4284 = vst [vmem:[#allocation2 + $0x68] sm:$0xf] %v4109
        %4285 = vst [vmem:[#allocation2 + $0x6c] sm:$0xf] %v4119
        %4286 = vst [vmem:[#allocation2 + $0x70] sm:$0xf] %v4129
        %4287 = vst [vmem:[#allocation2 + $0x74] sm:$0xf] %v4139
        %4288 = vst [vmem:[#allocation2 + $0x78] sm:$0xf] %v4149
        %4289 = vst [vmem:[#allocation2 + $0x7c] sm:$0xf] %v4159
        %4290 = vst [vmem:[#allocation2 + $0x80] sm:$0xf] %v4169
        %4291 = vst [vmem:[#allocation2 + $0x84] sm:$0xf] %v4179
        %4292 = vst [vmem:[#allocation2 + $0x88] sm:$0xf] %v4189
        %4293 = vst [vmem:[#allocation2 + $0x8c] sm:$0xf] %v4199
        %4294 = vst [vmem:[#allocation2 + $0x90] sm:$0xf] %v4209
        %4295 = vst [vmem:[#allocation2 + $0x94] sm:$0xf] %v4219
        %v4296 = vld [vmem:[#allocation2 + $0x98] sm:$0x3]
        %v4297 = vsel %vm1307, %v4220, %v4296
        %4298 = vst [vmem:[#allocation2 + $0x98] sm:$0x3] %v4297
        %p4299 = scmp.gt.s32.totalorder %s28, 0
        // Predicated region
        $region57: #{tpu_custom_call.1} parent=55 // pred_check
          %p4300 = pneg %p4299
        $region58: #{tpu_custom_call.1} parent=55 // pred_check_branch
          %4302 = sbr.rel (%p4300) target = $region60
        $region59: #{tpu_custom_call.1} parent=55 // pred_region
          %v4303 = vld [vmem:[%s462] sm:$0xf]
          %v4304 = vld [vmem:[%s462 + $0x4] sm:$0xf]
          %v4305 = vld [vmem:[%s462 + $0x8] sm:$0x1]
          %v4306 = vld [vmem:[%s3] sm:$0xf]
          %v4307 = vld [vmem:[%s3 + $0x4] sm:$0xf]
          %v4308 = vld [vmem:[%s3 + $0x8] sm:$0xf]
          %v4309 = vld [vmem:[%s3 + $0xc] sm:$0xf]
          %v4310 = vld [vmem:[%s3 + $0x10] sm:$0xf]
          %v4311 = vld [vmem:[%s3 + $0x14] sm:$0xf]
          %v4312 = vld [vmem:[%s3 + $0x18] sm:$0xf]
          %v4313 = vld [vmem:[%s3 + $0x1c] sm:$0xf]
          %v4314 = vld [vmem:[%s3 + $0x20] sm:$0xf]
          %v4315 = vld [vmem:[%s3 + $0x24] sm:$0xf]
          %v4316 = vld [vmem:[%s3 + $0x28] sm:$0xf]
          %v4317 = vld [vmem:[%s3 + $0x2c] sm:$0xf]
          %v4318 = vld [vmem:[%s3 + $0x30] sm:$0xf]
          %v4319 = vld [vmem:[%s3 + $0x34] sm:$0xf]
          %v4320 = vld [vmem:[%s3 + $0x38] sm:$0xf]
          %v4321 = vld [vmem:[%s3 + $0x3c] sm:$0xf]
          %v4325 = vunpack.c.l.b16 %v4303
          %v4326 = vunpack.c.l.b16 %v4304
          %v4327 = vunpack.c.l.b16 %v4305
          %v4328 = vpack.c.b16 %v4326, %v4325
          %v4329 = vpack.c.b16 %v4327, %v4327
          %v4348 = vunpack.c.l.b16 %v4306
          %v4349 = vunpack.c.l.b16 %v4307
          %v4350 = vunpack.c.l.b16 %v4308
          %v4351 = vunpack.c.l.b16 %v4309
          %v4352 = vunpack.c.l.b16 %v4310
          %v4353 = vunpack.c.l.b16 %v4311
          %v4354 = vunpack.c.l.b16 %v4312
          %v4355 = vunpack.c.l.b16 %v4313
          %v4356 = vunpack.c.l.b16 %v4314
          %v4357 = vunpack.c.l.b16 %v4315
          %v4358 = vunpack.c.l.b16 %v4316
          %v4359 = vunpack.c.l.b16 %v4317
          %v4360 = vunpack.c.l.b16 %v4318
          %v4361 = vunpack.c.l.b16 %v4319
          %v4362 = vunpack.c.l.b16 %v4320
          %v4363 = vunpack.c.l.b16 %v4321
          %v4364 = vpack.c.b16 %v4349, %v4348
          %v4365 = vpack.c.b16 %v4351, %v4350
          %v4366 = vpack.c.b16 %v4353, %v4352
          %v4367 = vpack.c.b16 %v4355, %v4354
          %v4368 = vpack.c.b16 %v4357, %v4356
          %v4369 = vpack.c.b16 %v4359, %v4358
          %v4370 = vpack.c.b16 %v4361, %v4360
          %v4371 = vpack.c.b16 %v4363, %v4362
          %4380 = vmatprep.subr.bf16.mxu0 0
          %4381 = vmatpush1.bf16.msra.mxu0 %v4371
          %4382 = vmatprep.subr.bf16.mxu0 0
          %4383 = vmatpush1.bf16.msra.mxu0 %v4370
          %4384 = vmatprep.subr.bf16.mxu0 0
          %4385 = vmatpush1.bf16.msra.mxu0 %v4369
          %4386 = vmatprep.subr.bf16.mxu0 0
          %4387 = vmatpush1.bf16.msra.mxu0 %v4368
          %4388 = vmatprep.subr.bf16.mxu0 0
          %4389 = vmatpush1.bf16.msra.mxu0 %v4367
          %4390 = vmatprep.subr.bf16.mxu0 0
          %4391 = vmatpush1.bf16.msra.mxu0 %v4366
          %4392 = vmatprep.subr.bf16.mxu0 0
          %4393 = vmatpush1.bf16.msra.mxu0 %v4365
          %4394 = vmatprep.subr.bf16.mxu0 0
          %4395 = vmatpush1.bf16.msra.mxu0 %v4364
          %4396 = vmatprep.subr.bf16.mxu0 0
          %4397 = vmatpush2.bf16.msra.mxu0 0
          %4398 = vmatprep.subr.bf16.mxu0 0
          %4399 = vmatpush2.bf16.msra.mxu0 0
          %4400 = vmatprep.subr.bf16.mxu0 0
          %4401 = vmatpush2.bf16.msra.mxu0 0
          %4402 = vmatprep.subr.bf16.mxu0 0
          %4403 = vmatpush2.bf16.msra.mxu0 0
          %4404 = vmatprep.subr.bf16.mxu0 0
          %4405 = vmatpush2.bf16.msra.mxu0 0
          %4406 = vmatprep.subr.bf16.mxu0 0
          %4407 = vmatpush2.bf16.msra.mxu0 0
          %4408 = vmatprep.subr.bf16.mxu0 0
          %4409 = vmatpush2.bf16.msra.mxu0 0
          %4410 = vmatprep.subr.bf16.mxu0 0
          %4411 = vmatpush2.bf16.msra.mxu0 0
          %4412 = vmatprep.mubr.bf16.mxu0 0
          %4413 = vmatmul.mubr.bf16.gmra.mxu0 %v4328
          %v4414 = vpop.f32.mrf.mxu0
          %v4415 = vadd.f32 %v2571, %v4414
          %v4416 = vpop.f32.mrf.mxu0
          %v4417 = vpop.f32.mrf.mxu0
          %v4418 = vadd.f32 %v2571, %v4417
          %v4419 = vpop.f32.mrf.mxu0
          %4420 = vmatprep.mubr.bf16.mxu0 0
          %4421 = vmatmul.mubr.bf16.gmra.mxu0 %v4329
          %v4422 = vpop.f32.mrf.mxu0
          %v4423 = vadd.f32 %v2571, %v4422
          %v4424 = vpop.f32.mrf.mxu0
          %v4425 = vpop.f32.mrf.mxu0
          %v4426 = vpop.f32.mrf.mxu0
          %4427 = vdwg.mxu0
          %v4428 = vmax.f32 %v4415, 0.0
          %v4429 = vmax.f32 %v4418, 0.0
          %v4430 = vmax.f32 %v4423, 0.0
          %v4431 = vpack.c.bf16 %v4429, %v4428
          %v4432 = vpack.c.bf16 %v4430, %v4430
          %v4433 = vmul.bf16 %v4431, %v1285
          %v4434 = vmul.bf16 %v4432, %v1286
          %v4437 = vunpack.c.l.b16 %v4433
          %v4438 = vunpack.c.h.b16 %v4433
          %v4439 = vunpack.c.l.b16 %v4434
          %v4440 = vpack.c.b16 %v4437, %v4437
          %v4441 = vpack.c.b16 %v4438, %v4438
          %v4442 = vpack.c.b16 %v4439, %v4439
          %vm4443 = vsmask.f32 256
          %vm4444 = vsmask.f32 4368
          %vm4445 = vmor %vm4443, %vm4444
          %v4447 = vshrl.u32 %v4440, 16
          %v4449 = vrot.slane %v4447, 7
          %v4450 = vshll.u32 %v4440, 16
          %v4452 = vor.u32 %v4449, %v4450
          %v4453 = vrot.slane %v4449, 4
          %v4455 = vshrl.u32 %v4441, 16
          %v4457 = vrot.slane %v4455, 7
          %v4458 = vshll.u32 %v4441, 16
          %v4460 = vor.u32 %v4457, %v4458
          %v4461 = vsel %vm4445, %v4453, %v4460
          %v4462 = vrot.slane %v4457, 4
          %v4464 = vshrl.u32 %v4442, 16
          %v4466 = vrot.slane %v4464, 7
          %v4467 = vshll.u32 %v4442, 16
          %v4469 = vor.u32 %v4466, %v4467
          %v4470 = vsel %vm4445, %v4462, %v4469
          %vm4474 = vcmask 1043456
          %vm4475 = vsmask.f32 7938
          %vm4476 = vmand %vm4474, %vm4475
          %v4477 = vld [vmem:[#allocation2] sm:$0xf]
          %v4478 = vsel %vm4476, %v4452, %v4477
          %4479 = vst [vmem:[#allocation2] sm:$0xf] %v4478
          %4480 = vst [vmem:[#allocation2 + $0x4] sm:$0xf] %v4461
          %v4481 = vld [vmem:[#allocation2 + $0x8] sm:$0x3]
          %v4482 = vsel %vm1307, %v4470, %v4481
          %4483 = vst [vmem:[#allocation2 + $0x8] sm:$0x3] %v4482
        $region60: #{tpu_custom_call.1} parent=55 // pred_fallthru
          _
        %p4484 = scmp.lt.s32.totalorder %s28, 0
        // Predicated region
        $region61: #{tpu_custom_call.1} parent=55 // pred_check
          %p4485 = pneg %p4484
        $region62: #{tpu_custom_call.1} parent=55 // pred_check_branch
          %4487 = sbr.rel (%p4485) target = $region64
        $region63: #{tpu_custom_call.1} parent=55 // pred_region
          %v4488 = vld [vmem:[%s480] sm:$0xf]
          %v4489 = vld [vmem:[%s480 + $0x4] sm:$0xf]
          %v4490 = vld [vmem:[%s480 + $0x8] sm:$0x1]
          %v4491 = vld [vmem:[%s3] sm:$0xf]
          %v4492 = vld [vmem:[%s3 + $0x4] sm:$0xf]
          %v4493 = vld [vmem:[%s3 + $0x8] sm:$0xf]
          %v4494 = vld [vmem:[%s3 + $0xc] sm:$0xf]
          %v4495 = vld [vmem:[%s3 + $0x10] sm:$0xf]
          %v4496 = vld [vmem:[%s3 + $0x14] sm:$0xf]
          %v4497 = vld [vmem:[%s3 + $0x18] sm:$0xf]
          %v4498 = vld [vmem:[%s3 + $0x1c] sm:$0xf]
          %v4499 = vld [vmem:[%s3 + $0x20] sm:$0xf]
          %v4500 = vld [vmem:[%s3 + $0x24] sm:$0xf]
          %v4501 = vld [vmem:[%s3 + $0x28] sm:$0xf]
          %v4502 = vld [vmem:[%s3 + $0x2c] sm:$0xf]
          %v4503 = vld [vmem:[%s3 + $0x30] sm:$0xf]
          %v4504 = vld [vmem:[%s3 + $0x34] sm:$0xf]
          %v4505 = vld [vmem:[%s3 + $0x38] sm:$0xf]
          %v4506 = vld [vmem:[%s3 + $0x3c] sm:$0xf]
          %v4510 = vunpack.c.l.b16 %v4488
          %v4511 = vunpack.c.l.b16 %v4489
          %v4512 = vunpack.c.l.b16 %v4490
          %v4513 = vpack.c.b16 %v4511, %v4510
          %v4514 = vpack.c.b16 %v4512, %v4512
          %v4533 = vunpack.c.l.b16 %v4491
          %v4534 = vunpack.c.l.b16 %v4492
          %v4535 = vunpack.c.l.b16 %v4493
          %v4536 = vunpack.c.l.b16 %v4494
          %v4537 = vunpack.c.l.b16 %v4495
          %v4538 = vunpack.c.l.b16 %v4496
          %v4539 = vunpack.c.l.b16 %v4497
          %v4540 = vunpack.c.l.b16 %v4498
          %v4541 = vunpack.c.l.b16 %v4499
          %v4542 = vunpack.c.l.b16 %v4500
          %v4543 = vunpack.c.l.b16 %v4501
          %v4544 = vunpack.c.l.b16 %v4502
          %v4545 = vunpack.c.l.b16 %v4503
          %v4546 = vunpack.c.l.b16 %v4504
          %v4547 = vunpack.c.l.b16 %v4505
          %v4548 = vunpack.c.l.b16 %v4506
          %v4549 = vpack.c.b16 %v4534, %v4533
          %v4550 = vpack.c.b16 %v4536, %v4535
          %v4551 = vpack.c.b16 %v4538, %v4537
          %v4552 = vpack.c.b16 %v4540, %v4539
          %v4553 = vpack.c.b16 %v4542, %v4541
          %v4554 = vpack.c.b16 %v4544, %v4543
          %v4555 = vpack.c.b16 %v4546, %v4545
          %v4556 = vpack.c.b16 %v4548, %v4547
          %4565 = vmatprep.subr.bf16.mxu0 0
          %4566 = vmatpush1.bf16.msra.mxu0 %v4556
          %4567 = vmatprep.subr.bf16.mxu0 0
          %4568 = vmatpush1.bf16.msra.mxu0 %v4555
          %4569 = vmatprep.subr.bf16.mxu0 0
          %4570 = vmatpush1.bf16.msra.mxu0 %v4554
          %4571 = vmatprep.subr.bf16.mxu0 0
          %4572 = vmatpush1.bf16.msra.mxu0 %v4553
          %4573 = vmatprep.subr.bf16.mxu0 0
          %4574 = vmatpush1.bf16.msra.mxu0 %v4552
          %4575 = vmatprep.subr.bf16.mxu0 0
          %4576 = vmatpush1.bf16.msra.mxu0 %v4551
          %4577 = vmatprep.subr.bf16.mxu0 0
          %4578 = vmatpush1.bf16.msra.mxu0 %v4550
          %4579 = vmatprep.subr.bf16.mxu0 0
          %4580 = vmatpush1.bf16.msra.mxu0 %v4549
          %4581 = vmatprep.subr.bf16.mxu0 0
          %4582 = vmatpush2.bf16.msra.mxu0 0
          %4583 = vmatprep.subr.bf16.mxu0 0
          %4584 = vmatpush2.bf16.msra.mxu0 0
          %4585 = vmatprep.subr.bf16.mxu0 0
          %4586 = vmatpush2.bf16.msra.mxu0 0
          %4587 = vmatprep.subr.bf16.mxu0 0
          %4588 = vmatpush2.bf16.msra.mxu0 0
          %4589 = vmatprep.subr.bf16.mxu0 0
          %4590 = vmatpush2.bf16.msra.mxu0 0
          %4591 = vmatprep.subr.bf16.mxu0 0
          %4592 = vmatpush2.bf16.msra.mxu0 0
          %4593 = vmatprep.subr.bf16.mxu0 0
          %4594 = vmatpush2.bf16.msra.mxu0 0
          %4595 = vmatprep.subr.bf16.mxu0 0
          %4596 = vmatpush2.bf16.msra.mxu0 0
          %4597 = vmatprep.mubr.bf16.mxu0 0
          %4598 = vmatmul.mubr.bf16.gmra.mxu0 %v4513
          %v4599 = vpop.f32.mrf.mxu0
          %v4600 = vadd.f32 %v2571, %v4599
          %v4601 = vpop.f32.mrf.mxu0
          %v4602 = vpop.f32.mrf.mxu0
          %v4603 = vadd.f32 %v2571, %v4602
          %v4604 = vpop.f32.mrf.mxu0
          %4605 = vmatprep.mubr.bf16.mxu0 0
          %4606 = vmatmul.mubr.bf16.gmra.mxu0 %v4514
          %v4607 = vpop.f32.mrf.mxu0
          %v4608 = vadd.f32 %v2571, %v4607
          %v4609 = vpop.f32.mrf.mxu0
          %v4610 = vpop.f32.mrf.mxu0
          %v4611 = vpop.f32.mrf.mxu0
          %4612 = vdwg.mxu0
          %v4613 = vmax.f32 %v4600, 0.0
          %v4614 = vmax.f32 %v4603, 0.0
          %v4615 = vmax.f32 %v4608, 0.0
          %v4616 = vpack.c.bf16 %v4614, %v4613
          %v4617 = vpack.c.bf16 %v4615, %v4615
          %v4618 = vmul.bf16 %v4616, %v1285
          %v4619 = vmul.bf16 %v4617, %v1286
          %v4622 = vunpack.c.l.b16 %v4618
          %v4623 = vunpack.c.h.b16 %v4618
          %v4624 = vunpack.c.l.b16 %v4619
          %v4625 = vpack.c.b16 %v4622, %v4622
          %v4626 = vpack.c.b16 %v4623, %v4623
          %v4627 = vpack.c.b16 %v4624, %v4624
          %v4629 = vshrl.u32 %v4625, 16
          %v4631 = vrot.slane %v4629, 6
          %v4632 = vshll.u32 %v4625, 16
          %v4634 = vrot.slane %v4632, 7
          %v4635 = vor.u32 %v4631, %v4634
          %v4636 = vrot.slane %v4635, 4
          %v4638 = vshrl.u32 %v4626, 16
          %v4640 = vrot.slane %v4638, 6
          %v4641 = vshll.u32 %v4626, 16
          %v4643 = vrot.slane %v4641, 7
          %v4644 = vor.u32 %v4640, %v4643
          %v4645 = vsel %vm3861, %v4636, %v4644
          %v4646 = vrot.slane %v4644, 4
          %v4648 = vshrl.u32 %v4627, 16
          %v4650 = vrot.slane %v4648, 6
          %v4651 = vshll.u32 %v4627, 16
          %v4653 = vrot.slane %v4651, 7
          %v4654 = vor.u32 %v4650, %v4653
          %v4655 = vsel %vm3861, %v4646, %v4654
          %v4659 = vld [vmem:[#allocation2 + $0x98] sm:$0xe]
          %v4660 = vsel %vm1313, %v4635, %v4659
          %4661 = vst [vmem:[#allocation2 + $0x98] sm:$0xe] %v4660
          %4662 = vst [vmem:[#allocation2 + $0x9c] sm:$0xf] %v4645
          %vm4663 = vcmask 1042432
          %vm4664 = vsmask.f32 2304
          %vm4665 = vmand %vm4663, %vm4664
          %v4666 = vld [vmem:[#allocation2 + $0xa0] sm:$0x7]
          %v4667 = vsel %vm4665, %v4655, %v4666
          %4668 = vst [vmem:[#allocation2 + $0xa0] sm:$0x7] %v4667
        $region64: #{tpu_custom_call.1} parent=55 // pred_fallthru
          _
        %v4669 = vld [vmem:[#allocation2] sm:$0xf]
        %v4670 = vld [vmem:[#allocation2 + $0x4] sm:$0xf]
        %v4671 = vld [vmem:[#allocation2 + $0x8] sm:$0xf]
        %v4672 = vld [vmem:[#allocation2 + $0xc] sm:$0xf]
        %v4673 = vld [vmem:[#allocation2 + $0x10] sm:$0xf]
        %v4674 = vld [vmem:[#allocation2 + $0x14] sm:$0xf]
        %v4675 = vld [vmem:[#allocation2 + $0x18] sm:$0xf]
        %v4676 = vld [vmem:[#allocation2 + $0x1c] sm:$0xf]
        %v4677 = vld [vmem:[#allocation2 + $0x20] sm:$0xf]
        %v4678 = vld [vmem:[#allocation2 + $0x24] sm:$0xf]
        %v4679 = vld [vmem:[#allocation2 + $0x28] sm:$0xf]
        %v4680 = vld [vmem:[#allocation2 + $0x2c] sm:$0xf]
        %v4681 = vld [vmem:[#allocation2 + $0x30] sm:$0xf]
        %v4682 = vld [vmem:[#allocation2 + $0x34] sm:$0xf]
        %v4683 = vld [vmem:[#allocation2 + $0x38] sm:$0xf]
        %v4684 = vld [vmem:[#allocation2 + $0x3c] sm:$0xf]
        %v4685 = vld [vmem:[#allocation2 + $0x40] sm:$0xf]
        %v4686 = vld [vmem:[#allocation2 + $0x44] sm:$0xf]
        %v4687 = vld [vmem:[#allocation2 + $0x48] sm:$0xf]
        %v4688 = vld [vmem:[#allocation2 + $0x4c] sm:$0xf]
        %v4689 = vld [vmem:[#allocation2 + $0x50] sm:$0xf]
        %v4690 = vld [vmem:[#allocation2 + $0x54] sm:$0xf]
        %v4691 = vld [vmem:[#allocation2 + $0x58] sm:$0xf]
        %v4692 = vld [vmem:[#allocation2 + $0x5c] sm:$0xf]
        %v4693 = vld [vmem:[#allocation2 + $0x60] sm:$0xf]
        %v4694 = vld [vmem:[#allocation2 + $0x64] sm:$0xf]
        %v4695 = vld [vmem:[#allocation2 + $0x68] sm:$0xf]
        %v4696 = vld [vmem:[#allocation2 + $0x6c] sm:$0xf]
        %v4697 = vld [vmem:[#allocation2 + $0x70] sm:$0xf]
        %v4698 = vld [vmem:[#allocation2 + $0x74] sm:$0xf]
        %v4699 = vld [vmem:[#allocation2 + $0x78] sm:$0xf]
        %v4700 = vld [vmem:[#allocation2 + $0x7c] sm:$0xf]
        %v4701 = vld [vmem:[#allocation2 + $0x80] sm:$0xf]
        %v4702 = vld [vmem:[#allocation2 + $0x84] sm:$0xf]
        %v4703 = vld [vmem:[#allocation2 + $0x88] sm:$0xf]
        %v4704 = vld [vmem:[#allocation2 + $0x8c] sm:$0xf]
        %v4705 = vld [vmem:[%s5] sm:$0xf]
        %v4706 = vld [vmem:[%s5 + $0x4] sm:$0xf]
        %v4707 = vld [vmem:[%s5 + $0x8] sm:$0xf]
        %v4708 = vld [vmem:[%s5 + $0xc] sm:$0xf]
        %v4709 = vld [vmem:[%s5 + $0x10] sm:$0xf]
        %v4710 = vld [vmem:[%s5 + $0x14] sm:$0xf]
        %v4711 = vld [vmem:[%s5 + $0x18] sm:$0xf]
        %v4712 = vld [vmem:[%s5 + $0x1c] sm:$0xf]
        %v4713 = vld [vmem:[%s5 + $0x20] sm:$0xf]
        %v4714 = vld [vmem:[%s5 + $0x24] sm:$0xf]
        %v4715 = vld [vmem:[%s5 + $0x28] sm:$0xf]
        %v4716 = vld [vmem:[%s5 + $0x2c] sm:$0xf]
        %v4717 = vld [vmem:[%s5 + $0x30] sm:$0xf]
        %v4718 = vld [vmem:[%s5 + $0x34] sm:$0xf]
        %v4719 = vld [vmem:[%s5 + $0x38] sm:$0xf]
        %v4720 = vld [vmem:[%s5 + $0x3c] sm:$0xf]
        %v4721 = vld [vmem:[#allocation2 + $0x90] sm:$0x1]
        %s4722 = scalar_lea.vmem %s5, 64
        %v4723 = vld [vmem:[%s4722] sm:$0xf]
        %v4724 = vld [vmem:[%s4722 + $0x4] sm:$0xf]
        %v4725 = vld [vmem:[%s4722 + $0x8] sm:$0xf]
        %v4726 = vld [vmem:[%s4722 + $0xc] sm:$0xf]
        %v4727 = vld [vmem:[%s4722 + $0x10] sm:$0xf]
        %v4728 = vld [vmem:[%s4722 + $0x14] sm:$0xf]
        %v4729 = vld [vmem:[%s4722 + $0x18] sm:$0xf]
        %v4730 = vld [vmem:[%s4722 + $0x1c] sm:$0xf]
        %v4731 = vld [vmem:[%s4722 + $0x20] sm:$0xf]
        %v4732 = vld [vmem:[%s4722 + $0x24] sm:$0xf]
        %v4733 = vld [vmem:[%s4722 + $0x28] sm:$0xf]
        %v4734 = vld [vmem:[%s4722 + $0x2c] sm:$0xf]
        %v4735 = vld [vmem:[%s4722 + $0x30] sm:$0xf]
        %v4736 = vld [vmem:[%s4722 + $0x34] sm:$0xf]
        %v4737 = vld [vmem:[%s4722 + $0x38] sm:$0xf]
        %v4738 = vld [vmem:[%s4722 + $0x3c] sm:$0xf]
        %v4776 = vunpack.c.l.b16 %v4669
        %v4777 = vunpack.c.l.b16 %v4670
        %v4778 = vunpack.c.l.b16 %v4671
        %v4779 = vunpack.c.l.b16 %v4672
        %v4780 = vunpack.c.l.b16 %v4673
        %v4781 = vunpack.c.l.b16 %v4674
        %v4782 = vunpack.c.l.b16 %v4675
        %v4783 = vunpack.c.l.b16 %v4676
        %v4784 = vunpack.c.l.b16 %v4677
        %v4785 = vunpack.c.l.b16 %v4678
        %v4786 = vunpack.c.l.b16 %v4679
        %v4787 = vunpack.c.l.b16 %v4680
        %v4788 = vunpack.c.l.b16 %v4681
        %v4789 = vunpack.c.l.b16 %v4682
        %v4790 = vunpack.c.l.b16 %v4683
        %v4791 = vunpack.c.l.b16 %v4684
        %v4792 = vunpack.c.l.b16 %v4685
        %v4793 = vunpack.c.l.b16 %v4686
        %v4794 = vunpack.c.l.b16 %v4687
        %v4795 = vunpack.c.l.b16 %v4688
        %v4796 = vunpack.c.l.b16 %v4689
        %v4797 = vunpack.c.l.b16 %v4690
        %v4798 = vunpack.c.l.b16 %v4691
        %v4799 = vunpack.c.l.b16 %v4692
        %v4800 = vunpack.c.l.b16 %v4693
        %v4801 = vunpack.c.l.b16 %v4694
        %v4802 = vunpack.c.l.b16 %v4695
        %v4803 = vunpack.c.l.b16 %v4696
        %v4804 = vunpack.c.l.b16 %v4697
        %v4805 = vunpack.c.l.b16 %v4698
        %v4806 = vunpack.c.l.b16 %v4699
        %v4807 = vunpack.c.l.b16 %v4700
        %v4808 = vunpack.c.l.b16 %v4701
        %v4809 = vunpack.c.l.b16 %v4702
        %v4810 = vunpack.c.l.b16 %v4703
        %v4811 = vunpack.c.l.b16 %v4704
        %v4812 = vunpack.c.l.b16 %v4721
        %v4813 = vpack.c.b16 %v4777, %v4776
        %v4814 = vpack.c.b16 %v4779, %v4778
        %v4815 = vpack.c.b16 %v4781, %v4780
        %v4816 = vpack.c.b16 %v4783, %v4782
        %v4817 = vpack.c.b16 %v4785, %v4784
        %v4818 = vpack.c.b16 %v4787, %v4786
        %v4819 = vpack.c.b16 %v4789, %v4788
        %v4820 = vpack.c.b16 %v4791, %v4790
        %v4821 = vpack.c.b16 %v4793, %v4792
        %v4822 = vpack.c.b16 %v4795, %v4794
        %v4823 = vpack.c.b16 %v4797, %v4796
        %v4824 = vpack.c.b16 %v4799, %v4798
        %v4825 = vpack.c.b16 %v4801, %v4800
        %v4826 = vpack.c.b16 %v4803, %v4802
        %v4827 = vpack.c.b16 %v4805, %v4804
        %v4828 = vpack.c.b16 %v4807, %v4806
        %v4829 = vpack.c.b16 %v4809, %v4808
        %v4830 = vpack.c.b16 %v4811, %v4810
        %v4831 = vpack.c.b16 %v4812, %v4812
        %vm4832 = vsmask.f32 7424
        %v4834 = vshrl.u32 %v4813, 16
        %v4836 = vshll.u32 %v4813, 16
        %v4838 = vrot.slane %v4836, 1
        %v4839 = vor.u32 %v4834, %v4838
        %v4841 = vshll.u32 %v4814, 16
        %v4843 = vrot.slane %v4841, 1
        %v4844 = vsel %vm4832, %v4839, %v4843
        %v4845 = vshrl.u32 %v4814, 16
        %v4847 = vor.u32 %v4845, %v4843
        %v4849 = vshll.u32 %v4815, 16
        %v4851 = vrot.slane %v4849, 1
        %v4852 = vsel %vm4832, %v4847, %v4851
        %v4853 = vshrl.u32 %v4815, 16
        %v4855 = vor.u32 %v4853, %v4851
        %v4857 = vshll.u32 %v4816, 16
        %v4859 = vrot.slane %v4857, 1
        %v4860 = vsel %vm4832, %v4855, %v4859
        %v4861 = vshrl.u32 %v4816, 16
        %v4863 = vor.u32 %v4861, %v4859
        %v4865 = vshll.u32 %v4817, 16
        %v4867 = vrot.slane %v4865, 1
        %v4868 = vsel %vm4832, %v4863, %v4867
        %v4869 = vshrl.u32 %v4817, 16
        %v4871 = vor.u32 %v4869, %v4867
        %v4873 = vshll.u32 %v4818, 16
        %v4875 = vrot.slane %v4873, 1
        %v4876 = vsel %vm4832, %v4871, %v4875
        %v4877 = vshrl.u32 %v4818, 16
        %v4879 = vor.u32 %v4877, %v4875
        %v4881 = vshll.u32 %v4819, 16
        %v4883 = vrot.slane %v4881, 1
        %v4884 = vsel %vm4832, %v4879, %v4883
        %v4885 = vshrl.u32 %v4819, 16
        %v4887 = vor.u32 %v4885, %v4883
        %v4889 = vshll.u32 %v4820, 16
        %v4891 = vrot.slane %v4889, 1
        %v4892 = vsel %vm4832, %v4887, %v4891
        %v4893 = vshrl.u32 %v4820, 16
        %v4895 = vor.u32 %v4893, %v4891
        %v4897 = vshll.u32 %v4821, 16
        %v4899 = vrot.slane %v4897, 1
        %v4900 = vsel %vm4832, %v4895, %v4899
        %v4901 = vshrl.u32 %v4821, 16
        %v4903 = vor.u32 %v4901, %v4899
        %v4905 = vshll.u32 %v4822, 16
        %v4907 = vrot.slane %v4905, 1
        %v4908 = vsel %vm4832, %v4903, %v4907
        %v4909 = vshrl.u32 %v4822, 16
        %v4911 = vor.u32 %v4909, %v4907
        %v4913 = vshll.u32 %v4823, 16
        %v4915 = vrot.slane %v4913, 1
        %v4916 = vsel %vm4832, %v4911, %v4915
        %v4917 = vshrl.u32 %v4823, 16
        %v4919 = vor.u32 %v4917, %v4915
        %v4921 = vshll.u32 %v4824, 16
        %v4923 = vrot.slane %v4921, 1
        %v4924 = vsel %vm4832, %v4919, %v4923
        %v4925 = vshrl.u32 %v4824, 16
        %v4927 = vor.u32 %v4925, %v4923
        %v4929 = vshll.u32 %v4825, 16
        %v4931 = vrot.slane %v4929, 1
        %v4932 = vsel %vm4832, %v4927, %v4931
        %v4933 = vshrl.u32 %v4825, 16
        %v4935 = vor.u32 %v4933, %v4931
        %v4937 = vshll.u32 %v4826, 16
        %v4939 = vrot.slane %v4937, 1
        %v4940 = vsel %vm4832, %v4935, %v4939
        %v4941 = vshrl.u32 %v4826, 16
        %v4943 = vor.u32 %v4941, %v4939
        %v4945 = vshll.u32 %v4827, 16
        %v4947 = vrot.slane %v4945, 1
        %v4948 = vsel %vm4832, %v4943, %v4947
        %v4949 = vshrl.u32 %v4827, 16
        %v4951 = vor.u32 %v4949, %v4947
        %v4953 = vshll.u32 %v4828, 16
        %v4955 = vrot.slane %v4953, 1
        %v4956 = vsel %vm4832, %v4951, %v4955
        %v4957 = vshrl.u32 %v4828, 16
        %v4959 = vor.u32 %v4957, %v4955
        %v4961 = vshll.u32 %v4829, 16
        %v4963 = vrot.slane %v4961, 1
        %v4964 = vsel %vm4832, %v4959, %v4963
        %v4965 = vshrl.u32 %v4829, 16
        %v4967 = vor.u32 %v4965, %v4963
        %v4969 = vshll.u32 %v4830, 16
        %v4971 = vrot.slane %v4969, 1
        %v4972 = vsel %vm4832, %v4967, %v4971
        %v4973 = vshrl.u32 %v4830, 16
        %v4975 = vor.u32 %v4973, %v4971
        %v4977 = vshll.u32 %v4831, 16
        %v4979 = vrot.slane %v4977, 1
        %v4980 = vsel %vm4832, %v4975, %v4979
        %v5015 = vunpack.c.l.b16 %v4723
        %v5016 = vunpack.c.l.b16 %v4724
        %v5017 = vunpack.c.l.b16 %v4725
        %v5018 = vunpack.c.l.b16 %v4726
        %v5019 = vunpack.c.l.b16 %v4727
        %v5020 = vunpack.c.l.b16 %v4728
        %v5021 = vunpack.c.l.b16 %v4729
        %v5022 = vunpack.c.l.b16 %v4730
        %v5023 = vunpack.c.l.b16 %v4731
        %v5024 = vunpack.c.l.b16 %v4732
        %v5025 = vunpack.c.l.b16 %v4733
        %v5026 = vunpack.c.l.b16 %v4734
        %v5027 = vunpack.c.l.b16 %v4735
        %v5028 = vunpack.c.l.b16 %v4736
        %v5029 = vunpack.c.l.b16 %v4737
        %v5030 = vunpack.c.l.b16 %v4738
        %v5031 = vpack.c.b16 %v5016, %v5015
        %v5032 = vpack.c.b16 %v5018, %v5017
        %v5033 = vpack.c.b16 %v5020, %v5019
        %v5034 = vpack.c.b16 %v5022, %v5021
        %v5035 = vpack.c.b16 %v5024, %v5023
        %v5036 = vpack.c.b16 %v5026, %v5025
        %v5037 = vpack.c.b16 %v5028, %v5027
        %v5038 = vpack.c.b16 %v5030, %v5029
        %5047 = vmatprep.subr.bf16.mxu0 0
        %5048 = vmatpush1.bf16.msra.mxu0 %v5038
        %5049 = vmatprep.subr.bf16.mxu0 0
        %5050 = vmatpush1.bf16.msra.mxu0 %v5037
        %5051 = vmatprep.subr.bf16.mxu0 0
        %5052 = vmatpush1.bf16.msra.mxu0 %v5036
        %5053 = vmatprep.subr.bf16.mxu0 0
        %5054 = vmatpush1.bf16.msra.mxu0 %v5035
        %5055 = vmatprep.subr.bf16.mxu0 0
        %5056 = vmatpush1.bf16.msra.mxu0 %v5034
        %5057 = vmatprep.subr.bf16.mxu0 0
        %5058 = vmatpush1.bf16.msra.mxu0 %v5033
        %5059 = vmatprep.subr.bf16.mxu0 0
        %5060 = vmatpush1.bf16.msra.mxu0 %v5032
        %5061 = vmatprep.subr.bf16.mxu0 0
        %5062 = vmatpush1.bf16.msra.mxu0 %v5031
        %5063 = vmatprep.subr.bf16.mxu0 0
        %5064 = vmatpush2.bf16.msra.mxu0 0
        %5065 = vmatprep.subr.bf16.mxu0 0
        %5066 = vmatpush2.bf16.msra.mxu0 0
        %5067 = vmatprep.subr.bf16.mxu0 0
        %5068 = vmatpush2.bf16.msra.mxu0 0
        %5069 = vmatprep.subr.bf16.mxu0 0
        %5070 = vmatpush2.bf16.msra.mxu0 0
        %5071 = vmatprep.subr.bf16.mxu0 0
        %5072 = vmatpush2.bf16.msra.mxu0 0
        %5073 = vmatprep.subr.bf16.mxu0 0
        %5074 = vmatpush2.bf16.msra.mxu0 0
        %5075 = vmatprep.subr.bf16.mxu0 0
        %5076 = vmatpush2.bf16.msra.mxu0 0
        %5077 = vmatprep.subr.bf16.mxu0 0
        %5078 = vmatpush2.bf16.msra.mxu0 0
        %5079 = vmatprep.mubr.bf16.mxu0 0
        %5080 = vmatmul.mubr.bf16.gmra.mxu0 %v4844
        %v5081 = vpop.f32.mrf.mxu0
        %v5082 = vadd.f32 0.0, %v5081
        %v5083 = vpop.f32.mrf.mxu0
        %v5084 = vpop.f32.mrf.mxu0
        %v5085 = vadd.f32 0.0, %v5084
        %v5086 = vpop.f32.mrf.mxu0
        %5087 = vmatprep.mubr.bf16.mxu0 0
        %5088 = vmatmul.mubr.bf16.gmra.mxu0 %v4852
        %v5089 = vpop.f32.mrf.mxu0
        %v5090 = vadd.f32 0.0, %v5089
        %v5091 = vpop.f32.mrf.mxu0
        %v5092 = vpop.f32.mrf.mxu0
        %v5093 = vadd.f32 0.0, %v5092
        %v5094 = vpop.f32.mrf.mxu0
        %5095 = vmatprep.mubr.bf16.mxu0 0
        %5096 = vmatmul.mubr.bf16.gmra.mxu0 %v4860
        %v5097 = vpop.f32.mrf.mxu0
        %v5098 = vadd.f32 0.0, %v5097
        %v5099 = vpop.f32.mrf.mxu0
        %v5100 = vpop.f32.mrf.mxu0
        %v5101 = vadd.f32 0.0, %v5100
        %v5102 = vpop.f32.mrf.mxu0
        %5103 = vmatprep.mubr.bf16.mxu0 0
        %5104 = vmatmul.mubr.bf16.gmra.mxu0 %v4868
        %v5105 = vpop.f32.mrf.mxu0
        %v5106 = vadd.f32 0.0, %v5105
        %v5107 = vpop.f32.mrf.mxu0
        %v5108 = vpop.f32.mrf.mxu0
        %v5109 = vadd.f32 0.0, %v5108
        %v5110 = vpop.f32.mrf.mxu0
        %5111 = vmatprep.mubr.bf16.mxu0 0
        %5112 = vmatmul.mubr.bf16.gmra.mxu0 %v4876
        %v5113 = vpop.f32.mrf.mxu0
        %v5114 = vadd.f32 0.0, %v5113
        %v5115 = vpop.f32.mrf.mxu0
        %v5116 = vpop.f32.mrf.mxu0
        %v5117 = vadd.f32 0.0, %v5116
        %v5118 = vpop.f32.mrf.mxu0
        %5119 = vmatprep.mubr.bf16.mxu0 0
        %5120 = vmatmul.mubr.bf16.gmra.mxu0 %v4884
        %v5121 = vpop.f32.mrf.mxu0
        %v5122 = vadd.f32 0.0, %v5121
        %v5123 = vpop.f32.mrf.mxu0
        %v5124 = vpop.f32.mrf.mxu0
        %v5125 = vadd.f32 0.0, %v5124
        %v5126 = vpop.f32.mrf.mxu0
        %5127 = vmatprep.mubr.bf16.mxu0 0
        %5128 = vmatmul.mubr.bf16.gmra.mxu0 %v4892
        %v5129 = vpop.f32.mrf.mxu0
        %v5130 = vadd.f32 0.0, %v5129
        %v5131 = vpop.f32.mrf.mxu0
        %v5132 = vpop.f32.mrf.mxu0
        %v5133 = vadd.f32 0.0, %v5132
        %v5134 = vpop.f32.mrf.mxu0
        %5135 = vmatprep.mubr.bf16.mxu0 0
        %5136 = vmatmul.mubr.bf16.gmra.mxu0 %v4900
        %v5137 = vpop.f32.mrf.mxu0
        %v5138 = vadd.f32 0.0, %v5137
        %v5139 = vpop.f32.mrf.mxu0
        %v5140 = vpop.f32.mrf.mxu0
        %v5141 = vadd.f32 0.0, %v5140
        %v5142 = vpop.f32.mrf.mxu0
        %5143 = vmatprep.mubr.bf16.mxu0 0
        %5144 = vmatmul.mubr.bf16.gmra.mxu0 %v4908
        %v5145 = vpop.f32.mrf.mxu0
        %v5146 = vadd.f32 0.0, %v5145
        %v5147 = vpop.f32.mrf.mxu0
        %v5148 = vpop.f32.mrf.mxu0
        %v5149 = vadd.f32 0.0, %v5148
        %v5150 = vpop.f32.mrf.mxu0
        %5151 = vmatprep.mubr.bf16.mxu0 0
        %5152 = vmatmul.mubr.bf16.gmra.mxu0 %v4916
        %v5153 = vpop.f32.mrf.mxu0
        %v5154 = vadd.f32 0.0, %v5153
        %v5155 = vpop.f32.mrf.mxu0
        %v5156 = vpop.f32.mrf.mxu0
        %v5157 = vadd.f32 0.0, %v5156
        %v5158 = vpop.f32.mrf.mxu0
        %5159 = vmatprep.mubr.bf16.mxu0 0
        %5160 = vmatmul.mubr.bf16.gmra.mxu0 %v4924
        %v5161 = vpop.f32.mrf.mxu0
        %v5162 = vadd.f32 0.0, %v5161
        %v5163 = vpop.f32.mrf.mxu0
        %v5164 = vpop.f32.mrf.mxu0
        %v5165 = vadd.f32 0.0, %v5164
        %v5166 = vpop.f32.mrf.mxu0
        %5167 = vmatprep.mubr.bf16.mxu0 0
        %5168 = vmatmul.mubr.bf16.gmra.mxu0 %v4932
        %v5169 = vpop.f32.mrf.mxu0
        %v5170 = vadd.f32 0.0, %v5169
        %v5171 = vpop.f32.mrf.mxu0
        %v5172 = vpop.f32.mrf.mxu0
        %v5173 = vadd.f32 0.0, %v5172
        %v5174 = vpop.f32.mrf.mxu0
        %5175 = vmatprep.mubr.bf16.mxu0 0
        %5176 = vmatmul.mubr.bf16.gmra.mxu0 %v4940
        %v5177 = vpop.f32.mrf.mxu0
        %v5178 = vadd.f32 0.0, %v5177
        %v5179 = vpop.f32.mrf.mxu0
        %v5180 = vpop.f32.mrf.mxu0
        %v5181 = vadd.f32 0.0, %v5180
        %v5182 = vpop.f32.mrf.mxu0
        %5183 = vmatprep.mubr.bf16.mxu0 0
        %5184 = vmatmul.mubr.bf16.gmra.mxu0 %v4948
        %v5185 = vpop.f32.mrf.mxu0
        %v5186 = vadd.f32 0.0, %v5185
        %v5187 = vpop.f32.mrf.mxu0
        %v5188 = vpop.f32.mrf.mxu0
        %v5189 = vadd.f32 0.0, %v5188
        %v5190 = vpop.f32.mrf.mxu0
        %5191 = vmatprep.mubr.bf16.mxu0 0
        %5192 = vmatmul.mubr.bf16.gmra.mxu0 %v4956
        %v5193 = vpop.f32.mrf.mxu0
        %v5194 = vadd.f32 0.0, %v5193
        %v5195 = vpop.f32.mrf.mxu0
        %v5196 = vpop.f32.mrf.mxu0
        %v5197 = vadd.f32 0.0, %v5196
        %v5198 = vpop.f32.mrf.mxu0
        %5199 = vmatprep.mubr.bf16.mxu0 0
        %5200 = vmatmul.mubr.bf16.gmra.mxu0 %v4964
        %v5201 = vpop.f32.mrf.mxu0
        %v5202 = vadd.f32 0.0, %v5201
        %v5203 = vpop.f32.mrf.mxu0
        %v5204 = vpop.f32.mrf.mxu0
        %v5205 = vadd.f32 0.0, %v5204
        %v5206 = vpop.f32.mrf.mxu0
        %5207 = vmatprep.mubr.bf16.mxu0 0
        %5208 = vmatmul.mubr.bf16.gmra.mxu0 %v4972
        %v5209 = vpop.f32.mrf.mxu0
        %v5210 = vadd.f32 0.0, %v5209
        %v5211 = vpop.f32.mrf.mxu0
        %v5212 = vpop.f32.mrf.mxu0
        %v5213 = vadd.f32 0.0, %v5212
        %v5214 = vpop.f32.mrf.mxu0
        %5215 = vmatprep.mubr.bf16.mxu0 0
        %5216 = vmatmul.mubr.bf16.gmra.mxu0 %v4980
        %v5217 = vpop.f32.mrf.mxu0
        %v5218 = vadd.f32 0.0, %v5217
        %v5219 = vpop.f32.mrf.mxu0
        %v5220 = vpop.f32.mrf.mxu0
        %v5221 = vadd.f32 0.0, %v5220
        %v5222 = vpop.f32.mrf.mxu0
        %5223 = vdwg.mxu0
        %v5258 = vunpack.c.l.b16 %v4705
        %v5259 = vunpack.c.l.b16 %v4706
        %v5260 = vunpack.c.l.b16 %v4707
        %v5261 = vunpack.c.l.b16 %v4708
        %v5262 = vunpack.c.l.b16 %v4709
        %v5263 = vunpack.c.l.b16 %v4710
        %v5264 = vunpack.c.l.b16 %v4711
        %v5265 = vunpack.c.l.b16 %v4712
        %v5266 = vunpack.c.l.b16 %v4713
        %v5267 = vunpack.c.l.b16 %v4714
        %v5268 = vunpack.c.l.b16 %v4715
        %v5269 = vunpack.c.l.b16 %v4716
        %v5270 = vunpack.c.l.b16 %v4717
        %v5271 = vunpack.c.l.b16 %v4718
        %v5272 = vunpack.c.l.b16 %v4719
        %v5273 = vunpack.c.l.b16 %v4720
        %v5274 = vpack.c.b16 %v5259, %v5258
        %v5275 = vpack.c.b16 %v5261, %v5260
        %v5276 = vpack.c.b16 %v5263, %v5262
        %v5277 = vpack.c.b16 %v5265, %v5264
        %v5278 = vpack.c.b16 %v5267, %v5266
        %v5279 = vpack.c.b16 %v5269, %v5268
        %v5280 = vpack.c.b16 %v5271, %v5270
        %v5281 = vpack.c.b16 %v5273, %v5272
        %5290 = vmatprep.subr.bf16.mxu0 0
        %5291 = vmatpush1.bf16.msra.mxu0 %v5281
        %5292 = vmatprep.subr.bf16.mxu0 0
        %5293 = vmatpush1.bf16.msra.mxu0 %v5280
        %5294 = vmatprep.subr.bf16.mxu0 0
        %5295 = vmatpush1.bf16.msra.mxu0 %v5279
        %5296 = vmatprep.subr.bf16.mxu0 0
        %5297 = vmatpush1.bf16.msra.mxu0 %v5278
        %5298 = vmatprep.subr.bf16.mxu0 0
        %5299 = vmatpush1.bf16.msra.mxu0 %v5277
        %5300 = vmatprep.subr.bf16.mxu0 0
        %5301 = vmatpush1.bf16.msra.mxu0 %v5276
        %5302 = vmatprep.subr.bf16.mxu0 0
        %5303 = vmatpush1.bf16.msra.mxu0 %v5275
        %5304 = vmatprep.subr.bf16.mxu0 0
        %5305 = vmatpush1.bf16.msra.mxu0 %v5274
        %5306 = vmatprep.subr.bf16.mxu0 0
        %5307 = vmatpush2.bf16.msra.mxu0 0
        %5308 = vmatprep.subr.bf16.mxu0 0
        %5309 = vmatpush2.bf16.msra.mxu0 0
        %5310 = vmatprep.subr.bf16.mxu0 0
        %5311 = vmatpush2.bf16.msra.mxu0 0
        %5312 = vmatprep.subr.bf16.mxu0 0
        %5313 = vmatpush2.bf16.msra.mxu0 0
        %5314 = vmatprep.subr.bf16.mxu0 0
        %5315 = vmatpush2.bf16.msra.mxu0 0
        %5316 = vmatprep.subr.bf16.mxu0 0
        %5317 = vmatpush2.bf16.msra.mxu0 0
        %5318 = vmatprep.subr.bf16.mxu0 0
        %5319 = vmatpush2.bf16.msra.mxu0 0
        %5320 = vmatprep.subr.bf16.mxu0 0
        %5321 = vmatpush2.bf16.msra.mxu0 0
        %5322 = vmatprep.mubr.bf16.mxu0 0
        %5323 = vmatmul.mubr.bf16.gmra.mxu0 %v4813
        %v5324 = vpop.f32.mrf.mxu0
        %v5325 = vadd.f32 %v5082, %v5324
        %v5326 = vpop.f32.mrf.mxu0
        %v5327 = vpop.f32.mrf.mxu0
        %v5328 = vadd.f32 %v5085, %v5327
        %v5329 = vpop.f32.mrf.mxu0
        %5330 = vmatprep.mubr.bf16.mxu0 0
        %5331 = vmatmul.mubr.bf16.gmra.mxu0 %v4814
        %v5332 = vpop.f32.mrf.mxu0
        %v5333 = vadd.f32 %v5090, %v5332
        %v5334 = vpop.f32.mrf.mxu0
        %v5335 = vpop.f32.mrf.mxu0
        %v5336 = vadd.f32 %v5093, %v5335
        %v5337 = vpop.f32.mrf.mxu0
        %5338 = vmatprep.mubr.bf16.mxu0 0
        %5339 = vmatmul.mubr.bf16.gmra.mxu0 %v4815
        %v5340 = vpop.f32.mrf.mxu0
        %v5341 = vadd.f32 %v5098, %v5340
        %v5342 = vpop.f32.mrf.mxu0
        %v5343 = vpop.f32.mrf.mxu0
        %v5344 = vadd.f32 %v5101, %v5343
        %v5345 = vpop.f32.mrf.mxu0
        %5346 = vmatprep.mubr.bf16.mxu0 0
        %5347 = vmatmul.mubr.bf16.gmra.mxu0 %v4816
        %v5348 = vpop.f32.mrf.mxu0
        %v5349 = vadd.f32 %v5106, %v5348
        %v5350 = vpop.f32.mrf.mxu0
        %v5351 = vpop.f32.mrf.mxu0
        %v5352 = vadd.f32 %v5109, %v5351
        %v5353 = vpop.f32.mrf.mxu0
        %5354 = vmatprep.mubr.bf16.mxu0 0
        %5355 = vmatmul.mubr.bf16.gmra.mxu0 %v4817
        %v5356 = vpop.f32.mrf.mxu0
        %v5357 = vadd.f32 %v5114, %v5356
        %v5358 = vpop.f32.mrf.mxu0
        %v5359 = vpop.f32.mrf.mxu0
        %v5360 = vadd.f32 %v5117, %v5359
        %v5361 = vpop.f32.mrf.mxu0
        %5362 = vmatprep.mubr.bf16.mxu0 0
        %5363 = vmatmul.mubr.bf16.gmra.mxu0 %v4818
        %v5364 = vpop.f32.mrf.mxu0
        %v5365 = vadd.f32 %v5122, %v5364
        %v5366 = vpop.f32.mrf.mxu0
        %v5367 = vpop.f32.mrf.mxu0
        %v5368 = vadd.f32 %v5125, %v5367
        %v5369 = vpop.f32.mrf.mxu0
        %5370 = vmatprep.mubr.bf16.mxu0 0
        %5371 = vmatmul.mubr.bf16.gmra.mxu0 %v4819
        %v5372 = vpop.f32.mrf.mxu0
        %v5373 = vadd.f32 %v5130, %v5372
        %v5374 = vpop.f32.mrf.mxu0
        %v5375 = vpop.f32.mrf.mxu0
        %v5376 = vadd.f32 %v5133, %v5375
        %v5377 = vpop.f32.mrf.mxu0
        %5378 = vmatprep.mubr.bf16.mxu0 0
        %5379 = vmatmul.mubr.bf16.gmra.mxu0 %v4820
        %v5380 = vpop.f32.mrf.mxu0
        %v5381 = vadd.f32 %v5138, %v5380
        %v5382 = vpop.f32.mrf.mxu0
        %v5383 = vpop.f32.mrf.mxu0
        %v5384 = vadd.f32 %v5141, %v5383
        %v5385 = vpop.f32.mrf.mxu0
        %5386 = vmatprep.mubr.bf16.mxu0 0
        %5387 = vmatmul.mubr.bf16.gmra.mxu0 %v4821
        %v5388 = vpop.f32.mrf.mxu0
        %v5389 = vadd.f32 %v5146, %v5388
        %v5390 = vpop.f32.mrf.mxu0
        %v5391 = vpop.f32.mrf.mxu0
        %v5392 = vadd.f32 %v5149, %v5391
        %v5393 = vpop.f32.mrf.mxu0
        %5394 = vmatprep.mubr.bf16.mxu0 0
        %5395 = vmatmul.mubr.bf16.gmra.mxu0 %v4822
        %v5396 = vpop.f32.mrf.mxu0
        %v5397 = vadd.f32 %v5154, %v5396
        %v5398 = vpop.f32.mrf.mxu0
        %v5399 = vpop.f32.mrf.mxu0
        %v5400 = vadd.f32 %v5157, %v5399
        %v5401 = vpop.f32.mrf.mxu0
        %5402 = vmatprep.mubr.bf16.mxu0 0
        %5403 = vmatmul.mubr.bf16.gmra.mxu0 %v4823
        %v5404 = vpop.f32.mrf.mxu0
        %v5405 = vadd.f32 %v5162, %v5404
        %v5406 = vpop.f32.mrf.mxu0
        %v5407 = vpop.f32.mrf.mxu0
        %v5408 = vadd.f32 %v5165, %v5407
        %v5409 = vpop.f32.mrf.mxu0
        %5410 = vmatprep.mubr.bf16.mxu0 0
        %5411 = vmatmul.mubr.bf16.gmra.mxu0 %v4824
        %v5412 = vpop.f32.mrf.mxu0
        %v5413 = vadd.f32 %v5170, %v5412
        %v5414 = vpop.f32.mrf.mxu0
        %v5415 = vpop.f32.mrf.mxu0
        %v5416 = vadd.f32 %v5173, %v5415
        %v5417 = vpop.f32.mrf.mxu0
        %5418 = vmatprep.mubr.bf16.mxu0 0
        %5419 = vmatmul.mubr.bf16.gmra.mxu0 %v4825
        %v5420 = vpop.f32.mrf.mxu0
        %v5421 = vadd.f32 %v5178, %v5420
        %v5422 = vpop.f32.mrf.mxu0
        %v5423 = vpop.f32.mrf.mxu0
        %v5424 = vadd.f32 %v5181, %v5423
        %v5425 = vpop.f32.mrf.mxu0
        %5426 = vmatprep.mubr.bf16.mxu0 0
        %5427 = vmatmul.mubr.bf16.gmra.mxu0 %v4826
        %v5428 = vpop.f32.mrf.mxu0
        %v5429 = vadd.f32 %v5186, %v5428
        %v5430 = vpop.f32.mrf.mxu0
        %v5431 = vpop.f32.mrf.mxu0
        %v5432 = vadd.f32 %v5189, %v5431
        %v5433 = vpop.f32.mrf.mxu0
        %5434 = vmatprep.mubr.bf16.mxu0 0
        %5435 = vmatmul.mubr.bf16.gmra.mxu0 %v4827
        %v5436 = vpop.f32.mrf.mxu0
        %v5437 = vadd.f32 %v5194, %v5436
        %v5438 = vpop.f32.mrf.mxu0
        %v5439 = vpop.f32.mrf.mxu0
        %v5440 = vadd.f32 %v5197, %v5439
        %v5441 = vpop.f32.mrf.mxu0
        %5442 = vmatprep.mubr.bf16.mxu0 0
        %5443 = vmatmul.mubr.bf16.gmra.mxu0 %v4828
        %v5444 = vpop.f32.mrf.mxu0
        %v5445 = vadd.f32 %v5202, %v5444
        %v5446 = vpop.f32.mrf.mxu0
        %v5447 = vpop.f32.mrf.mxu0
        %v5448 = vadd.f32 %v5205, %v5447
        %v5449 = vpop.f32.mrf.mxu0
        %5450 = vmatprep.mubr.bf16.mxu0 0
        %5451 = vmatmul.mubr.bf16.gmra.mxu0 %v4829
        %v5452 = vpop.f32.mrf.mxu0
        %v5453 = vadd.f32 %v5210, %v5452
        %v5454 = vpop.f32.mrf.mxu0
        %v5455 = vpop.f32.mrf.mxu0
        %v5456 = vadd.f32 %v5213, %v5455
        %v5457 = vpop.f32.mrf.mxu0
        %5458 = vmatprep.mubr.bf16.mxu0 0
        %5459 = vmatmul.mubr.bf16.gmra.mxu0 %v4830
        %v5460 = vpop.f32.mrf.mxu0
        %v5461 = vadd.f32 %v5218, %v5460
        %v5462 = vpop.f32.mrf.mxu0
        %v5463 = vpop.f32.mrf.mxu0
        %v5464 = vadd.f32 %v5221, %v5463
        %v5465 = vpop.f32.mrf.mxu0
        %5466 = vdwg.mxu0
        %v5467 = vld [vmem:[#allocation2] sm:$0xe]
        %s5468 = scalar_lea.vmem %s5, 128
        %v5469 = vld [vmem:[%s5468] sm:$0xf]
        %v5470 = vld [vmem:[%s5468 + $0x4] sm:$0xf]
        %v5471 = vld [vmem:[%s5468 + $0x8] sm:$0xf]
        %v5472 = vld [vmem:[%s5468 + $0xc] sm:$0xf]
        %v5473 = vld [vmem:[%s5468 + $0x10] sm:$0xf]
        %v5474 = vld [vmem:[%s5468 + $0x14] sm:$0xf]
        %v5475 = vld [vmem:[%s5468 + $0x18] sm:$0xf]
        %v5476 = vld [vmem:[%s5468 + $0x1c] sm:$0xf]
        %v5477 = vld [vmem:[%s5468 + $0x20] sm:$0xf]
        %v5478 = vld [vmem:[%s5468 + $0x24] sm:$0xf]
        %v5479 = vld [vmem:[%s5468 + $0x28] sm:$0xf]
        %v5480 = vld [vmem:[%s5468 + $0x2c] sm:$0xf]
        %v5481 = vld [vmem:[%s5468 + $0x30] sm:$0xf]
        %v5482 = vld [vmem:[%s5468 + $0x34] sm:$0xf]
        %v5483 = vld [vmem:[%s5468 + $0x38] sm:$0xf]
        %v5484 = vld [vmem:[%s5468 + $0x3c] sm:$0xf]
        %v5486 = vunpack.c.l.b16 %v5467
        %v5487 = vpack.c.b16 %v4777, %v5486
        %vm5488 = vcmask 1046528
        %v5489 = vrot.slane %v5487, 1
        %v5490 = vrot.slane %v4814, 1
        %v5491 = vsel %vm5488, %v5489, %v5490
        %v5492 = vrot.slane %v4815, 1
        %v5493 = vsel %vm5488, %v5490, %v5492
        %v5494 = vrot.slane %v4816, 1
        %v5495 = vsel %vm5488, %v5492, %v5494
        %v5496 = vrot.slane %v4817, 1
        %v5497 = vsel %vm5488, %v5494, %v5496
        %v5498 = vrot.slane %v4818, 1
        %v5499 = vsel %vm5488, %v5496, %v5498
        %v5500 = vrot.slane %v4819, 1
        %v5501 = vsel %vm5488, %v5498, %v5500
        %v5502 = vrot.slane %v4820, 1
        %v5503 = vsel %vm5488, %v5500, %v5502
        %v5504 = vrot.slane %v4821, 1
        %v5505 = vsel %vm5488, %v5502, %v5504
        %v5506 = vrot.slane %v4822, 1
        %v5507 = vsel %vm5488, %v5504, %v5506
        %v5508 = vrot.slane %v4823, 1
        %v5509 = vsel %vm5488, %v5506, %v5508
        %v5510 = vrot.slane %v4824, 1
        %v5511 = vsel %vm5488, %v5508, %v5510
        %v5512 = vrot.slane %v4825, 1
        %v5513 = vsel %vm5488, %v5510, %v5512
        %v5514 = vrot.slane %v4826, 1
        %v5515 = vsel %vm5488, %v5512, %v5514
        %v5516 = vrot.slane %v4827, 1
        %v5517 = vsel %vm5488, %v5514, %v5516
        %v5518 = vrot.slane %v4828, 1
        %v5519 = vsel %vm5488, %v5516, %v5518
        %v5520 = vrot.slane %v4829, 1
        %v5521 = vsel %vm5488, %v5518, %v5520
        %v5522 = vrot.slane %v4830, 1
        %v5523 = vsel %vm5488, %v5520, %v5522
        %v5524 = vrot.slane %v4831, 1
        %v5525 = vsel %vm5488, %v5522, %v5524
        %v5560 = vunpack.c.l.b16 %v5469
        %v5561 = vunpack.c.l.b16 %v5470
        %v5562 = vunpack.c.l.b16 %v5471
        %v5563 = vunpack.c.l.b16 %v5472
        %v5564 = vunpack.c.l.b16 %v5473
        %v5565 = vunpack.c.l.b16 %v5474
        %v5566 = vunpack.c.l.b16 %v5475
        %v5567 = vunpack.c.l.b16 %v5476
        %v5568 = vunpack.c.l.b16 %v5477
        %v5569 = vunpack.c.l.b16 %v5478
        %v5570 = vunpack.c.l.b16 %v5479
        %v5571 = vunpack.c.l.b16 %v5480
        %v5572 = vunpack.c.l.b16 %v5481
        %v5573 = vunpack.c.l.b16 %v5482
        %v5574 = vunpack.c.l.b16 %v5483
        %v5575 = vunpack.c.l.b16 %v5484
        %v5576 = vpack.c.b16 %v5561, %v5560
        %v5577 = vpack.c.b16 %v5563, %v5562
        %v5578 = vpack.c.b16 %v5565, %v5564
        %v5579 = vpack.c.b16 %v5567, %v5566
        %v5580 = vpack.c.b16 %v5569, %v5568
        %v5581 = vpack.c.b16 %v5571, %v5570
        %v5582 = vpack.c.b16 %v5573, %v5572
        %v5583 = vpack.c.b16 %v5575, %v5574
        %5592 = vmatprep.subr.bf16.mxu0 0
        %5593 = vmatpush1.bf16.msra.mxu0 %v5583
        %5594 = vmatprep.subr.bf16.mxu0 0
        %5595 = vmatpush1.bf16.msra.mxu0 %v5582
        %5596 = vmatprep.subr.bf16.mxu0 0
        %5597 = vmatpush1.bf16.msra.mxu0 %v5581
        %5598 = vmatprep.subr.bf16.mxu0 0
        %5599 = vmatpush1.bf16.msra.mxu0 %v5580
        %5600 = vmatprep.subr.bf16.mxu0 0
        %5601 = vmatpush1.bf16.msra.mxu0 %v5579
        %5602 = vmatprep.subr.bf16.mxu0 0
        %5603 = vmatpush1.bf16.msra.mxu0 %v5578
        %5604 = vmatprep.subr.bf16.mxu0 0
        %5605 = vmatpush1.bf16.msra.mxu0 %v5577
        %5606 = vmatprep.subr.bf16.mxu0 0
        %5607 = vmatpush1.bf16.msra.mxu0 %v5576
        %5608 = vmatprep.subr.bf16.mxu0 0
        %5609 = vmatpush2.bf16.msra.mxu0 0
        %5610 = vmatprep.subr.bf16.mxu0 0
        %5611 = vmatpush2.bf16.msra.mxu0 0
        %5612 = vmatprep.subr.bf16.mxu0 0
        %5613 = vmatpush2.bf16.msra.mxu0 0
        %5614 = vmatprep.subr.bf16.mxu0 0
        %5615 = vmatpush2.bf16.msra.mxu0 0
        %5616 = vmatprep.subr.bf16.mxu0 0
        %5617 = vmatpush2.bf16.msra.mxu0 0
        %5618 = vmatprep.subr.bf16.mxu0 0
        %5619 = vmatpush2.bf16.msra.mxu0 0
        %5620 = vmatprep.subr.bf16.mxu0 0
        %5621 = vmatpush2.bf16.msra.mxu0 0
        %5622 = vmatprep.subr.bf16.mxu0 0
        %5623 = vmatpush2.bf16.msra.mxu0 0
        %5624 = vmatprep.mubr.bf16.mxu0 0
        %5625 = vmatmul.mubr.bf16.gmra.mxu0 %v5491
        %v5626 = vpop.f32.mrf.mxu0
        %v5627 = vadd.f32 0.0, %v5626
        %v5628 = vpop.f32.mrf.mxu0
        %v5629 = vpop.f32.mrf.mxu0
        %v5630 = vadd.f32 0.0, %v5629
        %v5631 = vpop.f32.mrf.mxu0
        %5632 = vmatprep.mubr.bf16.mxu0 0
        %5633 = vmatmul.mubr.bf16.gmra.mxu0 %v5493
        %v5634 = vpop.f32.mrf.mxu0
        %v5635 = vadd.f32 0.0, %v5634
        %v5636 = vpop.f32.mrf.mxu0
        %v5637 = vpop.f32.mrf.mxu0
        %v5638 = vadd.f32 0.0, %v5637
        %v5639 = vpop.f32.mrf.mxu0
        %5640 = vmatprep.mubr.bf16.mxu0 0
        %5641 = vmatmul.mubr.bf16.gmra.mxu0 %v5495
        %v5642 = vpop.f32.mrf.mxu0
        %v5643 = vadd.f32 0.0, %v5642
        %v5644 = vpop.f32.mrf.mxu0
        %v5645 = vpop.f32.mrf.mxu0
        %v5646 = vadd.f32 0.0, %v5645
        %v5647 = vpop.f32.mrf.mxu0
        %5648 = vmatprep.mubr.bf16.mxu0 0
        %5649 = vmatmul.mubr.bf16.gmra.mxu0 %v5497
        %v5650 = vpop.f32.mrf.mxu0
        %v5651 = vadd.f32 0.0, %v5650
        %v5652 = vpop.f32.mrf.mxu0
        %v5653 = vpop.f32.mrf.mxu0
        %v5654 = vadd.f32 0.0, %v5653
        %v5655 = vpop.f32.mrf.mxu0
        %5656 = vmatprep.mubr.bf16.mxu0 0
        %5657 = vmatmul.mubr.bf16.gmra.mxu0 %v5499
        %v5658 = vpop.f32.mrf.mxu0
        %v5659 = vadd.f32 0.0, %v5658
        %v5660 = vpop.f32.mrf.mxu0
        %v5661 = vpop.f32.mrf.mxu0
        %v5662 = vadd.f32 0.0, %v5661
        %v5663 = vpop.f32.mrf.mxu0
        %5664 = vmatprep.mubr.bf16.mxu0 0
        %5665 = vmatmul.mubr.bf16.gmra.mxu0 %v5501
        %v5666 = vpop.f32.mrf.mxu0
        %v5667 = vadd.f32 0.0, %v5666
        %v5668 = vpop.f32.mrf.mxu0
        %v5669 = vpop.f32.mrf.mxu0
        %v5670 = vadd.f32 0.0, %v5669
        %v5671 = vpop.f32.mrf.mxu0
        %5672 = vmatprep.mubr.bf16.mxu0 0
        %5673 = vmatmul.mubr.bf16.gmra.mxu0 %v5503
        %v5674 = vpop.f32.mrf.mxu0
        %v5675 = vadd.f32 0.0, %v5674
        %v5676 = vpop.f32.mrf.mxu0
        %v5677 = vpop.f32.mrf.mxu0
        %v5678 = vadd.f32 0.0, %v5677
        %v5679 = vpop.f32.mrf.mxu0
        %5680 = vmatprep.mubr.bf16.mxu0 0
        %5681 = vmatmul.mubr.bf16.gmra.mxu0 %v5505
        %v5682 = vpop.f32.mrf.mxu0
        %v5683 = vadd.f32 0.0, %v5682
        %v5684 = vpop.f32.mrf.mxu0
        %v5685 = vpop.f32.mrf.mxu0
        %v5686 = vadd.f32 0.0, %v5685
        %v5687 = vpop.f32.mrf.mxu0
        %5688 = vmatprep.mubr.bf16.mxu0 0
        %5689 = vmatmul.mubr.bf16.gmra.mxu0 %v5507
        %v5690 = vpop.f32.mrf.mxu0
        %v5691 = vadd.f32 0.0, %v5690
        %v5692 = vpop.f32.mrf.mxu0
        %v5693 = vpop.f32.mrf.mxu0
        %v5694 = vadd.f32 0.0, %v5693
        %v5695 = vpop.f32.mrf.mxu0
        %5696 = vmatprep.mubr.bf16.mxu0 0
        %5697 = vmatmul.mubr.bf16.gmra.mxu0 %v5509
        %v5698 = vpop.f32.mrf.mxu0
        %v5699 = vadd.f32 0.0, %v5698
        %v5700 = vpop.f32.mrf.mxu0
        %v5701 = vpop.f32.mrf.mxu0
        %v5702 = vadd.f32 0.0, %v5701
        %v5703 = vpop.f32.mrf.mxu0
        %5704 = vmatprep.mubr.bf16.mxu0 0
        %5705 = vmatmul.mubr.bf16.gmra.mxu0 %v5511
        %v5706 = vpop.f32.mrf.mxu0
        %v5707 = vadd.f32 0.0, %v5706
        %v5708 = vpop.f32.mrf.mxu0
        %v5709 = vpop.f32.mrf.mxu0
        %v5710 = vadd.f32 0.0, %v5709
        %v5711 = vpop.f32.mrf.mxu0
        %5712 = vmatprep.mubr.bf16.mxu0 0
        %5713 = vmatmul.mubr.bf16.gmra.mxu0 %v5513
        %v5714 = vpop.f32.mrf.mxu0
        %v5715 = vadd.f32 0.0, %v5714
        %v5716 = vpop.f32.mrf.mxu0
        %v5717 = vpop.f32.mrf.mxu0
        %v5718 = vadd.f32 0.0, %v5717
        %v5719 = vpop.f32.mrf.mxu0
        %5720 = vmatprep.mubr.bf16.mxu0 0
        %5721 = vmatmul.mubr.bf16.gmra.mxu0 %v5515
        %v5722 = vpop.f32.mrf.mxu0
        %v5723 = vadd.f32 0.0, %v5722
        %v5724 = vpop.f32.mrf.mxu0
        %v5725 = vpop.f32.mrf.mxu0
        %v5726 = vadd.f32 0.0, %v5725
        %v5727 = vpop.f32.mrf.mxu0
        %5728 = vmatprep.mubr.bf16.mxu0 0
        %5729 = vmatmul.mubr.bf16.gmra.mxu0 %v5517
        %v5730 = vpop.f32.mrf.mxu0
        %v5731 = vadd.f32 0.0, %v5730
        %v5732 = vpop.f32.mrf.mxu0
        %v5733 = vpop.f32.mrf.mxu0
        %v5734 = vadd.f32 0.0, %v5733
        %v5735 = vpop.f32.mrf.mxu0
        %5736 = vmatprep.mubr.bf16.mxu0 0
        %5737 = vmatmul.mubr.bf16.gmra.mxu0 %v5519
        %v5738 = vpop.f32.mrf.mxu0
        %v5739 = vadd.f32 0.0, %v5738
        %v5740 = vpop.f32.mrf.mxu0
        %v5741 = vpop.f32.mrf.mxu0
        %v5742 = vadd.f32 0.0, %v5741
        %v5743 = vpop.f32.mrf.mxu0
        %5744 = vmatprep.mubr.bf16.mxu0 0
        %5745 = vmatmul.mubr.bf16.gmra.mxu0 %v5521
        %v5746 = vpop.f32.mrf.mxu0
        %v5747 = vadd.f32 0.0, %v5746
        %v5748 = vpop.f32.mrf.mxu0
        %v5749 = vpop.f32.mrf.mxu0
        %v5750 = vadd.f32 0.0, %v5749
        %v5751 = vpop.f32.mrf.mxu0
        %5752 = vmatprep.mubr.bf16.mxu0 0
        %5753 = vmatmul.mubr.bf16.gmra.mxu0 %v5523
        %v5754 = vpop.f32.mrf.mxu0
        %v5755 = vadd.f32 0.0, %v5754
        %v5756 = vpop.f32.mrf.mxu0
        %v5757 = vpop.f32.mrf.mxu0
        %v5758 = vadd.f32 0.0, %v5757
        %v5759 = vpop.f32.mrf.mxu0
        %5760 = vmatprep.mubr.bf16.mxu0 0
        %5761 = vmatmul.mubr.bf16.gmra.mxu0 %v5525
        %v5762 = vpop.f32.mrf.mxu0
        %v5763 = vadd.f32 0.0, %v5762
        %v5764 = vpop.f32.mrf.mxu0
        %v5765 = vpop.f32.mrf.mxu0
        %v5766 = vadd.f32 0.0, %v5765
        %v5767 = vpop.f32.mrf.mxu0
        %5768 = vdwg.mxu0
        %v5769 = vadd.f32 %v5325, %v5627
        %v5770 = vadd.f32 %v5328, %v5630
        %v5771 = vadd.f32 %v5333, %v5635
        %v5772 = vadd.f32 %v5336, %v5638
        %v5773 = vadd.f32 %v5341, %v5643
        %v5774 = vadd.f32 %v5344, %v5646
        %v5775 = vadd.f32 %v5349, %v5651
        %v5776 = vadd.f32 %v5352, %v5654
        %v5777 = vadd.f32 %v5357, %v5659
        %v5778 = vadd.f32 %v5360, %v5662
        %v5779 = vadd.f32 %v5365, %v5667
        %v5780 = vadd.f32 %v5368, %v5670
        %v5781 = vadd.f32 %v5373, %v5675
        %v5782 = vadd.f32 %v5376, %v5678
        %v5783 = vadd.f32 %v5381, %v5683
        %v5784 = vadd.f32 %v5384, %v5686
        %v5785 = vadd.f32 %v5389, %v5691
        %v5786 = vadd.f32 %v5392, %v5694
        %v5787 = vadd.f32 %v5397, %v5699
        %v5788 = vadd.f32 %v5400, %v5702
        %v5789 = vadd.f32 %v5405, %v5707
        %v5790 = vadd.f32 %v5408, %v5710
        %v5791 = vadd.f32 %v5413, %v5715
        %v5792 = vadd.f32 %v5416, %v5718
        %v5793 = vadd.f32 %v5421, %v5723
        %v5794 = vadd.f32 %v5424, %v5726
        %v5795 = vadd.f32 %v5429, %v5731
        %v5796 = vadd.f32 %v5432, %v5734
        %v5797 = vadd.f32 %v5437, %v5739
        %v5798 = vadd.f32 %v5440, %v5742
        %v5799 = vadd.f32 %v5445, %v5747
        %v5800 = vadd.f32 %v5448, %v5750
        %v5801 = vadd.f32 %v5453, %v5755
        %v5802 = vadd.f32 %v5456, %v5758
        %v5803 = vadd.f32 %v5461, %v5763
        %v5804 = vadd.f32 %v5464, %v5766
        %v5805 = vld [vmem:[#allocation2 + $0x8] sm:$0xe]
        %v5806 = vld [vmem:[#allocation2 + $0xc] sm:$0xf]
        %v5807 = vld [vmem:[#allocation2 + $0x10] sm:$0xf]
        %v5808 = vld [vmem:[#allocation2 + $0x14] sm:$0xf]
        %v5809 = vld [vmem:[#allocation2 + $0x18] sm:$0xf]
        %v5810 = vld [vmem:[#allocation2 + $0x1c] sm:$0xf]
        %v5811 = vld [vmem:[#allocation2 + $0x20] sm:$0xf]
        %v5812 = vld [vmem:[#allocation2 + $0x24] sm:$0xf]
        %v5813 = vld [vmem:[#allocation2 + $0x28] sm:$0xf]
        %v5814 = vld [vmem:[#allocation2 + $0x2c] sm:$0xf]
        %v5815 = vld [vmem:[#allocation2 + $0x30] sm:$0xf]
        %v5816 = vld [vmem:[#allocation2 + $0x34] sm:$0xf]
        %v5817 = vld [vmem:[#allocation2 + $0x38] sm:$0xf]
        %v5818 = vld [vmem:[#allocation2 + $0x3c] sm:$0xf]
        %v5819 = vld [vmem:[#allocation2 + $0x40] sm:$0xf]
        %v5820 = vld [vmem:[#allocation2 + $0x44] sm:$0xf]
        %v5821 = vld [vmem:[#allocation2 + $0x48] sm:$0xf]
        %v5822 = vld [vmem:[#allocation2 + $0x4c] sm:$0xf]
        %v5823 = vld [vmem:[#allocation2 + $0x50] sm:$0xf]
        %v5824 = vld [vmem:[#allocation2 + $0x54] sm:$0xf]
        %v5825 = vld [vmem:[#allocation2 + $0x58] sm:$0xf]
        %v5826 = vld [vmem:[#allocation2 + $0x5c] sm:$0xf]
        %v5827 = vld [vmem:[#allocation2 + $0x60] sm:$0xf]
        %v5828 = vld [vmem:[#allocation2 + $0x64] sm:$0xf]
        %v5829 = vld [vmem:[#allocation2 + $0x68] sm:$0xf]
        %v5830 = vld [vmem:[#allocation2 + $0x6c] sm:$0xf]
        %v5831 = vld [vmem:[#allocation2 + $0x70] sm:$0xf]
        %v5832 = vld [vmem:[#allocation2 + $0x74] sm:$0xf]
        %v5833 = vld [vmem:[#allocation2 + $0x78] sm:$0xf]
        %v5834 = vld [vmem:[#allocation2 + $0x7c] sm:$0xf]
        %v5835 = vld [vmem:[#allocation2 + $0x80] sm:$0xf]
        %v5836 = vld [vmem:[#allocation2 + $0x84] sm:$0xf]
        %v5837 = vld [vmem:[#allocation2 + $0x88] sm:$0xf]
        %v5838 = vld [vmem:[#allocation2 + $0x8c] sm:$0xf]
        %v5839 = vld [vmem:[#allocation2 + $0x90] sm:$0xf]
        %v5840 = vld [vmem:[#allocation2 + $0x94] sm:$0xf]
        %v5841 = vld [vmem:[#allocation2 + $0x98] sm:$0x1]
        %s5842 = scalar_lea.vmem %s5, 192
        %v5843 = vld [vmem:[%s5842] sm:$0xf]
        %v5844 = vld [vmem:[%s5842 + $0x4] sm:$0xf]
        %v5845 = vld [vmem:[%s5842 + $0x8] sm:$0xf]
        %v5846 = vld [vmem:[%s5842 + $0xc] sm:$0xf]
        %v5847 = vld [vmem:[%s5842 + $0x10] sm:$0xf]
        %v5848 = vld [vmem:[%s5842 + $0x14] sm:$0xf]
        %v5849 = vld [vmem:[%s5842 + $0x18] sm:$0xf]
        %v5850 = vld [vmem:[%s5842 + $0x1c] sm:$0xf]
        %v5851 = vld [vmem:[%s5842 + $0x20] sm:$0xf]
        %v5852 = vld [vmem:[%s5842 + $0x24] sm:$0xf]
        %v5853 = vld [vmem:[%s5842 + $0x28] sm:$0xf]
        %v5854 = vld [vmem:[%s5842 + $0x2c] sm:$0xf]
        %v5855 = vld [vmem:[%s5842 + $0x30] sm:$0xf]
        %v5856 = vld [vmem:[%s5842 + $0x34] sm:$0xf]
        %v5857 = vld [vmem:[%s5842 + $0x38] sm:$0xf]
        %v5858 = vld [vmem:[%s5842 + $0x3c] sm:$0xf]
        %v5896 = vunpack.c.l.b16 %v5805
        %v5897 = vunpack.c.l.b16 %v5806
        %v5898 = vunpack.c.l.b16 %v5807
        %v5899 = vunpack.c.l.b16 %v5808
        %v5900 = vunpack.c.l.b16 %v5809
        %v5901 = vunpack.c.l.b16 %v5810
        %v5902 = vunpack.c.l.b16 %v5811
        %v5903 = vunpack.c.l.b16 %v5812
        %v5904 = vunpack.c.l.b16 %v5813
        %v5905 = vunpack.c.l.b16 %v5814
        %v5906 = vunpack.c.l.b16 %v5815
        %v5907 = vunpack.c.l.b16 %v5816
        %v5908 = vunpack.c.l.b16 %v5817
        %v5909 = vunpack.c.l.b16 %v5818
        %v5910 = vunpack.c.l.b16 %v5819
        %v5911 = vunpack.c.l.b16 %v5820
        %v5912 = vunpack.c.l.b16 %v5821
        %v5913 = vunpack.c.l.b16 %v5822
        %v5914 = vunpack.c.l.b16 %v5823
        %v5915 = vunpack.c.l.b16 %v5824
        %v5916 = vunpack.c.l.b16 %v5825
        %v5917 = vunpack.c.l.b16 %v5826
        %v5918 = vunpack.c.l.b16 %v5827
        %v5919 = vunpack.c.l.b16 %v5828
        %v5920 = vunpack.c.l.b16 %v5829
        %v5921 = vunpack.c.l.b16 %v5830
        %v5922 = vunpack.c.l.b16 %v5831
        %v5923 = vunpack.c.l.b16 %v5832
        %v5924 = vunpack.c.l.b16 %v5833
        %v5925 = vunpack.c.l.b16 %v5834
        %v5926 = vunpack.c.l.b16 %v5835
        %v5927 = vunpack.c.l.b16 %v5836
        %v5928 = vunpack.c.l.b16 %v5837
        %v5929 = vunpack.c.l.b16 %v5838
        %v5930 = vunpack.c.l.b16 %v5839
        %v5931 = vunpack.c.l.b16 %v5840
        %v5932 = vunpack.c.l.b16 %v5841
        %v5933 = vpack.c.b16 %v5897, %v5896
        %v5934 = vpack.c.b16 %v5899, %v5898
        %v5935 = vpack.c.b16 %v5901, %v5900
        %v5936 = vpack.c.b16 %v5903, %v5902
        %v5937 = vpack.c.b16 %v5905, %v5904
        %v5938 = vpack.c.b16 %v5907, %v5906
        %v5939 = vpack.c.b16 %v5909, %v5908
        %v5940 = vpack.c.b16 %v5911, %v5910
        %v5941 = vpack.c.b16 %v5913, %v5912
        %v5942 = vpack.c.b16 %v5915, %v5914
        %v5943 = vpack.c.b16 %v5917, %v5916
        %v5944 = vpack.c.b16 %v5919, %v5918
        %v5945 = vpack.c.b16 %v5921, %v5920
        %v5946 = vpack.c.b16 %v5923, %v5922
        %v5947 = vpack.c.b16 %v5925, %v5924
        %v5948 = vpack.c.b16 %v5927, %v5926
        %v5949 = vpack.c.b16 %v5929, %v5928
        %v5950 = vpack.c.b16 %v5931, %v5930
        %v5951 = vpack.c.b16 %v5932, %v5932
        %v5952 = vrot.slane %v5933, 1
        %v5953 = vrot.slane %v5934, 1
        %v5954 = vsel %vm5488, %v5952, %v5953
        %v5955 = vrot.slane %v5935, 1
        %v5956 = vsel %vm5488, %v5953, %v5955
        %v5957 = vrot.slane %v5936, 1
        %v5958 = vsel %vm5488, %v5955, %v5957
        %v5959 = vrot.slane %v5937, 1
        %v5960 = vsel %vm5488, %v5957, %v5959
        %v5961 = vrot.slane %v5938, 1
        %v5962 = vsel %vm5488, %v5959, %v5961
        %v5963 = vrot.slane %v5939, 1
        %v5964 = vsel %vm5488, %v5961, %v5963
        %v5965 = vrot.slane %v5940, 1
        %v5966 = vsel %vm5488, %v5963, %v5965
        %v5967 = vrot.slane %v5941, 1
        %v5968 = vsel %vm5488, %v5965, %v5967
        %v5969 = vrot.slane %v5942, 1
        %v5970 = vsel %vm5488, %v5967, %v5969
        %v5971 = vrot.slane %v5943, 1
        %v5972 = vsel %vm5488, %v5969, %v5971
        %v5973 = vrot.slane %v5944, 1
        %v5974 = vsel %vm5488, %v5971, %v5973
        %v5975 = vrot.slane %v5945, 1
        %v5976 = vsel %vm5488, %v5973, %v5975
        %v5977 = vrot.slane %v5946, 1
        %v5978 = vsel %vm5488, %v5975, %v5977
        %v5979 = vrot.slane %v5947, 1
        %v5980 = vsel %vm5488, %v5977, %v5979
        %v5981 = vrot.slane %v5948, 1
        %v5982 = vsel %vm5488, %v5979, %v5981
        %v5983 = vrot.slane %v5949, 1
        %v5984 = vsel %vm5488, %v5981, %v5983
        %v5985 = vrot.slane %v5950, 1
        %v5986 = vsel %vm5488, %v5983, %v5985
        %v5987 = vrot.slane %v5951, 1
        %v5988 = vsel %vm5488, %v5985, %v5987
        %v6023 = vunpack.c.l.b16 %v5843
        %v6024 = vunpack.c.l.b16 %v5844
        %v6025 = vunpack.c.l.b16 %v5845
        %v6026 = vunpack.c.l.b16 %v5846
        %v6027 = vunpack.c.l.b16 %v5847
        %v6028 = vunpack.c.l.b16 %v5848
        %v6029 = vunpack.c.l.b16 %v5849
        %v6030 = vunpack.c.l.b16 %v5850
        %v6031 = vunpack.c.l.b16 %v5851
        %v6032 = vunpack.c.l.b16 %v5852
        %v6033 = vunpack.c.l.b16 %v5853
        %v6034 = vunpack.c.l.b16 %v5854
        %v6035 = vunpack.c.l.b16 %v5855
        %v6036 = vunpack.c.l.b16 %v5856
        %v6037 = vunpack.c.l.b16 %v5857
        %v6038 = vunpack.c.l.b16 %v5858
        %v6039 = vpack.c.b16 %v6024, %v6023
        %v6040 = vpack.c.b16 %v6026, %v6025
        %v6041 = vpack.c.b16 %v6028, %v6027
        %v6042 = vpack.c.b16 %v6030, %v6029
        %v6043 = vpack.c.b16 %v6032, %v6031
        %v6044 = vpack.c.b16 %v6034, %v6033
        %v6045 = vpack.c.b16 %v6036, %v6035
        %v6046 = vpack.c.b16 %v6038, %v6037
        %6055 = vmatprep.subr.bf16.mxu0 0
        %6056 = vmatpush1.bf16.msra.mxu0 %v6046
        %6057 = vmatprep.subr.bf16.mxu0 0
        %6058 = vmatpush1.bf16.msra.mxu0 %v6045
        %6059 = vmatprep.subr.bf16.mxu0 0
        %6060 = vmatpush1.bf16.msra.mxu0 %v6044
        %6061 = vmatprep.subr.bf16.mxu0 0
        %6062 = vmatpush1.bf16.msra.mxu0 %v6043
        %6063 = vmatprep.subr.bf16.mxu0 0
        %6064 = vmatpush1.bf16.msra.mxu0 %v6042
        %6065 = vmatprep.subr.bf16.mxu0 0
        %6066 = vmatpush1.bf16.msra.mxu0 %v6041
        %6067 = vmatprep.subr.bf16.mxu0 0
        %6068 = vmatpush1.bf16.msra.mxu0 %v6040
        %6069 = vmatprep.subr.bf16.mxu0 0
        %6070 = vmatpush1.bf16.msra.mxu0 %v6039
        %6071 = vmatprep.subr.bf16.mxu0 0
        %6072 = vmatpush2.bf16.msra.mxu0 0
        %6073 = vmatprep.subr.bf16.mxu0 0
        %6074 = vmatpush2.bf16.msra.mxu0 0
        %6075 = vmatprep.subr.bf16.mxu0 0
        %6076 = vmatpush2.bf16.msra.mxu0 0
        %6077 = vmatprep.subr.bf16.mxu0 0
        %6078 = vmatpush2.bf16.msra.mxu0 0
        %6079 = vmatprep.subr.bf16.mxu0 0
        %6080 = vmatpush2.bf16.msra.mxu0 0
        %6081 = vmatprep.subr.bf16.mxu0 0
        %6082 = vmatpush2.bf16.msra.mxu0 0
        %6083 = vmatprep.subr.bf16.mxu0 0
        %6084 = vmatpush2.bf16.msra.mxu0 0
        %6085 = vmatprep.subr.bf16.mxu0 0
        %6086 = vmatpush2.bf16.msra.mxu0 0
        %6087 = vmatprep.mubr.bf16.mxu0 0
        %6088 = vmatmul.mubr.bf16.gmra.mxu0 %v5954
        %v6089 = vpop.f32.mrf.mxu0
        %v6090 = vadd.f32 0.0, %v6089
        %v6091 = vpop.f32.mrf.mxu0
        %v6092 = vpop.f32.mrf.mxu0
        %v6093 = vadd.f32 0.0, %v6092
        %v6094 = vpop.f32.mrf.mxu0
        %6095 = vmatprep.mubr.bf16.mxu0 0
        %6096 = vmatmul.mubr.bf16.gmra.mxu0 %v5956
        %v6097 = vpop.f32.mrf.mxu0
        %v6098 = vadd.f32 0.0, %v6097
        %v6099 = vpop.f32.mrf.mxu0
        %v6100 = vpop.f32.mrf.mxu0
        %v6101 = vadd.f32 0.0, %v6100
        %v6102 = vpop.f32.mrf.mxu0
        %6103 = vmatprep.mubr.bf16.mxu0 0
        %6104 = vmatmul.mubr.bf16.gmra.mxu0 %v5958
        %v6105 = vpop.f32.mrf.mxu0
        %v6106 = vadd.f32 0.0, %v6105
        %v6107 = vpop.f32.mrf.mxu0
        %v6108 = vpop.f32.mrf.mxu0
        %v6109 = vadd.f32 0.0, %v6108
        %v6110 = vpop.f32.mrf.mxu0
        %6111 = vmatprep.mubr.bf16.mxu0 0
        %6112 = vmatmul.mubr.bf16.gmra.mxu0 %v5960
        %v6113 = vpop.f32.mrf.mxu0
        %v6114 = vadd.f32 0.0, %v6113
        %v6115 = vpop.f32.mrf.mxu0
        %v6116 = vpop.f32.mrf.mxu0
        %v6117 = vadd.f32 0.0, %v6116
        %v6118 = vpop.f32.mrf.mxu0
        %6119 = vmatprep.mubr.bf16.mxu0 0
        %6120 = vmatmul.mubr.bf16.gmra.mxu0 %v5962
        %v6121 = vpop.f32.mrf.mxu0
        %v6122 = vadd.f32 0.0, %v6121
        %v6123 = vpop.f32.mrf.mxu0
        %v6124 = vpop.f32.mrf.mxu0
        %v6125 = vadd.f32 0.0, %v6124
        %v6126 = vpop.f32.mrf.mxu0
        %6127 = vmatprep.mubr.bf16.mxu0 0
        %6128 = vmatmul.mubr.bf16.gmra.mxu0 %v5964
        %v6129 = vpop.f32.mrf.mxu0
        %v6130 = vadd.f32 0.0, %v6129
        %v6131 = vpop.f32.mrf.mxu0
        %v6132 = vpop.f32.mrf.mxu0
        %v6133 = vadd.f32 0.0, %v6132
        %v6134 = vpop.f32.mrf.mxu0
        %6135 = vmatprep.mubr.bf16.mxu0 0
        %6136 = vmatmul.mubr.bf16.gmra.mxu0 %v5966
        %v6137 = vpop.f32.mrf.mxu0
        %v6138 = vadd.f32 0.0, %v6137
        %v6139 = vpop.f32.mrf.mxu0
        %v6140 = vpop.f32.mrf.mxu0
        %v6141 = vadd.f32 0.0, %v6140
        %v6142 = vpop.f32.mrf.mxu0
        %6143 = vmatprep.mubr.bf16.mxu0 0
        %6144 = vmatmul.mubr.bf16.gmra.mxu0 %v5968
        %v6145 = vpop.f32.mrf.mxu0
        %v6146 = vadd.f32 0.0, %v6145
        %v6147 = vpop.f32.mrf.mxu0
        %v6148 = vpop.f32.mrf.mxu0
        %v6149 = vadd.f32 0.0, %v6148
        %v6150 = vpop.f32.mrf.mxu0
        %6151 = vmatprep.mubr.bf16.mxu0 0
        %6152 = vmatmul.mubr.bf16.gmra.mxu0 %v5970
        %v6153 = vpop.f32.mrf.mxu0
        %v6154 = vadd.f32 0.0, %v6153
        %v6155 = vpop.f32.mrf.mxu0
        %v6156 = vpop.f32.mrf.mxu0
        %v6157 = vadd.f32 0.0, %v6156
        %v6158 = vpop.f32.mrf.mxu0
        %6159 = vmatprep.mubr.bf16.mxu0 0
        %6160 = vmatmul.mubr.bf16.gmra.mxu0 %v5972
        %v6161 = vpop.f32.mrf.mxu0
        %v6162 = vadd.f32 0.0, %v6161
        %v6163 = vpop.f32.mrf.mxu0
        %v6164 = vpop.f32.mrf.mxu0
        %v6165 = vadd.f32 0.0, %v6164
        %v6166 = vpop.f32.mrf.mxu0
        %6167 = vmatprep.mubr.bf16.mxu0 0
        %6168 = vmatmul.mubr.bf16.gmra.mxu0 %v5974
        %v6169 = vpop.f32.mrf.mxu0
        %v6170 = vadd.f32 0.0, %v6169
        %v6171 = vpop.f32.mrf.mxu0
        %v6172 = vpop.f32.mrf.mxu0
        %v6173 = vadd.f32 0.0, %v6172
        %v6174 = vpop.f32.mrf.mxu0
        %6175 = vmatprep.mubr.bf16.mxu0 0
        %6176 = vmatmul.mubr.bf16.gmra.mxu0 %v5976
        %v6177 = vpop.f32.mrf.mxu0
        %v6178 = vadd.f32 0.0, %v6177
        %v6179 = vpop.f32.mrf.mxu0
        %v6180 = vpop.f32.mrf.mxu0
        %v6181 = vadd.f32 0.0, %v6180
        %v6182 = vpop.f32.mrf.mxu0
        %6183 = vmatprep.mubr.bf16.mxu0 0
        %6184 = vmatmul.mubr.bf16.gmra.mxu0 %v5978
        %v6185 = vpop.f32.mrf.mxu0
        %v6186 = vadd.f32 0.0, %v6185
        %v6187 = vpop.f32.mrf.mxu0
        %v6188 = vpop.f32.mrf.mxu0
        %v6189 = vadd.f32 0.0, %v6188
        %v6190 = vpop.f32.mrf.mxu0
        %6191 = vmatprep.mubr.bf16.mxu0 0
        %6192 = vmatmul.mubr.bf16.gmra.mxu0 %v5980
        %v6193 = vpop.f32.mrf.mxu0
        %v6194 = vadd.f32 0.0, %v6193
        %v6195 = vpop.f32.mrf.mxu0
        %v6196 = vpop.f32.mrf.mxu0
        %v6197 = vadd.f32 0.0, %v6196
        %v6198 = vpop.f32.mrf.mxu0
        %6199 = vmatprep.mubr.bf16.mxu0 0
        %6200 = vmatmul.mubr.bf16.gmra.mxu0 %v5982
        %v6201 = vpop.f32.mrf.mxu0
        %v6202 = vadd.f32 0.0, %v6201
        %v6203 = vpop.f32.mrf.mxu0
        %v6204 = vpop.f32.mrf.mxu0
        %v6205 = vadd.f32 0.0, %v6204
        %v6206 = vpop.f32.mrf.mxu0
        %6207 = vmatprep.mubr.bf16.mxu0 0
        %6208 = vmatmul.mubr.bf16.gmra.mxu0 %v5984
        %v6209 = vpop.f32.mrf.mxu0
        %v6210 = vadd.f32 0.0, %v6209
        %v6211 = vpop.f32.mrf.mxu0
        %v6212 = vpop.f32.mrf.mxu0
        %v6213 = vadd.f32 0.0, %v6212
        %v6214 = vpop.f32.mrf.mxu0
        %6215 = vmatprep.mubr.bf16.mxu0 0
        %6216 = vmatmul.mubr.bf16.gmra.mxu0 %v5986
        %v6217 = vpop.f32.mrf.mxu0
        %v6218 = vadd.f32 0.0, %v6217
        %v6219 = vpop.f32.mrf.mxu0
        %v6220 = vpop.f32.mrf.mxu0
        %v6221 = vadd.f32 0.0, %v6220
        %v6222 = vpop.f32.mrf.mxu0
        %6223 = vmatprep.mubr.bf16.mxu0 0
        %6224 = vmatmul.mubr.bf16.gmra.mxu0 %v5988
        %v6225 = vpop.f32.mrf.mxu0
        %v6226 = vadd.f32 0.0, %v6225
        %v6227 = vpop.f32.mrf.mxu0
        %v6228 = vpop.f32.mrf.mxu0
        %v6229 = vadd.f32 0.0, %v6228
        %v6230 = vpop.f32.mrf.mxu0
        %6231 = vdwg.mxu0
        %v6232 = vadd.f32 %v5769, %v6090
        %v6233 = vadd.f32 %v5770, %v6093
        %v6234 = vadd.f32 %v5771, %v6098
        %v6235 = vadd.f32 %v5772, %v6101
        %v6236 = vadd.f32 %v5773, %v6106
        %v6237 = vadd.f32 %v5774, %v6109
        %v6238 = vadd.f32 %v5775, %v6114
        %v6239 = vadd.f32 %v5776, %v6117
        %v6240 = vadd.f32 %v5777, %v6122
        %v6241 = vadd.f32 %v5778, %v6125
        %v6242 = vadd.f32 %v5779, %v6130
        %v6243 = vadd.f32 %v5780, %v6133
        %v6244 = vadd.f32 %v5781, %v6138
        %v6245 = vadd.f32 %v5782, %v6141
        %v6246 = vadd.f32 %v5783, %v6146
        %v6247 = vadd.f32 %v5784, %v6149
        %v6248 = vadd.f32 %v5785, %v6154
        %v6249 = vadd.f32 %v5786, %v6157
        %v6250 = vadd.f32 %v5787, %v6162
        %v6251 = vadd.f32 %v5788, %v6165
        %v6252 = vadd.f32 %v5789, %v6170
        %v6253 = vadd.f32 %v5790, %v6173
        %v6254 = vadd.f32 %v5791, %v6178
        %v6255 = vadd.f32 %v5792, %v6181
        %v6256 = vadd.f32 %v5793, %v6186
        %v6257 = vadd.f32 %v5794, %v6189
        %v6258 = vadd.f32 %v5795, %v6194
        %v6259 = vadd.f32 %v5796, %v6197
        %v6260 = vadd.f32 %v5797, %v6202
        %v6261 = vadd.f32 %v5798, %v6205
        %v6262 = vadd.f32 %v5799, %v6210
        %v6263 = vadd.f32 %v5800, %v6213
        %v6264 = vadd.f32 %v5801, %v6218
        %v6265 = vadd.f32 %v5802, %v6221
        %v6266 = vadd.f32 %v5803, %v6226
        %v6267 = vadd.f32 %v5804, %v6229
        %v6268 = vld [vmem:[#allocation2 + $0x98] sm:$0x3]
        %s6269 = scalar_lea.vmem %s5, 256
        %v6270 = vld [vmem:[%s6269] sm:$0xf]
        %v6271 = vld [vmem:[%s6269 + $0x4] sm:$0xf]
        %v6272 = vld [vmem:[%s6269 + $0x8] sm:$0xf]
        %v6273 = vld [vmem:[%s6269 + $0xc] sm:$0xf]
        %v6274 = vld [vmem:[%s6269 + $0x10] sm:$0xf]
        %v6275 = vld [vmem:[%s6269 + $0x14] sm:$0xf]
        %v6276 = vld [vmem:[%s6269 + $0x18] sm:$0xf]
        %v6277 = vld [vmem:[%s6269 + $0x1c] sm:$0xf]
        %v6278 = vld [vmem:[%s6269 + $0x20] sm:$0xf]
        %v6279 = vld [vmem:[%s6269 + $0x24] sm:$0xf]
        %v6280 = vld [vmem:[%s6269 + $0x28] sm:$0xf]
        %v6281 = vld [vmem:[%s6269 + $0x2c] sm:$0xf]
        %v6282 = vld [vmem:[%s6269 + $0x30] sm:$0xf]
        %v6283 = vld [vmem:[%s6269 + $0x34] sm:$0xf]
        %v6284 = vld [vmem:[%s6269 + $0x38] sm:$0xf]
        %v6285 = vld [vmem:[%s6269 + $0x3c] sm:$0xf]
        %v6287 = vunpack.c.l.b16 %v6268
        %v6288 = vpack.c.b16 %v6287, %v6287
        %vm6289 = vsmask.f32 6400
        %v6291 = vshrl.u32 %v5933, 16
        %v6293 = vrot.slane %v6291, 1
        %v6294 = vshll.u32 %v5933, 16
        %v6296 = vrot.slane %v6294, 2
        %v6297 = vor.u32 %v6293, %v6296
        %v6299 = vshrl.u32 %v5934, 16
        %v6301 = vrot.slane %v6299, 1
        %v6302 = vshll.u32 %v5934, 16
        %v6304 = vrot.slane %v6302, 2
        %v6305 = vor.u32 %v6301, %v6304
        %v6306 = vsel %vm6289, %v6297, %v6305
        %v6308 = vshrl.u32 %v5935, 16
        %v6310 = vrot.slane %v6308, 1
        %v6311 = vshll.u32 %v5935, 16
        %v6313 = vrot.slane %v6311, 2
        %v6314 = vor.u32 %v6310, %v6313
        %v6315 = vsel %vm6289, %v6305, %v6314
        %v6317 = vshrl.u32 %v5936, 16
        %v6319 = vrot.slane %v6317, 1
        %v6320 = vshll.u32 %v5936, 16
        %v6322 = vrot.slane %v6320, 2
        %v6323 = vor.u32 %v6319, %v6322
        %v6324 = vsel %vm6289, %v6314, %v6323
        %v6326 = vshrl.u32 %v5937, 16
        %v6328 = vrot.slane %v6326, 1
        %v6329 = vshll.u32 %v5937, 16
        %v6331 = vrot.slane %v6329, 2
        %v6332 = vor.u32 %v6328, %v6331
        %v6333 = vsel %vm6289, %v6323, %v6332
        %v6335 = vshrl.u32 %v5938, 16
        %v6337 = vrot.slane %v6335, 1
        %v6338 = vshll.u32 %v5938, 16
        %v6340 = vrot.slane %v6338, 2
        %v6341 = vor.u32 %v6337, %v6340
        %v6342 = vsel %vm6289, %v6332, %v6341
        %v6344 = vshrl.u32 %v5939, 16
        %v6346 = vrot.slane %v6344, 1
        %v6347 = vshll.u32 %v5939, 16
        %v6349 = vrot.slane %v6347, 2
        %v6350 = vor.u32 %v6346, %v6349
        %v6351 = vsel %vm6289, %v6341, %v6350
        %v6353 = vshrl.u32 %v5940, 16
        %v6355 = vrot.slane %v6353, 1
        %v6356 = vshll.u32 %v5940, 16
        %v6358 = vrot.slane %v6356, 2
        %v6359 = vor.u32 %v6355, %v6358
        %v6360 = vsel %vm6289, %v6350, %v6359
        %v6362 = vshrl.u32 %v5941, 16
        %v6364 = vrot.slane %v6362, 1
        %v6365 = vshll.u32 %v5941, 16
        %v6367 = vrot.slane %v6365, 2
        %v6368 = vor.u32 %v6364, %v6367
        %v6369 = vsel %vm6289, %v6359, %v6368
        %v6371 = vshrl.u32 %v5942, 16
        %v6373 = vrot.slane %v6371, 1
        %v6374 = vshll.u32 %v5942, 16
        %v6376 = vrot.slane %v6374, 2
        %v6377 = vor.u32 %v6373, %v6376
        %v6378 = vsel %vm6289, %v6368, %v6377
        %v6380 = vshrl.u32 %v5943, 16
        %v6382 = vrot.slane %v6380, 1
        %v6383 = vshll.u32 %v5943, 16
        %v6385 = vrot.slane %v6383, 2
        %v6386 = vor.u32 %v6382, %v6385
        %v6387 = vsel %vm6289, %v6377, %v6386
        %v6389 = vshrl.u32 %v5944, 16
        %v6391 = vrot.slane %v6389, 1
        %v6392 = vshll.u32 %v5944, 16
        %v6394 = vrot.slane %v6392, 2
        %v6395 = vor.u32 %v6391, %v6394
        %v6396 = vsel %vm6289, %v6386, %v6395
        %v6398 = vshrl.u32 %v5945, 16
        %v6400 = vrot.slane %v6398, 1
        %v6401 = vshll.u32 %v5945, 16
        %v6403 = vrot.slane %v6401, 2
        %v6404 = vor.u32 %v6400, %v6403
        %v6405 = vsel %vm6289, %v6395, %v6404
        %v6407 = vshrl.u32 %v5946, 16
        %v6409 = vrot.slane %v6407, 1
        %v6410 = vshll.u32 %v5946, 16
        %v6412 = vrot.slane %v6410, 2
        %v6413 = vor.u32 %v6409, %v6412
        %v6414 = vsel %vm6289, %v6404, %v6413
        %v6416 = vshrl.u32 %v5947, 16
        %v6418 = vrot.slane %v6416, 1
        %v6419 = vshll.u32 %v5947, 16
        %v6421 = vrot.slane %v6419, 2
        %v6422 = vor.u32 %v6418, %v6421
        %v6423 = vsel %vm6289, %v6413, %v6422
        %v6425 = vshrl.u32 %v5948, 16
        %v6427 = vrot.slane %v6425, 1
        %v6428 = vshll.u32 %v5948, 16
        %v6430 = vrot.slane %v6428, 2
        %v6431 = vor.u32 %v6427, %v6430
        %v6432 = vsel %vm6289, %v6422, %v6431
        %v6434 = vshrl.u32 %v5949, 16
        %v6436 = vrot.slane %v6434, 1
        %v6437 = vshll.u32 %v5949, 16
        %v6439 = vrot.slane %v6437, 2
        %v6440 = vor.u32 %v6436, %v6439
        %v6441 = vsel %vm6289, %v6431, %v6440
        %v6443 = vshrl.u32 %v5950, 16
        %v6445 = vrot.slane %v6443, 1
        %v6446 = vshll.u32 %v5950, 16
        %v6448 = vrot.slane %v6446, 2
        %v6449 = vor.u32 %v6445, %v6448
        %v6450 = vsel %vm6289, %v6440, %v6449
        %v6452 = vshrl.u32 %v6288, 16
        %v6454 = vrot.slane %v6452, 1
        %v6455 = vshll.u32 %v6288, 16
        %v6457 = vrot.slane %v6455, 2
        %v6458 = vor.u32 %v6454, %v6457
        %v6459 = vsel %vm6289, %v6449, %v6458
        %v6494 = vunpack.c.l.b16 %v6270
        %v6495 = vunpack.c.l.b16 %v6271
        %v6496 = vunpack.c.l.b16 %v6272
        %v6497 = vunpack.c.l.b16 %v6273
        %v6498 = vunpack.c.l.b16 %v6274
        %v6499 = vunpack.c.l.b16 %v6275
        %v6500 = vunpack.c.l.b16 %v6276
        %v6501 = vunpack.c.l.b16 %v6277
        %v6502 = vunpack.c.l.b16 %v6278
        %v6503 = vunpack.c.l.b16 %v6279
        %v6504 = vunpack.c.l.b16 %v6280
        %v6505 = vunpack.c.l.b16 %v6281
        %v6506 = vunpack.c.l.b16 %v6282
        %v6507 = vunpack.c.l.b16 %v6283
        %v6508 = vunpack.c.l.b16 %v6284
        %v6509 = vunpack.c.l.b16 %v6285
        %v6510 = vpack.c.b16 %v6495, %v6494
        %v6511 = vpack.c.b16 %v6497, %v6496
        %v6512 = vpack.c.b16 %v6499, %v6498
        %v6513 = vpack.c.b16 %v6501, %v6500
        %v6514 = vpack.c.b16 %v6503, %v6502
        %v6515 = vpack.c.b16 %v6505, %v6504
        %v6516 = vpack.c.b16 %v6507, %v6506
        %v6517 = vpack.c.b16 %v6509, %v6508
        %6526 = vmatprep.subr.bf16.mxu0 0
        %6527 = vmatpush1.bf16.msra.mxu0 %v6517
        %6528 = vmatprep.subr.bf16.mxu0 0
        %6529 = vmatpush1.bf16.msra.mxu0 %v6516
        %6530 = vmatprep.subr.bf16.mxu0 0
        %6531 = vmatpush1.bf16.msra.mxu0 %v6515
        %6532 = vmatprep.subr.bf16.mxu0 0
        %6533 = vmatpush1.bf16.msra.mxu0 %v6514
        %6534 = vmatprep.subr.bf16.mxu0 0
        %6535 = vmatpush1.bf16.msra.mxu0 %v6513
        %6536 = vmatprep.subr.bf16.mxu0 0
        %6537 = vmatpush1.bf16.msra.mxu0 %v6512
        %6538 = vmatprep.subr.bf16.mxu0 0
        %6539 = vmatpush1.bf16.msra.mxu0 %v6511
        %6540 = vmatprep.subr.bf16.mxu0 0
        %6541 = vmatpush1.bf16.msra.mxu0 %v6510
        %6542 = vmatprep.subr.bf16.mxu0 0
        %6543 = vmatpush2.bf16.msra.mxu0 0
        %6544 = vmatprep.subr.bf16.mxu0 0
        %6545 = vmatpush2.bf16.msra.mxu0 0
        %6546 = vmatprep.subr.bf16.mxu0 0
        %6547 = vmatpush2.bf16.msra.mxu0 0
        %6548 = vmatprep.subr.bf16.mxu0 0
        %6549 = vmatpush2.bf16.msra.mxu0 0
        %6550 = vmatprep.subr.bf16.mxu0 0
        %6551 = vmatpush2.bf16.msra.mxu0 0
        %6552 = vmatprep.subr.bf16.mxu0 0
        %6553 = vmatpush2.bf16.msra.mxu0 0
        %6554 = vmatprep.subr.bf16.mxu0 0
        %6555 = vmatpush2.bf16.msra.mxu0 0
        %6556 = vmatprep.subr.bf16.mxu0 0
        %6557 = vmatpush2.bf16.msra.mxu0 0
        %6558 = vmatprep.mubr.bf16.mxu0 0
        %6559 = vmatmul.mubr.bf16.gmra.mxu0 %v6306
        %v6560 = vpop.f32.mrf.mxu0
        %v6561 = vadd.f32 0.0, %v6560
        %v6562 = vpop.f32.mrf.mxu0
        %v6563 = vpop.f32.mrf.mxu0
        %v6564 = vadd.f32 0.0, %v6563
        %v6565 = vpop.f32.mrf.mxu0
        %6566 = vmatprep.mubr.bf16.mxu0 0
        %6567 = vmatmul.mubr.bf16.gmra.mxu0 %v6315
        %v6568 = vpop.f32.mrf.mxu0
        %v6569 = vadd.f32 0.0, %v6568
        %v6570 = vpop.f32.mrf.mxu0
        %v6571 = vpop.f32.mrf.mxu0
        %v6572 = vadd.f32 0.0, %v6571
        %v6573 = vpop.f32.mrf.mxu0
        %6574 = vmatprep.mubr.bf16.mxu0 0
        %6575 = vmatmul.mubr.bf16.gmra.mxu0 %v6324
        %v6576 = vpop.f32.mrf.mxu0
        %v6577 = vadd.f32 0.0, %v6576
        %v6578 = vpop.f32.mrf.mxu0
        %v6579 = vpop.f32.mrf.mxu0
        %v6580 = vadd.f32 0.0, %v6579
        %v6581 = vpop.f32.mrf.mxu0
        %6582 = vmatprep.mubr.bf16.mxu0 0
        %6583 = vmatmul.mubr.bf16.gmra.mxu0 %v6333
        %v6584 = vpop.f32.mrf.mxu0
        %v6585 = vadd.f32 0.0, %v6584
        %v6586 = vpop.f32.mrf.mxu0
        %v6587 = vpop.f32.mrf.mxu0
        %v6588 = vadd.f32 0.0, %v6587
        %v6589 = vpop.f32.mrf.mxu0
        %6590 = vmatprep.mubr.bf16.mxu0 0
        %6591 = vmatmul.mubr.bf16.gmra.mxu0 %v6342
        %v6592 = vpop.f32.mrf.mxu0
        %v6593 = vadd.f32 0.0, %v6592
        %v6594 = vpop.f32.mrf.mxu0
        %v6595 = vpop.f32.mrf.mxu0
        %v6596 = vadd.f32 0.0, %v6595
        %v6597 = vpop.f32.mrf.mxu0
        %6598 = vmatprep.mubr.bf16.mxu0 0
        %6599 = vmatmul.mubr.bf16.gmra.mxu0 %v6351
        %v6600 = vpop.f32.mrf.mxu0
        %v6601 = vadd.f32 0.0, %v6600
        %v6602 = vpop.f32.mrf.mxu0
        %v6603 = vpop.f32.mrf.mxu0
        %v6604 = vadd.f32 0.0, %v6603
        %v6605 = vpop.f32.mrf.mxu0
        %6606 = vmatprep.mubr.bf16.mxu0 0
        %6607 = vmatmul.mubr.bf16.gmra.mxu0 %v6360
        %v6608 = vpop.f32.mrf.mxu0
        %v6609 = vadd.f32 0.0, %v6608
        %v6610 = vpop.f32.mrf.mxu0
        %v6611 = vpop.f32.mrf.mxu0
        %v6612 = vadd.f32 0.0, %v6611
        %v6613 = vpop.f32.mrf.mxu0
        %6614 = vmatprep.mubr.bf16.mxu0 0
        %6615 = vmatmul.mubr.bf16.gmra.mxu0 %v6369
        %v6616 = vpop.f32.mrf.mxu0
        %v6617 = vadd.f32 0.0, %v6616
        %v6618 = vpop.f32.mrf.mxu0
        %v6619 = vpop.f32.mrf.mxu0
        %v6620 = vadd.f32 0.0, %v6619
        %v6621 = vpop.f32.mrf.mxu0
        %6622 = vmatprep.mubr.bf16.mxu0 0
        %6623 = vmatmul.mubr.bf16.gmra.mxu0 %v6378
        %v6624 = vpop.f32.mrf.mxu0
        %v6625 = vadd.f32 0.0, %v6624
        %v6626 = vpop.f32.mrf.mxu0
        %v6627 = vpop.f32.mrf.mxu0
        %v6628 = vadd.f32 0.0, %v6627
        %v6629 = vpop.f32.mrf.mxu0
        %6630 = vmatprep.mubr.bf16.mxu0 0
        %6631 = vmatmul.mubr.bf16.gmra.mxu0 %v6387
        %v6632 = vpop.f32.mrf.mxu0
        %v6633 = vadd.f32 0.0, %v6632
        %v6634 = vpop.f32.mrf.mxu0
        %v6635 = vpop.f32.mrf.mxu0
        %v6636 = vadd.f32 0.0, %v6635
        %v6637 = vpop.f32.mrf.mxu0
        %6638 = vmatprep.mubr.bf16.mxu0 0
        %6639 = vmatmul.mubr.bf16.gmra.mxu0 %v6396
        %v6640 = vpop.f32.mrf.mxu0
        %v6641 = vadd.f32 0.0, %v6640
        %v6642 = vpop.f32.mrf.mxu0
        %v6643 = vpop.f32.mrf.mxu0
        %v6644 = vadd.f32 0.0, %v6643
        %v6645 = vpop.f32.mrf.mxu0
        %6646 = vmatprep.mubr.bf16.mxu0 0
        %6647 = vmatmul.mubr.bf16.gmra.mxu0 %v6405
        %v6648 = vpop.f32.mrf.mxu0
        %v6649 = vadd.f32 0.0, %v6648
        %v6650 = vpop.f32.mrf.mxu0
        %v6651 = vpop.f32.mrf.mxu0
        %v6652 = vadd.f32 0.0, %v6651
        %v6653 = vpop.f32.mrf.mxu0
        %6654 = vmatprep.mubr.bf16.mxu0 0
        %6655 = vmatmul.mubr.bf16.gmra.mxu0 %v6414
        %v6656 = vpop.f32.mrf.mxu0
        %v6657 = vadd.f32 0.0, %v6656
        %v6658 = vpop.f32.mrf.mxu0
        %v6659 = vpop.f32.mrf.mxu0
        %v6660 = vadd.f32 0.0, %v6659
        %v6661 = vpop.f32.mrf.mxu0
        %6662 = vmatprep.mubr.bf16.mxu0 0
        %6663 = vmatmul.mubr.bf16.gmra.mxu0 %v6423
        %v6664 = vpop.f32.mrf.mxu0
        %v6665 = vadd.f32 0.0, %v6664
        %v6666 = vpop.f32.mrf.mxu0
        %v6667 = vpop.f32.mrf.mxu0
        %v6668 = vadd.f32 0.0, %v6667
        %v6669 = vpop.f32.mrf.mxu0
        %6670 = vmatprep.mubr.bf16.mxu0 0
        %6671 = vmatmul.mubr.bf16.gmra.mxu0 %v6432
        %v6672 = vpop.f32.mrf.mxu0
        %v6673 = vadd.f32 0.0, %v6672
        %v6674 = vpop.f32.mrf.mxu0
        %v6675 = vpop.f32.mrf.mxu0
        %v6676 = vadd.f32 0.0, %v6675
        %v6677 = vpop.f32.mrf.mxu0
        %6678 = vmatprep.mubr.bf16.mxu0 0
        %6679 = vmatmul.mubr.bf16.gmra.mxu0 %v6441
        %v6680 = vpop.f32.mrf.mxu0
        %v6681 = vadd.f32 0.0, %v6680
        %v6682 = vpop.f32.mrf.mxu0
        %v6683 = vpop.f32.mrf.mxu0
        %v6684 = vadd.f32 0.0, %v6683
        %v6685 = vpop.f32.mrf.mxu0
        %6686 = vmatprep.mubr.bf16.mxu0 0
        %6687 = vmatmul.mubr.bf16.gmra.mxu0 %v6450
        %v6688 = vpop.f32.mrf.mxu0
        %v6689 = vadd.f32 0.0, %v6688
        %v6690 = vpop.f32.mrf.mxu0
        %v6691 = vpop.f32.mrf.mxu0
        %v6692 = vadd.f32 0.0, %v6691
        %v6693 = vpop.f32.mrf.mxu0
        %6694 = vmatprep.mubr.bf16.mxu0 0
        %6695 = vmatmul.mubr.bf16.gmra.mxu0 %v6459
        %v6696 = vpop.f32.mrf.mxu0
        %v6697 = vadd.f32 0.0, %v6696
        %v6698 = vpop.f32.mrf.mxu0
        %v6699 = vpop.f32.mrf.mxu0
        %v6700 = vadd.f32 0.0, %v6699
        %v6701 = vpop.f32.mrf.mxu0
        %6702 = vdwg.mxu0
        %v6703 = vadd.f32 %v6232, %v6561
        %v6704 = vadd.f32 %v6233, %v6564
        %v6705 = vadd.f32 %v6234, %v6569
        %v6706 = vadd.f32 %v6235, %v6572
        %v6707 = vadd.f32 %v6236, %v6577
        %v6708 = vadd.f32 %v6237, %v6580
        %v6709 = vadd.f32 %v6238, %v6585
        %v6710 = vadd.f32 %v6239, %v6588
        %v6711 = vadd.f32 %v6240, %v6593
        %v6712 = vadd.f32 %v6241, %v6596
        %v6713 = vadd.f32 %v6242, %v6601
        %v6714 = vadd.f32 %v6243, %v6604
        %v6715 = vadd.f32 %v6244, %v6609
        %v6716 = vadd.f32 %v6245, %v6612
        %v6717 = vadd.f32 %v6246, %v6617
        %v6718 = vadd.f32 %v6247, %v6620
        %v6719 = vadd.f32 %v6248, %v6625
        %v6720 = vadd.f32 %v6249, %v6628
        %v6721 = vadd.f32 %v6250, %v6633
        %v6722 = vadd.f32 %v6251, %v6636
        %v6723 = vadd.f32 %v6252, %v6641
        %v6724 = vadd.f32 %v6253, %v6644
        %v6725 = vadd.f32 %v6254, %v6649
        %v6726 = vadd.f32 %v6255, %v6652
        %v6727 = vadd.f32 %v6256, %v6657
        %v6728 = vadd.f32 %v6257, %v6660
        %v6729 = vadd.f32 %v6258, %v6665
        %v6730 = vadd.f32 %v6259, %v6668
        %v6731 = vadd.f32 %v6260, %v6673
        %v6732 = vadd.f32 %v6261, %v6676
        %v6733 = vadd.f32 %v6262, %v6681
        %v6734 = vadd.f32 %v6263, %v6684
        %v6735 = vadd.f32 %v6264, %v6689
        %v6736 = vadd.f32 %v6265, %v6692
        %v6737 = vadd.f32 %v6266, %v6697
        %v6738 = vadd.f32 %v6267, %v6700
        %v6739 = vld [vmem:[#allocation2 + $0x8] sm:$0xc]
        %s6740 = scalar_lea.vmem %s5, 320
        %v6741 = vld [vmem:[%s6740] sm:$0xf]
        %v6742 = vld [vmem:[%s6740 + $0x4] sm:$0xf]
        %v6743 = vld [vmem:[%s6740 + $0x8] sm:$0xf]
        %v6744 = vld [vmem:[%s6740 + $0xc] sm:$0xf]
        %v6745 = vld [vmem:[%s6740 + $0x10] sm:$0xf]
        %v6746 = vld [vmem:[%s6740 + $0x14] sm:$0xf]
        %v6747 = vld [vmem:[%s6740 + $0x18] sm:$0xf]
        %v6748 = vld [vmem:[%s6740 + $0x1c] sm:$0xf]
        %v6749 = vld [vmem:[%s6740 + $0x20] sm:$0xf]
        %v6750 = vld [vmem:[%s6740 + $0x24] sm:$0xf]
        %v6751 = vld [vmem:[%s6740 + $0x28] sm:$0xf]
        %v6752 = vld [vmem:[%s6740 + $0x2c] sm:$0xf]
        %v6753 = vld [vmem:[%s6740 + $0x30] sm:$0xf]
        %v6754 = vld [vmem:[%s6740 + $0x34] sm:$0xf]
        %v6755 = vld [vmem:[%s6740 + $0x38] sm:$0xf]
        %v6756 = vld [vmem:[%s6740 + $0x3c] sm:$0xf]
        %v6758 = vunpack.c.l.b16 %v6739
        %v6759 = vpack.c.b16 %v5897, %v6758
        %vm6760 = vcmask 1045504
        %v6761 = vrot.slane %v6759, 2
        %v6762 = vrot.slane %v5934, 2
        %v6763 = vsel %vm6760, %v6761, %v6762
        %v6764 = vrot.slane %v5935, 2
        %v6765 = vsel %vm6760, %v6762, %v6764
        %v6766 = vrot.slane %v5936, 2
        %v6767 = vsel %vm6760, %v6764, %v6766
        %v6768 = vrot.slane %v5937, 2
        %v6769 = vsel %vm6760, %v6766, %v6768
        %v6770 = vrot.slane %v5938, 2
        %v6771 = vsel %vm6760, %v6768, %v6770
        %v6772 = vrot.slane %v5939, 2
        %v6773 = vsel %vm6760, %v6770, %v6772
        %v6774 = vrot.slane %v5940, 2
        %v6775 = vsel %vm6760, %v6772, %v6774
        %v6776 = vrot.slane %v5941, 2
        %v6777 = vsel %vm6760, %v6774, %v6776
        %v6778 = vrot.slane %v5942, 2
        %v6779 = vsel %vm6760, %v6776, %v6778
        %v6780 = vrot.slane %v5943, 2
        %v6781 = vsel %vm6760, %v6778, %v6780
        %v6782 = vrot.slane %v5944, 2
        %v6783 = vsel %vm6760, %v6780, %v6782
        %v6784 = vrot.slane %v5945, 2
        %v6785 = vsel %vm6760, %v6782, %v6784
        %v6786 = vrot.slane %v5946, 2
        %v6787 = vsel %vm6760, %v6784, %v6786
        %v6788 = vrot.slane %v5947, 2
        %v6789 = vsel %vm6760, %v6786, %v6788
        %v6790 = vrot.slane %v5948, 2
        %v6791 = vsel %vm6760, %v6788, %v6790
        %v6792 = vrot.slane %v5949, 2
        %v6793 = vsel %vm6760, %v6790, %v6792
        %v6794 = vrot.slane %v5950, 2
        %v6795 = vsel %vm6760, %v6792, %v6794
        %v6796 = vrot.slane %v6288, 2
        %v6797 = vsel %vm6760, %v6794, %v6796
        %v6832 = vunpack.c.l.b16 %v6741
        %v6833 = vunpack.c.l.b16 %v6742
        %v6834 = vunpack.c.l.b16 %v6743
        %v6835 = vunpack.c.l.b16 %v6744
        %v6836 = vunpack.c.l.b16 %v6745
        %v6837 = vunpack.c.l.b16 %v6746
        %v6838 = vunpack.c.l.b16 %v6747
        %v6839 = vunpack.c.l.b16 %v6748
        %v6840 = vunpack.c.l.b16 %v6749
        %v6841 = vunpack.c.l.b16 %v6750
        %v6842 = vunpack.c.l.b16 %v6751
        %v6843 = vunpack.c.l.b16 %v6752
        %v6844 = vunpack.c.l.b16 %v6753
        %v6845 = vunpack.c.l.b16 %v6754
        %v6846 = vunpack.c.l.b16 %v6755
        %v6847 = vunpack.c.l.b16 %v6756
        %v6848 = vpack.c.b16 %v6833, %v6832
        %v6849 = vpack.c.b16 %v6835, %v6834
        %v6850 = vpack.c.b16 %v6837, %v6836
        %v6851 = vpack.c.b16 %v6839, %v6838
        %v6852 = vpack.c.b16 %v6841, %v6840
        %v6853 = vpack.c.b16 %v6843, %v6842
        %v6854 = vpack.c.b16 %v6845, %v6844
        %v6855 = vpack.c.b16 %v6847, %v6846
        %6864 = vmatprep.subr.bf16.mxu0 0
        %6865 = vmatpush1.bf16.msra.mxu0 %v6855
        %6866 = vmatprep.subr.bf16.mxu0 0
        %6867 = vmatpush1.bf16.msra.mxu0 %v6854
        %6868 = vmatprep.subr.bf16.mxu0 0
        %6869 = vmatpush1.bf16.msra.mxu0 %v6853
        %6870 = vmatprep.subr.bf16.mxu0 0
        %6871 = vmatpush1.bf16.msra.mxu0 %v6852
        %6872 = vmatprep.subr.bf16.mxu0 0
        %6873 = vmatpush1.bf16.msra.mxu0 %v6851
        %6874 = vmatprep.subr.bf16.mxu0 0
        %6875 = vmatpush1.bf16.msra.mxu0 %v6850
        %6876 = vmatprep.subr.bf16.mxu0 0
        %6877 = vmatpush1.bf16.msra.mxu0 %v6849
        %6878 = vmatprep.subr.bf16.mxu0 0
        %6879 = vmatpush1.bf16.msra.mxu0 %v6848
        %6880 = vmatprep.subr.bf16.mxu0 0
        %6881 = vmatpush2.bf16.msra.mxu0 0
        %6882 = vmatprep.subr.bf16.mxu0 0
        %6883 = vmatpush2.bf16.msra.mxu0 0
        %6884 = vmatprep.subr.bf16.mxu0 0
        %6885 = vmatpush2.bf16.msra.mxu0 0
        %6886 = vmatprep.subr.bf16.mxu0 0
        %6887 = vmatpush2.bf16.msra.mxu0 0
        %6888 = vmatprep.subr.bf16.mxu0 0
        %6889 = vmatpush2.bf16.msra.mxu0 0
        %6890 = vmatprep.subr.bf16.mxu0 0
        %6891 = vmatpush2.bf16.msra.mxu0 0
        %6892 = vmatprep.subr.bf16.mxu0 0
        %6893 = vmatpush2.bf16.msra.mxu0 0
        %6894 = vmatprep.subr.bf16.mxu0 0
        %6895 = vmatpush2.bf16.msra.mxu0 0
        %6896 = vmatprep.mubr.bf16.mxu0 0
        %6897 = vmatmul.mubr.bf16.gmra.mxu0 %v6763
        %v6898 = vpop.f32.mrf.mxu0
        %v6899 = vadd.f32 0.0, %v6898
        %v6900 = vpop.f32.mrf.mxu0
        %v6901 = vpop.f32.mrf.mxu0
        %v6902 = vadd.f32 0.0, %v6901
        %v6903 = vpop.f32.mrf.mxu0
        %6904 = vmatprep.mubr.bf16.mxu0 0
        %6905 = vmatmul.mubr.bf16.gmra.mxu0 %v6765
        %v6906 = vpop.f32.mrf.mxu0
        %v6907 = vadd.f32 0.0, %v6906
        %v6908 = vpop.f32.mrf.mxu0
        %v6909 = vpop.f32.mrf.mxu0
        %v6910 = vadd.f32 0.0, %v6909
        %v6911 = vpop.f32.mrf.mxu0
        %6912 = vmatprep.mubr.bf16.mxu0 0
        %6913 = vmatmul.mubr.bf16.gmra.mxu0 %v6767
        %v6914 = vpop.f32.mrf.mxu0
        %v6915 = vadd.f32 0.0, %v6914
        %v6916 = vpop.f32.mrf.mxu0
        %v6917 = vpop.f32.mrf.mxu0
        %v6918 = vadd.f32 0.0, %v6917
        %v6919 = vpop.f32.mrf.mxu0
        %6920 = vmatprep.mubr.bf16.mxu0 0
        %6921 = vmatmul.mubr.bf16.gmra.mxu0 %v6769
        %v6922 = vpop.f32.mrf.mxu0
        %v6923 = vadd.f32 0.0, %v6922
        %v6924 = vpop.f32.mrf.mxu0
        %v6925 = vpop.f32.mrf.mxu0
        %v6926 = vadd.f32 0.0, %v6925
        %v6927 = vpop.f32.mrf.mxu0
        %6928 = vmatprep.mubr.bf16.mxu0 0
        %6929 = vmatmul.mubr.bf16.gmra.mxu0 %v6771
        %v6930 = vpop.f32.mrf.mxu0
        %v6931 = vadd.f32 0.0, %v6930
        %v6932 = vpop.f32.mrf.mxu0
        %v6933 = vpop.f32.mrf.mxu0
        %v6934 = vadd.f32 0.0, %v6933
        %v6935 = vpop.f32.mrf.mxu0
        %6936 = vmatprep.mubr.bf16.mxu0 0
        %6937 = vmatmul.mubr.bf16.gmra.mxu0 %v6773
        %v6938 = vpop.f32.mrf.mxu0
        %v6939 = vadd.f32 0.0, %v6938
        %v6940 = vpop.f32.mrf.mxu0
        %v6941 = vpop.f32.mrf.mxu0
        %v6942 = vadd.f32 0.0, %v6941
        %v6943 = vpop.f32.mrf.mxu0
        %6944 = vmatprep.mubr.bf16.mxu0 0
        %6945 = vmatmul.mubr.bf16.gmra.mxu0 %v6775
        %v6946 = vpop.f32.mrf.mxu0
        %v6947 = vadd.f32 0.0, %v6946
        %v6948 = vpop.f32.mrf.mxu0
        %v6949 = vpop.f32.mrf.mxu0
        %v6950 = vadd.f32 0.0, %v6949
        %v6951 = vpop.f32.mrf.mxu0
        %6952 = vmatprep.mubr.bf16.mxu0 0
        %6953 = vmatmul.mubr.bf16.gmra.mxu0 %v6777
        %v6954 = vpop.f32.mrf.mxu0
        %v6955 = vadd.f32 0.0, %v6954
        %v6956 = vpop.f32.mrf.mxu0
        %v6957 = vpop.f32.mrf.mxu0
        %v6958 = vadd.f32 0.0, %v6957
        %v6959 = vpop.f32.mrf.mxu0
        %6960 = vmatprep.mubr.bf16.mxu0 0
        %6961 = vmatmul.mubr.bf16.gmra.mxu0 %v6779
        %v6962 = vpop.f32.mrf.mxu0
        %v6963 = vadd.f32 0.0, %v6962
        %v6964 = vpop.f32.mrf.mxu0
        %v6965 = vpop.f32.mrf.mxu0
        %v6966 = vadd.f32 0.0, %v6965
        %v6967 = vpop.f32.mrf.mxu0
        %6968 = vmatprep.mubr.bf16.mxu0 0
        %6969 = vmatmul.mubr.bf16.gmra.mxu0 %v6781
        %v6970 = vpop.f32.mrf.mxu0
        %v6971 = vadd.f32 0.0, %v6970
        %v6972 = vpop.f32.mrf.mxu0
        %v6973 = vpop.f32.mrf.mxu0
        %v6974 = vadd.f32 0.0, %v6973
        %v6975 = vpop.f32.mrf.mxu0
        %6976 = vmatprep.mubr.bf16.mxu0 0
        %6977 = vmatmul.mubr.bf16.gmra.mxu0 %v6783
        %v6978 = vpop.f32.mrf.mxu0
        %v6979 = vadd.f32 0.0, %v6978
        %v6980 = vpop.f32.mrf.mxu0
        %v6981 = vpop.f32.mrf.mxu0
        %v6982 = vadd.f32 0.0, %v6981
        %v6983 = vpop.f32.mrf.mxu0
        %6984 = vmatprep.mubr.bf16.mxu0 0
        %6985 = vmatmul.mubr.bf16.gmra.mxu0 %v6785
        %v6986 = vpop.f32.mrf.mxu0
        %v6987 = vadd.f32 0.0, %v6986
        %v6988 = vpop.f32.mrf.mxu0
        %v6989 = vpop.f32.mrf.mxu0
        %v6990 = vadd.f32 0.0, %v6989
        %v6991 = vpop.f32.mrf.mxu0
        %6992 = vmatprep.mubr.bf16.mxu0 0
        %6993 = vmatmul.mubr.bf16.gmra.mxu0 %v6787
        %v6994 = vpop.f32.mrf.mxu0
        %v6995 = vadd.f32 0.0, %v6994
        %v6996 = vpop.f32.mrf.mxu0
        %v6997 = vpop.f32.mrf.mxu0
        %v6998 = vadd.f32 0.0, %v6997
        %v6999 = vpop.f32.mrf.mxu0
        %7000 = vmatprep.mubr.bf16.mxu0 0
        %7001 = vmatmul.mubr.bf16.gmra.mxu0 %v6789
        %v7002 = vpop.f32.mrf.mxu0
        %v7003 = vadd.f32 0.0, %v7002
        %v7004 = vpop.f32.mrf.mxu0
        %v7005 = vpop.f32.mrf.mxu0
        %v7006 = vadd.f32 0.0, %v7005
        %v7007 = vpop.f32.mrf.mxu0
        %7008 = vmatprep.mubr.bf16.mxu0 0
        %7009 = vmatmul.mubr.bf16.gmra.mxu0 %v6791
        %v7010 = vpop.f32.mrf.mxu0
        %v7011 = vadd.f32 0.0, %v7010
        %v7012 = vpop.f32.mrf.mxu0
        %v7013 = vpop.f32.mrf.mxu0
        %v7014 = vadd.f32 0.0, %v7013
        %v7015 = vpop.f32.mrf.mxu0
        %7016 = vmatprep.mubr.bf16.mxu0 0
        %7017 = vmatmul.mubr.bf16.gmra.mxu0 %v6793
        %v7018 = vpop.f32.mrf.mxu0
        %v7019 = vadd.f32 0.0, %v7018
        %v7020 = vpop.f32.mrf.mxu0
        %v7021 = vpop.f32.mrf.mxu0
        %v7022 = vadd.f32 0.0, %v7021
        %v7023 = vpop.f32.mrf.mxu0
        %7024 = vmatprep.mubr.bf16.mxu0 0
        %7025 = vmatmul.mubr.bf16.gmra.mxu0 %v6795
        %v7026 = vpop.f32.mrf.mxu0
        %v7027 = vadd.f32 0.0, %v7026
        %v7028 = vpop.f32.mrf.mxu0
        %v7029 = vpop.f32.mrf.mxu0
        %v7030 = vadd.f32 0.0, %v7029
        %v7031 = vpop.f32.mrf.mxu0
        %7032 = vmatprep.mubr.bf16.mxu0 0
        %7033 = vmatmul.mubr.bf16.gmra.mxu0 %v6797
        %v7034 = vpop.f32.mrf.mxu0
        %v7035 = vadd.f32 0.0, %v7034
        %v7036 = vpop.f32.mrf.mxu0
        %v7037 = vpop.f32.mrf.mxu0
        %v7038 = vadd.f32 0.0, %v7037
        %v7039 = vpop.f32.mrf.mxu0
        %7040 = vdwg.mxu0
        %v7041 = vadd.f32 %v6703, %v6899
        %v7042 = vadd.f32 %v6704, %v6902
        %v7043 = vadd.f32 %v6705, %v6907
        %v7044 = vadd.f32 %v6706, %v6910
        %v7045 = vadd.f32 %v6707, %v6915
        %v7046 = vadd.f32 %v6708, %v6918
        %v7047 = vadd.f32 %v6709, %v6923
        %v7048 = vadd.f32 %v6710, %v6926
        %v7049 = vadd.f32 %v6711, %v6931
        %v7050 = vadd.f32 %v6712, %v6934
        %v7051 = vadd.f32 %v6713, %v6939
        %v7052 = vadd.f32 %v6714, %v6942
        %v7053 = vadd.f32 %v6715, %v6947
        %v7054 = vadd.f32 %v6716, %v6950
        %v7055 = vadd.f32 %v6717, %v6955
        %v7056 = vadd.f32 %v6718, %v6958
        %v7057 = vadd.f32 %v6719, %v6963
        %v7058 = vadd.f32 %v6720, %v6966
        %v7059 = vadd.f32 %v6721, %v6971
        %v7060 = vadd.f32 %v6722, %v6974
        %v7061 = vadd.f32 %v6723, %v6979
        %v7062 = vadd.f32 %v6724, %v6982
        %v7063 = vadd.f32 %v6725, %v6987
        %v7064 = vadd.f32 %v6726, %v6990
        %v7065 = vadd.f32 %v6727, %v6995
        %v7066 = vadd.f32 %v6728, %v6998
        %v7067 = vadd.f32 %v6729, %v7003
        %v7068 = vadd.f32 %v6730, %v7006
        %v7069 = vadd.f32 %v6731, %v7011
        %v7070 = vadd.f32 %v6732, %v7014
        %v7071 = vadd.f32 %v6733, %v7019
        %v7072 = vadd.f32 %v6734, %v7022
        %v7073 = vadd.f32 %v6735, %v7027
        %v7074 = vadd.f32 %v6736, %v7030
        %v7075 = vadd.f32 %v6737, %v7035
        %v7076 = vadd.f32 %v6738, %v7038
        %v7077 = vld [vmem:[#allocation2 + $0x10] sm:$0xc]
        %v7078 = vld [vmem:[#allocation2 + $0x14] sm:$0xf]
        %v7079 = vld [vmem:[#allocation2 + $0x18] sm:$0xf]
        %v7080 = vld [vmem:[#allocation2 + $0x1c] sm:$0xf]
        %v7081 = vld [vmem:[#allocation2 + $0x20] sm:$0xf]
        %v7082 = vld [vmem:[#allocation2 + $0x24] sm:$0xf]
        %v7083 = vld [vmem:[#allocation2 + $0x28] sm:$0xf]
        %v7084 = vld [vmem:[#allocation2 + $0x2c] sm:$0xf]
        %v7085 = vld [vmem:[#allocation2 + $0x30] sm:$0xf]
        %v7086 = vld [vmem:[#allocation2 + $0x34] sm:$0xf]
        %v7087 = vld [vmem:[#allocation2 + $0x38] sm:$0xf]
        %v7088 = vld [vmem:[#allocation2 + $0x3c] sm:$0xf]
        %v7089 = vld [vmem:[#allocation2 + $0x40] sm:$0xf]
        %v7090 = vld [vmem:[#allocation2 + $0x44] sm:$0xf]
        %v7091 = vld [vmem:[#allocation2 + $0x48] sm:$0xf]
        %v7092 = vld [vmem:[#allocation2 + $0x4c] sm:$0xf]
        %v7093 = vld [vmem:[#allocation2 + $0x50] sm:$0xf]
        %v7094 = vld [vmem:[#allocation2 + $0x54] sm:$0xf]
        %v7095 = vld [vmem:[#allocation2 + $0x58] sm:$0xf]
        %v7096 = vld [vmem:[#allocation2 + $0x5c] sm:$0xf]
        %v7097 = vld [vmem:[#allocation2 + $0x60] sm:$0xf]
        %v7098 = vld [vmem:[#allocation2 + $0x64] sm:$0xf]
        %v7099 = vld [vmem:[#allocation2 + $0x68] sm:$0xf]
        %v7100 = vld [vmem:[#allocation2 + $0x6c] sm:$0xf]
        %v7101 = vld [vmem:[#allocation2 + $0x70] sm:$0xf]
        %v7102 = vld [vmem:[#allocation2 + $0x74] sm:$0xf]
        %v7103 = vld [vmem:[#allocation2 + $0x78] sm:$0xf]
        %v7104 = vld [vmem:[#allocation2 + $0x7c] sm:$0xf]
        %v7105 = vld [vmem:[#allocation2 + $0x80] sm:$0xf]
        %v7106 = vld [vmem:[#allocation2 + $0x84] sm:$0xf]
        %v7107 = vld [vmem:[#allocation2 + $0x88] sm:$0xf]
        %v7108 = vld [vmem:[#allocation2 + $0x8c] sm:$0xf]
        %v7109 = vld [vmem:[#allocation2 + $0x90] sm:$0xf]
        %v7110 = vld [vmem:[#allocation2 + $0x94] sm:$0xf]
        %v7111 = vld [vmem:[#allocation2 + $0x98] sm:$0xf]
        %v7112 = vld [vmem:[#allocation2 + $0x9c] sm:$0xf]
        %v7113 = vld [vmem:[#allocation2 + $0xa0] sm:$0x3]
        %s7114 = scalar_lea.vmem %s5, 384
        %v7115 = vld [vmem:[%s7114] sm:$0xf]
        %v7116 = vld [vmem:[%s7114 + $0x4] sm:$0xf]
        %v7117 = vld [vmem:[%s7114 + $0x8] sm:$0xf]
        %v7118 = vld [vmem:[%s7114 + $0xc] sm:$0xf]
        %v7119 = vld [vmem:[%s7114 + $0x10] sm:$0xf]
        %v7120 = vld [vmem:[%s7114 + $0x14] sm:$0xf]
        %v7121 = vld [vmem:[%s7114 + $0x18] sm:$0xf]
        %v7122 = vld [vmem:[%s7114 + $0x1c] sm:$0xf]
        %v7123 = vld [vmem:[%s7114 + $0x20] sm:$0xf]
        %v7124 = vld [vmem:[%s7114 + $0x24] sm:$0xf]
        %v7125 = vld [vmem:[%s7114 + $0x28] sm:$0xf]
        %v7126 = vld [vmem:[%s7114 + $0x2c] sm:$0xf]
        %v7127 = vld [vmem:[%s7114 + $0x30] sm:$0xf]
        %v7128 = vld [vmem:[%s7114 + $0x34] sm:$0xf]
        %v7129 = vld [vmem:[%s7114 + $0x38] sm:$0xf]
        %v7130 = vld [vmem:[%s7114 + $0x3c] sm:$0xf]
        %v7168 = vunpack.c.l.b16 %v7077
        %v7169 = vunpack.c.l.b16 %v7078
        %v7170 = vunpack.c.l.b16 %v7079
        %v7171 = vunpack.c.l.b16 %v7080
        %v7172 = vunpack.c.l.b16 %v7081
        %v7173 = vunpack.c.l.b16 %v7082
        %v7174 = vunpack.c.l.b16 %v7083
        %v7175 = vunpack.c.l.b16 %v7084
        %v7176 = vunpack.c.l.b16 %v7085
        %v7177 = vunpack.c.l.b16 %v7086
        %v7178 = vunpack.c.l.b16 %v7087
        %v7179 = vunpack.c.l.b16 %v7088
        %v7180 = vunpack.c.l.b16 %v7089
        %v7181 = vunpack.c.l.b16 %v7090
        %v7182 = vunpack.c.l.b16 %v7091
        %v7183 = vunpack.c.l.b16 %v7092
        %v7184 = vunpack.c.l.b16 %v7093
        %v7185 = vunpack.c.l.b16 %v7094
        %v7186 = vunpack.c.l.b16 %v7095
        %v7187 = vunpack.c.l.b16 %v7096
        %v7188 = vunpack.c.l.b16 %v7097
        %v7189 = vunpack.c.l.b16 %v7098
        %v7190 = vunpack.c.l.b16 %v7099
        %v7191 = vunpack.c.l.b16 %v7100
        %v7192 = vunpack.c.l.b16 %v7101
        %v7193 = vunpack.c.l.b16 %v7102
        %v7194 = vunpack.c.l.b16 %v7103
        %v7195 = vunpack.c.l.b16 %v7104
        %v7196 = vunpack.c.l.b16 %v7105
        %v7197 = vunpack.c.l.b16 %v7106
        %v7198 = vunpack.c.l.b16 %v7107
        %v7199 = vunpack.c.l.b16 %v7108
        %v7200 = vunpack.c.l.b16 %v7109
        %v7201 = vunpack.c.l.b16 %v7110
        %v7202 = vunpack.c.l.b16 %v7111
        %v7203 = vunpack.c.l.b16 %v7112
        %v7204 = vunpack.c.l.b16 %v7113
        %v7205 = vpack.c.b16 %v7169, %v7168
        %v7206 = vpack.c.b16 %v7171, %v7170
        %v7207 = vpack.c.b16 %v7173, %v7172
        %v7208 = vpack.c.b16 %v7175, %v7174
        %v7209 = vpack.c.b16 %v7177, %v7176
        %v7210 = vpack.c.b16 %v7179, %v7178
        %v7211 = vpack.c.b16 %v7181, %v7180
        %v7212 = vpack.c.b16 %v7183, %v7182
        %v7213 = vpack.c.b16 %v7185, %v7184
        %v7214 = vpack.c.b16 %v7187, %v7186
        %v7215 = vpack.c.b16 %v7189, %v7188
        %v7216 = vpack.c.b16 %v7191, %v7190
        %v7217 = vpack.c.b16 %v7193, %v7192
        %v7218 = vpack.c.b16 %v7195, %v7194
        %v7219 = vpack.c.b16 %v7197, %v7196
        %v7220 = vpack.c.b16 %v7199, %v7198
        %v7221 = vpack.c.b16 %v7201, %v7200
        %v7222 = vpack.c.b16 %v7203, %v7202
        %v7223 = vpack.c.b16 %v7204, %v7204
        %v7224 = vrot.slane %v7205, 2
        %v7225 = vrot.slane %v7206, 2
        %v7226 = vsel %vm6760, %v7224, %v7225
        %v7227 = vrot.slane %v7207, 2
        %v7228 = vsel %vm6760, %v7225, %v7227
        %v7229 = vrot.slane %v7208, 2
        %v7230 = vsel %vm6760, %v7227, %v7229
        %v7231 = vrot.slane %v7209, 2
        %v7232 = vsel %vm6760, %v7229, %v7231
        %v7233 = vrot.slane %v7210, 2
        %v7234 = vsel %vm6760, %v7231, %v7233
        %v7235 = vrot.slane %v7211, 2
        %v7236 = vsel %vm6760, %v7233, %v7235
        %v7237 = vrot.slane %v7212, 2
        %v7238 = vsel %vm6760, %v7235, %v7237
        %v7239 = vrot.slane %v7213, 2
        %v7240 = vsel %vm6760, %v7237, %v7239
        %v7241 = vrot.slane %v7214, 2
        %v7242 = vsel %vm6760, %v7239, %v7241
        %v7243 = vrot.slane %v7215, 2
        %v7244 = vsel %vm6760, %v7241, %v7243
        %v7245 = vrot.slane %v7216, 2
        %v7246 = vsel %vm6760, %v7243, %v7245
        %v7247 = vrot.slane %v7217, 2
        %v7248 = vsel %vm6760, %v7245, %v7247
        %v7249 = vrot.slane %v7218, 2
        %v7250 = vsel %vm6760, %v7247, %v7249
        %v7251 = vrot.slane %v7219, 2
        %v7252 = vsel %vm6760, %v7249, %v7251
        %v7253 = vrot.slane %v7220, 2
        %v7254 = vsel %vm6760, %v7251, %v7253
        %v7255 = vrot.slane %v7221, 2
        %v7256 = vsel %vm6760, %v7253, %v7255
        %v7257 = vrot.slane %v7222, 2
        %v7258 = vsel %vm6760, %v7255, %v7257
        %v7259 = vrot.slane %v7223, 2
        %v7260 = vsel %vm6760, %v7257, %v7259
        %v7295 = vunpack.c.l.b16 %v7115
        %v7296 = vunpack.c.l.b16 %v7116
        %v7297 = vunpack.c.l.b16 %v7117
        %v7298 = vunpack.c.l.b16 %v7118
        %v7299 = vunpack.c.l.b16 %v7119
        %v7300 = vunpack.c.l.b16 %v7120
        %v7301 = vunpack.c.l.b16 %v7121
        %v7302 = vunpack.c.l.b16 %v7122
        %v7303 = vunpack.c.l.b16 %v7123
        %v7304 = vunpack.c.l.b16 %v7124
        %v7305 = vunpack.c.l.b16 %v7125
        %v7306 = vunpack.c.l.b16 %v7126
        %v7307 = vunpack.c.l.b16 %v7127
        %v7308 = vunpack.c.l.b16 %v7128
        %v7309 = vunpack.c.l.b16 %v7129
        %v7310 = vunpack.c.l.b16 %v7130
        %v7311 = vpack.c.b16 %v7296, %v7295
        %v7312 = vpack.c.b16 %v7298, %v7297
        %v7313 = vpack.c.b16 %v7300, %v7299
        %v7314 = vpack.c.b16 %v7302, %v7301
        %v7315 = vpack.c.b16 %v7304, %v7303
        %v7316 = vpack.c.b16 %v7306, %v7305
        %v7317 = vpack.c.b16 %v7308, %v7307
        %v7318 = vpack.c.b16 %v7310, %v7309
        %7327 = vmatprep.subr.bf16.mxu0 0
        %7328 = vmatpush1.bf16.msra.mxu0 %v7318
        %7329 = vmatprep.subr.bf16.mxu0 0
        %7330 = vmatpush1.bf16.msra.mxu0 %v7317
        %7331 = vmatprep.subr.bf16.mxu0 0
        %7332 = vmatpush1.bf16.msra.mxu0 %v7316
        %7333 = vmatprep.subr.bf16.mxu0 0
        %7334 = vmatpush1.bf16.msra.mxu0 %v7315
        %7335 = vmatprep.subr.bf16.mxu0 0
        %7336 = vmatpush1.bf16.msra.mxu0 %v7314
        %7337 = vmatprep.subr.bf16.mxu0 0
        %7338 = vmatpush1.bf16.msra.mxu0 %v7313
        %7339 = vmatprep.subr.bf16.mxu0 0
        %7340 = vmatpush1.bf16.msra.mxu0 %v7312
        %7341 = vmatprep.subr.bf16.mxu0 0
        %7342 = vmatpush1.bf16.msra.mxu0 %v7311
        %7343 = vmatprep.subr.bf16.mxu0 0
        %7344 = vmatpush2.bf16.msra.mxu0 0
        %7345 = vmatprep.subr.bf16.mxu0 0
        %7346 = vmatpush2.bf16.msra.mxu0 0
        %7347 = vmatprep.subr.bf16.mxu0 0
        %7348 = vmatpush2.bf16.msra.mxu0 0
        %7349 = vmatprep.subr.bf16.mxu0 0
        %7350 = vmatpush2.bf16.msra.mxu0 0
        %7351 = vmatprep.subr.bf16.mxu0 0
        %7352 = vmatpush2.bf16.msra.mxu0 0
        %7353 = vmatprep.subr.bf16.mxu0 0
        %7354 = vmatpush2.bf16.msra.mxu0 0
        %7355 = vmatprep.subr.bf16.mxu0 0
        %7356 = vmatpush2.bf16.msra.mxu0 0
        %7357 = vmatprep.subr.bf16.mxu0 0
        %7358 = vmatpush2.bf16.msra.mxu0 0
        %7359 = vmatprep.mubr.bf16.mxu0 0
        %7360 = vmatmul.mubr.bf16.gmra.mxu0 %v7226
        %v7361 = vpop.f32.mrf.mxu0
        %v7362 = vadd.f32 0.0, %v7361
        %v7363 = vpop.f32.mrf.mxu0
        %v7364 = vpop.f32.mrf.mxu0
        %v7365 = vadd.f32 0.0, %v7364
        %v7366 = vpop.f32.mrf.mxu0
        %7367 = vmatprep.mubr.bf16.mxu0 0
        %7368 = vmatmul.mubr.bf16.gmra.mxu0 %v7228
        %v7369 = vpop.f32.mrf.mxu0
        %v7370 = vadd.f32 0.0, %v7369
        %v7371 = vpop.f32.mrf.mxu0
        %v7372 = vpop.f32.mrf.mxu0
        %v7373 = vadd.f32 0.0, %v7372
        %v7374 = vpop.f32.mrf.mxu0
        %7375 = vmatprep.mubr.bf16.mxu0 0
        %7376 = vmatmul.mubr.bf16.gmra.mxu0 %v7230
        %v7377 = vpop.f32.mrf.mxu0
        %v7378 = vadd.f32 0.0, %v7377
        %v7379 = vpop.f32.mrf.mxu0
        %v7380 = vpop.f32.mrf.mxu0
        %v7381 = vadd.f32 0.0, %v7380
        %v7382 = vpop.f32.mrf.mxu0
        %7383 = vmatprep.mubr.bf16.mxu0 0
        %7384 = vmatmul.mubr.bf16.gmra.mxu0 %v7232
        %v7385 = vpop.f32.mrf.mxu0
        %v7386 = vadd.f32 0.0, %v7385
        %v7387 = vpop.f32.mrf.mxu0
        %v7388 = vpop.f32.mrf.mxu0
        %v7389 = vadd.f32 0.0, %v7388
        %v7390 = vpop.f32.mrf.mxu0
        %7391 = vmatprep.mubr.bf16.mxu0 0
        %7392 = vmatmul.mubr.bf16.gmra.mxu0 %v7234
        %v7393 = vpop.f32.mrf.mxu0
        %v7394 = vadd.f32 0.0, %v7393
        %v7395 = vpop.f32.mrf.mxu0
        %v7396 = vpop.f32.mrf.mxu0
        %v7397 = vadd.f32 0.0, %v7396
        %v7398 = vpop.f32.mrf.mxu0
        %7399 = vmatprep.mubr.bf16.mxu0 0
        %7400 = vmatmul.mubr.bf16.gmra.mxu0 %v7236
        %v7401 = vpop.f32.mrf.mxu0
        %v7402 = vadd.f32 0.0, %v7401
        %v7403 = vpop.f32.mrf.mxu0
        %v7404 = vpop.f32.mrf.mxu0
        %v7405 = vadd.f32 0.0, %v7404
        %v7406 = vpop.f32.mrf.mxu0
        %7407 = vmatprep.mubr.bf16.mxu0 0
        %7408 = vmatmul.mubr.bf16.gmra.mxu0 %v7238
        %v7409 = vpop.f32.mrf.mxu0
        %v7410 = vadd.f32 0.0, %v7409
        %v7411 = vpop.f32.mrf.mxu0
        %v7412 = vpop.f32.mrf.mxu0
        %v7413 = vadd.f32 0.0, %v7412
        %v7414 = vpop.f32.mrf.mxu0
        %7415 = vmatprep.mubr.bf16.mxu0 0
        %7416 = vmatmul.mubr.bf16.gmra.mxu0 %v7240
        %v7417 = vpop.f32.mrf.mxu0
        %v7418 = vadd.f32 0.0, %v7417
        %v7419 = vpop.f32.mrf.mxu0
        %v7420 = vpop.f32.mrf.mxu0
        %v7421 = vadd.f32 0.0, %v7420
        %v7422 = vpop.f32.mrf.mxu0
        %7423 = vmatprep.mubr.bf16.mxu0 0
        %7424 = vmatmul.mubr.bf16.gmra.mxu0 %v7242
        %v7425 = vpop.f32.mrf.mxu0
        %v7426 = vadd.f32 0.0, %v7425
        %v7427 = vpop.f32.mrf.mxu0
        %v7428 = vpop.f32.mrf.mxu0
        %v7429 = vadd.f32 0.0, %v7428
        %v7430 = vpop.f32.mrf.mxu0
        %7431 = vmatprep.mubr.bf16.mxu0 0
        %7432 = vmatmul.mubr.bf16.gmra.mxu0 %v7244
        %v7433 = vpop.f32.mrf.mxu0
        %v7434 = vadd.f32 0.0, %v7433
        %v7435 = vpop.f32.mrf.mxu0
        %v7436 = vpop.f32.mrf.mxu0
        %v7437 = vadd.f32 0.0, %v7436
        %v7438 = vpop.f32.mrf.mxu0
        %7439 = vmatprep.mubr.bf16.mxu0 0
        %7440 = vmatmul.mubr.bf16.gmra.mxu0 %v7246
        %v7441 = vpop.f32.mrf.mxu0
        %v7442 = vadd.f32 0.0, %v7441
        %v7443 = vpop.f32.mrf.mxu0
        %v7444 = vpop.f32.mrf.mxu0
        %v7445 = vadd.f32 0.0, %v7444
        %v7446 = vpop.f32.mrf.mxu0
        %7447 = vmatprep.mubr.bf16.mxu0 0
        %7448 = vmatmul.mubr.bf16.gmra.mxu0 %v7248
        %v7449 = vpop.f32.mrf.mxu0
        %v7450 = vadd.f32 0.0, %v7449
        %v7451 = vpop.f32.mrf.mxu0
        %v7452 = vpop.f32.mrf.mxu0
        %v7453 = vadd.f32 0.0, %v7452
        %v7454 = vpop.f32.mrf.mxu0
        %7455 = vmatprep.mubr.bf16.mxu0 0
        %7456 = vmatmul.mubr.bf16.gmra.mxu0 %v7250
        %v7457 = vpop.f32.mrf.mxu0
        %v7458 = vadd.f32 0.0, %v7457
        %v7459 = vpop.f32.mrf.mxu0
        %v7460 = vpop.f32.mrf.mxu0
        %v7461 = vadd.f32 0.0, %v7460
        %v7462 = vpop.f32.mrf.mxu0
        %7463 = vmatprep.mubr.bf16.mxu0 0
        %7464 = vmatmul.mubr.bf16.gmra.mxu0 %v7252
        %v7465 = vpop.f32.mrf.mxu0
        %v7466 = vadd.f32 0.0, %v7465
        %v7467 = vpop.f32.mrf.mxu0
        %v7468 = vpop.f32.mrf.mxu0
        %v7469 = vadd.f32 0.0, %v7468
        %v7470 = vpop.f32.mrf.mxu0
        %7471 = vmatprep.mubr.bf16.mxu0 0
        %7472 = vmatmul.mubr.bf16.gmra.mxu0 %v7254
        %v7473 = vpop.f32.mrf.mxu0
        %v7474 = vadd.f32 0.0, %v7473
        %v7475 = vpop.f32.mrf.mxu0
        %v7476 = vpop.f32.mrf.mxu0
        %v7477 = vadd.f32 0.0, %v7476
        %v7478 = vpop.f32.mrf.mxu0
        %7479 = vmatprep.mubr.bf16.mxu0 0
        %7480 = vmatmul.mubr.bf16.gmra.mxu0 %v7256
        %v7481 = vpop.f32.mrf.mxu0
        %v7482 = vadd.f32 0.0, %v7481
        %v7483 = vpop.f32.mrf.mxu0
        %v7484 = vpop.f32.mrf.mxu0
        %v7485 = vadd.f32 0.0, %v7484
        %v7486 = vpop.f32.mrf.mxu0
        %7487 = vmatprep.mubr.bf16.mxu0 0
        %7488 = vmatmul.mubr.bf16.gmra.mxu0 %v7258
        %v7489 = vpop.f32.mrf.mxu0
        %v7490 = vadd.f32 0.0, %v7489
        %v7491 = vpop.f32.mrf.mxu0
        %v7492 = vpop.f32.mrf.mxu0
        %v7493 = vadd.f32 0.0, %v7492
        %v7494 = vpop.f32.mrf.mxu0
        %7495 = vmatprep.mubr.bf16.mxu0 0
        %7496 = vmatmul.mubr.bf16.gmra.mxu0 %v7260
        %v7497 = vpop.f32.mrf.mxu0
        %v7498 = vadd.f32 0.0, %v7497
        %v7499 = vpop.f32.mrf.mxu0
        %v7500 = vpop.f32.mrf.mxu0
        %v7501 = vadd.f32 0.0, %v7500
        %v7502 = vpop.f32.mrf.mxu0
        %7503 = vdwg.mxu0
        %v7504 = vadd.f32 %v7041, %v7362
        %v7505 = vadd.f32 %v7042, %v7365
        %v7506 = vadd.f32 %v7043, %v7370
        %v7507 = vadd.f32 %v7044, %v7373
        %v7508 = vadd.f32 %v7045, %v7378
        %v7509 = vadd.f32 %v7046, %v7381
        %v7510 = vadd.f32 %v7047, %v7386
        %v7511 = vadd.f32 %v7048, %v7389
        %v7512 = vadd.f32 %v7049, %v7394
        %v7513 = vadd.f32 %v7050, %v7397
        %v7514 = vadd.f32 %v7051, %v7402
        %v7515 = vadd.f32 %v7052, %v7405
        %v7516 = vadd.f32 %v7053, %v7410
        %v7517 = vadd.f32 %v7054, %v7413
        %v7518 = vadd.f32 %v7055, %v7418
        %v7519 = vadd.f32 %v7056, %v7421
        %v7520 = vadd.f32 %v7057, %v7426
        %v7521 = vadd.f32 %v7058, %v7429
        %v7522 = vadd.f32 %v7059, %v7434
        %v7523 = vadd.f32 %v7060, %v7437
        %v7524 = vadd.f32 %v7061, %v7442
        %v7525 = vadd.f32 %v7062, %v7445
        %v7526 = vadd.f32 %v7063, %v7450
        %v7527 = vadd.f32 %v7064, %v7453
        %v7528 = vadd.f32 %v7065, %v7458
        %v7529 = vadd.f32 %v7066, %v7461
        %v7530 = vadd.f32 %v7067, %v7466
        %v7531 = vadd.f32 %v7068, %v7469
        %v7532 = vadd.f32 %v7069, %v7474
        %v7533 = vadd.f32 %v7070, %v7477
        %v7534 = vadd.f32 %v7071, %v7482
        %v7535 = vadd.f32 %v7072, %v7485
        %v7536 = vadd.f32 %v7073, %v7490
        %v7537 = vadd.f32 %v7074, %v7493
        %v7538 = vadd.f32 %v7075, %v7498
        %v7539 = vadd.f32 %v7076, %v7501
        %v7540 = vld [vmem:[#allocation2 + $0xa0] sm:$0x7]
        %s7541 = scalar_lea.vmem %s5, 448
        %v7542 = vld [vmem:[%s7541] sm:$0xf]
        %v7543 = vld [vmem:[%s7541 + $0x4] sm:$0xf]
        %v7544 = vld [vmem:[%s7541 + $0x8] sm:$0xf]
        %v7545 = vld [vmem:[%s7541 + $0xc] sm:$0xf]
        %v7546 = vld [vmem:[%s7541 + $0x10] sm:$0xf]
        %v7547 = vld [vmem:[%s7541 + $0x14] sm:$0xf]
        %v7548 = vld [vmem:[%s7541 + $0x18] sm:$0xf]
        %v7549 = vld [vmem:[%s7541 + $0x1c] sm:$0xf]
        %v7550 = vld [vmem:[%s7541 + $0x20] sm:$0xf]
        %v7551 = vld [vmem:[%s7541 + $0x24] sm:$0xf]
        %v7552 = vld [vmem:[%s7541 + $0x28] sm:$0xf]
        %v7553 = vld [vmem:[%s7541 + $0x2c] sm:$0xf]
        %v7554 = vld [vmem:[%s7541 + $0x30] sm:$0xf]
        %v7555 = vld [vmem:[%s7541 + $0x34] sm:$0xf]
        %v7556 = vld [vmem:[%s7541 + $0x38] sm:$0xf]
        %v7557 = vld [vmem:[%s7541 + $0x3c] sm:$0xf]
        %v7559 = vunpack.c.l.b16 %v7540
        %v7560 = vpack.c.b16 %v7559, %v7559
        %vm7561 = vsmask.f32 5376
        %v7563 = vshrl.u32 %v7205, 16
        %v7565 = vrot.slane %v7563, 2
        %v7566 = vshll.u32 %v7205, 16
        %v7568 = vrot.slane %v7566, 3
        %v7569 = vor.u32 %v7565, %v7568
        %v7571 = vshrl.u32 %v7206, 16
        %v7573 = vrot.slane %v7571, 2
        %v7574 = vshll.u32 %v7206, 16
        %v7576 = vrot.slane %v7574, 3
        %v7577 = vor.u32 %v7573, %v7576
        %v7578 = vsel %vm7561, %v7569, %v7577
        %v7580 = vshrl.u32 %v7207, 16
        %v7582 = vrot.slane %v7580, 2
        %v7583 = vshll.u32 %v7207, 16
        %v7585 = vrot.slane %v7583, 3
        %v7586 = vor.u32 %v7582, %v7585
        %v7587 = vsel %vm7561, %v7577, %v7586
        %v7589 = vshrl.u32 %v7208, 16
        %v7591 = vrot.slane %v7589, 2
        %v7592 = vshll.u32 %v7208, 16
        %v7594 = vrot.slane %v7592, 3
        %v7595 = vor.u32 %v7591, %v7594
        %v7596 = vsel %vm7561, %v7586, %v7595
        %v7598 = vshrl.u32 %v7209, 16
        %v7600 = vrot.slane %v7598, 2
        %v7601 = vshll.u32 %v7209, 16
        %v7603 = vrot.slane %v7601, 3
        %v7604 = vor.u32 %v7600, %v7603
        %v7605 = vsel %vm7561, %v7595, %v7604
        %v7607 = vshrl.u32 %v7210, 16
        %v7609 = vrot.slane %v7607, 2
        %v7610 = vshll.u32 %v7210, 16
        %v7612 = vrot.slane %v7610, 3
        %v7613 = vor.u32 %v7609, %v7612
        %v7614 = vsel %vm7561, %v7604, %v7613
        %v7616 = vshrl.u32 %v7211, 16
        %v7618 = vrot.slane %v7616, 2
        %v7619 = vshll.u32 %v7211, 16
        %v7621 = vrot.slane %v7619, 3
        %v7622 = vor.u32 %v7618, %v7621
        %v7623 = vsel %vm7561, %v7613, %v7622
        %v7625 = vshrl.u32 %v7212, 16
        %v7627 = vrot.slane %v7625, 2
        %v7628 = vshll.u32 %v7212, 16
        %v7630 = vrot.slane %v7628, 3
        %v7631 = vor.u32 %v7627, %v7630
        %v7632 = vsel %vm7561, %v7622, %v7631
        %v7634 = vshrl.u32 %v7213, 16
        %v7636 = vrot.slane %v7634, 2
        %v7637 = vshll.u32 %v7213, 16
        %v7639 = vrot.slane %v7637, 3
        %v7640 = vor.u32 %v7636, %v7639
        %v7641 = vsel %vm7561, %v7631, %v7640
        %v7643 = vshrl.u32 %v7214, 16
        %v7645 = vrot.slane %v7643, 2
        %v7646 = vshll.u32 %v7214, 16
        %v7648 = vrot.slane %v7646, 3
        %v7649 = vor.u32 %v7645, %v7648
        %v7650 = vsel %vm7561, %v7640, %v7649
        %v7652 = vshrl.u32 %v7215, 16
        %v7654 = vrot.slane %v7652, 2
        %v7655 = vshll.u32 %v7215, 16
        %v7657 = vrot.slane %v7655, 3
        %v7658 = vor.u32 %v7654, %v7657
        %v7659 = vsel %vm7561, %v7649, %v7658
        %v7661 = vshrl.u32 %v7216, 16
        %v7663 = vrot.slane %v7661, 2
        %v7664 = vshll.u32 %v7216, 16
        %v7666 = vrot.slane %v7664, 3
        %v7667 = vor.u32 %v7663, %v7666
        %v7668 = vsel %vm7561, %v7658, %v7667
        %v7670 = vshrl.u32 %v7217, 16
        %v7672 = vrot.slane %v7670, 2
        %v7673 = vshll.u32 %v7217, 16
        %v7675 = vrot.slane %v7673, 3
        %v7676 = vor.u32 %v7672, %v7675
        %v7677 = vsel %vm7561, %v7667, %v7676
        %v7679 = vshrl.u32 %v7218, 16
        %v7681 = vrot.slane %v7679, 2
        %v7682 = vshll.u32 %v7218, 16
        %v7684 = vrot.slane %v7682, 3
        %v7685 = vor.u32 %v7681, %v7684
        %v7686 = vsel %vm7561, %v7676, %v7685
        %v7688 = vshrl.u32 %v7219, 16
        %v7690 = vrot.slane %v7688, 2
        %v7691 = vshll.u32 %v7219, 16
        %v7693 = vrot.slane %v7691, 3
        %v7694 = vor.u32 %v7690, %v7693
        %v7695 = vsel %vm7561, %v7685, %v7694
        %v7697 = vshrl.u32 %v7220, 16
        %v7699 = vrot.slane %v7697, 2
        %v7700 = vshll.u32 %v7220, 16
        %v7702 = vrot.slane %v7700, 3
        %v7703 = vor.u32 %v7699, %v7702
        %v7704 = vsel %vm7561, %v7694, %v7703
        %v7706 = vshrl.u32 %v7221, 16
        %v7708 = vrot.slane %v7706, 2
        %v7709 = vshll.u32 %v7221, 16
        %v7711 = vrot.slane %v7709, 3
        %v7712 = vor.u32 %v7708, %v7711
        %v7713 = vsel %vm7561, %v7703, %v7712
        %v7715 = vshrl.u32 %v7222, 16
        %v7717 = vrot.slane %v7715, 2
        %v7718 = vshll.u32 %v7222, 16
        %v7720 = vrot.slane %v7718, 3
        %v7721 = vor.u32 %v7717, %v7720
        %v7722 = vsel %vm7561, %v7712, %v7721
        %v7724 = vshrl.u32 %v7560, 16
        %v7726 = vrot.slane %v7724, 2
        %v7727 = vshll.u32 %v7560, 16
        %v7729 = vrot.slane %v7727, 3
        %v7730 = vor.u32 %v7726, %v7729
        %v7731 = vsel %vm7561, %v7721, %v7730
        %v7766 = vunpack.c.l.b16 %v7542
        %v7767 = vunpack.c.l.b16 %v7543
        %v7768 = vunpack.c.l.b16 %v7544
        %v7769 = vunpack.c.l.b16 %v7545
        %v7770 = vunpack.c.l.b16 %v7546
        %v7771 = vunpack.c.l.b16 %v7547
        %v7772 = vunpack.c.l.b16 %v7548
        %v7773 = vunpack.c.l.b16 %v7549
        %v7774 = vunpack.c.l.b16 %v7550
        %v7775 = vunpack.c.l.b16 %v7551
        %v7776 = vunpack.c.l.b16 %v7552
        %v7777 = vunpack.c.l.b16 %v7553
        %v7778 = vunpack.c.l.b16 %v7554
        %v7779 = vunpack.c.l.b16 %v7555
        %v7780 = vunpack.c.l.b16 %v7556
        %v7781 = vunpack.c.l.b16 %v7557
        %v7782 = vpack.c.b16 %v7767, %v7766
        %v7783 = vpack.c.b16 %v7769, %v7768
        %v7784 = vpack.c.b16 %v7771, %v7770
        %v7785 = vpack.c.b16 %v7773, %v7772
        %v7786 = vpack.c.b16 %v7775, %v7774
        %v7787 = vpack.c.b16 %v7777, %v7776
        %v7788 = vpack.c.b16 %v7779, %v7778
        %v7789 = vpack.c.b16 %v7781, %v7780
        %7798 = vmatprep.subr.bf16.mxu0 0
        %7799 = vmatpush1.bf16.msra.mxu0 %v7789
        %7800 = vmatprep.subr.bf16.mxu0 0
        %7801 = vmatpush1.bf16.msra.mxu0 %v7788
        %7802 = vmatprep.subr.bf16.mxu0 0
        %7803 = vmatpush1.bf16.msra.mxu0 %v7787
        %7804 = vmatprep.subr.bf16.mxu0 0
        %7805 = vmatpush1.bf16.msra.mxu0 %v7786
        %7806 = vmatprep.subr.bf16.mxu0 0
        %7807 = vmatpush1.bf16.msra.mxu0 %v7785
        %7808 = vmatprep.subr.bf16.mxu0 0
        %7809 = vmatpush1.bf16.msra.mxu0 %v7784
        %7810 = vmatprep.subr.bf16.mxu0 0
        %7811 = vmatpush1.bf16.msra.mxu0 %v7783
        %7812 = vmatprep.subr.bf16.mxu0 0
        %7813 = vmatpush1.bf16.msra.mxu0 %v7782
        %7814 = vmatprep.subr.bf16.mxu0 0
        %7815 = vmatpush2.bf16.msra.mxu0 0
        %7816 = vmatprep.subr.bf16.mxu0 0
        %7817 = vmatpush2.bf16.msra.mxu0 0
        %7818 = vmatprep.subr.bf16.mxu0 0
        %7819 = vmatpush2.bf16.msra.mxu0 0
        %7820 = vmatprep.subr.bf16.mxu0 0
        %7821 = vmatpush2.bf16.msra.mxu0 0
        %7822 = vmatprep.subr.bf16.mxu0 0
        %7823 = vmatpush2.bf16.msra.mxu0 0
        %7824 = vmatprep.subr.bf16.mxu0 0
        %7825 = vmatpush2.bf16.msra.mxu0 0
        %7826 = vmatprep.subr.bf16.mxu0 0
        %7827 = vmatpush2.bf16.msra.mxu0 0
        %7828 = vmatprep.subr.bf16.mxu0 0
        %7829 = vmatpush2.bf16.msra.mxu0 0
        %7830 = vmatprep.mubr.bf16.mxu0 0
        %7831 = vmatmul.mubr.bf16.gmra.mxu0 %v7578
        %v7832 = vpop.f32.mrf.mxu0
        %v7833 = vadd.f32 0.0, %v7832
        %v7834 = vpop.f32.mrf.mxu0
        %v7835 = vpop.f32.mrf.mxu0
        %v7836 = vadd.f32 0.0, %v7835
        %v7837 = vpop.f32.mrf.mxu0
        %7838 = vmatprep.mubr.bf16.mxu0 0
        %7839 = vmatmul.mubr.bf16.gmra.mxu0 %v7587
        %v7840 = vpop.f32.mrf.mxu0
        %v7841 = vadd.f32 0.0, %v7840
        %v7842 = vpop.f32.mrf.mxu0
        %v7843 = vpop.f32.mrf.mxu0
        %v7844 = vadd.f32 0.0, %v7843
        %v7845 = vpop.f32.mrf.mxu0
        %7846 = vmatprep.mubr.bf16.mxu0 0
        %7847 = vmatmul.mubr.bf16.gmra.mxu0 %v7596
        %v7848 = vpop.f32.mrf.mxu0
        %v7849 = vadd.f32 0.0, %v7848
        %v7850 = vpop.f32.mrf.mxu0
        %v7851 = vpop.f32.mrf.mxu0
        %v7852 = vadd.f32 0.0, %v7851
        %v7853 = vpop.f32.mrf.mxu0
        %7854 = vmatprep.mubr.bf16.mxu0 0
        %7855 = vmatmul.mubr.bf16.gmra.mxu0 %v7605
        %v7856 = vpop.f32.mrf.mxu0
        %v7857 = vadd.f32 0.0, %v7856
        %v7858 = vpop.f32.mrf.mxu0
        %v7859 = vpop.f32.mrf.mxu0
        %v7860 = vadd.f32 0.0, %v7859
        %v7861 = vpop.f32.mrf.mxu0
        %7862 = vmatprep.mubr.bf16.mxu0 0
        %7863 = vmatmul.mubr.bf16.gmra.mxu0 %v7614
        %v7864 = vpop.f32.mrf.mxu0
        %v7865 = vadd.f32 0.0, %v7864
        %v7866 = vpop.f32.mrf.mxu0
        %v7867 = vpop.f32.mrf.mxu0
        %v7868 = vadd.f32 0.0, %v7867
        %v7869 = vpop.f32.mrf.mxu0
        %7870 = vmatprep.mubr.bf16.mxu0 0
        %7871 = vmatmul.mubr.bf16.gmra.mxu0 %v7623
        %v7872 = vpop.f32.mrf.mxu0
        %v7873 = vadd.f32 0.0, %v7872
        %v7874 = vpop.f32.mrf.mxu0
        %v7875 = vpop.f32.mrf.mxu0
        %v7876 = vadd.f32 0.0, %v7875
        %v7877 = vpop.f32.mrf.mxu0
        %7878 = vmatprep.mubr.bf16.mxu0 0
        %7879 = vmatmul.mubr.bf16.gmra.mxu0 %v7632
        %v7880 = vpop.f32.mrf.mxu0
        %v7881 = vadd.f32 0.0, %v7880
        %v7882 = vpop.f32.mrf.mxu0
        %v7883 = vpop.f32.mrf.mxu0
        %v7884 = vadd.f32 0.0, %v7883
        %v7885 = vpop.f32.mrf.mxu0
        %7886 = vmatprep.mubr.bf16.mxu0 0
        %7887 = vmatmul.mubr.bf16.gmra.mxu0 %v7641
        %v7888 = vpop.f32.mrf.mxu0
        %v7889 = vadd.f32 0.0, %v7888
        %v7890 = vpop.f32.mrf.mxu0
        %v7891 = vpop.f32.mrf.mxu0
        %v7892 = vadd.f32 0.0, %v7891
        %v7893 = vpop.f32.mrf.mxu0
        %7894 = vmatprep.mubr.bf16.mxu0 0
        %7895 = vmatmul.mubr.bf16.gmra.mxu0 %v7650
        %v7896 = vpop.f32.mrf.mxu0
        %v7897 = vadd.f32 0.0, %v7896
        %v7898 = vpop.f32.mrf.mxu0
        %v7899 = vpop.f32.mrf.mxu0
        %v7900 = vadd.f32 0.0, %v7899
        %v7901 = vpop.f32.mrf.mxu0
        %7902 = vmatprep.mubr.bf16.mxu0 0
        %7903 = vmatmul.mubr.bf16.gmra.mxu0 %v7659
        %v7904 = vpop.f32.mrf.mxu0
        %v7905 = vadd.f32 0.0, %v7904
        %v7906 = vpop.f32.mrf.mxu0
        %v7907 = vpop.f32.mrf.mxu0
        %v7908 = vadd.f32 0.0, %v7907
        %v7909 = vpop.f32.mrf.mxu0
        %7910 = vmatprep.mubr.bf16.mxu0 0
        %7911 = vmatmul.mubr.bf16.gmra.mxu0 %v7668
        %v7912 = vpop.f32.mrf.mxu0
        %v7913 = vadd.f32 0.0, %v7912
        %v7914 = vpop.f32.mrf.mxu0
        %v7915 = vpop.f32.mrf.mxu0
        %v7916 = vadd.f32 0.0, %v7915
        %v7917 = vpop.f32.mrf.mxu0
        %7918 = vmatprep.mubr.bf16.mxu0 0
        %7919 = vmatmul.mubr.bf16.gmra.mxu0 %v7677
        %v7920 = vpop.f32.mrf.mxu0
        %v7921 = vadd.f32 0.0, %v7920
        %v7922 = vpop.f32.mrf.mxu0
        %v7923 = vpop.f32.mrf.mxu0
        %v7924 = vadd.f32 0.0, %v7923
        %v7925 = vpop.f32.mrf.mxu0
        %7926 = vmatprep.mubr.bf16.mxu0 0
        %7927 = vmatmul.mubr.bf16.gmra.mxu0 %v7686
        %v7928 = vpop.f32.mrf.mxu0
        %v7929 = vadd.f32 0.0, %v7928
        %v7930 = vpop.f32.mrf.mxu0
        %v7931 = vpop.f32.mrf.mxu0
        %v7932 = vadd.f32 0.0, %v7931
        %v7933 = vpop.f32.mrf.mxu0
        %7934 = vmatprep.mubr.bf16.mxu0 0
        %7935 = vmatmul.mubr.bf16.gmra.mxu0 %v7695
        %v7936 = vpop.f32.mrf.mxu0
        %v7937 = vadd.f32 0.0, %v7936
        %v7938 = vpop.f32.mrf.mxu0
        %v7939 = vpop.f32.mrf.mxu0
        %v7940 = vadd.f32 0.0, %v7939
        %v7941 = vpop.f32.mrf.mxu0
        %7942 = vmatprep.mubr.bf16.mxu0 0
        %7943 = vmatmul.mubr.bf16.gmra.mxu0 %v7704
        %v7944 = vpop.f32.mrf.mxu0
        %v7945 = vadd.f32 0.0, %v7944
        %v7946 = vpop.f32.mrf.mxu0
        %v7947 = vpop.f32.mrf.mxu0
        %v7948 = vadd.f32 0.0, %v7947
        %v7949 = vpop.f32.mrf.mxu0
        %7950 = vmatprep.mubr.bf16.mxu0 0
        %7951 = vmatmul.mubr.bf16.gmra.mxu0 %v7713
        %v7952 = vpop.f32.mrf.mxu0
        %v7953 = vadd.f32 0.0, %v7952
        %v7954 = vpop.f32.mrf.mxu0
        %v7955 = vpop.f32.mrf.mxu0
        %v7956 = vadd.f32 0.0, %v7955
        %v7957 = vpop.f32.mrf.mxu0
        %7958 = vmatprep.mubr.bf16.mxu0 0
        %7959 = vmatmul.mubr.bf16.gmra.mxu0 %v7722
        %v7960 = vpop.f32.mrf.mxu0
        %v7961 = vadd.f32 0.0, %v7960
        %v7962 = vpop.f32.mrf.mxu0
        %v7963 = vpop.f32.mrf.mxu0
        %v7964 = vadd.f32 0.0, %v7963
        %v7965 = vpop.f32.mrf.mxu0
        %7966 = vmatprep.mubr.bf16.mxu0 0
        %7967 = vmatmul.mubr.bf16.gmra.mxu0 %v7731
        %v7968 = vpop.f32.mrf.mxu0
        %v7969 = vadd.f32 0.0, %v7968
        %v7970 = vpop.f32.mrf.mxu0
        %v7971 = vpop.f32.mrf.mxu0
        %v7972 = vadd.f32 0.0, %v7971
        %v7973 = vpop.f32.mrf.mxu0
        %7974 = vdwg.mxu0
        %v7975 = vadd.f32 %v7504, %v7833
        %v7976 = vadd.f32 %v7505, %v7836
        %v7977 = vadd.f32 %v7506, %v7841
        %v7978 = vadd.f32 %v7507, %v7844
        %v7979 = vadd.f32 %v7508, %v7849
        %v7980 = vadd.f32 %v7509, %v7852
        %v7981 = vadd.f32 %v7510, %v7857
        %v7982 = vadd.f32 %v7511, %v7860
        %v7983 = vadd.f32 %v7512, %v7865
        %v7984 = vadd.f32 %v7513, %v7868
        %v7985 = vadd.f32 %v7514, %v7873
        %v7986 = vadd.f32 %v7515, %v7876
        %v7987 = vadd.f32 %v7516, %v7881
        %v7988 = vadd.f32 %v7517, %v7884
        %v7989 = vadd.f32 %v7518, %v7889
        %v7990 = vadd.f32 %v7519, %v7892
        %v7991 = vadd.f32 %v7520, %v7897
        %v7992 = vadd.f32 %v7521, %v7900
        %v7993 = vadd.f32 %v7522, %v7905
        %v7994 = vadd.f32 %v7523, %v7908
        %v7995 = vadd.f32 %v7524, %v7913
        %v7996 = vadd.f32 %v7525, %v7916
        %v7997 = vadd.f32 %v7526, %v7921
        %v7998 = vadd.f32 %v7527, %v7924
        %v7999 = vadd.f32 %v7528, %v7929
        %v8000 = vadd.f32 %v7529, %v7932
        %v8001 = vadd.f32 %v7530, %v7937
        %v8002 = vadd.f32 %v7531, %v7940
        %v8003 = vadd.f32 %v7532, %v7945
        %v8004 = vadd.f32 %v7533, %v7948
        %v8005 = vadd.f32 %v7534, %v7953
        %v8006 = vadd.f32 %v7535, %v7956
        %v8007 = vadd.f32 %v7536, %v7961
        %v8008 = vadd.f32 %v7537, %v7964
        %v8009 = vadd.f32 %v7538, %v7969
        %v8010 = vadd.f32 %v7539, %v7972
        %v8011 = vld [vmem:[#allocation2 + $0x10] sm:$0x8]
        %s8012 = scalar_lea.vmem %s5, 512
        %v8013 = vld [vmem:[%s8012] sm:$0xf]
        %v8014 = vld [vmem:[%s8012 + $0x4] sm:$0xf]
        %v8015 = vld [vmem:[%s8012 + $0x8] sm:$0xf]
        %v8016 = vld [vmem:[%s8012 + $0xc] sm:$0xf]
        %v8017 = vld [vmem:[%s8012 + $0x10] sm:$0xf]
        %v8018 = vld [vmem:[%s8012 + $0x14] sm:$0xf]
        %v8019 = vld [vmem:[%s8012 + $0x18] sm:$0xf]
        %v8020 = vld [vmem:[%s8012 + $0x1c] sm:$0xf]
        %v8021 = vld [vmem:[%s8012 + $0x20] sm:$0xf]
        %v8022 = vld [vmem:[%s8012 + $0x24] sm:$0xf]
        %v8023 = vld [vmem:[%s8012 + $0x28] sm:$0xf]
        %v8024 = vld [vmem:[%s8012 + $0x2c] sm:$0xf]
        %v8025 = vld [vmem:[%s8012 + $0x30] sm:$0xf]
        %v8026 = vld [vmem:[%s8012 + $0x34] sm:$0xf]
        %v8027 = vld [vmem:[%s8012 + $0x38] sm:$0xf]
        %v8028 = vld [vmem:[%s8012 + $0x3c] sm:$0xf]
        %v8030 = vunpack.c.l.b16 %v8011
        %v8031 = vpack.c.b16 %v7169, %v8030
        %vm8032 = vcmask 1044480
        %v8033 = vrot.slane %v8031, 3
        %v8034 = vrot.slane %v7206, 3
        %v8035 = vsel %vm8032, %v8033, %v8034
        %v8036 = vrot.slane %v7207, 3
        %v8037 = vsel %vm8032, %v8034, %v8036
        %v8038 = vrot.slane %v7208, 3
        %v8039 = vsel %vm8032, %v8036, %v8038
        %v8040 = vrot.slane %v7209, 3
        %v8041 = vsel %vm8032, %v8038, %v8040
        %v8042 = vrot.slane %v7210, 3
        %v8043 = vsel %vm8032, %v8040, %v8042
        %v8044 = vrot.slane %v7211, 3
        %v8045 = vsel %vm8032, %v8042, %v8044
        %v8046 = vrot.slane %v7212, 3
        %v8047 = vsel %vm8032, %v8044, %v8046
        %v8048 = vrot.slane %v7213, 3
        %v8049 = vsel %vm8032, %v8046, %v8048
        %v8050 = vrot.slane %v7214, 3
        %v8051 = vsel %vm8032, %v8048, %v8050
        %v8052 = vrot.slane %v7215, 3
        %v8053 = vsel %vm8032, %v8050, %v8052
        %v8054 = vrot.slane %v7216, 3
        %v8055 = vsel %vm8032, %v8052, %v8054
        %v8056 = vrot.slane %v7217, 3
        %v8057 = vsel %vm8032, %v8054, %v8056
        %v8058 = vrot.slane %v7218, 3
        %v8059 = vsel %vm8032, %v8056, %v8058
        %v8060 = vrot.slane %v7219, 3
        %v8061 = vsel %vm8032, %v8058, %v8060
        %v8062 = vrot.slane %v7220, 3
        %v8063 = vsel %vm8032, %v8060, %v8062
        %v8064 = vrot.slane %v7221, 3
        %v8065 = vsel %vm8032, %v8062, %v8064
        %v8066 = vrot.slane %v7222, 3
        %v8067 = vsel %vm8032, %v8064, %v8066
        %v8068 = vrot.slane %v7560, 3
        %v8069 = vsel %vm8032, %v8066, %v8068
        %v8104 = vunpack.c.l.b16 %v8013
        %v8105 = vunpack.c.l.b16 %v8014
        %v8106 = vunpack.c.l.b16 %v8015
        %v8107 = vunpack.c.l.b16 %v8016
        %v8108 = vunpack.c.l.b16 %v8017
        %v8109 = vunpack.c.l.b16 %v8018
        %v8110 = vunpack.c.l.b16 %v8019
        %v8111 = vunpack.c.l.b16 %v8020
        %v8112 = vunpack.c.l.b16 %v8021
        %v8113 = vunpack.c.l.b16 %v8022
        %v8114 = vunpack.c.l.b16 %v8023
        %v8115 = vunpack.c.l.b16 %v8024
        %v8116 = vunpack.c.l.b16 %v8025
        %v8117 = vunpack.c.l.b16 %v8026
        %v8118 = vunpack.c.l.b16 %v8027
        %v8119 = vunpack.c.l.b16 %v8028
        %v8120 = vpack.c.b16 %v8105, %v8104
        %v8121 = vpack.c.b16 %v8107, %v8106
        %v8122 = vpack.c.b16 %v8109, %v8108
        %v8123 = vpack.c.b16 %v8111, %v8110
        %v8124 = vpack.c.b16 %v8113, %v8112
        %v8125 = vpack.c.b16 %v8115, %v8114
        %v8126 = vpack.c.b16 %v8117, %v8116
        %v8127 = vpack.c.b16 %v8119, %v8118
        %8136 = vmatprep.subr.bf16.mxu0 0
        %8137 = vmatpush1.bf16.msra.mxu0 %v8127
        %8138 = vmatprep.subr.bf16.mxu0 0
        %8139 = vmatpush1.bf16.msra.mxu0 %v8126
        %8140 = vmatprep.subr.bf16.mxu0 0
        %8141 = vmatpush1.bf16.msra.mxu0 %v8125
        %8142 = vmatprep.subr.bf16.mxu0 0
        %8143 = vmatpush1.bf16.msra.mxu0 %v8124
        %8144 = vmatprep.subr.bf16.mxu0 0
        %8145 = vmatpush1.bf16.msra.mxu0 %v8123
        %8146 = vmatprep.subr.bf16.mxu0 0
        %8147 = vmatpush1.bf16.msra.mxu0 %v8122
        %8148 = vmatprep.subr.bf16.mxu0 0
        %8149 = vmatpush1.bf16.msra.mxu0 %v8121
        %8150 = vmatprep.subr.bf16.mxu0 0
        %8151 = vmatpush1.bf16.msra.mxu0 %v8120
        %8152 = vmatprep.subr.bf16.mxu0 0
        %8153 = vmatpush2.bf16.msra.mxu0 0
        %8154 = vmatprep.subr.bf16.mxu0 0
        %8155 = vmatpush2.bf16.msra.mxu0 0
        %8156 = vmatprep.subr.bf16.mxu0 0
        %8157 = vmatpush2.bf16.msra.mxu0 0
        %8158 = vmatprep.subr.bf16.mxu0 0
        %8159 = vmatpush2.bf16.msra.mxu0 0
        %8160 = vmatprep.subr.bf16.mxu0 0
        %8161 = vmatpush2.bf16.msra.mxu0 0
        %8162 = vmatprep.subr.bf16.mxu0 0
        %8163 = vmatpush2.bf16.msra.mxu0 0
        %8164 = vmatprep.subr.bf16.mxu0 0
        %8165 = vmatpush2.bf16.msra.mxu0 0
        %8166 = vmatprep.subr.bf16.mxu0 0
        %8167 = vmatpush2.bf16.msra.mxu0 0
        %8168 = vmatprep.mubr.bf16.mxu0 0
        %8169 = vmatmul.mubr.bf16.gmra.mxu0 %v8035
        %v8170 = vpop.f32.mrf.mxu0
        %v8171 = vadd.f32 0.0, %v8170
        %v8172 = vpop.f32.mrf.mxu0
        %v8173 = vpop.f32.mrf.mxu0
        %v8174 = vadd.f32 0.0, %v8173
        %v8175 = vpop.f32.mrf.mxu0
        %8176 = vmatprep.mubr.bf16.mxu0 0
        %8177 = vmatmul.mubr.bf16.gmra.mxu0 %v8037
        %v8178 = vpop.f32.mrf.mxu0
        %v8179 = vadd.f32 0.0, %v8178
        %v8180 = vpop.f32.mrf.mxu0
        %v8181 = vpop.f32.mrf.mxu0
        %v8182 = vadd.f32 0.0, %v8181
        %v8183 = vpop.f32.mrf.mxu0
        %8184 = vmatprep.mubr.bf16.mxu0 0
        %8185 = vmatmul.mubr.bf16.gmra.mxu0 %v8039
        %v8186 = vpop.f32.mrf.mxu0
        %v8187 = vadd.f32 0.0, %v8186
        %v8188 = vpop.f32.mrf.mxu0
        %v8189 = vpop.f32.mrf.mxu0
        %v8190 = vadd.f32 0.0, %v8189
        %v8191 = vpop.f32.mrf.mxu0
        %8192 = vmatprep.mubr.bf16.mxu0 0
        %8193 = vmatmul.mubr.bf16.gmra.mxu0 %v8041
        %v8194 = vpop.f32.mrf.mxu0
        %v8195 = vadd.f32 0.0, %v8194
        %v8196 = vpop.f32.mrf.mxu0
        %v8197 = vpop.f32.mrf.mxu0
        %v8198 = vadd.f32 0.0, %v8197
        %v8199 = vpop.f32.mrf.mxu0
        %8200 = vmatprep.mubr.bf16.mxu0 0
        %8201 = vmatmul.mubr.bf16.gmra.mxu0 %v8043
        %v8202 = vpop.f32.mrf.mxu0
        %v8203 = vadd.f32 0.0, %v8202
        %v8204 = vpop.f32.mrf.mxu0
        %v8205 = vpop.f32.mrf.mxu0
        %v8206 = vadd.f32 0.0, %v8205
        %v8207 = vpop.f32.mrf.mxu0
        %8208 = vmatprep.mubr.bf16.mxu0 0
        %8209 = vmatmul.mubr.bf16.gmra.mxu0 %v8045
        %v8210 = vpop.f32.mrf.mxu0
        %v8211 = vadd.f32 0.0, %v8210
        %v8212 = vpop.f32.mrf.mxu0
        %v8213 = vpop.f32.mrf.mxu0
        %v8214 = vadd.f32 0.0, %v8213
        %v8215 = vpop.f32.mrf.mxu0
        %8216 = vmatprep.mubr.bf16.mxu0 0
        %8217 = vmatmul.mubr.bf16.gmra.mxu0 %v8047
        %v8218 = vpop.f32.mrf.mxu0
        %v8219 = vadd.f32 0.0, %v8218
        %v8220 = vpop.f32.mrf.mxu0
        %v8221 = vpop.f32.mrf.mxu0
        %v8222 = vadd.f32 0.0, %v8221
        %v8223 = vpop.f32.mrf.mxu0
        %8224 = vmatprep.mubr.bf16.mxu0 0
        %8225 = vmatmul.mubr.bf16.gmra.mxu0 %v8049
        %v8226 = vpop.f32.mrf.mxu0
        %v8227 = vadd.f32 0.0, %v8226
        %v8228 = vpop.f32.mrf.mxu0
        %v8229 = vpop.f32.mrf.mxu0
        %v8230 = vadd.f32 0.0, %v8229
        %v8231 = vpop.f32.mrf.mxu0
        %8232 = vmatprep.mubr.bf16.mxu0 0
        %8233 = vmatmul.mubr.bf16.gmra.mxu0 %v8051
        %v8234 = vpop.f32.mrf.mxu0
        %v8235 = vadd.f32 0.0, %v8234
        %v8236 = vpop.f32.mrf.mxu0
        %v8237 = vpop.f32.mrf.mxu0
        %v8238 = vadd.f32 0.0, %v8237
        %v8239 = vpop.f32.mrf.mxu0
        %8240 = vmatprep.mubr.bf16.mxu0 0
        %8241 = vmatmul.mubr.bf16.gmra.mxu0 %v8053
        %v8242 = vpop.f32.mrf.mxu0
        %v8243 = vadd.f32 0.0, %v8242
        %v8244 = vpop.f32.mrf.mxu0
        %v8245 = vpop.f32.mrf.mxu0
        %v8246 = vadd.f32 0.0, %v8245
        %v8247 = vpop.f32.mrf.mxu0
        %8248 = vmatprep.mubr.bf16.mxu0 0
        %8249 = vmatmul.mubr.bf16.gmra.mxu0 %v8055
        %v8250 = vpop.f32.mrf.mxu0
        %v8251 = vadd.f32 0.0, %v8250
        %v8252 = vpop.f32.mrf.mxu0
        %v8253 = vpop.f32.mrf.mxu0
        %v8254 = vadd.f32 0.0, %v8253
        %v8255 = vpop.f32.mrf.mxu0
        %8256 = vmatprep.mubr.bf16.mxu0 0
        %8257 = vmatmul.mubr.bf16.gmra.mxu0 %v8057
        %v8258 = vpop.f32.mrf.mxu0
        %v8259 = vadd.f32 0.0, %v8258
        %v8260 = vpop.f32.mrf.mxu0
        %v8261 = vpop.f32.mrf.mxu0
        %v8262 = vadd.f32 0.0, %v8261
        %v8263 = vpop.f32.mrf.mxu0
        %8264 = vmatprep.mubr.bf16.mxu0 0
        %8265 = vmatmul.mubr.bf16.gmra.mxu0 %v8059
        %v8266 = vpop.f32.mrf.mxu0
        %v8267 = vadd.f32 0.0, %v8266
        %v8268 = vpop.f32.mrf.mxu0
        %v8269 = vpop.f32.mrf.mxu0
        %v8270 = vadd.f32 0.0, %v8269
        %v8271 = vpop.f32.mrf.mxu0
        %8272 = vmatprep.mubr.bf16.mxu0 0
        %8273 = vmatmul.mubr.bf16.gmra.mxu0 %v8061
        %v8274 = vpop.f32.mrf.mxu0
        %v8275 = vadd.f32 0.0, %v8274
        %v8276 = vpop.f32.mrf.mxu0
        %v8277 = vpop.f32.mrf.mxu0
        %v8278 = vadd.f32 0.0, %v8277
        %v8279 = vpop.f32.mrf.mxu0
        %8280 = vmatprep.mubr.bf16.mxu0 0
        %8281 = vmatmul.mubr.bf16.gmra.mxu0 %v8063
        %v8282 = vpop.f32.mrf.mxu0
        %v8283 = vadd.f32 0.0, %v8282
        %v8284 = vpop.f32.mrf.mxu0
        %v8285 = vpop.f32.mrf.mxu0
        %v8286 = vadd.f32 0.0, %v8285
        %v8287 = vpop.f32.mrf.mxu0
        %8288 = vmatprep.mubr.bf16.mxu0 0
        %8289 = vmatmul.mubr.bf16.gmra.mxu0 %v8065
        %v8290 = vpop.f32.mrf.mxu0
        %v8291 = vadd.f32 0.0, %v8290
        %v8292 = vpop.f32.mrf.mxu0
        %v8293 = vpop.f32.mrf.mxu0
        %v8294 = vadd.f32 0.0, %v8293
        %v8295 = vpop.f32.mrf.mxu0
        %8296 = vmatprep.mubr.bf16.mxu0 0
        %8297 = vmatmul.mubr.bf16.gmra.mxu0 %v8067
        %v8298 = vpop.f32.mrf.mxu0
        %v8299 = vadd.f32 0.0, %v8298
        %v8300 = vpop.f32.mrf.mxu0
        %v8301 = vpop.f32.mrf.mxu0
        %v8302 = vadd.f32 0.0, %v8301
        %v8303 = vpop.f32.mrf.mxu0
        %8304 = vmatprep.mubr.bf16.mxu0 0
        %8305 = vmatmul.mubr.bf16.gmra.mxu0 %v8069
        %v8306 = vpop.f32.mrf.mxu0
        %v8307 = vadd.f32 0.0, %v8306
        %v8308 = vpop.f32.mrf.mxu0
        %v8309 = vpop.f32.mrf.mxu0
        %v8310 = vadd.f32 0.0, %v8309
        %v8311 = vpop.f32.mrf.mxu0
        %8312 = vdwg.mxu0
        %v8313 = vadd.f32 %v7975, %v8171
        %v8314 = vadd.f32 %v7976, %v8174
        %v8315 = vadd.f32 %v7977, %v8179
        %v8316 = vadd.f32 %v7978, %v8182
        %v8317 = vadd.f32 %v7979, %v8187
        %v8318 = vadd.f32 %v7980, %v8190
        %v8319 = vadd.f32 %v7981, %v8195
        %v8320 = vadd.f32 %v7982, %v8198
        %v8321 = vadd.f32 %v7983, %v8203
        %v8322 = vadd.f32 %v7984, %v8206
        %v8323 = vadd.f32 %v7985, %v8211
        %v8324 = vadd.f32 %v7986, %v8214
        %v8325 = vadd.f32 %v7987, %v8219
        %v8326 = vadd.f32 %v7988, %v8222
        %v8327 = vadd.f32 %v7989, %v8227
        %v8328 = vadd.f32 %v7990, %v8230
        %v8329 = vadd.f32 %v7991, %v8235
        %v8330 = vadd.f32 %v7992, %v8238
        %v8331 = vadd.f32 %v7993, %v8243
        %v8332 = vadd.f32 %v7994, %v8246
        %v8333 = vadd.f32 %v7995, %v8251
        %v8334 = vadd.f32 %v7996, %v8254
        %v8335 = vadd.f32 %v7997, %v8259
        %v8336 = vadd.f32 %v7998, %v8262
        %v8337 = vadd.f32 %v7999, %v8267
        %v8338 = vadd.f32 %v8000, %v8270
        %v8339 = vadd.f32 %v8001, %v8275
        %v8340 = vadd.f32 %v8002, %v8278
        %v8341 = vadd.f32 %v8003, %v8283
        %v8342 = vadd.f32 %v8004, %v8286
        %v8343 = vadd.f32 %v8005, %v8291
        %v8344 = vadd.f32 %v8006, %v8294
        %v8345 = vadd.f32 %v8007, %v8299
        %v8346 = vadd.f32 %v8008, %v8302
        %v8347 = vadd.f32 %v8009, %v8307
        %v8348 = vadd.f32 %v8010, %v8310
        %v8349 = vld [vmem:[%s6] sm:$0x1]
        %v8351 = vlaneseq
        %v8352 = vshrl.u32 %v8351, 7
        %v8353 = vsub.s32 0, %v8352
        %v8354 = vrot.slane %v8349, %v8353
        %v8356 = vadd.f32 %v8313, %v8354
        %v8357 = vadd.f32 %v8314, %v8354
        %v8358 = vadd.f32 %v8315, %v8354
        %v8359 = vadd.f32 %v8316, %v8354
        %v8360 = vadd.f32 %v8317, %v8354
        %v8361 = vadd.f32 %v8318, %v8354
        %v8362 = vadd.f32 %v8319, %v8354
        %v8363 = vadd.f32 %v8320, %v8354
        %v8364 = vadd.f32 %v8321, %v8354
        %v8365 = vadd.f32 %v8322, %v8354
        %v8366 = vadd.f32 %v8323, %v8354
        %v8367 = vadd.f32 %v8324, %v8354
        %v8368 = vadd.f32 %v8325, %v8354
        %v8369 = vadd.f32 %v8326, %v8354
        %v8370 = vadd.f32 %v8327, %v8354
        %v8371 = vadd.f32 %v8328, %v8354
        %v8372 = vadd.f32 %v8329, %v8354
        %v8373 = vadd.f32 %v8330, %v8354
        %v8374 = vadd.f32 %v8331, %v8354
        %v8375 = vadd.f32 %v8332, %v8354
        %v8376 = vadd.f32 %v8333, %v8354
        %v8377 = vadd.f32 %v8334, %v8354
        %v8378 = vadd.f32 %v8335, %v8354
        %v8379 = vadd.f32 %v8336, %v8354
        %v8380 = vadd.f32 %v8337, %v8354
        %v8381 = vadd.f32 %v8338, %v8354
        %v8382 = vadd.f32 %v8339, %v8354
        %v8383 = vadd.f32 %v8340, %v8354
        %v8384 = vadd.f32 %v8341, %v8354
        %v8385 = vadd.f32 %v8342, %v8354
        %v8386 = vadd.f32 %v8343, %v8354
        %v8387 = vadd.f32 %v8344, %v8354
        %v8388 = vadd.f32 %v8345, %v8354
        %v8389 = vadd.f32 %v8346, %v8354
        %v8390 = vadd.f32 %v8347, %v8354
        %v8391 = vadd.f32 %v8348, %v8354
        %v8392 = vmax.f32 %v8356, 0.0
        %v8393 = vmax.f32 %v8357, 0.0
        %v8394 = vmax.f32 %v8358, 0.0
        %v8395 = vmax.f32 %v8359, 0.0
        %v8396 = vmax.f32 %v8360, 0.0
        %v8397 = vmax.f32 %v8361, 0.0
        %v8398 = vmax.f32 %v8362, 0.0
        %v8399 = vmax.f32 %v8363, 0.0
        %v8400 = vmax.f32 %v8364, 0.0
        %v8401 = vmax.f32 %v8365, 0.0
        %v8402 = vmax.f32 %v8366, 0.0
        %v8403 = vmax.f32 %v8367, 0.0
        %v8404 = vmax.f32 %v8368, 0.0
        %v8405 = vmax.f32 %v8369, 0.0
        %v8406 = vmax.f32 %v8370, 0.0
        %v8407 = vmax.f32 %v8371, 0.0
        %v8408 = vmax.f32 %v8372, 0.0
        %v8409 = vmax.f32 %v8373, 0.0
        %v8410 = vmax.f32 %v8374, 0.0
        %v8411 = vmax.f32 %v8375, 0.0
        %v8412 = vmax.f32 %v8376, 0.0
        %v8413 = vmax.f32 %v8377, 0.0
        %v8414 = vmax.f32 %v8378, 0.0
        %v8415 = vmax.f32 %v8379, 0.0
        %v8416 = vmax.f32 %v8380, 0.0
        %v8417 = vmax.f32 %v8381, 0.0
        %v8418 = vmax.f32 %v8382, 0.0
        %v8419 = vmax.f32 %v8383, 0.0
        %v8420 = vmax.f32 %v8384, 0.0
        %v8421 = vmax.f32 %v8385, 0.0
        %v8422 = vmax.f32 %v8386, 0.0
        %v8423 = vmax.f32 %v8387, 0.0
        %v8424 = vmax.f32 %v8388, 0.0
        %v8425 = vmax.f32 %v8389, 0.0
        %v8426 = vmax.f32 %v8390, 0.0
        %v8427 = vmax.f32 %v8391, 0.0
        %v8428 = vpack.c.bf16 %v8393, %v8392
        %v8429 = vpack.c.bf16 %v8395, %v8394
        %v8430 = vpack.c.bf16 %v8397, %v8396
        %v8431 = vpack.c.bf16 %v8399, %v8398
        %v8432 = vpack.c.bf16 %v8401, %v8400
        %v8433 = vpack.c.bf16 %v8403, %v8402
        %v8434 = vpack.c.bf16 %v8405, %v8404
        %v8435 = vpack.c.bf16 %v8407, %v8406
        %v8436 = vpack.c.bf16 %v8409, %v8408
        %v8437 = vpack.c.bf16 %v8411, %v8410
        %v8438 = vpack.c.bf16 %v8413, %v8412
        %v8439 = vpack.c.bf16 %v8415, %v8414
        %v8440 = vpack.c.bf16 %v8417, %v8416
        %v8441 = vpack.c.bf16 %v8419, %v8418
        %v8442 = vpack.c.bf16 %v8421, %v8420
        %v8443 = vpack.c.bf16 %v8423, %v8422
        %v8444 = vpack.c.bf16 %v8425, %v8424
        %v8445 = vpack.c.bf16 %v8427, %v8426
        %v8446 = vld [vmem:[%s7] sm:$0xf]
        %v8447 = vld [vmem:[%s7 + $0x4] sm:$0xf]
        %v8448 = vld [vmem:[%s7 + $0x8] sm:$0xf]
        %v8449 = vld [vmem:[%s7 + $0xc] sm:$0xf]
        %v8450 = vld [vmem:[%s7 + $0x10] sm:$0xf]
        %v8451 = vld [vmem:[%s7 + $0x14] sm:$0xf]
        %v8452 = vld [vmem:[%s7 + $0x18] sm:$0xf]
        %v8453 = vld [vmem:[%s7 + $0x1c] sm:$0xf]
        %v8454 = vld [vmem:[%s7 + $0x20] sm:$0xf]
        %v8455 = vld [vmem:[%s7 + $0x24] sm:$0xf]
        %v8456 = vld [vmem:[%s7 + $0x28] sm:$0xf]
        %v8457 = vld [vmem:[%s7 + $0x2c] sm:$0xf]
        %v8458 = vld [vmem:[%s7 + $0x30] sm:$0xf]
        %v8459 = vld [vmem:[%s7 + $0x34] sm:$0xf]
        %v8460 = vld [vmem:[%s7 + $0x38] sm:$0xf]
        %v8461 = vld [vmem:[%s7 + $0x3c] sm:$0xf]
        %v8462 = vld [vmem:[%s8] sm:$0x1]
        %v8464 = vlaneseq
        %v8465 = vshrl.u32 %v8464, 7
        %v8466 = vsub.s32 0, %v8465
        %v8467 = vrot.slane %v8462, %v8466
        %v8485 = vunpack.c.l.b16 %v8446
        %v8486 = vunpack.c.l.b16 %v8447
        %v8487 = vunpack.c.l.b16 %v8448
        %v8488 = vunpack.c.l.b16 %v8449
        %v8489 = vunpack.c.l.b16 %v8450
        %v8490 = vunpack.c.l.b16 %v8451
        %v8491 = vunpack.c.l.b16 %v8452
        %v8492 = vunpack.c.l.b16 %v8453
        %v8493 = vunpack.c.l.b16 %v8454
        %v8494 = vunpack.c.l.b16 %v8455
        %v8495 = vunpack.c.l.b16 %v8456
        %v8496 = vunpack.c.l.b16 %v8457
        %v8497 = vunpack.c.l.b16 %v8458
        %v8498 = vunpack.c.l.b16 %v8459
        %v8499 = vunpack.c.l.b16 %v8460
        %v8500 = vunpack.c.l.b16 %v8461
        %v8501 = vpack.c.b16 %v8486, %v8485
        %v8502 = vpack.c.b16 %v8488, %v8487
        %v8503 = vpack.c.b16 %v8490, %v8489
        %v8504 = vpack.c.b16 %v8492, %v8491
        %v8505 = vpack.c.b16 %v8494, %v8493
        %v8506 = vpack.c.b16 %v8496, %v8495
        %v8507 = vpack.c.b16 %v8498, %v8497
        %v8508 = vpack.c.b16 %v8500, %v8499
        %8517 = vmatprep.subr.bf16.mxu0 0
        %8518 = vmatpush1.bf16.msra.mxu0 %v8508
        %8519 = vmatprep.subr.bf16.mxu0 0
        %8520 = vmatpush1.bf16.msra.mxu0 %v8507
        %8521 = vmatprep.subr.bf16.mxu0 0
        %8522 = vmatpush1.bf16.msra.mxu0 %v8506
        %8523 = vmatprep.subr.bf16.mxu0 0
        %8524 = vmatpush1.bf16.msra.mxu0 %v8505
        %8525 = vmatprep.subr.bf16.mxu0 0
        %8526 = vmatpush1.bf16.msra.mxu0 %v8504
        %8527 = vmatprep.subr.bf16.mxu0 0
        %8528 = vmatpush1.bf16.msra.mxu0 %v8503
        %8529 = vmatprep.subr.bf16.mxu0 0
        %8530 = vmatpush1.bf16.msra.mxu0 %v8502
        %8531 = vmatprep.subr.bf16.mxu0 0
        %8532 = vmatpush1.bf16.msra.mxu0 %v8501
        %8533 = vmatprep.subr.bf16.mxu0 0
        %8534 = vmatpush2.bf16.msra.mxu0 0
        %8535 = vmatprep.subr.bf16.mxu0 0
        %8536 = vmatpush2.bf16.msra.mxu0 0
        %8537 = vmatprep.subr.bf16.mxu0 0
        %8538 = vmatpush2.bf16.msra.mxu0 0
        %8539 = vmatprep.subr.bf16.mxu0 0
        %8540 = vmatpush2.bf16.msra.mxu0 0
        %8541 = vmatprep.subr.bf16.mxu0 0
        %8542 = vmatpush2.bf16.msra.mxu0 0
        %8543 = vmatprep.subr.bf16.mxu0 0
        %8544 = vmatpush2.bf16.msra.mxu0 0
        %8545 = vmatprep.subr.bf16.mxu0 0
        %8546 = vmatpush2.bf16.msra.mxu0 0
        %8547 = vmatprep.subr.bf16.mxu0 0
        %8548 = vmatpush2.bf16.msra.mxu0 0
        %8549 = vmatprep.mubr.bf16.mxu0 0
        %8550 = vmatmul.mubr.bf16.gmra.mxu0 %v8428
        %v8551 = vpop.f32.mrf.mxu0
        %v8552 = vadd.f32 %v8467, %v8551
        %v8553 = vpop.f32.mrf.mxu0
        %v8554 = vpop.f32.mrf.mxu0
        %v8555 = vadd.f32 %v8467, %v8554
        %v8556 = vpop.f32.mrf.mxu0
        %8557 = vmatprep.mubr.bf16.mxu0 0
        %8558 = vmatmul.mubr.bf16.gmra.mxu0 %v8429
        %v8559 = vpop.f32.mrf.mxu0
        %v8560 = vadd.f32 %v8467, %v8559
        %v8561 = vpop.f32.mrf.mxu0
        %v8562 = vpop.f32.mrf.mxu0
        %v8563 = vadd.f32 %v8467, %v8562
        %v8564 = vpop.f32.mrf.mxu0
        %8565 = vmatprep.mubr.bf16.mxu0 0
        %8566 = vmatmul.mubr.bf16.gmra.mxu0 %v8430
        %v8567 = vpop.f32.mrf.mxu0
        %v8568 = vadd.f32 %v8467, %v8567
        %v8569 = vpop.f32.mrf.mxu0
        %v8570 = vpop.f32.mrf.mxu0
        %v8571 = vadd.f32 %v8467, %v8570
        %v8572 = vpop.f32.mrf.mxu0
        %8573 = vmatprep.mubr.bf16.mxu0 0
        %8574 = vmatmul.mubr.bf16.gmra.mxu0 %v8431
        %v8575 = vpop.f32.mrf.mxu0
        %v8576 = vadd.f32 %v8467, %v8575
        %v8577 = vpop.f32.mrf.mxu0
        %v8578 = vpop.f32.mrf.mxu0
        %v8579 = vadd.f32 %v8467, %v8578
        %v8580 = vpop.f32.mrf.mxu0
        %8581 = vmatprep.mubr.bf16.mxu0 0
        %8582 = vmatmul.mubr.bf16.gmra.mxu0 %v8432
        %v8583 = vpop.f32.mrf.mxu0
        %v8584 = vadd.f32 %v8467, %v8583
        %v8585 = vpop.f32.mrf.mxu0
        %v8586 = vpop.f32.mrf.mxu0
        %v8587 = vadd.f32 %v8467, %v8586
        %v8588 = vpop.f32.mrf.mxu0
        %8589 = vmatprep.mubr.bf16.mxu0 0
        %8590 = vmatmul.mubr.bf16.gmra.mxu0 %v8433
        %v8591 = vpop.f32.mrf.mxu0
        %v8592 = vadd.f32 %v8467, %v8591
        %v8593 = vpop.f32.mrf.mxu0
        %v8594 = vpop.f32.mrf.mxu0
        %v8595 = vadd.f32 %v8467, %v8594
        %v8596 = vpop.f32.mrf.mxu0
        %8597 = vmatprep.mubr.bf16.mxu0 0
        %8598 = vmatmul.mubr.bf16.gmra.mxu0 %v8434
        %v8599 = vpop.f32.mrf.mxu0
        %v8600 = vadd.f32 %v8467, %v8599
        %v8601 = vpop.f32.mrf.mxu0
        %v8602 = vpop.f32.mrf.mxu0
        %v8603 = vadd.f32 %v8467, %v8602
        %v8604 = vpop.f32.mrf.mxu0
        %8605 = vmatprep.mubr.bf16.mxu0 0
        %8606 = vmatmul.mubr.bf16.gmra.mxu0 %v8435
        %v8607 = vpop.f32.mrf.mxu0
        %v8608 = vadd.f32 %v8467, %v8607
        %v8609 = vpop.f32.mrf.mxu0
        %v8610 = vpop.f32.mrf.mxu0
        %v8611 = vadd.f32 %v8467, %v8610
        %v8612 = vpop.f32.mrf.mxu0
        %8613 = vmatprep.mubr.bf16.mxu0 0
        %8614 = vmatmul.mubr.bf16.gmra.mxu0 %v8436
        %v8615 = vpop.f32.mrf.mxu0
        %v8616 = vadd.f32 %v8467, %v8615
        %v8617 = vpop.f32.mrf.mxu0
        %v8618 = vpop.f32.mrf.mxu0
        %v8619 = vadd.f32 %v8467, %v8618
        %v8620 = vpop.f32.mrf.mxu0
        %8621 = vmatprep.mubr.bf16.mxu0 0
        %8622 = vmatmul.mubr.bf16.gmra.mxu0 %v8437
        %v8623 = vpop.f32.mrf.mxu0
        %v8624 = vadd.f32 %v8467, %v8623
        %v8625 = vpop.f32.mrf.mxu0
        %v8626 = vpop.f32.mrf.mxu0
        %v8627 = vadd.f32 %v8467, %v8626
        %v8628 = vpop.f32.mrf.mxu0
        %8629 = vmatprep.mubr.bf16.mxu0 0
        %8630 = vmatmul.mubr.bf16.gmra.mxu0 %v8438
        %v8631 = vpop.f32.mrf.mxu0
        %v8632 = vadd.f32 %v8467, %v8631
        %v8633 = vpop.f32.mrf.mxu0
        %v8634 = vpop.f32.mrf.mxu0
        %v8635 = vadd.f32 %v8467, %v8634
        %v8636 = vpop.f32.mrf.mxu0
        %8637 = vmatprep.mubr.bf16.mxu0 0
        %8638 = vmatmul.mubr.bf16.gmra.mxu0 %v8439
        %v8639 = vpop.f32.mrf.mxu0
        %v8640 = vadd.f32 %v8467, %v8639
        %v8641 = vpop.f32.mrf.mxu0
        %v8642 = vpop.f32.mrf.mxu0
        %v8643 = vadd.f32 %v8467, %v8642
        %v8644 = vpop.f32.mrf.mxu0
        %8645 = vmatprep.mubr.bf16.mxu0 0
        %8646 = vmatmul.mubr.bf16.gmra.mxu0 %v8440
        %v8647 = vpop.f32.mrf.mxu0
        %v8648 = vadd.f32 %v8467, %v8647
        %v8649 = vpop.f32.mrf.mxu0
        %v8650 = vpop.f32.mrf.mxu0
        %v8651 = vadd.f32 %v8467, %v8650
        %v8652 = vpop.f32.mrf.mxu0
        %8653 = vmatprep.mubr.bf16.mxu0 0
        %8654 = vmatmul.mubr.bf16.gmra.mxu0 %v8441
        %v8655 = vpop.f32.mrf.mxu0
        %v8656 = vadd.f32 %v8467, %v8655
        %v8657 = vpop.f32.mrf.mxu0
        %v8658 = vpop.f32.mrf.mxu0
        %v8659 = vadd.f32 %v8467, %v8658
        %v8660 = vpop.f32.mrf.mxu0
        %8661 = vmatprep.mubr.bf16.mxu0 0
        %8662 = vmatmul.mubr.bf16.gmra.mxu0 %v8442
        %v8663 = vpop.f32.mrf.mxu0
        %v8664 = vadd.f32 %v8467, %v8663
        %v8665 = vpop.f32.mrf.mxu0
        %v8666 = vpop.f32.mrf.mxu0
        %v8667 = vadd.f32 %v8467, %v8666
        %v8668 = vpop.f32.mrf.mxu0
        %8669 = vmatprep.mubr.bf16.mxu0 0
        %8670 = vmatmul.mubr.bf16.gmra.mxu0 %v8443
        %v8671 = vpop.f32.mrf.mxu0
        %v8672 = vadd.f32 %v8467, %v8671
        %v8673 = vpop.f32.mrf.mxu0
        %v8674 = vpop.f32.mrf.mxu0
        %v8675 = vadd.f32 %v8467, %v8674
        %v8676 = vpop.f32.mrf.mxu0
        %8677 = vmatprep.mubr.bf16.mxu0 0
        %8678 = vmatmul.mubr.bf16.gmra.mxu0 %v8444
        %v8679 = vpop.f32.mrf.mxu0
        %v8680 = vadd.f32 %v8467, %v8679
        %v8681 = vpop.f32.mrf.mxu0
        %v8682 = vpop.f32.mrf.mxu0
        %v8683 = vadd.f32 %v8467, %v8682
        %v8684 = vpop.f32.mrf.mxu0
        %8685 = vmatprep.mubr.bf16.mxu0 0
        %8686 = vmatmul.mubr.bf16.gmra.mxu0 %v8445
        %v8687 = vpop.f32.mrf.mxu0
        %v8688 = vadd.f32 %v8467, %v8687
        %v8689 = vpop.f32.mrf.mxu0
        %v8690 = vpop.f32.mrf.mxu0
        %v8691 = vadd.f32 %v8467, %v8690
        %v8692 = vpop.f32.mrf.mxu0
        %8693 = vdwg.mxu0
        %v8694 = vunpack.c.l.bf16 %v1429
        %v8695 = vunpack.c.l.bf16 %v1436
        %v8696 = vunpack.c.l.bf16 %v1437
        %v8697 = vunpack.c.l.bf16 %v1438
        %v8698 = vunpack.c.l.bf16 %v1453
        %v8699 = vunpack.c.l.bf16 %v1460
        %v8700 = vunpack.c.l.bf16 %v1461
        %v8701 = vunpack.c.l.bf16 %v1462
        %v8702 = vunpack.c.l.bf16 %v1476
        %v8703 = vunpack.c.l.bf16 %v1491
        %v8704 = vunpack.c.l.bf16 %v1498
        %v8705 = vunpack.c.l.bf16 %v1499
        %v8706 = vunpack.c.l.bf16 %v1500
        %v8707 = vunpack.c.l.bf16 %v1515
        %v8708 = vunpack.c.l.bf16 %v1522
        %v8709 = vunpack.c.l.bf16 %v1523
        %v8710 = vunpack.c.l.bf16 %v1524
        %v8711 = vunpack.c.l.bf16 %v1538
        %v8712 = vunpack.c.l.bf16 %v1553
        %v8713 = vunpack.c.l.bf16 %v1560
        %v8714 = vunpack.c.l.bf16 %v1561
        %v8715 = vunpack.c.l.bf16 %v1562
        %v8716 = vunpack.c.l.bf16 %v1577
        %v8717 = vunpack.c.l.bf16 %v1584
        %v8718 = vunpack.c.l.bf16 %v1585
        %v8719 = vunpack.c.l.bf16 %v1586
        %v8720 = vunpack.c.l.bf16 %v1600
        %v8721 = vunpack.c.l.bf16 %v1615
        %v8722 = vunpack.c.l.bf16 %v1622
        %v8723 = vunpack.c.l.bf16 %v1623
        %v8724 = vunpack.c.l.bf16 %v1624
        %v8725 = vunpack.c.l.bf16 %v1639
        %v8726 = vunpack.c.l.bf16 %v1646
        %v8727 = vunpack.c.l.bf16 %v1647
        %v8728 = vunpack.c.l.bf16 %v1648
        %v8729 = vunpack.c.l.bf16 %v1662
        %v8730 = vunpack.c.l.bf16 %v1677
        %v8731 = vunpack.c.l.bf16 %v1684
        %v8732 = vunpack.c.l.bf16 %v1685
        %v8733 = vunpack.c.l.bf16 %v1686
        %v8734 = vunpack.c.l.bf16 %v1701
        %v8735 = vunpack.c.l.bf16 %v1708
        %v8736 = vunpack.c.l.bf16 %v1709
        %v8737 = vunpack.c.l.bf16 %v1710
        %v8738 = vunpack.c.l.bf16 %v1724
        %v8739 = vunpack.c.l.bf16 %v1739
        %v8740 = vunpack.c.l.bf16 %v1746
        %v8741 = vunpack.c.l.bf16 %v1747
        %v8742 = vunpack.c.l.bf16 %v1748
        %v8743 = vunpack.c.l.bf16 %v1763
        %v8744 = vunpack.c.l.bf16 %v1770
        %v8745 = vunpack.c.l.bf16 %v1771
        %v8746 = vunpack.c.l.bf16 %v1772
        %v8747 = vunpack.c.l.bf16 %v1786
        %v8748 = vunpack.c.l.bf16 %v1801
        %v8749 = vunpack.c.l.bf16 %v1808
        %v8750 = vunpack.c.l.bf16 %v1809
        %v8751 = vunpack.c.l.bf16 %v1810
        %v8752 = vunpack.c.l.bf16 %v1825
        %v8753 = vunpack.c.l.bf16 %v1832
        %v8754 = vunpack.c.l.bf16 %v1833
        %v8755 = vunpack.c.l.bf16 %v1834
        %v8756 = vunpack.c.l.bf16 %v1848
        %v8757 = vunpack.c.l.bf16 %v1863
        %v8758 = vunpack.c.l.bf16 %v1870
        %v8759 = vunpack.c.l.bf16 %v1871
        %v8760 = vunpack.c.l.bf16 %v1872
        %v8761 = vunpack.c.l.bf16 %v1887
        %v8762 = vunpack.c.l.bf16 %v1894
        %v8763 = vunpack.c.l.bf16 %v1895
        %v8764 = vunpack.c.l.bf16 %v1896
        %v8765 = vunpack.c.l.bf16 %v1910
        %v8766 = vunpack.c.l.bf16 %v1925
        %v8767 = vunpack.c.l.bf16 %v1932
        %v8768 = vunpack.c.l.bf16 %v1933
        %v8769 = vunpack.c.l.bf16 %v1934
        %v8770 = vunpack.c.l.bf16 %v1949
        %v8771 = vunpack.c.l.bf16 %v1956
        %v8772 = vunpack.c.l.bf16 %v1957
        %v8773 = vunpack.c.l.bf16 %v1958
        %v8774 = vunpack.c.l.bf16 %v1972
        %v8775 = vunpack.c.l.bf16 %v1987
        %v8776 = vunpack.c.l.bf16 %v1994
        %v8777 = vunpack.c.l.bf16 %v1995
        %v8778 = vunpack.c.l.bf16 %v1996
        %v8779 = vunpack.c.l.bf16 %v2011
        %v8780 = vunpack.c.l.bf16 %v2018
        %v8781 = vunpack.c.l.bf16 %v2019
        %v8782 = vunpack.c.l.bf16 %v2020
        %v8783 = vunpack.c.l.bf16 %v2034
        %v8784 = vunpack.c.l.bf16 %v2049
        %v8785 = vunpack.c.l.bf16 %v2056
        %v8786 = vunpack.c.l.bf16 %v2057
        %v8787 = vunpack.c.l.bf16 %v2058
        %v8788 = vunpack.c.l.bf16 %v2073
        %v8789 = vunpack.c.l.bf16 %v2080
        %v8790 = vunpack.c.l.bf16 %v2081
        %v8791 = vunpack.c.l.bf16 %v2082
        %v8792 = vunpack.c.l.bf16 %v2096
        %v8793 = vunpack.c.l.bf16 %v2111
        %v8794 = vunpack.c.l.bf16 %v2118
        %v8795 = vunpack.c.l.bf16 %v2119
        %v8796 = vunpack.c.l.bf16 %v2120
        %v8797 = vunpack.c.l.bf16 %v2135
        %v8798 = vunpack.c.l.bf16 %v2142
        %v8799 = vunpack.c.l.bf16 %v2143
        %v8800 = vunpack.c.l.bf16 %v2144
        %v8801 = vunpack.c.l.bf16 %v2158
        %v8802 = vunpack.c.l.bf16 %v2173
        %v8803 = vunpack.c.l.bf16 %v2180
        %v8804 = vunpack.c.l.bf16 %v2181
        %v8805 = vunpack.c.l.bf16 %v2182
        %v8806 = vunpack.c.l.bf16 %v2197
        %v8807 = vunpack.c.l.bf16 %v2204
        %v8808 = vunpack.c.l.bf16 %v2205
        %v8809 = vunpack.c.l.bf16 %v2206
        %v8810 = vunpack.c.l.bf16 %v2220
        %v8811 = vunpack.c.l.bf16 %v2235
        %v8812 = vunpack.c.l.bf16 %v2242
        %v8813 = vunpack.c.l.bf16 %v2243
        %v8814 = vunpack.c.l.bf16 %v2244
        %v8815 = vunpack.c.l.bf16 %v2259
        %v8816 = vunpack.c.l.bf16 %v2266
        %v8817 = vunpack.c.l.bf16 %v2267
        %v8818 = vunpack.c.l.bf16 %v2268
        %v8819 = vunpack.c.l.bf16 %v2282
        %v8820 = vunpack.c.l.bf16 %v2297
        %v8821 = vunpack.c.l.bf16 %v2304
        %v8822 = vunpack.c.l.bf16 %v2305
        %v8823 = vunpack.c.l.bf16 %v2306
        %v8824 = vunpack.c.l.bf16 %v2321
        %v8825 = vunpack.c.l.bf16 %v2328
        %v8826 = vunpack.c.l.bf16 %v2329
        %v8827 = vunpack.c.l.bf16 %v2330
        %v8828 = vunpack.c.l.bf16 %v2344
        %v8829 = vunpack.c.l.bf16 %v2359
        %v8830 = vunpack.c.l.bf16 %v2366
        %v8831 = vunpack.c.l.bf16 %v2367
        %v8832 = vunpack.c.l.bf16 %v2368
        %v8833 = vunpack.c.l.bf16 %v2383
        %v8834 = vunpack.c.l.bf16 %v2390
        %v8835 = vunpack.c.l.bf16 %v2391
        %v8836 = vunpack.c.l.bf16 %v2392
        %v8837 = vunpack.c.l.bf16 %v2406
        %v8982 = vcombine.low %v8694, %v8695
        %v8983 = vcombine.low %v8696, %v8697
        %v8985 = vunpack.c.l.s4 1983009808
        %v8986 = vunpack.c.0.s8 %v8985
        %v8987 = vlaneseq
        %v8988 = vshrl.u32 %v8987, 7
        %v8989 = vsub.s32 %v8986, %v8988
        %v8990 = vrot.slane %v8982, %v8989
        %v8992 = vunpack.c.l.s4 1983009808
        %v8993 = vunpack.c.0.s8 %v8992
        %v8994 = vlaneseq
        %v8995 = vshrl.u32 %v8994, 7
        %v8996 = vsub.s32 %v8993, %v8995
        %v8997 = vrot.slane %v8983, %v8996
        %v8998 = vcombine.low %v8990, %v8997
        %v8999 = vcombine.low %v8698, %v8699
        %v9000 = vcombine.low %v8700, %v8701
        %v9002 = vunpack.c.l.s4 1983009808
        %v9003 = vunpack.c.0.s8 %v9002
        %v9004 = vlaneseq
        %v9005 = vshrl.u32 %v9004, 7
        %v9006 = vsub.s32 %v9003, %v9005
        %v9007 = vrot.slane %v8999, %v9006
        %v9009 = vunpack.c.l.s4 1983009808
        %v9010 = vunpack.c.0.s8 %v9009
        %v9011 = vlaneseq
        %v9012 = vshrl.u32 %v9011, 7
        %v9013 = vsub.s32 %v9010, %v9012
        %v9014 = vrot.slane %v9000, %v9013
        %v9015 = vcombine.low %v9007, %v9014
        %v9016 = vcombine.low %v8702, %v8703
        %v9017 = vcombine.low %v8704, %v8705
        %v9019 = vunpack.c.l.s4 1983009808
        %v9020 = vunpack.c.0.s8 %v9019
        %v9021 = vlaneseq
        %v9022 = vshrl.u32 %v9021, 7
        %v9023 = vsub.s32 %v9020, %v9022
        %v9024 = vrot.slane %v9016, %v9023
        %v9026 = vunpack.c.l.s4 1983009808
        %v9027 = vunpack.c.0.s8 %v9026
        %v9028 = vlaneseq
        %v9029 = vshrl.u32 %v9028, 7
        %v9030 = vsub.s32 %v9027, %v9029
        %v9031 = vrot.slane %v9017, %v9030
        %v9032 = vcombine.low %v9024, %v9031
        %v9033 = vcombine.low %v8706, %v8707
        %v9034 = vcombine.low %v8708, %v8709
        %v9036 = vunpack.c.l.s4 1983009808
        %v9037 = vunpack.c.0.s8 %v9036
        %v9038 = vlaneseq
        %v9039 = vshrl.u32 %v9038, 7
        %v9040 = vsub.s32 %v9037, %v9039
        %v9041 = vrot.slane %v9033, %v9040
        %v9043 = vunpack.c.l.s4 1983009808
        %v9044 = vunpack.c.0.s8 %v9043
        %v9045 = vlaneseq
        %v9046 = vshrl.u32 %v9045, 7
        %v9047 = vsub.s32 %v9044, %v9046
        %v9048 = vrot.slane %v9034, %v9047
        %v9049 = vcombine.low %v9041, %v9048
        %v9050 = vcombine.low %v8710, %v8711
        %v9051 = vcombine.low %v8712, %v8713
        %v9053 = vunpack.c.l.s4 1983009808
        %v9054 = vunpack.c.0.s8 %v9053
        %v9055 = vlaneseq
        %v9056 = vshrl.u32 %v9055, 7
        %v9057 = vsub.s32 %v9054, %v9056
        %v9058 = vrot.slane %v9050, %v9057
        %v9060 = vunpack.c.l.s4 1983009808
        %v9061 = vunpack.c.0.s8 %v9060
        %v9062 = vlaneseq
        %v9063 = vshrl.u32 %v9062, 7
        %v9064 = vsub.s32 %v9061, %v9063
        %v9065 = vrot.slane %v9051, %v9064
        %v9066 = vcombine.low %v9058, %v9065
        %v9067 = vcombine.low %v8714, %v8715
        %v9068 = vcombine.low %v8716, %v8717
        %v9070 = vunpack.c.l.s4 1983009808
        %v9071 = vunpack.c.0.s8 %v9070
        %v9072 = vlaneseq
        %v9073 = vshrl.u32 %v9072, 7
        %v9074 = vsub.s32 %v9071, %v9073
        %v9075 = vrot.slane %v9067, %v9074
        %v9077 = vunpack.c.l.s4 1983009808
        %v9078 = vunpack.c.0.s8 %v9077
        %v9079 = vlaneseq
        %v9080 = vshrl.u32 %v9079, 7
        %v9081 = vsub.s32 %v9078, %v9080
        %v9082 = vrot.slane %v9068, %v9081
        %v9083 = vcombine.low %v9075, %v9082
        %v9084 = vcombine.low %v8718, %v8719
        %v9085 = vcombine.low %v8720, %v8721
        %v9087 = vunpack.c.l.s4 1983009808
        %v9088 = vunpack.c.0.s8 %v9087
        %v9089 = vlaneseq
        %v9090 = vshrl.u32 %v9089, 7
        %v9091 = vsub.s32 %v9088, %v9090
        %v9092 = vrot.slane %v9084, %v9091
        %v9094 = vunpack.c.l.s4 1983009808
        %v9095 = vunpack.c.0.s8 %v9094
        %v9096 = vlaneseq
        %v9097 = vshrl.u32 %v9096, 7
        %v9098 = vsub.s32 %v9095, %v9097
        %v9099 = vrot.slane %v9085, %v9098
        %v9100 = vcombine.low %v9092, %v9099
        %v9101 = vcombine.low %v8722, %v8723
        %v9102 = vcombine.low %v8724, %v8725
        %v9104 = vunpack.c.l.s4 1983009808
        %v9105 = vunpack.c.0.s8 %v9104
        %v9106 = vlaneseq
        %v9107 = vshrl.u32 %v9106, 7
        %v9108 = vsub.s32 %v9105, %v9107
        %v9109 = vrot.slane %v9101, %v9108
        %v9111 = vunpack.c.l.s4 1983009808
        %v9112 = vunpack.c.0.s8 %v9111
        %v9113 = vlaneseq
        %v9114 = vshrl.u32 %v9113, 7
        %v9115 = vsub.s32 %v9112, %v9114
        %v9116 = vrot.slane %v9102, %v9115
        %v9117 = vcombine.low %v9109, %v9116
        %v9118 = vcombine.low %v8726, %v8727
        %v9119 = vcombine.low %v8728, %v8729
        %v9121 = vunpack.c.l.s4 1983009808
        %v9122 = vunpack.c.0.s8 %v9121
        %v9123 = vlaneseq
        %v9124 = vshrl.u32 %v9123, 7
        %v9125 = vsub.s32 %v9122, %v9124
        %v9126 = vrot.slane %v9118, %v9125
        %v9128 = vunpack.c.l.s4 1983009808
        %v9129 = vunpack.c.0.s8 %v9128
        %v9130 = vlaneseq
        %v9131 = vshrl.u32 %v9130, 7
        %v9132 = vsub.s32 %v9129, %v9131
        %v9133 = vrot.slane %v9119, %v9132
        %v9134 = vcombine.low %v9126, %v9133
        %v9135 = vcombine.low %v8730, %v8731
        %v9136 = vcombine.low %v8732, %v8733
        %v9138 = vunpack.c.l.s4 1983009808
        %v9139 = vunpack.c.0.s8 %v9138
        %v9140 = vlaneseq
        %v9141 = vshrl.u32 %v9140, 7
        %v9142 = vsub.s32 %v9139, %v9141
        %v9143 = vrot.slane %v9135, %v9142
        %v9145 = vunpack.c.l.s4 1983009808
        %v9146 = vunpack.c.0.s8 %v9145
        %v9147 = vlaneseq
        %v9148 = vshrl.u32 %v9147, 7
        %v9149 = vsub.s32 %v9146, %v9148
        %v9150 = vrot.slane %v9136, %v9149
        %v9151 = vcombine.low %v9143, %v9150
        %v9152 = vcombine.low %v8734, %v8735
        %v9153 = vcombine.low %v8736, %v8737
        %v9155 = vunpack.c.l.s4 1983009808
        %v9156 = vunpack.c.0.s8 %v9155
        %v9157 = vlaneseq
        %v9158 = vshrl.u32 %v9157, 7
        %v9159 = vsub.s32 %v9156, %v9158
        %v9160 = vrot.slane %v9152, %v9159
        %v9162 = vunpack.c.l.s4 1983009808
        %v9163 = vunpack.c.0.s8 %v9162
        %v9164 = vlaneseq
        %v9165 = vshrl.u32 %v9164, 7
        %v9166 = vsub.s32 %v9163, %v9165
        %v9167 = vrot.slane %v9153, %v9166
        %v9168 = vcombine.low %v9160, %v9167
        %v9169 = vcombine.low %v8738, %v8739
        %v9170 = vcombine.low %v8740, %v8741
        %v9172 = vunpack.c.l.s4 1983009808
        %v9173 = vunpack.c.0.s8 %v9172
        %v9174 = vlaneseq
        %v9175 = vshrl.u32 %v9174, 7
        %v9176 = vsub.s32 %v9173, %v9175
        %v9177 = vrot.slane %v9169, %v9176
        %v9179 = vunpack.c.l.s4 1983009808
        %v9180 = vunpack.c.0.s8 %v9179
        %v9181 = vlaneseq
        %v9182 = vshrl.u32 %v9181, 7
        %v9183 = vsub.s32 %v9180, %v9182
        %v9184 = vrot.slane %v9170, %v9183
        %v9185 = vcombine.low %v9177, %v9184
        %v9186 = vcombine.low %v8742, %v8743
        %v9187 = vcombine.low %v8744, %v8745
        %v9189 = vunpack.c.l.s4 1983009808
        %v9190 = vunpack.c.0.s8 %v9189
        %v9191 = vlaneseq
        %v9192 = vshrl.u32 %v9191, 7
        %v9193 = vsub.s32 %v9190, %v9192
        %v9194 = vrot.slane %v9186, %v9193
        %v9196 = vunpack.c.l.s4 1983009808
        %v9197 = vunpack.c.0.s8 %v9196
        %v9198 = vlaneseq
        %v9199 = vshrl.u32 %v9198, 7
        %v9200 = vsub.s32 %v9197, %v9199
        %v9201 = vrot.slane %v9187, %v9200
        %v9202 = vcombine.low %v9194, %v9201
        %v9203 = vcombine.low %v8746, %v8747
        %v9204 = vcombine.low %v8748, %v8749
        %v9206 = vunpack.c.l.s4 1983009808
        %v9207 = vunpack.c.0.s8 %v9206
        %v9208 = vlaneseq
        %v9209 = vshrl.u32 %v9208, 7
        %v9210 = vsub.s32 %v9207, %v9209
        %v9211 = vrot.slane %v9203, %v9210
        %v9213 = vunpack.c.l.s4 1983009808
        %v9214 = vunpack.c.0.s8 %v9213
        %v9215 = vlaneseq
        %v9216 = vshrl.u32 %v9215, 7
        %v9217 = vsub.s32 %v9214, %v9216
        %v9218 = vrot.slane %v9204, %v9217
        %v9219 = vcombine.low %v9211, %v9218
        %v9220 = vcombine.low %v8750, %v8751
        %v9221 = vcombine.low %v8752, %v8753
        %v9223 = vunpack.c.l.s4 1983009808
        %v9224 = vunpack.c.0.s8 %v9223
        %v9225 = vlaneseq
        %v9226 = vshrl.u32 %v9225, 7
        %v9227 = vsub.s32 %v9224, %v9226
        %v9228 = vrot.slane %v9220, %v9227
        %v9230 = vunpack.c.l.s4 1983009808
        %v9231 = vunpack.c.0.s8 %v9230
        %v9232 = vlaneseq
        %v9233 = vshrl.u32 %v9232, 7
        %v9234 = vsub.s32 %v9231, %v9233
        %v9235 = vrot.slane %v9221, %v9234
        %v9236 = vcombine.low %v9228, %v9235
        %v9237 = vcombine.low %v8754, %v8755
        %v9238 = vcombine.low %v8756, %v8757
        %v9240 = vunpack.c.l.s4 1983009808
        %v9241 = vunpack.c.0.s8 %v9240
        %v9242 = vlaneseq
        %v9243 = vshrl.u32 %v9242, 7
        %v9244 = vsub.s32 %v9241, %v9243
        %v9245 = vrot.slane %v9237, %v9244
        %v9247 = vunpack.c.l.s4 1983009808
        %v9248 = vunpack.c.0.s8 %v9247
        %v9249 = vlaneseq
        %v9250 = vshrl.u32 %v9249, 7
        %v9251 = vsub.s32 %v9248, %v9250
        %v9252 = vrot.slane %v9238, %v9251
        %v9253 = vcombine.low %v9245, %v9252
        %v9254 = vcombine.low %v8758, %v8759
        %v9255 = vcombine.low %v8760, %v8761
        %v9257 = vunpack.c.l.s4 1983009808
        %v9258 = vunpack.c.0.s8 %v9257
        %v9259 = vlaneseq
        %v9260 = vshrl.u32 %v9259, 7
        %v9261 = vsub.s32 %v9258, %v9260
        %v9262 = vrot.slane %v9254, %v9261
        %v9264 = vunpack.c.l.s4 1983009808
        %v9265 = vunpack.c.0.s8 %v9264
        %v9266 = vlaneseq
        %v9267 = vshrl.u32 %v9266, 7
        %v9268 = vsub.s32 %v9265, %v9267
        %v9269 = vrot.slane %v9255, %v9268
        %v9270 = vcombine.low %v9262, %v9269
        %v9271 = vcombine.low %v8762, %v8763
        %v9272 = vcombine.low %v8764, %v8765
        %v9274 = vunpack.c.l.s4 1983009808
        %v9275 = vunpack.c.0.s8 %v9274
        %v9276 = vlaneseq
        %v9277 = vshrl.u32 %v9276, 7
        %v9278 = vsub.s32 %v9275, %v9277
        %v9279 = vrot.slane %v9271, %v9278
        %v9281 = vunpack.c.l.s4 1983009808
        %v9282 = vunpack.c.0.s8 %v9281
        %v9283 = vlaneseq
        %v9284 = vshrl.u32 %v9283, 7
        %v9285 = vsub.s32 %v9282, %v9284
        %v9286 = vrot.slane %v9272, %v9285
        %v9287 = vcombine.low %v9279, %v9286
        %v9288 = vcombine.low %v8766, %v8767
        %v9289 = vcombine.low %v8768, %v8769
        %v9291 = vunpack.c.l.s4 1983009808
        %v9292 = vunpack.c.0.s8 %v9291
        %v9293 = vlaneseq
        %v9294 = vshrl.u32 %v9293, 7
        %v9295 = vsub.s32 %v9292, %v9294
        %v9296 = vrot.slane %v9288, %v9295
        %v9298 = vunpack.c.l.s4 1983009808
        %v9299 = vunpack.c.0.s8 %v9298
        %v9300 = vlaneseq
        %v9301 = vshrl.u32 %v9300, 7
        %v9302 = vsub.s32 %v9299, %v9301
        %v9303 = vrot.slane %v9289, %v9302
        %v9304 = vcombine.low %v9296, %v9303
        %v9305 = vcombine.low %v8770, %v8771
        %v9306 = vcombine.low %v8772, %v8773
        %v9308 = vunpack.c.l.s4 1983009808
        %v9309 = vunpack.c.0.s8 %v9308
        %v9310 = vlaneseq
        %v9311 = vshrl.u32 %v9310, 7
        %v9312 = vsub.s32 %v9309, %v9311
        %v9313 = vrot.slane %v9305, %v9312
        %v9315 = vunpack.c.l.s4 1983009808
        %v9316 = vunpack.c.0.s8 %v9315
        %v9317 = vlaneseq
        %v9318 = vshrl.u32 %v9317, 7
        %v9319 = vsub.s32 %v9316, %v9318
        %v9320 = vrot.slane %v9306, %v9319
        %v9321 = vcombine.low %v9313, %v9320
        %v9322 = vcombine.low %v8774, %v8775
        %v9323 = vcombine.low %v8776, %v8777
        %v9325 = vunpack.c.l.s4 1983009808
        %v9326 = vunpack.c.0.s8 %v9325
        %v9327 = vlaneseq
        %v9328 = vshrl.u32 %v9327, 7
        %v9329 = vsub.s32 %v9326, %v9328
        %v9330 = vrot.slane %v9322, %v9329
        %v9332 = vunpack.c.l.s4 1983009808
        %v9333 = vunpack.c.0.s8 %v9332
        %v9334 = vlaneseq
        %v9335 = vshrl.u32 %v9334, 7
        %v9336 = vsub.s32 %v9333, %v9335
        %v9337 = vrot.slane %v9323, %v9336
        %v9338 = vcombine.low %v9330, %v9337
        %v9339 = vcombine.low %v8778, %v8779
        %v9340 = vcombine.low %v8780, %v8781
        %v9342 = vunpack.c.l.s4 1983009808
        %v9343 = vunpack.c.0.s8 %v9342
        %v9344 = vlaneseq
        %v9345 = vshrl.u32 %v9344, 7
        %v9346 = vsub.s32 %v9343, %v9345
        %v9347 = vrot.slane %v9339, %v9346
        %v9349 = vunpack.c.l.s4 1983009808
        %v9350 = vunpack.c.0.s8 %v9349
        %v9351 = vlaneseq
        %v9352 = vshrl.u32 %v9351, 7
        %v9353 = vsub.s32 %v9350, %v9352
        %v9354 = vrot.slane %v9340, %v9353
        %v9355 = vcombine.low %v9347, %v9354
        %v9356 = vcombine.low %v8782, %v8783
        %v9357 = vcombine.low %v8784, %v8785
        %v9359 = vunpack.c.l.s4 1983009808
        %v9360 = vunpack.c.0.s8 %v9359
        %v9361 = vlaneseq
        %v9362 = vshrl.u32 %v9361, 7
        %v9363 = vsub.s32 %v9360, %v9362
        %v9364 = vrot.slane %v9356, %v9363
        %v9366 = vunpack.c.l.s4 1983009808
        %v9367 = vunpack.c.0.s8 %v9366
        %v9368 = vlaneseq
        %v9369 = vshrl.u32 %v9368, 7
        %v9370 = vsub.s32 %v9367, %v9369
        %v9371 = vrot.slane %v9357, %v9370
        %v9372 = vcombine.low %v9364, %v9371
        %v9373 = vcombine.low %v8786, %v8787
        %v9374 = vcombine.low %v8788, %v8789
        %v9376 = vunpack.c.l.s4 1983009808
        %v9377 = vunpack.c.0.s8 %v9376
        %v9378 = vlaneseq
        %v9379 = vshrl.u32 %v9378, 7
        %v9380 = vsub.s32 %v9377, %v9379
        %v9381 = vrot.slane %v9373, %v9380
        %v9383 = vunpack.c.l.s4 1983009808
        %v9384 = vunpack.c.0.s8 %v9383
        %v9385 = vlaneseq
        %v9386 = vshrl.u32 %v9385, 7
        %v9387 = vsub.s32 %v9384, %v9386
        %v9388 = vrot.slane %v9374, %v9387
        %v9389 = vcombine.low %v9381, %v9388
        %v9390 = vcombine.low %v8790, %v8791
        %v9391 = vcombine.low %v8792, %v8793
        %v9393 = vunpack.c.l.s4 1983009808
        %v9394 = vunpack.c.0.s8 %v9393
        %v9395 = vlaneseq
        %v9396 = vshrl.u32 %v9395, 7
        %v9397 = vsub.s32 %v9394, %v9396
        %v9398 = vrot.slane %v9390, %v9397
        %v9400 = vunpack.c.l.s4 1983009808
        %v9401 = vunpack.c.0.s8 %v9400
        %v9402 = vlaneseq
        %v9403 = vshrl.u32 %v9402, 7
        %v9404 = vsub.s32 %v9401, %v9403
        %v9405 = vrot.slane %v9391, %v9404
        %v9406 = vcombine.low %v9398, %v9405
        %v9407 = vcombine.low %v8794, %v8795
        %v9408 = vcombine.low %v8796, %v8797
        %v9410 = vunpack.c.l.s4 1983009808
        %v9411 = vunpack.c.0.s8 %v9410
        %v9412 = vlaneseq
        %v9413 = vshrl.u32 %v9412, 7
        %v9414 = vsub.s32 %v9411, %v9413
        %v9415 = vrot.slane %v9407, %v9414
        %v9417 = vunpack.c.l.s4 1983009808
        %v9418 = vunpack.c.0.s8 %v9417
        %v9419 = vlaneseq
        %v9420 = vshrl.u32 %v9419, 7
        %v9421 = vsub.s32 %v9418, %v9420
        %v9422 = vrot.slane %v9408, %v9421
        %v9423 = vcombine.low %v9415, %v9422
        %v9424 = vcombine.low %v8798, %v8799
        %v9425 = vcombine.low %v8800, %v8801
        %v9427 = vunpack.c.l.s4 1983009808
        %v9428 = vunpack.c.0.s8 %v9427
        %v9429 = vlaneseq
        %v9430 = vshrl.u32 %v9429, 7
        %v9431 = vsub.s32 %v9428, %v9430
        %v9432 = vrot.slane %v9424, %v9431
        %v9434 = vunpack.c.l.s4 1983009808
        %v9435 = vunpack.c.0.s8 %v9434
        %v9436 = vlaneseq
        %v9437 = vshrl.u32 %v9436, 7
        %v9438 = vsub.s32 %v9435, %v9437
        %v9439 = vrot.slane %v9425, %v9438
        %v9440 = vcombine.low %v9432, %v9439
        %v9441 = vcombine.low %v8802, %v8803
        %v9442 = vcombine.low %v8804, %v8805
        %v9444 = vunpack.c.l.s4 1983009808
        %v9445 = vunpack.c.0.s8 %v9444
        %v9446 = vlaneseq
        %v9447 = vshrl.u32 %v9446, 7
        %v9448 = vsub.s32 %v9445, %v9447
        %v9449 = vrot.slane %v9441, %v9448
        %v9451 = vunpack.c.l.s4 1983009808
        %v9452 = vunpack.c.0.s8 %v9451
        %v9453 = vlaneseq
        %v9454 = vshrl.u32 %v9453, 7
        %v9455 = vsub.s32 %v9452, %v9454
        %v9456 = vrot.slane %v9442, %v9455
        %v9457 = vcombine.low %v9449, %v9456
        %v9458 = vcombine.low %v8806, %v8807
        %v9459 = vcombine.low %v8808, %v8809
        %v9461 = vunpack.c.l.s4 1983009808
        %v9462 = vunpack.c.0.s8 %v9461
        %v9463 = vlaneseq
        %v9464 = vshrl.u32 %v9463, 7
        %v9465 = vsub.s32 %v9462, %v9464
        %v9466 = vrot.slane %v9458, %v9465
        %v9468 = vunpack.c.l.s4 1983009808
        %v9469 = vunpack.c.0.s8 %v9468
        %v9470 = vlaneseq
        %v9471 = vshrl.u32 %v9470, 7
        %v9472 = vsub.s32 %v9469, %v9471
        %v9473 = vrot.slane %v9459, %v9472
        %v9474 = vcombine.low %v9466, %v9473
        %v9475 = vcombine.low %v8810, %v8811
        %v9476 = vcombine.low %v8812, %v8813
        %v9478 = vunpack.c.l.s4 1983009808
        %v9479 = vunpack.c.0.s8 %v9478
        %v9480 = vlaneseq
        %v9481 = vshrl.u32 %v9480, 7
        %v9482 = vsub.s32 %v9479, %v9481
        %v9483 = vrot.slane %v9475, %v9482
        %v9485 = vunpack.c.l.s4 1983009808
        %v9486 = vunpack.c.0.s8 %v9485
        %v9487 = vlaneseq
        %v9488 = vshrl.u32 %v9487, 7
        %v9489 = vsub.s32 %v9486, %v9488
        %v9490 = vrot.slane %v9476, %v9489
        %v9491 = vcombine.low %v9483, %v9490
        %v9492 = vcombine.low %v8814, %v8815
        %v9493 = vcombine.low %v8816, %v8817
        %v9495 = vunpack.c.l.s4 1983009808
        %v9496 = vunpack.c.0.s8 %v9495
        %v9497 = vlaneseq
        %v9498 = vshrl.u32 %v9497, 7
        %v9499 = vsub.s32 %v9496, %v9498
        %v9500 = vrot.slane %v9492, %v9499
        %v9502 = vunpack.c.l.s4 1983009808
        %v9503 = vunpack.c.0.s8 %v9502
        %v9504 = vlaneseq
        %v9505 = vshrl.u32 %v9504, 7
        %v9506 = vsub.s32 %v9503, %v9505
        %v9507 = vrot.slane %v9493, %v9506
        %v9508 = vcombine.low %v9500, %v9507
        %v9509 = vcombine.low %v8818, %v8819
        %v9510 = vcombine.low %v8820, %v8821
        %v9512 = vunpack.c.l.s4 1983009808
        %v9513 = vunpack.c.0.s8 %v9512
        %v9514 = vlaneseq
        %v9515 = vshrl.u32 %v9514, 7
        %v9516 = vsub.s32 %v9513, %v9515
        %v9517 = vrot.slane %v9509, %v9516
        %v9519 = vunpack.c.l.s4 1983009808
        %v9520 = vunpack.c.0.s8 %v9519
        %v9521 = vlaneseq
        %v9522 = vshrl.u32 %v9521, 7
        %v9523 = vsub.s32 %v9520, %v9522
        %v9524 = vrot.slane %v9510, %v9523
        %v9525 = vcombine.low %v9517, %v9524
        %v9526 = vcombine.low %v8822, %v8823
        %v9527 = vcombine.low %v8824, %v8825
        %v9529 = vunpack.c.l.s4 1983009808
        %v9530 = vunpack.c.0.s8 %v9529
        %v9531 = vlaneseq
        %v9532 = vshrl.u32 %v9531, 7
        %v9533 = vsub.s32 %v9530, %v9532
        %v9534 = vrot.slane %v9526, %v9533
        %v9536 = vunpack.c.l.s4 1983009808
        %v9537 = vunpack.c.0.s8 %v9536
        %v9538 = vlaneseq
        %v9539 = vshrl.u32 %v9538, 7
        %v9540 = vsub.s32 %v9537, %v9539
        %v9541 = vrot.slane %v9527, %v9540
        %v9542 = vcombine.low %v9534, %v9541
        %v9543 = vcombine.low %v8826, %v8827
        %v9544 = vcombine.low %v8828, %v8829
        %v9546 = vunpack.c.l.s4 1983009808
        %v9547 = vunpack.c.0.s8 %v9546
        %v9548 = vlaneseq
        %v9549 = vshrl.u32 %v9548, 7
        %v9550 = vsub.s32 %v9547, %v9549
        %v9551 = vrot.slane %v9543, %v9550
        %v9553 = vunpack.c.l.s4 1983009808
        %v9554 = vunpack.c.0.s8 %v9553
        %v9555 = vlaneseq
        %v9556 = vshrl.u32 %v9555, 7
        %v9557 = vsub.s32 %v9554, %v9556
        %v9558 = vrot.slane %v9544, %v9557
        %v9559 = vcombine.low %v9551, %v9558
        %v9560 = vcombine.low %v8830, %v8831
        %v9561 = vcombine.low %v8832, %v8833
        %v9563 = vunpack.c.l.s4 1983009808
        %v9564 = vunpack.c.0.s8 %v9563
        %v9565 = vlaneseq
        %v9566 = vshrl.u32 %v9565, 7
        %v9567 = vsub.s32 %v9564, %v9566
        %v9568 = vrot.slane %v9560, %v9567
        %v9570 = vunpack.c.l.s4 1983009808
        %v9571 = vunpack.c.0.s8 %v9570
        %v9572 = vlaneseq
        %v9573 = vshrl.u32 %v9572, 7
        %v9574 = vsub.s32 %v9571, %v9573
        %v9575 = vrot.slane %v9561, %v9574
        %v9576 = vcombine.low %v9568, %v9575
        %v9577 = vcombine.low %v8834, %v8835
        %v9578 = vcombine.low %v8836, %v8837
        %v9580 = vunpack.c.l.s4 1983009808
        %v9581 = vunpack.c.0.s8 %v9580
        %v9582 = vlaneseq
        %v9583 = vshrl.u32 %v9582, 7
        %v9584 = vsub.s32 %v9581, %v9583
        %v9585 = vrot.slane %v9577, %v9584
        %v9587 = vunpack.c.l.s4 1983009808
        %v9588 = vunpack.c.0.s8 %v9587
        %v9589 = vlaneseq
        %v9590 = vshrl.u32 %v9589, 7
        %v9591 = vsub.s32 %v9588, %v9590
        %v9592 = vrot.slane %v9578, %v9591
        %v9593 = vcombine.low %v9585, %v9592
        %v9630 = vadd.f32 %v8552, %v8998
        %v9631 = vadd.f32 %v8555, %v9015
        %v9632 = vadd.f32 %v8560, %v9032
        %v9633 = vadd.f32 %v8563, %v9049
        %v9634 = vadd.f32 %v8568, %v9066
        %v9635 = vadd.f32 %v8571, %v9083
        %v9636 = vadd.f32 %v8576, %v9100
        %v9637 = vadd.f32 %v8579, %v9117
        %v9638 = vadd.f32 %v8584, %v9134
        %v9639 = vadd.f32 %v8587, %v9151
        %v9640 = vadd.f32 %v8592, %v9168
        %v9641 = vadd.f32 %v8595, %v9185
        %v9642 = vadd.f32 %v8600, %v9202
        %v9643 = vadd.f32 %v8603, %v9219
        %v9644 = vadd.f32 %v8608, %v9236
        %v9645 = vadd.f32 %v8611, %v9253
        %v9646 = vadd.f32 %v8616, %v9270
        %v9647 = vadd.f32 %v8619, %v9287
        %v9648 = vadd.f32 %v8624, %v9304
        %v9649 = vadd.f32 %v8627, %v9321
        %v9650 = vadd.f32 %v8632, %v9338
        %v9651 = vadd.f32 %v8635, %v9355
        %v9652 = vadd.f32 %v8640, %v9372
        %v9653 = vadd.f32 %v8643, %v9389
        %v9654 = vadd.f32 %v8648, %v9406
        %v9655 = vadd.f32 %v8651, %v9423
        %v9656 = vadd.f32 %v8656, %v9440
        %v9657 = vadd.f32 %v8659, %v9457
        %v9658 = vadd.f32 %v8664, %v9474
        %v9659 = vadd.f32 %v8667, %v9491
        %v9660 = vadd.f32 %v8672, %v9508
        %v9661 = vadd.f32 %v8675, %v9525
        %v9662 = vadd.f32 %v8680, %v9542
        %v9663 = vadd.f32 %v8683, %v9559
        %v9664 = vadd.f32 %v8688, %v9576
        %v9665 = vadd.f32 %v8691, %v9593
        %v9666 = vmax.f32 %v9630, 0.0
        %v9667 = vmax.f32 %v9631, 0.0
        %v9668 = vmax.f32 %v9632, 0.0
        %v9669 = vmax.f32 %v9633, 0.0
        %v9670 = vmax.f32 %v9634, 0.0
        %v9671 = vmax.f32 %v9635, 0.0
        %v9672 = vmax.f32 %v9636, 0.0
        %v9673 = vmax.f32 %v9637, 0.0
        %v9674 = vmax.f32 %v9638, 0.0
        %v9675 = vmax.f32 %v9639, 0.0
        %v9676 = vmax.f32 %v9640, 0.0
        %v9677 = vmax.f32 %v9641, 0.0
        %v9678 = vmax.f32 %v9642, 0.0
        %v9679 = vmax.f32 %v9643, 0.0
        %v9680 = vmax.f32 %v9644, 0.0
        %v9681 = vmax.f32 %v9645, 0.0
        %v9682 = vmax.f32 %v9646, 0.0
        %v9683 = vmax.f32 %v9647, 0.0
        %v9684 = vmax.f32 %v9648, 0.0
        %v9685 = vmax.f32 %v9649, 0.0
        %v9686 = vmax.f32 %v9650, 0.0
        %v9687 = vmax.f32 %v9651, 0.0
        %v9688 = vmax.f32 %v9652, 0.0
        %v9689 = vmax.f32 %v9653, 0.0
        %v9690 = vmax.f32 %v9654, 0.0
        %v9691 = vmax.f32 %v9655, 0.0
        %v9692 = vmax.f32 %v9656, 0.0
        %v9693 = vmax.f32 %v9657, 0.0
        %v9694 = vmax.f32 %v9658, 0.0
        %v9695 = vmax.f32 %v9659, 0.0
        %v9696 = vmax.f32 %v9660, 0.0
        %v9697 = vmax.f32 %v9661, 0.0
        %v9698 = vmax.f32 %v9662, 0.0
        %v9699 = vmax.f32 %v9663, 0.0
        %v9700 = vmax.f32 %v9664, 0.0
        %v9701 = vmax.f32 %v9665, 0.0
        %v9702 = vpack.c.bf16 %v9667, %v9666
        %v9703 = vpack.c.bf16 %v9669, %v9668
        %v9704 = vpack.c.bf16 %v9671, %v9670
        %v9705 = vpack.c.bf16 %v9673, %v9672
        %v9706 = vpack.c.bf16 %v9675, %v9674
        %v9707 = vpack.c.bf16 %v9677, %v9676
        %v9708 = vpack.c.bf16 %v9679, %v9678
        %v9709 = vpack.c.bf16 %v9681, %v9680
        %v9710 = vpack.c.bf16 %v9683, %v9682
        %v9711 = vpack.c.bf16 %v9685, %v9684
        %v9712 = vpack.c.bf16 %v9687, %v9686
        %v9713 = vpack.c.bf16 %v9689, %v9688
        %v9714 = vpack.c.bf16 %v9691, %v9690
        %v9715 = vpack.c.bf16 %v9693, %v9692
        %v9716 = vpack.c.bf16 %v9695, %v9694
        %v9717 = vpack.c.bf16 %v9697, %v9696
        %v9718 = vpack.c.bf16 %v9699, %v9698
        %v9719 = vpack.c.bf16 %v9701, %v9700
        %v9738 = vcombine.high %v9702, %v9702
        %v9740 = vunpack.c.l.s4 1966171168
        %v9741 = vunpack.c.0.s8 %v9740
        %v9742 = vlaneseq
        %v9743 = vshrl.u32 %v9742, 7
        %v9744 = vsub.s32 %v9741, %v9743
        %v9745 = vrot.slane %v9702, %v9744
        %v9747 = vunpack.c.l.s4 1966171168
        %v9748 = vunpack.c.0.s8 %v9747
        %v9749 = vlaneseq
        %v9750 = vshrl.u32 %v9749, 7
        %v9751 = vsub.s32 %v9748, %v9750
        %v9752 = vrot.slane %v9738, %v9751
        %v9753 = vcombine.high %v9745, %v9745
        %v9754 = vcombine.high %v9752, %v9752
        %v9756 = vunpack.c.l.s4 1966171168
        %v9757 = vunpack.c.0.s8 %v9756
        %v9758 = vlaneseq
        %v9759 = vshrl.u32 %v9758, 7
        %v9760 = vsub.s32 %v9757, %v9759
        %v9761 = vrot.slane %v9745, %v9760
        %v9763 = vunpack.c.l.s4 1966171168
        %v9764 = vunpack.c.0.s8 %v9763
        %v9765 = vlaneseq
        %v9766 = vshrl.u32 %v9765, 7
        %v9767 = vsub.s32 %v9764, %v9766
        %v9768 = vrot.slane %v9752, %v9767
        %v9770 = vunpack.c.l.s4 1966171168
        %v9771 = vunpack.c.0.s8 %v9770
        %v9772 = vlaneseq
        %v9773 = vshrl.u32 %v9772, 7
        %v9774 = vsub.s32 %v9771, %v9773
        %v9775 = vrot.slane %v9753, %v9774
        %v9777 = vunpack.c.l.s4 1966171168
        %v9778 = vunpack.c.0.s8 %v9777
        %v9779 = vlaneseq
        %v9780 = vshrl.u32 %v9779, 7
        %v9781 = vsub.s32 %v9778, %v9780
        %v9782 = vrot.slane %v9754, %v9781
        %v9783 = vcombine.high %v9761, %v9761
        %v9784 = vcombine.high %v9768, %v9768
        %v9785 = vcombine.high %v9775, %v9775
        %v9786 = vcombine.high %v9782, %v9782
        %v9787 = vcombine.high %v9703, %v9703
        %v9789 = vunpack.c.l.s4 1966171168
        %v9790 = vunpack.c.0.s8 %v9789
        %v9791 = vlaneseq
        %v9792 = vshrl.u32 %v9791, 7
        %v9793 = vsub.s32 %v9790, %v9792
        %v9794 = vrot.slane %v9703, %v9793
        %v9796 = vunpack.c.l.s4 1966171168
        %v9797 = vunpack.c.0.s8 %v9796
        %v9798 = vlaneseq
        %v9799 = vshrl.u32 %v9798, 7
        %v9800 = vsub.s32 %v9797, %v9799
        %v9801 = vrot.slane %v9787, %v9800
        %v9802 = vcombine.high %v9794, %v9794
        %v9803 = vcombine.high %v9801, %v9801
        %v9805 = vunpack.c.l.s4 1966171168
        %v9806 = vunpack.c.0.s8 %v9805
        %v9807 = vlaneseq
        %v9808 = vshrl.u32 %v9807, 7
        %v9809 = vsub.s32 %v9806, %v9808
        %v9810 = vrot.slane %v9794, %v9809
        %v9812 = vunpack.c.l.s4 1966171168
        %v9813 = vunpack.c.0.s8 %v9812
        %v9814 = vlaneseq
        %v9815 = vshrl.u32 %v9814, 7
        %v9816 = vsub.s32 %v9813, %v9815
        %v9817 = vrot.slane %v9801, %v9816
        %v9819 = vunpack.c.l.s4 1966171168
        %v9820 = vunpack.c.0.s8 %v9819
        %v9821 = vlaneseq
        %v9822 = vshrl.u32 %v9821, 7
        %v9823 = vsub.s32 %v9820, %v9822
        %v9824 = vrot.slane %v9802, %v9823
        %v9826 = vunpack.c.l.s4 1966171168
        %v9827 = vunpack.c.0.s8 %v9826
        %v9828 = vlaneseq
        %v9829 = vshrl.u32 %v9828, 7
        %v9830 = vsub.s32 %v9827, %v9829
        %v9831 = vrot.slane %v9803, %v9830
        %v9832 = vcombine.high %v9810, %v9810
        %v9833 = vcombine.high %v9817, %v9817
        %v9834 = vcombine.high %v9824, %v9824
        %v9835 = vcombine.high %v9831, %v9831
        %v9836 = vcombine.high %v9704, %v9704
        %v9838 = vunpack.c.l.s4 1966171168
        %v9839 = vunpack.c.0.s8 %v9838
        %v9840 = vlaneseq
        %v9841 = vshrl.u32 %v9840, 7
        %v9842 = vsub.s32 %v9839, %v9841
        %v9843 = vrot.slane %v9704, %v9842
        %v9845 = vunpack.c.l.s4 1966171168
        %v9846 = vunpack.c.0.s8 %v9845
        %v9847 = vlaneseq
        %v9848 = vshrl.u32 %v9847, 7
        %v9849 = vsub.s32 %v9846, %v9848
        %v9850 = vrot.slane %v9836, %v9849
        %v9851 = vcombine.high %v9843, %v9843
        %v9852 = vcombine.high %v9850, %v9850
        %v9854 = vunpack.c.l.s4 1966171168
        %v9855 = vunpack.c.0.s8 %v9854
        %v9856 = vlaneseq
        %v9857 = vshrl.u32 %v9856, 7
        %v9858 = vsub.s32 %v9855, %v9857
        %v9859 = vrot.slane %v9843, %v9858
        %v9861 = vunpack.c.l.s4 1966171168
        %v9862 = vunpack.c.0.s8 %v9861
        %v9863 = vlaneseq
        %v9864 = vshrl.u32 %v9863, 7
        %v9865 = vsub.s32 %v9862, %v9864
        %v9866 = vrot.slane %v9850, %v9865
        %v9868 = vunpack.c.l.s4 1966171168
        %v9869 = vunpack.c.0.s8 %v9868
        %v9870 = vlaneseq
        %v9871 = vshrl.u32 %v9870, 7
        %v9872 = vsub.s32 %v9869, %v9871
        %v9873 = vrot.slane %v9851, %v9872
        %v9875 = vunpack.c.l.s4 1966171168
        %v9876 = vunpack.c.0.s8 %v9875
        %v9877 = vlaneseq
        %v9878 = vshrl.u32 %v9877, 7
        %v9879 = vsub.s32 %v9876, %v9878
        %v9880 = vrot.slane %v9852, %v9879
        %v9881 = vcombine.high %v9859, %v9859
        %v9882 = vcombine.high %v9866, %v9866
        %v9883 = vcombine.high %v9873, %v9873
        %v9884 = vcombine.high %v9880, %v9880
        %v9885 = vcombine.high %v9705, %v9705
        %v9887 = vunpack.c.l.s4 1966171168
        %v9888 = vunpack.c.0.s8 %v9887
        %v9889 = vlaneseq
        %v9890 = vshrl.u32 %v9889, 7
        %v9891 = vsub.s32 %v9888, %v9890
        %v9892 = vrot.slane %v9705, %v9891
        %v9894 = vunpack.c.l.s4 1966171168
        %v9895 = vunpack.c.0.s8 %v9894
        %v9896 = vlaneseq
        %v9897 = vshrl.u32 %v9896, 7
        %v9898 = vsub.s32 %v9895, %v9897
        %v9899 = vrot.slane %v9885, %v9898
        %v9900 = vcombine.high %v9892, %v9892
        %v9901 = vcombine.high %v9899, %v9899
        %v9903 = vunpack.c.l.s4 1966171168
        %v9904 = vunpack.c.0.s8 %v9903
        %v9905 = vlaneseq
        %v9906 = vshrl.u32 %v9905, 7
        %v9907 = vsub.s32 %v9904, %v9906
        %v9908 = vrot.slane %v9892, %v9907
        %v9910 = vunpack.c.l.s4 1966171168
        %v9911 = vunpack.c.0.s8 %v9910
        %v9912 = vlaneseq
        %v9913 = vshrl.u32 %v9912, 7
        %v9914 = vsub.s32 %v9911, %v9913
        %v9915 = vrot.slane %v9899, %v9914
        %v9917 = vunpack.c.l.s4 1966171168
        %v9918 = vunpack.c.0.s8 %v9917
        %v9919 = vlaneseq
        %v9920 = vshrl.u32 %v9919, 7
        %v9921 = vsub.s32 %v9918, %v9920
        %v9922 = vrot.slane %v9900, %v9921
        %v9924 = vunpack.c.l.s4 1966171168
        %v9925 = vunpack.c.0.s8 %v9924
        %v9926 = vlaneseq
        %v9927 = vshrl.u32 %v9926, 7
        %v9928 = vsub.s32 %v9925, %v9927
        %v9929 = vrot.slane %v9901, %v9928
        %v9930 = vcombine.high %v9908, %v9908
        %v9931 = vcombine.high %v9915, %v9915
        %v9932 = vcombine.high %v9922, %v9922
        %v9933 = vcombine.high %v9929, %v9929
        %v9934 = vcombine.high %v9706, %v9706
        %v9936 = vunpack.c.l.s4 1966171168
        %v9937 = vunpack.c.0.s8 %v9936
        %v9938 = vlaneseq
        %v9939 = vshrl.u32 %v9938, 7
        %v9940 = vsub.s32 %v9937, %v9939
        %v9941 = vrot.slane %v9706, %v9940
        %v9943 = vunpack.c.l.s4 1966171168
        %v9944 = vunpack.c.0.s8 %v9943
        %v9945 = vlaneseq
        %v9946 = vshrl.u32 %v9945, 7
        %v9947 = vsub.s32 %v9944, %v9946
        %v9948 = vrot.slane %v9934, %v9947
        %v9949 = vcombine.high %v9941, %v9941
        %v9950 = vcombine.high %v9948, %v9948
        %v9952 = vunpack.c.l.s4 1966171168
        %v9953 = vunpack.c.0.s8 %v9952
        %v9954 = vlaneseq
        %v9955 = vshrl.u32 %v9954, 7
        %v9956 = vsub.s32 %v9953, %v9955
        %v9957 = vrot.slane %v9941, %v9956
        %v9959 = vunpack.c.l.s4 1966171168
        %v9960 = vunpack.c.0.s8 %v9959
        %v9961 = vlaneseq
        %v9962 = vshrl.u32 %v9961, 7
        %v9963 = vsub.s32 %v9960, %v9962
        %v9964 = vrot.slane %v9948, %v9963
        %v9966 = vunpack.c.l.s4 1966171168
        %v9967 = vunpack.c.0.s8 %v9966
        %v9968 = vlaneseq
        %v9969 = vshrl.u32 %v9968, 7
        %v9970 = vsub.s32 %v9967, %v9969
        %v9971 = vrot.slane %v9949, %v9970
        %v9973 = vunpack.c.l.s4 1966171168
        %v9974 = vunpack.c.0.s8 %v9973
        %v9975 = vlaneseq
        %v9976 = vshrl.u32 %v9975, 7
        %v9977 = vsub.s32 %v9974, %v9976
        %v9978 = vrot.slane %v9950, %v9977
        %v9979 = vcombine.high %v9957, %v9957
        %v9980 = vcombine.high %v9964, %v9964
        %v9981 = vcombine.high %v9971, %v9971
        %v9982 = vcombine.high %v9978, %v9978
        %v9983 = vcombine.high %v9707, %v9707
        %v9985 = vunpack.c.l.s4 1966171168
        %v9986 = vunpack.c.0.s8 %v9985
        %v9987 = vlaneseq
        %v9988 = vshrl.u32 %v9987, 7
        %v9989 = vsub.s32 %v9986, %v9988
        %v9990 = vrot.slane %v9707, %v9989
        %v9992 = vunpack.c.l.s4 1966171168
        %v9993 = vunpack.c.0.s8 %v9992
        %v9994 = vlaneseq
        %v9995 = vshrl.u32 %v9994, 7
        %v9996 = vsub.s32 %v9993, %v9995
        %v9997 = vrot.slane %v9983, %v9996
        %v9998 = vcombine.high %v9990, %v9990
        %v9999 = vcombine.high %v9997, %v9997
        %v10001 = vunpack.c.l.s4 1966171168
        %v10002 = vunpack.c.0.s8 %v10001
        %v10003 = vlaneseq
        %v10004 = vshrl.u32 %v10003, 7
        %v10005 = vsub.s32 %v10002, %v10004
        %v10006 = vrot.slane %v9990, %v10005
        %v10008 = vunpack.c.l.s4 1966171168
        %v10009 = vunpack.c.0.s8 %v10008
        %v10010 = vlaneseq
        %v10011 = vshrl.u32 %v10010, 7
        %v10012 = vsub.s32 %v10009, %v10011
        %v10013 = vrot.slane %v9997, %v10012
        %v10015 = vunpack.c.l.s4 1966171168
        %v10016 = vunpack.c.0.s8 %v10015
        %v10017 = vlaneseq
        %v10018 = vshrl.u32 %v10017, 7
        %v10019 = vsub.s32 %v10016, %v10018
        %v10020 = vrot.slane %v9998, %v10019
        %v10022 = vunpack.c.l.s4 1966171168
        %v10023 = vunpack.c.0.s8 %v10022
        %v10024 = vlaneseq
        %v10025 = vshrl.u32 %v10024, 7
        %v10026 = vsub.s32 %v10023, %v10025
        %v10027 = vrot.slane %v9999, %v10026
        %v10028 = vcombine.high %v10006, %v10006
        %v10029 = vcombine.high %v10013, %v10013
        %v10030 = vcombine.high %v10020, %v10020
        %v10031 = vcombine.high %v10027, %v10027
        %v10032 = vcombine.high %v9708, %v9708
        %v10034 = vunpack.c.l.s4 1966171168
        %v10035 = vunpack.c.0.s8 %v10034
        %v10036 = vlaneseq
        %v10037 = vshrl.u32 %v10036, 7
        %v10038 = vsub.s32 %v10035, %v10037
        %v10039 = vrot.slane %v9708, %v10038
        %v10041 = vunpack.c.l.s4 1966171168
        %v10042 = vunpack.c.0.s8 %v10041
        %v10043 = vlaneseq
        %v10044 = vshrl.u32 %v10043, 7
        %v10045 = vsub.s32 %v10042, %v10044
        %v10046 = vrot.slane %v10032, %v10045
        %v10047 = vcombine.high %v10039, %v10039
        %v10048 = vcombine.high %v10046, %v10046
        %v10050 = vunpack.c.l.s4 1966171168
        %v10051 = vunpack.c.0.s8 %v10050
        %v10052 = vlaneseq
        %v10053 = vshrl.u32 %v10052, 7
        %v10054 = vsub.s32 %v10051, %v10053
        %v10055 = vrot.slane %v10039, %v10054
        %v10057 = vunpack.c.l.s4 1966171168
        %v10058 = vunpack.c.0.s8 %v10057
        %v10059 = vlaneseq
        %v10060 = vshrl.u32 %v10059, 7
        %v10061 = vsub.s32 %v10058, %v10060
        %v10062 = vrot.slane %v10046, %v10061
        %v10064 = vunpack.c.l.s4 1966171168
        %v10065 = vunpack.c.0.s8 %v10064
        %v10066 = vlaneseq
        %v10067 = vshrl.u32 %v10066, 7
        %v10068 = vsub.s32 %v10065, %v10067
        %v10069 = vrot.slane %v10047, %v10068
        %v10071 = vunpack.c.l.s4 1966171168
        %v10072 = vunpack.c.0.s8 %v10071
        %v10073 = vlaneseq
        %v10074 = vshrl.u32 %v10073, 7
        %v10075 = vsub.s32 %v10072, %v10074
        %v10076 = vrot.slane %v10048, %v10075
        %v10077 = vcombine.high %v10055, %v10055
        %v10078 = vcombine.high %v10062, %v10062
        %v10079 = vcombine.high %v10069, %v10069
        %v10080 = vcombine.high %v10076, %v10076
        %v10081 = vcombine.high %v9709, %v9709
        %v10083 = vunpack.c.l.s4 1966171168
        %v10084 = vunpack.c.0.s8 %v10083
        %v10085 = vlaneseq
        %v10086 = vshrl.u32 %v10085, 7
        %v10087 = vsub.s32 %v10084, %v10086
        %v10088 = vrot.slane %v9709, %v10087
        %v10090 = vunpack.c.l.s4 1966171168
        %v10091 = vunpack.c.0.s8 %v10090
        %v10092 = vlaneseq
        %v10093 = vshrl.u32 %v10092, 7
        %v10094 = vsub.s32 %v10091, %v10093
        %v10095 = vrot.slane %v10081, %v10094
        %v10096 = vcombine.high %v10088, %v10088
        %v10097 = vcombine.high %v10095, %v10095
        %v10099 = vunpack.c.l.s4 1966171168
        %v10100 = vunpack.c.0.s8 %v10099
        %v10101 = vlaneseq
        %v10102 = vshrl.u32 %v10101, 7
        %v10103 = vsub.s32 %v10100, %v10102
        %v10104 = vrot.slane %v10088, %v10103
        %v10106 = vunpack.c.l.s4 1966171168
        %v10107 = vunpack.c.0.s8 %v10106
        %v10108 = vlaneseq
        %v10109 = vshrl.u32 %v10108, 7
        %v10110 = vsub.s32 %v10107, %v10109
        %v10111 = vrot.slane %v10095, %v10110
        %v10113 = vunpack.c.l.s4 1966171168
        %v10114 = vunpack.c.0.s8 %v10113
        %v10115 = vlaneseq
        %v10116 = vshrl.u32 %v10115, 7
        %v10117 = vsub.s32 %v10114, %v10116
        %v10118 = vrot.slane %v10096, %v10117
        %v10120 = vunpack.c.l.s4 1966171168
        %v10121 = vunpack.c.0.s8 %v10120
        %v10122 = vlaneseq
        %v10123 = vshrl.u32 %v10122, 7
        %v10124 = vsub.s32 %v10121, %v10123
        %v10125 = vrot.slane %v10097, %v10124
        %v10126 = vcombine.high %v10104, %v10104
        %v10127 = vcombine.high %v10111, %v10111
        %v10128 = vcombine.high %v10118, %v10118
        %v10129 = vcombine.high %v10125, %v10125
        %v10130 = vcombine.high %v9710, %v9710
        %v10132 = vunpack.c.l.s4 1966171168
        %v10133 = vunpack.c.0.s8 %v10132
        %v10134 = vlaneseq
        %v10135 = vshrl.u32 %v10134, 7
        %v10136 = vsub.s32 %v10133, %v10135
        %v10137 = vrot.slane %v9710, %v10136
        %v10139 = vunpack.c.l.s4 1966171168
        %v10140 = vunpack.c.0.s8 %v10139
        %v10141 = vlaneseq
        %v10142 = vshrl.u32 %v10141, 7
        %v10143 = vsub.s32 %v10140, %v10142
        %v10144 = vrot.slane %v10130, %v10143
        %v10145 = vcombine.high %v10137, %v10137
        %v10146 = vcombine.high %v10144, %v10144
        %v10148 = vunpack.c.l.s4 1966171168
        %v10149 = vunpack.c.0.s8 %v10148
        %v10150 = vlaneseq
        %v10151 = vshrl.u32 %v10150, 7
        %v10152 = vsub.s32 %v10149, %v10151
        %v10153 = vrot.slane %v10137, %v10152
        %v10155 = vunpack.c.l.s4 1966171168
        %v10156 = vunpack.c.0.s8 %v10155
        %v10157 = vlaneseq
        %v10158 = vshrl.u32 %v10157, 7
        %v10159 = vsub.s32 %v10156, %v10158
        %v10160 = vrot.slane %v10144, %v10159
        %v10162 = vunpack.c.l.s4 1966171168
        %v10163 = vunpack.c.0.s8 %v10162
        %v10164 = vlaneseq
        %v10165 = vshrl.u32 %v10164, 7
        %v10166 = vsub.s32 %v10163, %v10165
        %v10167 = vrot.slane %v10145, %v10166
        %v10169 = vunpack.c.l.s4 1966171168
        %v10170 = vunpack.c.0.s8 %v10169
        %v10171 = vlaneseq
        %v10172 = vshrl.u32 %v10171, 7
        %v10173 = vsub.s32 %v10170, %v10172
        %v10174 = vrot.slane %v10146, %v10173
        %v10175 = vcombine.high %v10153, %v10153
        %v10176 = vcombine.high %v10160, %v10160
        %v10177 = vcombine.high %v10167, %v10167
        %v10178 = vcombine.high %v10174, %v10174
        %v10179 = vcombine.high %v9711, %v9711
        %v10181 = vunpack.c.l.s4 1966171168
        %v10182 = vunpack.c.0.s8 %v10181
        %v10183 = vlaneseq
        %v10184 = vshrl.u32 %v10183, 7
        %v10185 = vsub.s32 %v10182, %v10184
        %v10186 = vrot.slane %v9711, %v10185
        %v10188 = vunpack.c.l.s4 1966171168
        %v10189 = vunpack.c.0.s8 %v10188
        %v10190 = vlaneseq
        %v10191 = vshrl.u32 %v10190, 7
        %v10192 = vsub.s32 %v10189, %v10191
        %v10193 = vrot.slane %v10179, %v10192
        %v10194 = vcombine.high %v10186, %v10186
        %v10195 = vcombine.high %v10193, %v10193
        %v10197 = vunpack.c.l.s4 1966171168
        %v10198 = vunpack.c.0.s8 %v10197
        %v10199 = vlaneseq
        %v10200 = vshrl.u32 %v10199, 7
        %v10201 = vsub.s32 %v10198, %v10200
        %v10202 = vrot.slane %v10186, %v10201
        %v10204 = vunpack.c.l.s4 1966171168
        %v10205 = vunpack.c.0.s8 %v10204
        %v10206 = vlaneseq
        %v10207 = vshrl.u32 %v10206, 7
        %v10208 = vsub.s32 %v10205, %v10207
        %v10209 = vrot.slane %v10193, %v10208
        %v10211 = vunpack.c.l.s4 1966171168
        %v10212 = vunpack.c.0.s8 %v10211
        %v10213 = vlaneseq
        %v10214 = vshrl.u32 %v10213, 7
        %v10215 = vsub.s32 %v10212, %v10214
        %v10216 = vrot.slane %v10194, %v10215
        %v10218 = vunpack.c.l.s4 1966171168
        %v10219 = vunpack.c.0.s8 %v10218
        %v10220 = vlaneseq
        %v10221 = vshrl.u32 %v10220, 7
        %v10222 = vsub.s32 %v10219, %v10221
        %v10223 = vrot.slane %v10195, %v10222
        %v10224 = vcombine.high %v10202, %v10202
        %v10225 = vcombine.high %v10209, %v10209
        %v10226 = vcombine.high %v10216, %v10216
        %v10227 = vcombine.high %v10223, %v10223
        %v10228 = vcombine.high %v9712, %v9712
        %v10230 = vunpack.c.l.s4 1966171168
        %v10231 = vunpack.c.0.s8 %v10230
        %v10232 = vlaneseq
        %v10233 = vshrl.u32 %v10232, 7
        %v10234 = vsub.s32 %v10231, %v10233
        %v10235 = vrot.slane %v9712, %v10234
        %v10237 = vunpack.c.l.s4 1966171168
        %v10238 = vunpack.c.0.s8 %v10237
        %v10239 = vlaneseq
        %v10240 = vshrl.u32 %v10239, 7
        %v10241 = vsub.s32 %v10238, %v10240
        %v10242 = vrot.slane %v10228, %v10241
        %v10243 = vcombine.high %v10235, %v10235
        %v10244 = vcombine.high %v10242, %v10242
        %v10246 = vunpack.c.l.s4 1966171168
        %v10247 = vunpack.c.0.s8 %v10246
        %v10248 = vlaneseq
        %v10249 = vshrl.u32 %v10248, 7
        %v10250 = vsub.s32 %v10247, %v10249
        %v10251 = vrot.slane %v10235, %v10250
        %v10253 = vunpack.c.l.s4 1966171168
        %v10254 = vunpack.c.0.s8 %v10253
        %v10255 = vlaneseq
        %v10256 = vshrl.u32 %v10255, 7
        %v10257 = vsub.s32 %v10254, %v10256
        %v10258 = vrot.slane %v10242, %v10257
        %v10260 = vunpack.c.l.s4 1966171168
        %v10261 = vunpack.c.0.s8 %v10260
        %v10262 = vlaneseq
        %v10263 = vshrl.u32 %v10262, 7
        %v10264 = vsub.s32 %v10261, %v10263
        %v10265 = vrot.slane %v10243, %v10264
        %v10267 = vunpack.c.l.s4 1966171168
        %v10268 = vunpack.c.0.s8 %v10267
        %v10269 = vlaneseq
        %v10270 = vshrl.u32 %v10269, 7
        %v10271 = vsub.s32 %v10268, %v10270
        %v10272 = vrot.slane %v10244, %v10271
        %v10273 = vcombine.high %v10251, %v10251
        %v10274 = vcombine.high %v10258, %v10258
        %v10275 = vcombine.high %v10265, %v10265
        %v10276 = vcombine.high %v10272, %v10272
        %v10277 = vcombine.high %v9713, %v9713
        %v10279 = vunpack.c.l.s4 1966171168
        %v10280 = vunpack.c.0.s8 %v10279
        %v10281 = vlaneseq
        %v10282 = vshrl.u32 %v10281, 7
        %v10283 = vsub.s32 %v10280, %v10282
        %v10284 = vrot.slane %v9713, %v10283
        %v10286 = vunpack.c.l.s4 1966171168
        %v10287 = vunpack.c.0.s8 %v10286
        %v10288 = vlaneseq
        %v10289 = vshrl.u32 %v10288, 7
        %v10290 = vsub.s32 %v10287, %v10289
        %v10291 = vrot.slane %v10277, %v10290
        %v10292 = vcombine.high %v10284, %v10284
        %v10293 = vcombine.high %v10291, %v10291
        %v10295 = vunpack.c.l.s4 1966171168
        %v10296 = vunpack.c.0.s8 %v10295
        %v10297 = vlaneseq
        %v10298 = vshrl.u32 %v10297, 7
        %v10299 = vsub.s32 %v10296, %v10298
        %v10300 = vrot.slane %v10284, %v10299
        %v10302 = vunpack.c.l.s4 1966171168
        %v10303 = vunpack.c.0.s8 %v10302
        %v10304 = vlaneseq
        %v10305 = vshrl.u32 %v10304, 7
        %v10306 = vsub.s32 %v10303, %v10305
        %v10307 = vrot.slane %v10291, %v10306
        %v10309 = vunpack.c.l.s4 1966171168
        %v10310 = vunpack.c.0.s8 %v10309
        %v10311 = vlaneseq
        %v10312 = vshrl.u32 %v10311, 7
        %v10313 = vsub.s32 %v10310, %v10312
        %v10314 = vrot.slane %v10292, %v10313
        %v10316 = vunpack.c.l.s4 1966171168
        %v10317 = vunpack.c.0.s8 %v10316
        %v10318 = vlaneseq
        %v10319 = vshrl.u32 %v10318, 7
        %v10320 = vsub.s32 %v10317, %v10319
        %v10321 = vrot.slane %v10293, %v10320
        %v10322 = vcombine.high %v10300, %v10300
        %v10323 = vcombine.high %v10307, %v10307
        %v10324 = vcombine.high %v10314, %v10314
        %v10325 = vcombine.high %v10321, %v10321
        %v10326 = vcombine.high %v9714, %v9714
        %v10328 = vunpack.c.l.s4 1966171168
        %v10329 = vunpack.c.0.s8 %v10328
        %v10330 = vlaneseq
        %v10331 = vshrl.u32 %v10330, 7
        %v10332 = vsub.s32 %v10329, %v10331
        %v10333 = vrot.slane %v9714, %v10332
        %v10335 = vunpack.c.l.s4 1966171168
        %v10336 = vunpack.c.0.s8 %v10335
        %v10337 = vlaneseq
        %v10338 = vshrl.u32 %v10337, 7
        %v10339 = vsub.s32 %v10336, %v10338
        %v10340 = vrot.slane %v10326, %v10339
        %v10341 = vcombine.high %v10333, %v10333
        %v10342 = vcombine.high %v10340, %v10340
        %v10344 = vunpack.c.l.s4 1966171168
        %v10345 = vunpack.c.0.s8 %v10344
        %v10346 = vlaneseq
        %v10347 = vshrl.u32 %v10346, 7
        %v10348 = vsub.s32 %v10345, %v10347
        %v10349 = vrot.slane %v10333, %v10348
        %v10351 = vunpack.c.l.s4 1966171168
        %v10352 = vunpack.c.0.s8 %v10351
        %v10353 = vlaneseq
        %v10354 = vshrl.u32 %v10353, 7
        %v10355 = vsub.s32 %v10352, %v10354
        %v10356 = vrot.slane %v10340, %v10355
        %v10358 = vunpack.c.l.s4 1966171168
        %v10359 = vunpack.c.0.s8 %v10358
        %v10360 = vlaneseq
        %v10361 = vshrl.u32 %v10360, 7
        %v10362 = vsub.s32 %v10359, %v10361
        %v10363 = vrot.slane %v10341, %v10362
        %v10365 = vunpack.c.l.s4 1966171168
        %v10366 = vunpack.c.0.s8 %v10365
        %v10367 = vlaneseq
        %v10368 = vshrl.u32 %v10367, 7
        %v10369 = vsub.s32 %v10366, %v10368
        %v10370 = vrot.slane %v10342, %v10369
        %v10371 = vcombine.high %v10349, %v10349
        %v10372 = vcombine.high %v10356, %v10356
        %v10373 = vcombine.high %v10363, %v10363
        %v10374 = vcombine.high %v10370, %v10370
        %v10375 = vcombine.high %v9715, %v9715
        %v10377 = vunpack.c.l.s4 1966171168
        %v10378 = vunpack.c.0.s8 %v10377
        %v10379 = vlaneseq
        %v10380 = vshrl.u32 %v10379, 7
        %v10381 = vsub.s32 %v10378, %v10380
        %v10382 = vrot.slane %v9715, %v10381
        %v10384 = vunpack.c.l.s4 1966171168
        %v10385 = vunpack.c.0.s8 %v10384
        %v10386 = vlaneseq
        %v10387 = vshrl.u32 %v10386, 7
        %v10388 = vsub.s32 %v10385, %v10387
        %v10389 = vrot.slane %v10375, %v10388
        %v10390 = vcombine.high %v10382, %v10382
        %v10391 = vcombine.high %v10389, %v10389
        %v10393 = vunpack.c.l.s4 1966171168
        %v10394 = vunpack.c.0.s8 %v10393
        %v10395 = vlaneseq
        %v10396 = vshrl.u32 %v10395, 7
        %v10397 = vsub.s32 %v10394, %v10396
        %v10398 = vrot.slane %v10382, %v10397
        %v10400 = vunpack.c.l.s4 1966171168
        %v10401 = vunpack.c.0.s8 %v10400
        %v10402 = vlaneseq
        %v10403 = vshrl.u32 %v10402, 7
        %v10404 = vsub.s32 %v10401, %v10403
        %v10405 = vrot.slane %v10389, %v10404
        %v10407 = vunpack.c.l.s4 1966171168
        %v10408 = vunpack.c.0.s8 %v10407
        %v10409 = vlaneseq
        %v10410 = vshrl.u32 %v10409, 7
        %v10411 = vsub.s32 %v10408, %v10410
        %v10412 = vrot.slane %v10390, %v10411
        %v10414 = vunpack.c.l.s4 1966171168
        %v10415 = vunpack.c.0.s8 %v10414
        %v10416 = vlaneseq
        %v10417 = vshrl.u32 %v10416, 7
        %v10418 = vsub.s32 %v10415, %v10417
        %v10419 = vrot.slane %v10391, %v10418
        %v10420 = vcombine.high %v10398, %v10398
        %v10421 = vcombine.high %v10405, %v10405
        %v10422 = vcombine.high %v10412, %v10412
        %v10423 = vcombine.high %v10419, %v10419
        %v10424 = vcombine.high %v9716, %v9716
        %v10426 = vunpack.c.l.s4 1966171168
        %v10427 = vunpack.c.0.s8 %v10426
        %v10428 = vlaneseq
        %v10429 = vshrl.u32 %v10428, 7
        %v10430 = vsub.s32 %v10427, %v10429
        %v10431 = vrot.slane %v9716, %v10430
        %v10433 = vunpack.c.l.s4 1966171168
        %v10434 = vunpack.c.0.s8 %v10433
        %v10435 = vlaneseq
        %v10436 = vshrl.u32 %v10435, 7
        %v10437 = vsub.s32 %v10434, %v10436
        %v10438 = vrot.slane %v10424, %v10437
        %v10439 = vcombine.high %v10431, %v10431
        %v10440 = vcombine.high %v10438, %v10438
        %v10442 = vunpack.c.l.s4 1966171168
        %v10443 = vunpack.c.0.s8 %v10442
        %v10444 = vlaneseq
        %v10445 = vshrl.u32 %v10444, 7
        %v10446 = vsub.s32 %v10443, %v10445
        %v10447 = vrot.slane %v10431, %v10446
        %v10449 = vunpack.c.l.s4 1966171168
        %v10450 = vunpack.c.0.s8 %v10449
        %v10451 = vlaneseq
        %v10452 = vshrl.u32 %v10451, 7
        %v10453 = vsub.s32 %v10450, %v10452
        %v10454 = vrot.slane %v10438, %v10453
        %v10456 = vunpack.c.l.s4 1966171168
        %v10457 = vunpack.c.0.s8 %v10456
        %v10458 = vlaneseq
        %v10459 = vshrl.u32 %v10458, 7
        %v10460 = vsub.s32 %v10457, %v10459
        %v10461 = vrot.slane %v10439, %v10460
        %v10463 = vunpack.c.l.s4 1966171168
        %v10464 = vunpack.c.0.s8 %v10463
        %v10465 = vlaneseq
        %v10466 = vshrl.u32 %v10465, 7
        %v10467 = vsub.s32 %v10464, %v10466
        %v10468 = vrot.slane %v10440, %v10467
        %v10469 = vcombine.high %v10447, %v10447
        %v10470 = vcombine.high %v10454, %v10454
        %v10471 = vcombine.high %v10461, %v10461
        %v10472 = vcombine.high %v10468, %v10468
        %v10473 = vcombine.high %v9717, %v9717
        %v10475 = vunpack.c.l.s4 1966171168
        %v10476 = vunpack.c.0.s8 %v10475
        %v10477 = vlaneseq
        %v10478 = vshrl.u32 %v10477, 7
        %v10479 = vsub.s32 %v10476, %v10478
        %v10480 = vrot.slane %v9717, %v10479
        %v10482 = vunpack.c.l.s4 1966171168
        %v10483 = vunpack.c.0.s8 %v10482
        %v10484 = vlaneseq
        %v10485 = vshrl.u32 %v10484, 7
        %v10486 = vsub.s32 %v10483, %v10485
        %v10487 = vrot.slane %v10473, %v10486
        %v10488 = vcombine.high %v10480, %v10480
        %v10489 = vcombine.high %v10487, %v10487
        %v10491 = vunpack.c.l.s4 1966171168
        %v10492 = vunpack.c.0.s8 %v10491
        %v10493 = vlaneseq
        %v10494 = vshrl.u32 %v10493, 7
        %v10495 = vsub.s32 %v10492, %v10494
        %v10496 = vrot.slane %v10480, %v10495
        %v10498 = vunpack.c.l.s4 1966171168
        %v10499 = vunpack.c.0.s8 %v10498
        %v10500 = vlaneseq
        %v10501 = vshrl.u32 %v10500, 7
        %v10502 = vsub.s32 %v10499, %v10501
        %v10503 = vrot.slane %v10487, %v10502
        %v10505 = vunpack.c.l.s4 1966171168
        %v10506 = vunpack.c.0.s8 %v10505
        %v10507 = vlaneseq
        %v10508 = vshrl.u32 %v10507, 7
        %v10509 = vsub.s32 %v10506, %v10508
        %v10510 = vrot.slane %v10488, %v10509
        %v10512 = vunpack.c.l.s4 1966171168
        %v10513 = vunpack.c.0.s8 %v10512
        %v10514 = vlaneseq
        %v10515 = vshrl.u32 %v10514, 7
        %v10516 = vsub.s32 %v10513, %v10515
        %v10517 = vrot.slane %v10489, %v10516
        %v10518 = vcombine.high %v10496, %v10496
        %v10519 = vcombine.high %v10503, %v10503
        %v10520 = vcombine.high %v10510, %v10510
        %v10521 = vcombine.high %v10517, %v10517
        %v10522 = vcombine.high %v9718, %v9718
        %v10524 = vunpack.c.l.s4 1966171168
        %v10525 = vunpack.c.0.s8 %v10524
        %v10526 = vlaneseq
        %v10527 = vshrl.u32 %v10526, 7
        %v10528 = vsub.s32 %v10525, %v10527
        %v10529 = vrot.slane %v9718, %v10528
        %v10531 = vunpack.c.l.s4 1966171168
        %v10532 = vunpack.c.0.s8 %v10531
        %v10533 = vlaneseq
        %v10534 = vshrl.u32 %v10533, 7
        %v10535 = vsub.s32 %v10532, %v10534
        %v10536 = vrot.slane %v10522, %v10535
        %v10537 = vcombine.high %v10529, %v10529
        %v10538 = vcombine.high %v10536, %v10536
        %v10540 = vunpack.c.l.s4 1966171168
        %v10541 = vunpack.c.0.s8 %v10540
        %v10542 = vlaneseq
        %v10543 = vshrl.u32 %v10542, 7
        %v10544 = vsub.s32 %v10541, %v10543
        %v10545 = vrot.slane %v10529, %v10544
        %v10547 = vunpack.c.l.s4 1966171168
        %v10548 = vunpack.c.0.s8 %v10547
        %v10549 = vlaneseq
        %v10550 = vshrl.u32 %v10549, 7
        %v10551 = vsub.s32 %v10548, %v10550
        %v10552 = vrot.slane %v10536, %v10551
        %v10554 = vunpack.c.l.s4 1966171168
        %v10555 = vunpack.c.0.s8 %v10554
        %v10556 = vlaneseq
        %v10557 = vshrl.u32 %v10556, 7
        %v10558 = vsub.s32 %v10555, %v10557
        %v10559 = vrot.slane %v10537, %v10558
        %v10561 = vunpack.c.l.s4 1966171168
        %v10562 = vunpack.c.0.s8 %v10561
        %v10563 = vlaneseq
        %v10564 = vshrl.u32 %v10563, 7
        %v10565 = vsub.s32 %v10562, %v10564
        %v10566 = vrot.slane %v10538, %v10565
        %v10567 = vcombine.high %v10545, %v10545
        %v10568 = vcombine.high %v10552, %v10552
        %v10569 = vcombine.high %v10559, %v10559
        %v10570 = vcombine.high %v10566, %v10566
        %v10571 = vcombine.high %v9719, %v9719
        %v10573 = vunpack.c.l.s4 1966171168
        %v10574 = vunpack.c.0.s8 %v10573
        %v10575 = vlaneseq
        %v10576 = vshrl.u32 %v10575, 7
        %v10577 = vsub.s32 %v10574, %v10576
        %v10578 = vrot.slane %v9719, %v10577
        %v10580 = vunpack.c.l.s4 1966171168
        %v10581 = vunpack.c.0.s8 %v10580
        %v10582 = vlaneseq
        %v10583 = vshrl.u32 %v10582, 7
        %v10584 = vsub.s32 %v10581, %v10583
        %v10585 = vrot.slane %v10571, %v10584
        %v10586 = vcombine.high %v10578, %v10578
        %v10587 = vcombine.high %v10585, %v10585
        %v10589 = vunpack.c.l.s4 1966171168
        %v10590 = vunpack.c.0.s8 %v10589
        %v10591 = vlaneseq
        %v10592 = vshrl.u32 %v10591, 7
        %v10593 = vsub.s32 %v10590, %v10592
        %v10594 = vrot.slane %v10578, %v10593
        %v10596 = vunpack.c.l.s4 1966171168
        %v10597 = vunpack.c.0.s8 %v10596
        %v10598 = vlaneseq
        %v10599 = vshrl.u32 %v10598, 7
        %v10600 = vsub.s32 %v10597, %v10599
        %v10601 = vrot.slane %v10585, %v10600
        %v10603 = vunpack.c.l.s4 1966171168
        %v10604 = vunpack.c.0.s8 %v10603
        %v10605 = vlaneseq
        %v10606 = vshrl.u32 %v10605, 7
        %v10607 = vsub.s32 %v10604, %v10606
        %v10608 = vrot.slane %v10586, %v10607
        %v10610 = vunpack.c.l.s4 1966171168
        %v10611 = vunpack.c.0.s8 %v10610
        %v10612 = vlaneseq
        %v10613 = vshrl.u32 %v10612, 7
        %v10614 = vsub.s32 %v10611, %v10613
        %v10615 = vrot.slane %v10587, %v10614
        %v10616 = vcombine.high %v10594, %v10594
        %v10617 = vcombine.high %v10601, %v10601
        %v10618 = vcombine.high %v10608, %v10608
        %v10619 = vcombine.high %v10615, %v10615
        %v10620 = vcombine.low %v9761, %v9783
        %v10621 = vcombine.low %v9775, %v9785
        %v10623 = vunpack.c.l.s4 1935823168
        %v10624 = vunpack.c.0.s8 %v10623
        %v10625 = vlaneseq
        %v10626 = vshrl.u32 %v10625, 7
        %v10627 = vsub.s32 %v10624, %v10626
        %v10628 = vrot.slane %v10620, %v10627
        %v10630 = vunpack.c.l.s4 1935823168
        %v10631 = vunpack.c.0.s8 %v10630
        %v10632 = vlaneseq
        %v10633 = vshrl.u32 %v10632, 7
        %v10634 = vsub.s32 %v10631, %v10633
        %v10635 = vrot.slane %v10621, %v10634
        %v10636 = vcombine.low %v10628, %v10635
        %v10638 = vunpack.c.l.s4 1935823168
        %v10639 = vunpack.c.0.s8 %v10638
        %v10640 = vlaneseq
        %v10641 = vshrl.u32 %v10640, 7
        %v10642 = vsub.s32 %v10639, %v10641
        %v10643 = vrot.slane %v10636, %v10642
        %v10644 = vcombine.low %v9768, %v9784
        %v10645 = vcombine.low %v9782, %v9786
        %v10647 = vunpack.c.l.s4 1935823168
        %v10648 = vunpack.c.0.s8 %v10647
        %v10649 = vlaneseq
        %v10650 = vshrl.u32 %v10649, 7
        %v10651 = vsub.s32 %v10648, %v10650
        %v10652 = vrot.slane %v10644, %v10651
        %v10654 = vunpack.c.l.s4 1935823168
        %v10655 = vunpack.c.0.s8 %v10654
        %v10656 = vlaneseq
        %v10657 = vshrl.u32 %v10656, 7
        %v10658 = vsub.s32 %v10655, %v10657
        %v10659 = vrot.slane %v10645, %v10658
        %v10660 = vcombine.low %v10652, %v10659
        %v10662 = vunpack.c.l.s4 1935823168
        %v10663 = vunpack.c.0.s8 %v10662
        %v10664 = vlaneseq
        %v10665 = vshrl.u32 %v10664, 7
        %v10666 = vsub.s32 %v10663, %v10665
        %v10667 = vrot.slane %v10660, %v10666
        %v10669 = vunpack.c.l.s4 1935823168
        %v10670 = vunpack.c.0.s8 %v10669
        %v10671 = vlaneseq
        %v10672 = vshrl.u32 %v10671, 7
        %v10673 = vsub.s32 %v10670, %v10672
        %v10674 = vrot.slane %v9810, %v10673
        %v10676 = vunpack.c.l.s4 1935823168
        %v10677 = vunpack.c.0.s8 %v10676
        %v10678 = vlaneseq
        %v10679 = vshrl.u32 %v10678, 7
        %v10680 = vsub.s32 %v10677, %v10679
        %v10681 = vrot.slane %v10674, %v10680
        %v10682 = vcombine.low %v9824, %v9834
        %v10683 = vcombine.low %v9832, %v9817
        %v10685 = vunpack.c.l.s4 1935823168
        %v10686 = vunpack.c.0.s8 %v10685
        %v10687 = vlaneseq
        %v10688 = vshrl.u32 %v10687, 7
        %v10689 = vsub.s32 %v10686, %v10688
        %v10690 = vrot.slane %v10682, %v10689
        %v10692 = vunpack.c.l.s4 1935823168
        %v10693 = vunpack.c.0.s8 %v10692
        %v10694 = vlaneseq
        %v10695 = vshrl.u32 %v10694, 7
        %v10696 = vsub.s32 %v10693, %v10695
        %v10697 = vrot.slane %v10683, %v10696
        %v10698 = vcombine.low %v10690, %v10697
        %v10700 = vunpack.c.l.s4 1935823168
        %v10701 = vunpack.c.0.s8 %v10700
        %v10702 = vlaneseq
        %v10703 = vshrl.u32 %v10702, 7
        %v10704 = vsub.s32 %v10701, %v10703
        %v10705 = vrot.slane %v10698, %v10704
        %v10706 = vcombine.low %v9831, %v9835
        %v10707 = vcombine.low %v9833, %v9859
        %v10709 = vunpack.c.l.s4 1935823168
        %v10710 = vunpack.c.0.s8 %v10709
        %v10711 = vlaneseq
        %v10712 = vshrl.u32 %v10711, 7
        %v10713 = vsub.s32 %v10710, %v10712
        %v10714 = vrot.slane %v10706, %v10713
        %v10716 = vunpack.c.l.s4 1935823168
        %v10717 = vunpack.c.0.s8 %v10716
        %v10718 = vlaneseq
        %v10719 = vshrl.u32 %v10718, 7
        %v10720 = vsub.s32 %v10717, %v10719
        %v10721 = vrot.slane %v10707, %v10720
        %v10722 = vcombine.low %v10714, %v10721
        %v10724 = vunpack.c.l.s4 1935823168
        %v10725 = vunpack.c.0.s8 %v10724
        %v10726 = vlaneseq
        %v10727 = vshrl.u32 %v10726, 7
        %v10728 = vsub.s32 %v10725, %v10727
        %v10729 = vrot.slane %v10722, %v10728
        %v10731 = vunpack.c.l.s4 1935823168
        %v10732 = vunpack.c.0.s8 %v10731
        %v10733 = vlaneseq
        %v10734 = vshrl.u32 %v10733, 7
        %v10735 = vsub.s32 %v10732, %v10734
        %v10736 = vrot.slane %v9873, %v10735
        %v10738 = vunpack.c.l.s4 1935823168
        %v10739 = vunpack.c.0.s8 %v10738
        %v10740 = vlaneseq
        %v10741 = vshrl.u32 %v10740, 7
        %v10742 = vsub.s32 %v10739, %v10741
        %v10743 = vrot.slane %v10736, %v10742
        %v10744 = vcombine.low %v9881, %v9866
        %v10745 = vcombine.low %v9883, %v9880
        %v10747 = vunpack.c.l.s4 1935823168
        %v10748 = vunpack.c.0.s8 %v10747
        %v10749 = vlaneseq
        %v10750 = vshrl.u32 %v10749, 7
        %v10751 = vsub.s32 %v10748, %v10750
        %v10752 = vrot.slane %v10744, %v10751
        %v10754 = vunpack.c.l.s4 1935823168
        %v10755 = vunpack.c.0.s8 %v10754
        %v10756 = vlaneseq
        %v10757 = vshrl.u32 %v10756, 7
        %v10758 = vsub.s32 %v10755, %v10757
        %v10759 = vrot.slane %v10745, %v10758
        %v10760 = vcombine.low %v10752, %v10759
        %v10762 = vunpack.c.l.s4 1935823168
        %v10763 = vunpack.c.0.s8 %v10762
        %v10764 = vlaneseq
        %v10765 = vshrl.u32 %v10764, 7
        %v10766 = vsub.s32 %v10763, %v10765
        %v10767 = vrot.slane %v10760, %v10766
        %v10768 = vcombine.low %v9882, %v9908
        %v10769 = vcombine.low %v9884, %v9922
        %v10771 = vunpack.c.l.s4 1935823168
        %v10772 = vunpack.c.0.s8 %v10771
        %v10773 = vlaneseq
        %v10774 = vshrl.u32 %v10773, 7
        %v10775 = vsub.s32 %v10772, %v10774
        %v10776 = vrot.slane %v10768, %v10775
        %v10778 = vunpack.c.l.s4 1935823168
        %v10779 = vunpack.c.0.s8 %v10778
        %v10780 = vlaneseq
        %v10781 = vshrl.u32 %v10780, 7
        %v10782 = vsub.s32 %v10779, %v10781
        %v10783 = vrot.slane %v10769, %v10782
        %v10784 = vcombine.low %v10776, %v10783
        %v10786 = vunpack.c.l.s4 1935823168
        %v10787 = vunpack.c.0.s8 %v10786
        %v10788 = vlaneseq
        %v10789 = vshrl.u32 %v10788, 7
        %v10790 = vsub.s32 %v10787, %v10789
        %v10791 = vrot.slane %v10784, %v10790
        %v10793 = vunpack.c.l.s4 1935823168
        %v10794 = vunpack.c.0.s8 %v10793
        %v10795 = vlaneseq
        %v10796 = vshrl.u32 %v10795, 7
        %v10797 = vsub.s32 %v10794, %v10796
        %v10798 = vrot.slane %v9930, %v10797
        %v10800 = vunpack.c.l.s4 1935823168
        %v10801 = vunpack.c.0.s8 %v10800
        %v10802 = vlaneseq
        %v10803 = vshrl.u32 %v10802, 7
        %v10804 = vsub.s32 %v10801, %v10803
        %v10805 = vrot.slane %v10798, %v10804
        %v10806 = vcombine.low %v9932, %v9929
        %v10807 = vcombine.low %v9915, %v9931
        %v10809 = vunpack.c.l.s4 1935823168
        %v10810 = vunpack.c.0.s8 %v10809
        %v10811 = vlaneseq
        %v10812 = vshrl.u32 %v10811, 7
        %v10813 = vsub.s32 %v10810, %v10812
        %v10814 = vrot.slane %v10806, %v10813
        %v10816 = vunpack.c.l.s4 1935823168
        %v10817 = vunpack.c.0.s8 %v10816
        %v10818 = vlaneseq
        %v10819 = vshrl.u32 %v10818, 7
        %v10820 = vsub.s32 %v10817, %v10819
        %v10821 = vrot.slane %v10807, %v10820
        %v10822 = vcombine.low %v10814, %v10821
        %v10824 = vunpack.c.l.s4 1935823168
        %v10825 = vunpack.c.0.s8 %v10824
        %v10826 = vlaneseq
        %v10827 = vshrl.u32 %v10826, 7
        %v10828 = vsub.s32 %v10825, %v10827
        %v10829 = vrot.slane %v10822, %v10828
        %v10830 = vcombine.low %v9933, %v9971
        %v10831 = vcombine.low %v9957, %v9979
        %v10833 = vunpack.c.l.s4 1935823168
        %v10834 = vunpack.c.0.s8 %v10833
        %v10835 = vlaneseq
        %v10836 = vshrl.u32 %v10835, 7
        %v10837 = vsub.s32 %v10834, %v10836
        %v10838 = vrot.slane %v10830, %v10837
        %v10840 = vunpack.c.l.s4 1935823168
        %v10841 = vunpack.c.0.s8 %v10840
        %v10842 = vlaneseq
        %v10843 = vshrl.u32 %v10842, 7
        %v10844 = vsub.s32 %v10841, %v10843
        %v10845 = vrot.slane %v10831, %v10844
        %v10846 = vcombine.low %v10838, %v10845
        %v10848 = vunpack.c.l.s4 1935823168
        %v10849 = vunpack.c.0.s8 %v10848
        %v10850 = vlaneseq
        %v10851 = vshrl.u32 %v10850, 7
        %v10852 = vsub.s32 %v10849, %v10851
        %v10853 = vrot.slane %v10846, %v10852
        %v10855 = vunpack.c.l.s4 1935823168
        %v10856 = vunpack.c.0.s8 %v10855
        %v10857 = vlaneseq
        %v10858 = vshrl.u32 %v10857, 7
        %v10859 = vsub.s32 %v10856, %v10858
        %v10860 = vrot.slane %v9981, %v10859
        %v10862 = vunpack.c.l.s4 1935823168
        %v10863 = vunpack.c.0.s8 %v10862
        %v10864 = vlaneseq
        %v10865 = vshrl.u32 %v10864, 7
        %v10866 = vsub.s32 %v10863, %v10865
        %v10867 = vrot.slane %v10860, %v10866
        %v10868 = vcombine.low %v9964, %v9980
        %v10869 = vcombine.low %v9978, %v9982
        %v10871 = vunpack.c.l.s4 1935823168
        %v10872 = vunpack.c.0.s8 %v10871
        %v10873 = vlaneseq
        %v10874 = vshrl.u32 %v10873, 7
        %v10875 = vsub.s32 %v10872, %v10874
        %v10876 = vrot.slane %v10868, %v10875
        %v10878 = vunpack.c.l.s4 1935823168
        %v10879 = vunpack.c.0.s8 %v10878
        %v10880 = vlaneseq
        %v10881 = vshrl.u32 %v10880, 7
        %v10882 = vsub.s32 %v10879, %v10881
        %v10883 = vrot.slane %v10869, %v10882
        %v10884 = vcombine.low %v10876, %v10883
        %v10886 = vunpack.c.l.s4 1935823168
        %v10887 = vunpack.c.0.s8 %v10886
        %v10888 = vlaneseq
        %v10889 = vshrl.u32 %v10888, 7
        %v10890 = vsub.s32 %v10887, %v10889
        %v10891 = vrot.slane %v10884, %v10890
        %v10892 = vcombine.low %v10006, %v10028
        %v10893 = vcombine.low %v10020, %v10030
        %v10895 = vunpack.c.l.s4 1935823168
        %v10896 = vunpack.c.0.s8 %v10895
        %v10897 = vlaneseq
        %v10898 = vshrl.u32 %v10897, 7
        %v10899 = vsub.s32 %v10896, %v10898
        %v10900 = vrot.slane %v10892, %v10899
        %v10902 = vunpack.c.l.s4 1935823168
        %v10903 = vunpack.c.0.s8 %v10902
        %v10904 = vlaneseq
        %v10905 = vshrl.u32 %v10904, 7
        %v10906 = vsub.s32 %v10903, %v10905
        %v10907 = vrot.slane %v10893, %v10906
        %v10908 = vcombine.low %v10900, %v10907
        %v10910 = vunpack.c.l.s4 1935823168
        %v10911 = vunpack.c.0.s8 %v10910
        %v10912 = vlaneseq
        %v10913 = vshrl.u32 %v10912, 7
        %v10914 = vsub.s32 %v10911, %v10913
        %v10915 = vrot.slane %v10908, %v10914
        %v10917 = vunpack.c.l.s4 1935823168
        %v10918 = vunpack.c.0.s8 %v10917
        %v10919 = vlaneseq
        %v10920 = vshrl.u32 %v10919, 7
        %v10921 = vsub.s32 %v10918, %v10920
        %v10922 = vrot.slane %v10013, %v10921
        %v10924 = vunpack.c.l.s4 1935823168
        %v10925 = vunpack.c.0.s8 %v10924
        %v10926 = vlaneseq
        %v10927 = vshrl.u32 %v10926, 7
        %v10928 = vsub.s32 %v10925, %v10927
        %v10929 = vrot.slane %v10922, %v10928
        %v10930 = vcombine.low %v10027, %v10031
        %v10931 = vcombine.low %v10029, %v10055
        %v10933 = vunpack.c.l.s4 1935823168
        %v10934 = vunpack.c.0.s8 %v10933
        %v10935 = vlaneseq
        %v10936 = vshrl.u32 %v10935, 7
        %v10937 = vsub.s32 %v10934, %v10936
        %v10938 = vrot.slane %v10930, %v10937
        %v10940 = vunpack.c.l.s4 1935823168
        %v10941 = vunpack.c.0.s8 %v10940
        %v10942 = vlaneseq
        %v10943 = vshrl.u32 %v10942, 7
        %v10944 = vsub.s32 %v10941, %v10943
        %v10945 = vrot.slane %v10931, %v10944
        %v10946 = vcombine.low %v10938, %v10945
        %v10948 = vunpack.c.l.s4 1935823168
        %v10949 = vunpack.c.0.s8 %v10948
        %v10950 = vlaneseq
        %v10951 = vshrl.u32 %v10950, 7
        %v10952 = vsub.s32 %v10949, %v10951
        %v10953 = vrot.slane %v10946, %v10952
        %v10954 = vcombine.low %v10069, %v10079
        %v10955 = vcombine.low %v10077, %v10062
        %v10957 = vunpack.c.l.s4 1935823168
        %v10958 = vunpack.c.0.s8 %v10957
        %v10959 = vlaneseq
        %v10960 = vshrl.u32 %v10959, 7
        %v10961 = vsub.s32 %v10958, %v10960
        %v10962 = vrot.slane %v10954, %v10961
        %v10964 = vunpack.c.l.s4 1935823168
        %v10965 = vunpack.c.0.s8 %v10964
        %v10966 = vlaneseq
        %v10967 = vshrl.u32 %v10966, 7
        %v10968 = vsub.s32 %v10965, %v10967
        %v10969 = vrot.slane %v10955, %v10968
        %v10970 = vcombine.low %v10962, %v10969
        %v10972 = vunpack.c.l.s4 1935823168
        %v10973 = vunpack.c.0.s8 %v10972
        %v10974 = vlaneseq
        %v10975 = vshrl.u32 %v10974, 7
        %v10976 = vsub.s32 %v10973, %v10975
        %v10977 = vrot.slane %v10970, %v10976
        %v10979 = vunpack.c.l.s4 1935823168
        %v10980 = vunpack.c.0.s8 %v10979
        %v10981 = vlaneseq
        %v10982 = vshrl.u32 %v10981, 7
        %v10983 = vsub.s32 %v10980, %v10982
        %v10984 = vrot.slane %v10076, %v10983
        %v10986 = vunpack.c.l.s4 1935823168
        %v10987 = vunpack.c.0.s8 %v10986
        %v10988 = vlaneseq
        %v10989 = vshrl.u32 %v10988, 7
        %v10990 = vsub.s32 %v10987, %v10989
        %v10991 = vrot.slane %v10984, %v10990
        %v10992 = vcombine.low %v10078, %v10104
        %v10993 = vcombine.low %v10080, %v10118
        %v10995 = vunpack.c.l.s4 1935823168
        %v10996 = vunpack.c.0.s8 %v10995
        %v10997 = vlaneseq
        %v10998 = vshrl.u32 %v10997, 7
        %v10999 = vsub.s32 %v10996, %v10998
        %v11000 = vrot.slane %v10992, %v10999
        %v11002 = vunpack.c.l.s4 1935823168
        %v11003 = vunpack.c.0.s8 %v11002
        %v11004 = vlaneseq
        %v11005 = vshrl.u32 %v11004, 7
        %v11006 = vsub.s32 %v11003, %v11005
        %v11007 = vrot.slane %v10993, %v11006
        %v11008 = vcombine.low %v11000, %v11007
        %v11010 = vunpack.c.l.s4 1935823168
        %v11011 = vunpack.c.0.s8 %v11010
        %v11012 = vlaneseq
        %v11013 = vshrl.u32 %v11012, 7
        %v11014 = vsub.s32 %v11011, %v11013
        %v11015 = vrot.slane %v11008, %v11014
        %v11016 = vcombine.low %v10126, %v10111
        %v11017 = vcombine.low %v10128, %v10125
        %v11019 = vunpack.c.l.s4 1935823168
        %v11020 = vunpack.c.0.s8 %v11019
        %v11021 = vlaneseq
        %v11022 = vshrl.u32 %v11021, 7
        %v11023 = vsub.s32 %v11020, %v11022
        %v11024 = vrot.slane %v11016, %v11023
        %v11026 = vunpack.c.l.s4 1935823168
        %v11027 = vunpack.c.0.s8 %v11026
        %v11028 = vlaneseq
        %v11029 = vshrl.u32 %v11028, 7
        %v11030 = vsub.s32 %v11027, %v11029
        %v11031 = vrot.slane %v11017, %v11030
        %v11032 = vcombine.low %v11024, %v11031
        %v11034 = vunpack.c.l.s4 1935823168
        %v11035 = vunpack.c.0.s8 %v11034
        %v11036 = vlaneseq
        %v11037 = vshrl.u32 %v11036, 7
        %v11038 = vsub.s32 %v11035, %v11037
        %v11039 = vrot.slane %v11032, %v11038
        %v11041 = vunpack.c.l.s4 1935823168
        %v11042 = vunpack.c.0.s8 %v11041
        %v11043 = vlaneseq
        %v11044 = vshrl.u32 %v11043, 7
        %v11045 = vsub.s32 %v11042, %v11044
        %v11046 = vrot.slane %v10127, %v11045
        %v11048 = vunpack.c.l.s4 1935823168
        %v11049 = vunpack.c.0.s8 %v11048
        %v11050 = vlaneseq
        %v11051 = vshrl.u32 %v11050, 7
        %v11052 = vsub.s32 %v11049, %v11051
        %v11053 = vrot.slane %v11046, %v11052
        %v11054 = vcombine.low %v10129, %v10167
        %v11055 = vcombine.low %v10153, %v10175
        %v11057 = vunpack.c.l.s4 1935823168
        %v11058 = vunpack.c.0.s8 %v11057
        %v11059 = vlaneseq
        %v11060 = vshrl.u32 %v11059, 7
        %v11061 = vsub.s32 %v11058, %v11060
        %v11062 = vrot.slane %v11054, %v11061
        %v11064 = vunpack.c.l.s4 1935823168
        %v11065 = vunpack.c.0.s8 %v11064
        %v11066 = vlaneseq
        %v11067 = vshrl.u32 %v11066, 7
        %v11068 = vsub.s32 %v11065, %v11067
        %v11069 = vrot.slane %v11055, %v11068
        %v11070 = vcombine.low %v11062, %v11069
        %v11072 = vunpack.c.l.s4 1935823168
        %v11073 = vunpack.c.0.s8 %v11072
        %v11074 = vlaneseq
        %v11075 = vshrl.u32 %v11074, 7
        %v11076 = vsub.s32 %v11073, %v11075
        %v11077 = vrot.slane %v11070, %v11076
        %v11078 = vcombine.low %v10177, %v10174
        %v11079 = vcombine.low %v10160, %v10176
        %v11081 = vunpack.c.l.s4 1935823168
        %v11082 = vunpack.c.0.s8 %v11081
        %v11083 = vlaneseq
        %v11084 = vshrl.u32 %v11083, 7
        %v11085 = vsub.s32 %v11082, %v11084
        %v11086 = vrot.slane %v11078, %v11085
        %v11088 = vunpack.c.l.s4 1935823168
        %v11089 = vunpack.c.0.s8 %v11088
        %v11090 = vlaneseq
        %v11091 = vshrl.u32 %v11090, 7
        %v11092 = vsub.s32 %v11089, %v11091
        %v11093 = vrot.slane %v11079, %v11092
        %v11094 = vcombine.low %v11086, %v11093
        %v11096 = vunpack.c.l.s4 1935823168
        %v11097 = vunpack.c.0.s8 %v11096
        %v11098 = vlaneseq
        %v11099 = vshrl.u32 %v11098, 7
        %v11100 = vsub.s32 %v11097, %v11099
        %v11101 = vrot.slane %v11094, %v11100
        %v11103 = vunpack.c.l.s4 1935823168
        %v11104 = vunpack.c.0.s8 %v11103
        %v11105 = vlaneseq
        %v11106 = vshrl.u32 %v11105, 7
        %v11107 = vsub.s32 %v11104, %v11106
        %v11108 = vrot.slane %v10178, %v11107
        %v11110 = vunpack.c.l.s4 1935823168
        %v11111 = vunpack.c.0.s8 %v11110
        %v11112 = vlaneseq
        %v11113 = vshrl.u32 %v11112, 7
        %v11114 = vsub.s32 %v11111, %v11113
        %v11115 = vrot.slane %v11108, %v11114
        %v11116 = vcombine.low %v10202, %v10224
        %v11117 = vcombine.low %v10216, %v10226
        %v11119 = vunpack.c.l.s4 1935823168
        %v11120 = vunpack.c.0.s8 %v11119
        %v11121 = vlaneseq
        %v11122 = vshrl.u32 %v11121, 7
        %v11123 = vsub.s32 %v11120, %v11122
        %v11124 = vrot.slane %v11116, %v11123
        %v11126 = vunpack.c.l.s4 1935823168
        %v11127 = vunpack.c.0.s8 %v11126
        %v11128 = vlaneseq
        %v11129 = vshrl.u32 %v11128, 7
        %v11130 = vsub.s32 %v11127, %v11129
        %v11131 = vrot.slane %v11117, %v11130
        %v11132 = vcombine.low %v11124, %v11131
        %v11134 = vunpack.c.l.s4 1935823168
        %v11135 = vunpack.c.0.s8 %v11134
        %v11136 = vlaneseq
        %v11137 = vshrl.u32 %v11136, 7
        %v11138 = vsub.s32 %v11135, %v11137
        %v11139 = vrot.slane %v11132, %v11138
        %v11140 = vcombine.low %v10209, %v10225
        %v11141 = vcombine.low %v10223, %v10227
        %v11143 = vunpack.c.l.s4 1935823168
        %v11144 = vunpack.c.0.s8 %v11143
        %v11145 = vlaneseq
        %v11146 = vshrl.u32 %v11145, 7
        %v11147 = vsub.s32 %v11144, %v11146
        %v11148 = vrot.slane %v11140, %v11147
        %v11150 = vunpack.c.l.s4 1935823168
        %v11151 = vunpack.c.0.s8 %v11150
        %v11152 = vlaneseq
        %v11153 = vshrl.u32 %v11152, 7
        %v11154 = vsub.s32 %v11151, %v11153
        %v11155 = vrot.slane %v11141, %v11154
        %v11156 = vcombine.low %v11148, %v11155
        %v11158 = vunpack.c.l.s4 1935823168
        %v11159 = vunpack.c.0.s8 %v11158
        %v11160 = vlaneseq
        %v11161 = vshrl.u32 %v11160, 7
        %v11162 = vsub.s32 %v11159, %v11161
        %v11163 = vrot.slane %v11156, %v11162
        %v11165 = vunpack.c.l.s4 1935823168
        %v11166 = vunpack.c.0.s8 %v11165
        %v11167 = vlaneseq
        %v11168 = vshrl.u32 %v11167, 7
        %v11169 = vsub.s32 %v11166, %v11168
        %v11170 = vrot.slane %v10251, %v11169
        %v11172 = vunpack.c.l.s4 1935823168
        %v11173 = vunpack.c.0.s8 %v11172
        %v11174 = vlaneseq
        %v11175 = vshrl.u32 %v11174, 7
        %v11176 = vsub.s32 %v11173, %v11175
        %v11177 = vrot.slane %v11170, %v11176
        %v11178 = vcombine.low %v10265, %v10275
        %v11179 = vcombine.low %v10273, %v10258
        %v11181 = vunpack.c.l.s4 1935823168
        %v11182 = vunpack.c.0.s8 %v11181
        %v11183 = vlaneseq
        %v11184 = vshrl.u32 %v11183, 7
        %v11185 = vsub.s32 %v11182, %v11184
        %v11186 = vrot.slane %v11178, %v11185
        %v11188 = vunpack.c.l.s4 1935823168
        %v11189 = vunpack.c.0.s8 %v11188
        %v11190 = vlaneseq
        %v11191 = vshrl.u32 %v11190, 7
        %v11192 = vsub.s32 %v11189, %v11191
        %v11193 = vrot.slane %v11179, %v11192
        %v11194 = vcombine.low %v11186, %v11193
        %v11196 = vunpack.c.l.s4 1935823168
        %v11197 = vunpack.c.0.s8 %v11196
        %v11198 = vlaneseq
        %v11199 = vshrl.u32 %v11198, 7
        %v11200 = vsub.s32 %v11197, %v11199
        %v11201 = vrot.slane %v11194, %v11200
        %v11202 = vcombine.low %v10272, %v10276
        %v11203 = vcombine.low %v10274, %v10300
        %v11205 = vunpack.c.l.s4 1935823168
        %v11206 = vunpack.c.0.s8 %v11205
        %v11207 = vlaneseq
        %v11208 = vshrl.u32 %v11207, 7
        %v11209 = vsub.s32 %v11206, %v11208
        %v11210 = vrot.slane %v11202, %v11209
        %v11212 = vunpack.c.l.s4 1935823168
        %v11213 = vunpack.c.0.s8 %v11212
        %v11214 = vlaneseq
        %v11215 = vshrl.u32 %v11214, 7
        %v11216 = vsub.s32 %v11213, %v11215
        %v11217 = vrot.slane %v11203, %v11216
        %v11218 = vcombine.low %v11210, %v11217
        %v11220 = vunpack.c.l.s4 1935823168
        %v11221 = vunpack.c.0.s8 %v11220
        %v11222 = vlaneseq
        %v11223 = vshrl.u32 %v11222, 7
        %v11224 = vsub.s32 %v11221, %v11223
        %v11225 = vrot.slane %v11218, %v11224
        %v11227 = vunpack.c.l.s4 1935823168
        %v11228 = vunpack.c.0.s8 %v11227
        %v11229 = vlaneseq
        %v11230 = vshrl.u32 %v11229, 7
        %v11231 = vsub.s32 %v11228, %v11230
        %v11232 = vrot.slane %v10314, %v11231
        %v11234 = vunpack.c.l.s4 1935823168
        %v11235 = vunpack.c.0.s8 %v11234
        %v11236 = vlaneseq
        %v11237 = vshrl.u32 %v11236, 7
        %v11238 = vsub.s32 %v11235, %v11237
        %v11239 = vrot.slane %v11232, %v11238
        %v11240 = vcombine.low %v10322, %v10307
        %v11241 = vcombine.low %v10324, %v10321
        %v11243 = vunpack.c.l.s4 1935823168
        %v11244 = vunpack.c.0.s8 %v11243
        %v11245 = vlaneseq
        %v11246 = vshrl.u32 %v11245, 7
        %v11247 = vsub.s32 %v11244, %v11246
        %v11248 = vrot.slane %v11240, %v11247
        %v11250 = vunpack.c.l.s4 1935823168
        %v11251 = vunpack.c.0.s8 %v11250
        %v11252 = vlaneseq
        %v11253 = vshrl.u32 %v11252, 7
        %v11254 = vsub.s32 %v11251, %v11253
        %v11255 = vrot.slane %v11241, %v11254
        %v11256 = vcombine.low %v11248, %v11255
        %v11258 = vunpack.c.l.s4 1935823168
        %v11259 = vunpack.c.0.s8 %v11258
        %v11260 = vlaneseq
        %v11261 = vshrl.u32 %v11260, 7
        %v11262 = vsub.s32 %v11259, %v11261
        %v11263 = vrot.slane %v11256, %v11262
        %v11264 = vcombine.low %v10323, %v10349
        %v11265 = vcombine.low %v10325, %v10363
        %v11267 = vunpack.c.l.s4 1935823168
        %v11268 = vunpack.c.0.s8 %v11267
        %v11269 = vlaneseq
        %v11270 = vshrl.u32 %v11269, 7
        %v11271 = vsub.s32 %v11268, %v11270
        %v11272 = vrot.slane %v11264, %v11271
        %v11274 = vunpack.c.l.s4 1935823168
        %v11275 = vunpack.c.0.s8 %v11274
        %v11276 = vlaneseq
        %v11277 = vshrl.u32 %v11276, 7
        %v11278 = vsub.s32 %v11275, %v11277
        %v11279 = vrot.slane %v11265, %v11278
        %v11280 = vcombine.low %v11272, %v11279
        %v11282 = vunpack.c.l.s4 1935823168
        %v11283 = vunpack.c.0.s8 %v11282
        %v11284 = vlaneseq
        %v11285 = vshrl.u32 %v11284, 7
        %v11286 = vsub.s32 %v11283, %v11285
        %v11287 = vrot.slane %v11280, %v11286
        %v11289 = vunpack.c.l.s4 1935823168
        %v11290 = vunpack.c.0.s8 %v11289
        %v11291 = vlaneseq
        %v11292 = vshrl.u32 %v11291, 7
        %v11293 = vsub.s32 %v11290, %v11292
        %v11294 = vrot.slane %v10371, %v11293
        %v11296 = vunpack.c.l.s4 1935823168
        %v11297 = vunpack.c.0.s8 %v11296
        %v11298 = vlaneseq
        %v11299 = vshrl.u32 %v11298, 7
        %v11300 = vsub.s32 %v11297, %v11299
        %v11301 = vrot.slane %v11294, %v11300
        %v11302 = vcombine.low %v10373, %v10370
        %v11303 = vcombine.low %v10356, %v10372
        %v11305 = vunpack.c.l.s4 1935823168
        %v11306 = vunpack.c.0.s8 %v11305
        %v11307 = vlaneseq
        %v11308 = vshrl.u32 %v11307, 7
        %v11309 = vsub.s32 %v11306, %v11308
        %v11310 = vrot.slane %v11302, %v11309
        %v11312 = vunpack.c.l.s4 1935823168
        %v11313 = vunpack.c.0.s8 %v11312
        %v11314 = vlaneseq
        %v11315 = vshrl.u32 %v11314, 7
        %v11316 = vsub.s32 %v11313, %v11315
        %v11317 = vrot.slane %v11303, %v11316
        %v11318 = vcombine.low %v11310, %v11317
        %v11320 = vunpack.c.l.s4 1935823168
        %v11321 = vunpack.c.0.s8 %v11320
        %v11322 = vlaneseq
        %v11323 = vshrl.u32 %v11322, 7
        %v11324 = vsub.s32 %v11321, %v11323
        %v11325 = vrot.slane %v11318, %v11324
        %v11326 = vcombine.low %v10374, %v10412
        %v11327 = vcombine.low %v10398, %v10420
        %v11329 = vunpack.c.l.s4 1935823168
        %v11330 = vunpack.c.0.s8 %v11329
        %v11331 = vlaneseq
        %v11332 = vshrl.u32 %v11331, 7
        %v11333 = vsub.s32 %v11330, %v11332
        %v11334 = vrot.slane %v11326, %v11333
        %v11336 = vunpack.c.l.s4 1935823168
        %v11337 = vunpack.c.0.s8 %v11336
        %v11338 = vlaneseq
        %v11339 = vshrl.u32 %v11338, 7
        %v11340 = vsub.s32 %v11337, %v11339
        %v11341 = vrot.slane %v11327, %v11340
        %v11342 = vcombine.low %v11334, %v11341
        %v11344 = vunpack.c.l.s4 1935823168
        %v11345 = vunpack.c.0.s8 %v11344
        %v11346 = vlaneseq
        %v11347 = vshrl.u32 %v11346, 7
        %v11348 = vsub.s32 %v11345, %v11347
        %v11349 = vrot.slane %v11342, %v11348
        %v11351 = vunpack.c.l.s4 1935823168
        %v11352 = vunpack.c.0.s8 %v11351
        %v11353 = vlaneseq
        %v11354 = vshrl.u32 %v11353, 7
        %v11355 = vsub.s32 %v11352, %v11354
        %v11356 = vrot.slane %v10422, %v11355
        %v11358 = vunpack.c.l.s4 1935823168
        %v11359 = vunpack.c.0.s8 %v11358
        %v11360 = vlaneseq
        %v11361 = vshrl.u32 %v11360, 7
        %v11362 = vsub.s32 %v11359, %v11361
        %v11363 = vrot.slane %v11356, %v11362
        %v11364 = vcombine.low %v10405, %v10421
        %v11365 = vcombine.low %v10419, %v10423
        %v11367 = vunpack.c.l.s4 1935823168
        %v11368 = vunpack.c.0.s8 %v11367
        %v11369 = vlaneseq
        %v11370 = vshrl.u32 %v11369, 7
        %v11371 = vsub.s32 %v11368, %v11370
        %v11372 = vrot.slane %v11364, %v11371
        %v11374 = vunpack.c.l.s4 1935823168
        %v11375 = vunpack.c.0.s8 %v11374
        %v11376 = vlaneseq
        %v11377 = vshrl.u32 %v11376, 7
        %v11378 = vsub.s32 %v11375, %v11377
        %v11379 = vrot.slane %v11365, %v11378
        %v11380 = vcombine.low %v11372, %v11379
        %v11382 = vunpack.c.l.s4 1935823168
        %v11383 = vunpack.c.0.s8 %v11382
        %v11384 = vlaneseq
        %v11385 = vshrl.u32 %v11384, 7
        %v11386 = vsub.s32 %v11383, %v11385
        %v11387 = vrot.slane %v11380, %v11386
        %v11388 = vcombine.low %v10447, %v10469
        %v11389 = vcombine.low %v10461, %v10471
        %v11391 = vunpack.c.l.s4 1935823168
        %v11392 = vunpack.c.0.s8 %v11391
        %v11393 = vlaneseq
        %v11394 = vshrl.u32 %v11393, 7
        %v11395 = vsub.s32 %v11392, %v11394
        %v11396 = vrot.slane %v11388, %v11395
        %v11398 = vunpack.c.l.s4 1935823168
        %v11399 = vunpack.c.0.s8 %v11398
        %v11400 = vlaneseq
        %v11401 = vshrl.u32 %v11400, 7
        %v11402 = vsub.s32 %v11399, %v11401
        %v11403 = vrot.slane %v11389, %v11402
        %v11404 = vcombine.low %v11396, %v11403
        %v11406 = vunpack.c.l.s4 1935823168
        %v11407 = vunpack.c.0.s8 %v11406
        %v11408 = vlaneseq
        %v11409 = vshrl.u32 %v11408, 7
        %v11410 = vsub.s32 %v11407, %v11409
        %v11411 = vrot.slane %v11404, %v11410
        %v11413 = vunpack.c.l.s4 1935823168
        %v11414 = vunpack.c.0.s8 %v11413
        %v11415 = vlaneseq
        %v11416 = vshrl.u32 %v11415, 7
        %v11417 = vsub.s32 %v11414, %v11416
        %v11418 = vrot.slane %v10454, %v11417
        %v11420 = vunpack.c.l.s4 1935823168
        %v11421 = vunpack.c.0.s8 %v11420
        %v11422 = vlaneseq
        %v11423 = vshrl.u32 %v11422, 7
        %v11424 = vsub.s32 %v11421, %v11423
        %v11425 = vrot.slane %v11418, %v11424
        %v11426 = vcombine.low %v10468, %v10472
        %v11427 = vcombine.low %v10470, %v10496
        %v11429 = vunpack.c.l.s4 1935823168
        %v11430 = vunpack.c.0.s8 %v11429
        %v11431 = vlaneseq
        %v11432 = vshrl.u32 %v11431, 7
        %v11433 = vsub.s32 %v11430, %v11432
        %v11434 = vrot.slane %v11426, %v11433
        %v11436 = vunpack.c.l.s4 1935823168
        %v11437 = vunpack.c.0.s8 %v11436
        %v11438 = vlaneseq
        %v11439 = vshrl.u32 %v11438, 7
        %v11440 = vsub.s32 %v11437, %v11439
        %v11441 = vrot.slane %v11427, %v11440
        %v11442 = vcombine.low %v11434, %v11441
        %v11444 = vunpack.c.l.s4 1935823168
        %v11445 = vunpack.c.0.s8 %v11444
        %v11446 = vlaneseq
        %v11447 = vshrl.u32 %v11446, 7
        %v11448 = vsub.s32 %v11445, %v11447
        %v11449 = vrot.slane %v11442, %v11448
        %v11450 = vcombine.low %v10510, %v10520
        %v11451 = vcombine.low %v10518, %v10503
        %v11453 = vunpack.c.l.s4 1935823168
        %v11454 = vunpack.c.0.s8 %v11453
        %v11455 = vlaneseq
        %v11456 = vshrl.u32 %v11455, 7
        %v11457 = vsub.s32 %v11454, %v11456
        %v11458 = vrot.slane %v11450, %v11457
        %v11460 = vunpack.c.l.s4 1935823168
        %v11461 = vunpack.c.0.s8 %v11460
        %v11462 = vlaneseq
        %v11463 = vshrl.u32 %v11462, 7
        %v11464 = vsub.s32 %v11461, %v11463
        %v11465 = vrot.slane %v11451, %v11464
        %v11466 = vcombine.low %v11458, %v11465
        %v11468 = vunpack.c.l.s4 1935823168
        %v11469 = vunpack.c.0.s8 %v11468
        %v11470 = vlaneseq
        %v11471 = vshrl.u32 %v11470, 7
        %v11472 = vsub.s32 %v11469, %v11471
        %v11473 = vrot.slane %v11466, %v11472
        %v11475 = vunpack.c.l.s4 1935823168
        %v11476 = vunpack.c.0.s8 %v11475
        %v11477 = vlaneseq
        %v11478 = vshrl.u32 %v11477, 7
        %v11479 = vsub.s32 %v11476, %v11478
        %v11480 = vrot.slane %v10517, %v11479
        %v11482 = vunpack.c.l.s4 1935823168
        %v11483 = vunpack.c.0.s8 %v11482
        %v11484 = vlaneseq
        %v11485 = vshrl.u32 %v11484, 7
        %v11486 = vsub.s32 %v11483, %v11485
        %v11487 = vrot.slane %v11480, %v11486
        %v11488 = vcombine.low %v10519, %v10545
        %v11489 = vcombine.low %v10521, %v10559
        %v11491 = vunpack.c.l.s4 1935823168
        %v11492 = vunpack.c.0.s8 %v11491
        %v11493 = vlaneseq
        %v11494 = vshrl.u32 %v11493, 7
        %v11495 = vsub.s32 %v11492, %v11494
        %v11496 = vrot.slane %v11488, %v11495
        %v11498 = vunpack.c.l.s4 1935823168
        %v11499 = vunpack.c.0.s8 %v11498
        %v11500 = vlaneseq
        %v11501 = vshrl.u32 %v11500, 7
        %v11502 = vsub.s32 %v11499, %v11501
        %v11503 = vrot.slane %v11489, %v11502
        %v11504 = vcombine.low %v11496, %v11503
        %v11506 = vunpack.c.l.s4 1935823168
        %v11507 = vunpack.c.0.s8 %v11506
        %v11508 = vlaneseq
        %v11509 = vshrl.u32 %v11508, 7
        %v11510 = vsub.s32 %v11507, %v11509
        %v11511 = vrot.slane %v11504, %v11510
        %v11512 = vcombine.low %v10567, %v10552
        %v11513 = vcombine.low %v10569, %v10566
        %v11515 = vunpack.c.l.s4 1935823168
        %v11516 = vunpack.c.0.s8 %v11515
        %v11517 = vlaneseq
        %v11518 = vshrl.u32 %v11517, 7
        %v11519 = vsub.s32 %v11516, %v11518
        %v11520 = vrot.slane %v11512, %v11519
        %v11522 = vunpack.c.l.s4 1935823168
        %v11523 = vunpack.c.0.s8 %v11522
        %v11524 = vlaneseq
        %v11525 = vshrl.u32 %v11524, 7
        %v11526 = vsub.s32 %v11523, %v11525
        %v11527 = vrot.slane %v11513, %v11526
        %v11528 = vcombine.low %v11520, %v11527
        %v11530 = vunpack.c.l.s4 1935823168
        %v11531 = vunpack.c.0.s8 %v11530
        %v11532 = vlaneseq
        %v11533 = vshrl.u32 %v11532, 7
        %v11534 = vsub.s32 %v11531, %v11533
        %v11535 = vrot.slane %v11528, %v11534
        %v11537 = vunpack.c.l.s4 1935823168
        %v11538 = vunpack.c.0.s8 %v11537
        %v11539 = vlaneseq
        %v11540 = vshrl.u32 %v11539, 7
        %v11541 = vsub.s32 %v11538, %v11540
        %v11542 = vrot.slane %v10568, %v11541
        %v11544 = vunpack.c.l.s4 1935823168
        %v11545 = vunpack.c.0.s8 %v11544
        %v11546 = vlaneseq
        %v11547 = vshrl.u32 %v11546, 7
        %v11548 = vsub.s32 %v11545, %v11547
        %v11549 = vrot.slane %v11542, %v11548
        %v11550 = vcombine.low %v10570, %v10608
        %v11551 = vcombine.low %v10594, %v10616
        %v11553 = vunpack.c.l.s4 1935823168
        %v11554 = vunpack.c.0.s8 %v11553
        %v11555 = vlaneseq
        %v11556 = vshrl.u32 %v11555, 7
        %v11557 = vsub.s32 %v11554, %v11556
        %v11558 = vrot.slane %v11550, %v11557
        %v11560 = vunpack.c.l.s4 1935823168
        %v11561 = vunpack.c.0.s8 %v11560
        %v11562 = vlaneseq
        %v11563 = vshrl.u32 %v11562, 7
        %v11564 = vsub.s32 %v11561, %v11563
        %v11565 = vrot.slane %v11551, %v11564
        %v11566 = vcombine.low %v11558, %v11565
        %v11568 = vunpack.c.l.s4 1935823168
        %v11569 = vunpack.c.0.s8 %v11568
        %v11570 = vlaneseq
        %v11571 = vshrl.u32 %v11570, 7
        %v11572 = vsub.s32 %v11569, %v11571
        %v11573 = vrot.slane %v11566, %v11572
        %v11574 = vcombine.low %v10618, %v10615
        %v11575 = vcombine.low %v10601, %v10617
        %v11577 = vunpack.c.l.s4 1935823168
        %v11578 = vunpack.c.0.s8 %v11577
        %v11579 = vlaneseq
        %v11580 = vshrl.u32 %v11579, 7
        %v11581 = vsub.s32 %v11578, %v11580
        %v11582 = vrot.slane %v11574, %v11581
        %v11584 = vunpack.c.l.s4 1935823168
        %v11585 = vunpack.c.0.s8 %v11584
        %v11586 = vlaneseq
        %v11587 = vshrl.u32 %v11586, 7
        %v11588 = vsub.s32 %v11585, %v11587
        %v11589 = vrot.slane %v11575, %v11588
        %v11590 = vcombine.low %v11582, %v11589
        %v11592 = vunpack.c.l.s4 1935823168
        %v11593 = vunpack.c.0.s8 %v11592
        %v11594 = vlaneseq
        %v11595 = vshrl.u32 %v11594, 7
        %v11596 = vsub.s32 %v11593, %v11595
        %v11597 = vrot.slane %v11590, %v11596
        %v11599 = vunpack.c.l.s4 1935823168
        %v11600 = vunpack.c.0.s8 %v11599
        %v11601 = vlaneseq
        %v11602 = vshrl.u32 %v11601, 7
        %v11603 = vsub.s32 %v11600, %v11602
        %v11604 = vrot.slane %v10619, %v11603
        %v11606 = vunpack.c.l.s4 1935823168
        %v11607 = vunpack.c.0.s8 %v11606
        %v11608 = vlaneseq
        %v11609 = vshrl.u32 %v11608, 7
        %v11610 = vsub.s32 %v11607, %v11609
        %v11611 = vrot.slane %v11604, %v11610
        %vm11612 = vsmask.f32 3328
        %vm11613 = vsmask.f32 7440
        %vm11614 = vmor %vm11612, %vm11613
        %v11616 = vshrl.u32 %v10643, 16
        %v11618 = vrot.slane %v11616, 4
        %v11619 = vshll.u32 %v10643, 16
        %v11621 = vrot.slane %v11619, 5
        %v11622 = vor.u32 %v11618, %v11621
        %v11623 = vrot.slane %v11622, 4
        %v11625 = vshll.u32 %v10667, 16
        %v11627 = vrot.slane %v11625, 5
        %v11628 = vsel %vm11614, %v11623, %v11627
        %v11629 = vshrl.u32 %v10667, 16
        %v11631 = vrot.slane %v11629, 4
        %v11632 = vor.u32 %v11631, %v11627
        %v11633 = vrot.slane %v11632, 4
        %v11635 = vshll.u32 %v10681, 16
        %v11637 = vrot.slane %v11635, 5
        %v11638 = vsel %vm11614, %v11633, %v11637
        %v11640 = vshrl.u32 %v10705, 16
        %v11642 = vrot.slane %v11640, 4
        %v11643 = vshll.u32 %v10705, 16
        %v11645 = vrot.slane %v11643, 5
        %v11646 = vor.u32 %v11642, %v11645
        %v11647 = vrot.slane %v11646, 4
        %v11649 = vshll.u32 %v10729, 16
        %v11651 = vrot.slane %v11649, 5
        %v11652 = vsel %vm11614, %v11647, %v11651
        %v11653 = vshrl.u32 %v10729, 16
        %v11655 = vrot.slane %v11653, 4
        %v11656 = vor.u32 %v11655, %v11651
        %v11657 = vrot.slane %v11656, 4
        %v11659 = vshll.u32 %v10743, 16
        %v11661 = vrot.slane %v11659, 5
        %v11662 = vsel %vm11614, %v11657, %v11661
        %v11664 = vshrl.u32 %v10767, 16
        %v11666 = vrot.slane %v11664, 4
        %v11667 = vshll.u32 %v10767, 16
        %v11669 = vrot.slane %v11667, 5
        %v11670 = vor.u32 %v11666, %v11669
        %v11671 = vrot.slane %v11670, 4
        %v11673 = vshll.u32 %v10791, 16
        %v11675 = vrot.slane %v11673, 5
        %v11676 = vsel %vm11614, %v11671, %v11675
        %v11677 = vshrl.u32 %v10791, 16
        %v11679 = vrot.slane %v11677, 4
        %v11680 = vor.u32 %v11679, %v11675
        %v11681 = vrot.slane %v11680, 4
        %v11683 = vshll.u32 %v10805, 16
        %v11685 = vrot.slane %v11683, 5
        %v11686 = vsel %vm11614, %v11681, %v11685
        %v11688 = vshrl.u32 %v10829, 16
        %v11690 = vrot.slane %v11688, 4
        %v11691 = vshll.u32 %v10829, 16
        %v11693 = vrot.slane %v11691, 5
        %v11694 = vor.u32 %v11690, %v11693
        %v11695 = vrot.slane %v11694, 4
        %v11697 = vshll.u32 %v10853, 16
        %v11699 = vrot.slane %v11697, 5
        %v11700 = vsel %vm11614, %v11695, %v11699
        %v11701 = vshrl.u32 %v10853, 16
        %v11703 = vrot.slane %v11701, 4
        %v11704 = vor.u32 %v11703, %v11699
        %v11705 = vrot.slane %v11704, 4
        %v11707 = vshll.u32 %v10867, 16
        %v11709 = vrot.slane %v11707, 5
        %v11710 = vsel %vm11614, %v11705, %v11709
        %v11712 = vshrl.u32 %v10891, 16
        %v11714 = vrot.slane %v11712, 4
        %v11715 = vshll.u32 %v10891, 16
        %v11717 = vrot.slane %v11715, 5
        %v11718 = vor.u32 %v11714, %v11717
        %v11719 = vrot.slane %v11718, 4
        %v11721 = vshll.u32 %v10915, 16
        %v11723 = vrot.slane %v11721, 5
        %v11724 = vsel %vm11614, %v11719, %v11723
        %v11725 = vshrl.u32 %v10915, 16
        %v11727 = vrot.slane %v11725, 4
        %v11728 = vor.u32 %v11727, %v11723
        %v11729 = vrot.slane %v11728, 4
        %v11731 = vshll.u32 %v10929, 16
        %v11733 = vrot.slane %v11731, 5
        %v11734 = vsel %vm11614, %v11729, %v11733
        %v11736 = vshrl.u32 %v10953, 16
        %v11738 = vrot.slane %v11736, 4
        %v11739 = vshll.u32 %v10953, 16
        %v11741 = vrot.slane %v11739, 5
        %v11742 = vor.u32 %v11738, %v11741
        %v11743 = vrot.slane %v11742, 4
        %v11745 = vshll.u32 %v10977, 16
        %v11747 = vrot.slane %v11745, 5
        %v11748 = vsel %vm11614, %v11743, %v11747
        %v11749 = vshrl.u32 %v10977, 16
        %v11751 = vrot.slane %v11749, 4
        %v11752 = vor.u32 %v11751, %v11747
        %v11753 = vrot.slane %v11752, 4
        %v11755 = vshll.u32 %v10991, 16
        %v11757 = vrot.slane %v11755, 5
        %v11758 = vsel %vm11614, %v11753, %v11757
        %v11760 = vshrl.u32 %v11015, 16
        %v11762 = vrot.slane %v11760, 4
        %v11763 = vshll.u32 %v11015, 16
        %v11765 = vrot.slane %v11763, 5
        %v11766 = vor.u32 %v11762, %v11765
        %v11767 = vrot.slane %v11766, 4
        %v11769 = vshll.u32 %v11039, 16
        %v11771 = vrot.slane %v11769, 5
        %v11772 = vsel %vm11614, %v11767, %v11771
        %v11773 = vshrl.u32 %v11039, 16
        %v11775 = vrot.slane %v11773, 4
        %v11776 = vor.u32 %v11775, %v11771
        %v11777 = vrot.slane %v11776, 4
        %v11779 = vshll.u32 %v11053, 16
        %v11781 = vrot.slane %v11779, 5
        %v11782 = vsel %vm11614, %v11777, %v11781
        %v11784 = vshrl.u32 %v11077, 16
        %v11786 = vrot.slane %v11784, 4
        %v11787 = vshll.u32 %v11077, 16
        %v11789 = vrot.slane %v11787, 5
        %v11790 = vor.u32 %v11786, %v11789
        %v11791 = vrot.slane %v11790, 4
        %v11793 = vshll.u32 %v11101, 16
        %v11795 = vrot.slane %v11793, 5
        %v11796 = vsel %vm11614, %v11791, %v11795
        %v11797 = vshrl.u32 %v11101, 16
        %v11799 = vrot.slane %v11797, 4
        %v11800 = vor.u32 %v11799, %v11795
        %v11801 = vrot.slane %v11800, 4
        %v11803 = vshll.u32 %v11115, 16
        %v11805 = vrot.slane %v11803, 5
        %v11806 = vsel %vm11614, %v11801, %v11805
        %v11808 = vshrl.u32 %v11139, 16
        %v11810 = vrot.slane %v11808, 4
        %v11811 = vshll.u32 %v11139, 16
        %v11813 = vrot.slane %v11811, 5
        %v11814 = vor.u32 %v11810, %v11813
        %v11815 = vrot.slane %v11814, 4
        %v11817 = vshll.u32 %v11163, 16
        %v11819 = vrot.slane %v11817, 5
        %v11820 = vsel %vm11614, %v11815, %v11819
        %v11821 = vshrl.u32 %v11163, 16
        %v11823 = vrot.slane %v11821, 4
        %v11824 = vor.u32 %v11823, %v11819
        %v11825 = vrot.slane %v11824, 4
        %v11827 = vshll.u32 %v11177, 16
        %v11829 = vrot.slane %v11827, 5
        %v11830 = vsel %vm11614, %v11825, %v11829
        %v11832 = vshrl.u32 %v11201, 16
        %v11834 = vrot.slane %v11832, 4
        %v11835 = vshll.u32 %v11201, 16
        %v11837 = vrot.slane %v11835, 5
        %v11838 = vor.u32 %v11834, %v11837
        %v11839 = vrot.slane %v11838, 4
        %v11841 = vshll.u32 %v11225, 16
        %v11843 = vrot.slane %v11841, 5
        %v11844 = vsel %vm11614, %v11839, %v11843
        %v11845 = vshrl.u32 %v11225, 16
        %v11847 = vrot.slane %v11845, 4
        %v11848 = vor.u32 %v11847, %v11843
        %v11849 = vrot.slane %v11848, 4
        %v11851 = vshll.u32 %v11239, 16
        %v11853 = vrot.slane %v11851, 5
        %v11854 = vsel %vm11614, %v11849, %v11853
        %v11856 = vshrl.u32 %v11263, 16
        %v11858 = vrot.slane %v11856, 4
        %v11859 = vshll.u32 %v11263, 16
        %v11861 = vrot.slane %v11859, 5
        %v11862 = vor.u32 %v11858, %v11861
        %v11863 = vrot.slane %v11862, 4
        %v11865 = vshll.u32 %v11287, 16
        %v11867 = vrot.slane %v11865, 5
        %v11868 = vsel %vm11614, %v11863, %v11867
        %v11869 = vshrl.u32 %v11287, 16
        %v11871 = vrot.slane %v11869, 4
        %v11872 = vor.u32 %v11871, %v11867
        %v11873 = vrot.slane %v11872, 4
        %v11875 = vshll.u32 %v11301, 16
        %v11877 = vrot.slane %v11875, 5
        %v11878 = vsel %vm11614, %v11873, %v11877
        %v11880 = vshrl.u32 %v11325, 16
        %v11882 = vrot.slane %v11880, 4
        %v11883 = vshll.u32 %v11325, 16
        %v11885 = vrot.slane %v11883, 5
        %v11886 = vor.u32 %v11882, %v11885
        %v11887 = vrot.slane %v11886, 4
        %v11889 = vshll.u32 %v11349, 16
        %v11891 = vrot.slane %v11889, 5
        %v11892 = vsel %vm11614, %v11887, %v11891
        %v11893 = vshrl.u32 %v11349, 16
        %v11895 = vrot.slane %v11893, 4
        %v11896 = vor.u32 %v11895, %v11891
        %v11897 = vrot.slane %v11896, 4
        %v11899 = vshll.u32 %v11363, 16
        %v11901 = vrot.slane %v11899, 5
        %v11902 = vsel %vm11614, %v11897, %v11901
        %v11904 = vshrl.u32 %v11387, 16
        %v11906 = vrot.slane %v11904, 4
        %v11907 = vshll.u32 %v11387, 16
        %v11909 = vrot.slane %v11907, 5
        %v11910 = vor.u32 %v11906, %v11909
        %v11911 = vrot.slane %v11910, 4
        %v11913 = vshll.u32 %v11411, 16
        %v11915 = vrot.slane %v11913, 5
        %v11916 = vsel %vm11614, %v11911, %v11915
        %v11917 = vshrl.u32 %v11411, 16
        %v11919 = vrot.slane %v11917, 4
        %v11920 = vor.u32 %v11919, %v11915
        %v11921 = vrot.slane %v11920, 4
        %v11923 = vshll.u32 %v11425, 16
        %v11925 = vrot.slane %v11923, 5
        %v11926 = vsel %vm11614, %v11921, %v11925
        %v11928 = vshrl.u32 %v11449, 16
        %v11930 = vrot.slane %v11928, 4
        %v11931 = vshll.u32 %v11449, 16
        %v11933 = vrot.slane %v11931, 5
        %v11934 = vor.u32 %v11930, %v11933
        %v11935 = vrot.slane %v11934, 4
        %v11937 = vshll.u32 %v11473, 16
        %v11939 = vrot.slane %v11937, 5
        %v11940 = vsel %vm11614, %v11935, %v11939
        %v11941 = vshrl.u32 %v11473, 16
        %v11943 = vrot.slane %v11941, 4
        %v11944 = vor.u32 %v11943, %v11939
        %v11945 = vrot.slane %v11944, 4
        %v11947 = vshll.u32 %v11487, 16
        %v11949 = vrot.slane %v11947, 5
        %v11950 = vsel %vm11614, %v11945, %v11949
        %v11952 = vshrl.u32 %v11511, 16
        %v11954 = vrot.slane %v11952, 4
        %v11955 = vshll.u32 %v11511, 16
        %v11957 = vrot.slane %v11955, 5
        %v11958 = vor.u32 %v11954, %v11957
        %v11959 = vrot.slane %v11958, 4
        %v11961 = vshll.u32 %v11535, 16
        %v11963 = vrot.slane %v11961, 5
        %v11964 = vsel %vm11614, %v11959, %v11963
        %v11965 = vshrl.u32 %v11535, 16
        %v11967 = vrot.slane %v11965, 4
        %v11968 = vor.u32 %v11967, %v11963
        %v11969 = vrot.slane %v11968, 4
        %v11971 = vshll.u32 %v11549, 16
        %v11973 = vrot.slane %v11971, 5
        %v11974 = vsel %vm11614, %v11969, %v11973
        %v11976 = vshrl.u32 %v11573, 16
        %v11978 = vrot.slane %v11976, 4
        %v11979 = vshll.u32 %v11573, 16
        %v11981 = vrot.slane %v11979, 5
        %v11982 = vor.u32 %v11978, %v11981
        %v11983 = vrot.slane %v11982, 4
        %v11985 = vshll.u32 %v11597, 16
        %v11987 = vrot.slane %v11985, 5
        %v11988 = vsel %vm11614, %v11983, %v11987
        %v11989 = vshrl.u32 %v11597, 16
        %v11991 = vrot.slane %v11989, 4
        %v11992 = vor.u32 %v11991, %v11987
        %v11993 = vrot.slane %v11992, 4
        %v11995 = vshll.u32 %v11611, 16
        %v11997 = vrot.slane %v11995, 5
        %v11998 = vsel %vm11614, %v11993, %v11997
        %12031 = vst [vmem:[%s442] sm:$0xf] %v11628
        %12032 = vst [vmem:[%s442 + $0x4] sm:$0xf] %v11638
        %12033 = vst [vmem:[%s442 + $0x8] sm:$0xf] %v11652
        %12034 = vst [vmem:[%s442 + $0xc] sm:$0xf] %v11662
        %12035 = vst [vmem:[%s442 + $0x10] sm:$0xf] %v11676
        %12036 = vst [vmem:[%s442 + $0x14] sm:$0xf] %v11686
        %12037 = vst [vmem:[%s442 + $0x18] sm:$0xf] %v11700
        %12038 = vst [vmem:[%s442 + $0x1c] sm:$0xf] %v11710
        %12039 = vst [vmem:[%s442 + $0x20] sm:$0xf] %v11724
        %12040 = vst [vmem:[%s442 + $0x24] sm:$0xf] %v11734
        %12041 = vst [vmem:[%s442 + $0x28] sm:$0xf] %v11748
        %12042 = vst [vmem:[%s442 + $0x2c] sm:$0xf] %v11758
        %12043 = vst [vmem:[%s442 + $0x30] sm:$0xf] %v11772
        %12044 = vst [vmem:[%s442 + $0x34] sm:$0xf] %v11782
        %12045 = vst [vmem:[%s442 + $0x38] sm:$0xf] %v11796
        %12046 = vst [vmem:[%s442 + $0x3c] sm:$0xf] %v11806
        %12047 = vst [vmem:[%s442 + $0x40] sm:$0xf] %v11820
        %12048 = vst [vmem:[%s442 + $0x44] sm:$0xf] %v11830
        %12049 = vst [vmem:[%s442 + $0x48] sm:$0xf] %v11844
        %12050 = vst [vmem:[%s442 + $0x4c] sm:$0xf] %v11854
        %12051 = vst [vmem:[%s442 + $0x50] sm:$0xf] %v11868
        %12052 = vst [vmem:[%s442 + $0x54] sm:$0xf] %v11878
        %12053 = vst [vmem:[%s442 + $0x58] sm:$0xf] %v11892
        %12054 = vst [vmem:[%s442 + $0x5c] sm:$0xf] %v11902
        %12055 = vst [vmem:[%s442 + $0x60] sm:$0xf] %v11916
        %12056 = vst [vmem:[%s442 + $0x64] sm:$0xf] %v11926
        %12057 = vst [vmem:[%s442 + $0x68] sm:$0xf] %v11940
        %12058 = vst [vmem:[%s442 + $0x6c] sm:$0xf] %v11950
        %12059 = vst [vmem:[%s442 + $0x70] sm:$0xf] %v11964
        %12060 = vst [vmem:[%s442 + $0x74] sm:$0xf] %v11974
        %12061 = vst [vmem:[%s442 + $0x78] sm:$0xf] %v11988
        %12062 = vst [vmem:[%s442 + $0x7c] sm:$0xf] %v11998
        %s12063 = sand.u32 %s277, 1
        %s12064 = scalar_lea.sflag [#allocation4], %s12063
        %s12065 = sand.u32 %s277, 1
        %s12066 = smul.addr %s12065, 128
        %s12067 = scalar_lea.vmem [#allocation3], %s12066
        // Predicated region
        $region65: #{tpu_custom_call.1} parent=55 // pred_check
          %p12068 = pneg %p287
        $region66: #{tpu_custom_call.1} parent=55 // pred_check_branch
          %12070 = sbr.rel (%p12068) target = $region68
        $region67: #{tpu_custom_call.1} parent=55 // pred_region
          %s12071 = sadd.s32 %s27, %s28
          %s12072 = smul.u32 16, %s12071
          %s12074 = ssub.s32 2048, 2048
          %12075 = vsyncadd %s12064, %s12074
          %s12076 = smul.addr %s12072, 2
          %s12077 = smul.addr %s12076, 64
          %s12078 = scalar_lea.hbm %s9, %s12077
          %s12079 = sshll.u32 %s12067, 4
          %s12080 = int_to_ptr.vmem [resolvable:$true] %s12079
          %12085 = dma.vmem_to_hbm [thread:$0]  %s12080, 2048, %s12078, %s12064, 64, 64, 4
        $region68: #{tpu_custom_call.1} parent=55 // pred_fallthru
          _
      $region56: #{tpu_custom_call.1} parent=5 // pred_fallthru
        _
      %p12086 = scmp.le.s32.totalorder 2, %s18
      // Predicated region
      $region69: #{tpu_custom_call.1} parent=5 // pred_check
        %p12087 = pneg %p12086
      $region70: #{tpu_custom_call.1} parent=5 // pred_check_branch
        %12089 = sbr.rel (%p12087) target = $region72
      $region71: #{tpu_custom_call.1} parent=5 // pred_region
        %s12090 = ssub.s32 %s18, 2
        // Predicated region
        $region73: #{tpu_custom_call.1} parent=71 // pred_check
          %p12091 = pneg %p293
        $region74: #{tpu_custom_call.1} parent=71 // pred_check_branch
          %12093 = sbr.rel (%p12091) target = $region76
        $region75: #{tpu_custom_call.1} parent=71 // pred_region
          %s12094 = sand.u32 %s278, 1
          %s12095 = scalar_lea.sflag [#allocation4], %s12094
          %s12096 = sand.u32 %s278, 1
          %s12097 = smul.addr %s12096, 128
          %s12098 = scalar_lea.vmem [#allocation3], %s12097
          %12099 = dma.done %s12095, 2048
        $region76: #{tpu_custom_call.1} parent=71 // pred_fallthru
          _
      $region72: #{tpu_custom_call.1} parent=5 // pred_fallthru
        _
    $region6: #{tpu_custom_call.1} parent=1 // loop_footer
      %s22 = sadd.s32 1, %s18
    $region7: #{tpu_custom_call.1} parent=1 // loop_footer_branch
      %17 = sbr.rel target = $region3
    $region8: #{tpu_custom_call.1} parent=1 // loop_exit
      _
    %12100 = vsyncpa [#allocation4], 1
    %s12101 = scalar_lea.sflag [#allocation4], 1
    %12102 = vsyncpa %s12101, 1

</llo_original>
